<compile_context>
chip_gen: v6e
topology: v6e:2x2x1
jax: 0.10.0
libtpu: 0.0.40
codegen_flags: <defaults>
</compile_context>

<pallas_src>
import functools

import jax
import jax.numpy as jnp
from jax.experimental import pallas as pl
from jax.experimental.pallas import tpu as pltpu


# ----------------------------- Pallas kernels ------------------------------ #

def _matmul_bias_act_kernel(x_ref, w_ref, b_ref, o_ref, *, relu):
    # bf16 x bf16 -> f32 accumulation on the MXU; bias + ReLU fused in epilogue.
    acc = jnp.dot(x_ref[...], w_ref[...], preferred_element_type=jnp.float32)
    acc = acc + b_ref[...]                       # b_ref is (1, N): row broadcast
    if relu:
        acc = jnp.maximum(acc, 0.0)
    o_ref[...] = acc.astype(o_ref.dtype)


def matmul_bias_act(x, w, b_row, *, relu, out_dtype, tm=512):
    """y = relu?(x @ w + b): M-tiled, pipelined, bf16 MXU inputs, f32 acc."""
    M, K = x.shape
    K2, N = w.shape
    assert K == K2 and b_row.shape == (1, N)
    tile_m = M if M <= tm else tm               # tm is a multiple of 8
    return pl.pallas_call(
        functools.partial(_matmul_bias_act_kernel, relu=relu),
        out_shape=jax.ShapeDtypeStruct((M, N), out_dtype),
        grid=(pl.cdiv(M, tile_m),),
        in_specs=[pl.BlockSpec((tile_m, K), lambda i: (i, 0)),
                  pl.BlockSpec((K, N), lambda i: (0, 0)),      # weights resident
                  pl.BlockSpec((1, N), lambda i: (0, 0))],     # bias resident
        out_specs=pl.BlockSpec((tile_m, N), lambda i: (i, 0)),
        compiler_params=pltpu.CompilerParams(
            dimension_semantics=("parallel",)),
    )(x.astype(jnp.bfloat16), w, b_row)


def _maxpool2x2_kernel(x_ref, o_ref, *, C):
    # x_ref: (R, 2, Wo, 2*C). dim1 = row parity; last dim packs (col parity, C).
    top = x_ref[:, 0, :, :]                      # even rows  (R, Wo, 2*C)
    bot = x_ref[:, 1, :, :]                      # odd rows
    m = jnp.maximum(top, bot)
    o_ref[...] = jnp.maximum(m[:, :, :C], m[:, :, C:])   # max over col parity


def maxpool2x2(x_nhwc):
    """F.max_pool2d(x, 2): kernel 2, stride 2, floor. One read, one write."""
    N, H, W, C = x_nhwc.shape
    Ho, Wo = H // 2, W // 2
    x = x_nhwc[:, :2 * Ho, :2 * Wo, :]           # floor crop (no-op when even)
    x4 = x.reshape(N * Ho, 2, Wo, 2 * C)         # pure reshape of contiguous data
    R = N * Ho
    tr = R if R <= 256 else 256
    out = pl.pallas_call(
        functools.partial(_maxpool2x2_kernel, C=C),
        out_shape=jax.ShapeDtypeStruct((R, Wo, C), x_nhwc.dtype),
        grid=(pl.cdiv(R, tr),),
        in_specs=[pl.BlockSpec((tr, 2, Wo, 2 * C), lambda i: (i, 0, 0, 0))],
        out_specs=pl.BlockSpec((tr, Wo, C), lambda i: (i, 0, 0)),
        compiler_params=pltpu.CompilerParams(
            dimension_semantics=("parallel",)),
    )(x4)
    return out.reshape(N, Ho, Wo, C)


def _fc_fused_kernel(x_ref, w1_ref, b1_ref, w2_ref, b2_ref, o_ref):
    h = jnp.dot(x_ref[...], w1_ref[...], preferred_element_type=jnp.float32)
    h = jnp.maximum(h + b1_ref[...], 0.0)        # fc1 + ReLU
    # nn.Dropout(0.3) is the identity in eval/inference mode.
    o = jnp.dot(h.astype(jnp.bfloat16), w2_ref[...],
                preferred_element_type=jnp.float32)
    o_ref[...] = (o + b2_ref[...]).astype(o_ref.dtype)


def fc_head(x_flat, w1, b1, w2, b2):
    """Fused fc1 + ReLU + fc2 in one Pallas kernel (batch is tiny)."""
    B, K1 = x_flat.shape
    K1b, H1 = w1.shape
    H1b, NO = w2.shape
    assert K1 == K1b and H1 == H1b
    return pl.pallas_call(
        _fc_fused_kernel,
        out_shape=jax.ShapeDtypeStruct((B, NO), jnp.float32),
        grid=(1,),
        in_specs=[pl.BlockSpec((B, K1), lambda i: (0, 0)),
                  pl.BlockSpec((K1, H1), lambda i: (0, 0)),
                  pl.BlockSpec((1, H1), lambda i: (0, 0)),
                  pl.BlockSpec((H1, NO), lambda i: (0, 0)),
                  pl.BlockSpec((1, NO), lambda i: (0, 0))],
        out_specs=pl.BlockSpec((B, NO), lambda i: (0, 0)),
    )(x_flat.astype(jnp.bfloat16), w1, b1, w2, b2)


# ------------------------------ JAX glue ----------------------------------- #

def im2col(x_nhwc, k, pad):
    x = jnp.pad(x_nhwc, ((0, 0), (pad, pad), (pad, pad), (0, 0)))
    N, Hp, Wp, C = x.shape
    Ho, Wo = Hp - k + 1, Wp - k + 1
    patches = [x[:, dy:dy + Ho, dx:dx + Wo, :]
               for dy in range(k) for dx in range(k)]
    p = jnp.stack(patches, axis=3)               # (N, Ho, Wo, k*k, C)
    return p.reshape(N * Ho * Wo, k * k * C), Ho, Wo


def conv2d_relu(x_nhwc, w_mat, b_row, k, pad):
    """PyTorch Conv2d(stride=1, padding=pad) + ReLU via im2col matmul."""
    # TODO(synk): at large batch, fold the im2col tap loop into the conv kernel
    # (tap grid axis + VMEM accumulator) to avoid the k*k HBM patch blow-up.
    N = x_nhwc.shape[0]
    Cout = w_mat.shape[1]
    xm, Ho, Wo = im2col(x_nhwc, k, pad)          # bf16 patches
    y = matmul_bias_act(xm, w_mat, b_row, relu=True, out_dtype=jnp.bfloat16)
    return y.reshape(N, Ho, Wo, Cout)


def improved_digit_recognizer_forward(x_nchw, params):
    x = jnp.transpose(x_nchw, (0, 2, 3, 1)).astype(jnp.bfloat16)    # NCHW->NHWC
    x = conv2d_relu(x, params["conv1_w"], params["conv1_b"], 5, 2)  # (N,28,28,32)
    x = maxpool2x2(x)                                               # (N,14,14,32)
    x = conv2d_relu(x, params["conv2_w"], params["conv2_b"], 5, 2)  # (N,14,14,64)
    x = maxpool2x2(x)                                               # (N,7,7,64)
    x = conv2d_relu(x, params["conv3_w"], params["conv3_b"], 3, 1)  # (N,7,7,128)
    x = maxpool2x2(x)                                               # (N,3,3,128)
    # fc1_w columns were pre-permuted to NHWC order -> plain flatten matches
    # PyTorch's x.view(-1, 3*3*128) semantics without a runtime transpose.
    x = x.reshape(x.shape[0], 3 * 3 * 128)
    return fc_head(x, params["fc1_w"], params["fc1_b"],
                   params["fc2_w"], params["fc2_b"])


def prepare_params(raw):
    """One-time (outside jit) weight layout prep: conv weights -> (k*k*Cin, Cout)
    matmul form, fc1 columns permuted from NCHW-flatten to NHWC-flatten order,
    matmul operands cast to bf16, biases to f32 rows."""
    def conv_wmat(w_oihw):
        cout, cin, kh, kw = w_oihw.shape
        return (jnp.transpose(w_oihw, (2, 3, 1, 0))
                .reshape(kh * kw * cin, cout).astype(jnp.bfloat16))

    def brow(b):
        return b.reshape(1, -1).astype(jnp.float32)

    fc1 = raw["fc1_w"].reshape(256, 128, 3, 3)              # (out, c, h, w)
    fc1 = jnp.transpose(fc1, (2, 3, 1, 0)).reshape(3 * 3 * 128, 256)
    return {
        "conv1_w": conv_wmat(raw["conv1_w"]), "conv1_b": brow(raw["conv1_b"]),
        "conv2_w": conv_wmat(raw["conv2_w"]), "conv2_b": brow(raw["conv2_b"]),
        "conv3_w": conv_wmat(raw["conv3_w"]), "conv3_b": brow(raw["conv3_b"]),
        "fc1_w": fc1.astype(jnp.bfloat16), "fc1_b": brow(raw["fc1_b"]),
        "fc2_w": raw["fc2_w"].T.astype(jnp.bfloat16), "fc2_b": brow(raw["fc2_b"]),
    }


# ------------------------------- main --------------------------------------- #

if __name__ == "__main__":
    key = jax.random.PRNGKey(0)
    ks = jax.random.split(key, 11)
    s = 0.05  # deterministic synthetic init (not a checkpoint load)
    raw = {
        "conv1_w": jax.random.normal(ks[0], (32, 1, 5, 5), jnp.float32) * s,
        "conv1_b": jax.random.normal(ks[1], (32,), jnp.float32) * s,
        "conv2_w": jax.random.normal(ks[2], (64, 32, 5, 5), jnp.float32) * s,
        "conv2_b": jax.random.normal(ks[3], (64,), jnp.float32) * s,
        "conv3_w": jax.random.normal(ks[4], (128, 64, 3, 3), jnp.float32) * s,
        "conv3_b": jax.random.normal(ks[5], (128,), jnp.float32) * s,
        "fc1_w": jax.random.normal(ks[6], (256, 3 * 3 * 128), jnp.float32) * s,
        "fc1_b": jax.random.normal(ks[7], (256,), jnp.float32) * s,
        "fc2_w": jax.random.normal(ks[8], (10, 256), jnp.float32) * s,
        "fc2_b": jax.random.normal(ks[9], (10,), jnp.float32) * s,
    }
    params = prepare_params(raw)

    # The module's fc1 (3*3*128 inputs) implies 1x28x28 inputs (MNIST-like).
    x = jax.random.normal(ks[10], (2, 1, 28, 28), jnp.float32)

    logits = jax.jit(improved_digit_recognizer_forward)(x, params)
    logits = jax.block_until_ready(logits)
    assert logits.shape == (2, 10) and logits.dtype == jnp.float32
    print("KERNEL_OK")
</pallas_src>

<mosaic_0001>
module attributes {stable_mosaic.version = 11 : i64} {
  func.func @_matmul_bias_act_kernel(%arg0: i32, %arg1: memref<512x25xbf16, #tpu.memory_space<vmem>>, %arg2: memref<25x32xbf16, #tpu.memory_space<vmem>>, %arg3: memref<1x32xf32, #tpu.memory_space<vmem>>, %arg4: memref<512x32xbf16, #tpu.memory_space<vmem>>) attributes {dimension_semantics = [#tpu.dimension_semantics<parallel>], iteration_bounds = array<i64: 4>, scalar_prefetch = 0 : i64, scratch_operands = 0 : i64, tpu.core_type = #tpu.core_type<tc>, window_params = [{transform_indices = @transform_0, window_bounds = array<i64: 512, 25>}, {pipeline_mode = #tpu.pipeline_mode<synchronous>, transform_indices = @transform_1, window_bounds = array<i64: 25, 32>}, {pipeline_mode = #tpu.pipeline_mode<synchronous>, transform_indices = @transform_2, window_bounds = array<i64: 1, 32>}, {transform_indices = @transform_3, window_bounds = array<i64: 512, 32>}]} {
    %c0 = arith.constant 0 : index
    %c0_0 = arith.constant 0 : index
    %0 = vector.load %arg1[%c0, %c0_0] : memref<512x25xbf16, #tpu.memory_space<vmem>>, vector<512x25xbf16>
    %c0_1 = arith.constant 0 : index
    %c0_2 = arith.constant 0 : index
    %1 = vector.load %arg2[%c0_1, %c0_2] : memref<25x32xbf16, #tpu.memory_space<vmem>>, vector<25x32xbf16>
    %cst = arith.constant dense<0.000000e+00> : vector<512x32xf32>
    %2 = tpu.matmul %0, %1, %cst {dimension_numbers = #tpu.dot_dimension_numbers<[1], [0], [0], [1], [0, 0, 1, 1], [], []>} : vector<512x25xbf16>, vector<25x32xbf16>, vector<512x32xf32> -> vector<512x32xf32>
    %c0_3 = arith.constant 0 : index
    %c0_4 = arith.constant 0 : index
    %3 = vector.load %arg3[%c0_3, %c0_4] : memref<1x32xf32, #tpu.memory_space<vmem>>, vector<1x32xf32>
    %4 = vector.broadcast %3 : vector<1x32xf32> to vector<512x32xf32>
    %5 = arith.addf %2, %4 : vector<512x32xf32>
    %cst_5 = arith.constant 0.000000e+00 : f32
    %6 = vector.broadcast %cst_5 : f32 to vector<512x32xf32>
    %7 = arith.maximumf %5, %6 : vector<512x32xf32>
    %8 = arith.truncf %7 : vector<512x32xf32> to vector<512x32xbf16>
    %c0_6 = arith.constant 0 : index
    %c0_7 = arith.constant 0 : index
    %9 = vector.load %arg4[%c0_6, %c0_7] : memref<512x32xbf16, #tpu.memory_space<vmem>>, vector<512x32xbf16>
    tpu.vector_store %arg4[%c0_6, %c0_7], %8 {strides = array<i32>} : memref<512x32xbf16, #tpu.memory_space<vmem>>, vector<512x32xbf16>,
    return
  }
  func.func @transform_0(%arg0: i32) -> (i32, i32) {
    %c0_i32 = arith.constant 0 : i32
    %c0_i32_0 = arith.constant 0 : i32
    return %arg0, %c0_i32 : i32, i32
  }
  func.func @transform_1(%arg0: i32) -> (i32, i32) {
    %c0_i32 = arith.constant 0 : i32
    %c0_i32_0 = arith.constant 0 : i32
    %c0_i32_1 = arith.constant 0 : i32
    return %c0_i32, %c0_i32_0 : i32, i32
  }
  func.func @transform_2(%arg0: i32) -> (i32, i32) {
    %c0_i32 = arith.constant 0 : i32
    %c0_i32_0 = arith.constant 0 : i32
    %c0_i32_1 = arith.constant 0 : i32
    return %c0_i32, %c0_i32_0 : i32, i32
  }
  func.func @transform_3(%arg0: i32) -> (i32, i32) {
    %c0_i32 = arith.constant 0 : i32
    %c0_i32_0 = arith.constant 0 : i32
    return %arg0, %c0_i32 : i32, i32
  }
}

module attributes {stable_mosaic.version = 11 : i64} {
  func.func @_maxpool2x2_kernel(%arg0: i32, %arg1: memref<28x2x14x64xbf16, #tpu.memory_space<vmem>>, %arg2: memref<28x14x32xbf16, #tpu.memory_space<vmem>>) attributes {dimension_semantics = [#tpu.dimension_semantics<parallel>], iteration_bounds = array<i64: 1>, scalar_prefetch = 0 : i64, scratch_operands = 0 : i64, tpu.core_type = #tpu.core_type<tc>, window_params = [{transform_indices = @transform_0, window_bounds = array<i64: 28, 2, 14, 64>}, {transform_indices = @transform_1, window_bounds = array<i64: 28, 14, 32>}]} {
    %c0 = arith.constant 0 : index
    %c0_0 = arith.constant 0 : index
    %c0_1 = arith.constant 0 : index
    %c0_2 = arith.constant 0 : index
    %0 = vector.load %arg1[%c0, %c0_0, %c0_1, %c0_2] : memref<28x2x14x64xbf16, #tpu.memory_space<vmem>>, vector<28x1x14x64xbf16>
    %1 = vector.shape_cast %0 : vector<28x1x14x64xbf16> to vector<28x14x64xbf16>
    %c0_3 = arith.constant 0 : index
    %c1 = arith.constant 1 : index
    %c0_4 = arith.constant 0 : index
    %c0_5 = arith.constant 0 : index
    %2 = vector.load %arg1[%c0_3, %c1, %c0_4, %c0_5] : memref<28x2x14x64xbf16, #tpu.memory_space<vmem>>, vector<28x1x14x64xbf16>
    %3 = vector.shape_cast %2 : vector<28x1x14x64xbf16> to vector<28x14x64xbf16>
    %4 = arith.maximumf %1, %3 : vector<28x14x64xbf16>
    %5 = vector.extract_strided_slice %4 {offsets = [0, 0, 0], sizes = [28, 14, 32], strides = [1, 1, 1]} : vector<28x14x64xbf16> to vector<28x14x32xbf16>
    %6 = vector.extract_strided_slice %4 {offsets = [0, 0, 32], sizes = [28, 14, 32], strides = [1, 1, 1]} : vector<28x14x64xbf16> to vector<28x14x32xbf16>
    %7 = arith.maximumf %5, %6 : vector<28x14x32xbf16>
    %c0_6 = arith.constant 0 : index
    %c0_7 = arith.constant 0 : index
    %c0_8 = arith.constant 0 : index
    %8 = vector.load %arg2[%c0_6, %c0_7, %c0_8] : memref<28x14x32xbf16, #tpu.memory_space<vmem>>, vector<28x14x32xbf16>
    tpu.vector_store %arg2[%c0_6, %c0_7, %c0_8], %7 {strides = array<i32>} : memref<28x14x32xbf16, #tpu.memory_space<vmem>>, vector<28x14x32xbf16>,
    return
  }
  func.func @transform_0(%arg0: i32) -> (i32, i32, i32, i32) {
    %c0_i32 = arith.constant 0 : i32
    %c0_i32_0 = arith.constant 0 : i32
    %c0_i32_1 = arith.constant 0 : i32
    %c0_i32_2 = arith.constant 0 : i32
    return %arg0, %c0_i32, %c0_i32_0, %c0_i32_1 : i32, i32, i32, i32
  }
  func.func @transform_1(%arg0: i32) -> (i32, i32, i32) {
    %c0_i32 = arith.constant 0 : i32
    %c0_i32_0 = arith.constant 0 : i32
    %c0_i32_1 = arith.constant 0 : i32
    return %arg0, %c0_i32, %c0_i32_0 : i32, i32, i32
  }
}

module attributes {stable_mosaic.version = 11 : i64} {
  func.func @_matmul_bias_act_kernel(%arg0: i32, %arg1: memref<392x800xbf16, #tpu.memory_space<vmem>>, %arg2: memref<800x64xbf16, #tpu.memory_space<vmem>>, %arg3: memref<1x64xf32, #tpu.memory_space<vmem>>, %arg4: memref<392x64xbf16, #tpu.memory_space<vmem>>) attributes {dimension_semantics = [#tpu.dimension_semantics<parallel>], iteration_bounds = array<i64: 1>, scalar_prefetch = 0 : i64, scratch_operands = 0 : i64, tpu.core_type = #tpu.core_type<tc>, window_params = [{transform_indices = @transform_0, window_bounds = array<i64: 392, 800>}, {pipeline_mode = #tpu.pipeline_mode<synchronous>, transform_indices = @transform_1, window_bounds = array<i64: 800, 64>}, {pipeline_mode = #tpu.pipeline_mode<synchronous>, transform_indices = @transform_2, window_bounds = array<i64: 1, 64>}, {transform_indices = @transform_3, window_bounds = array<i64: 392, 64>}]} {
    %c0 = arith.constant 0 : index
    %c0_0 = arith.constant 0 : index
    %0 = vector.load %arg1[%c0, %c0_0] : memref<392x800xbf16, #tpu.memory_space<vmem>>, vector<392x800xbf16>
    %c0_1 = arith.constant 0 : index
    %c0_2 = arith.constant 0 : index
    %1 = vector.load %arg2[%c0_1, %c0_2] : memref<800x64xbf16, #tpu.memory_space<vmem>>, vector<800x64xbf16>
    %cst = arith.constant dense<0.000000e+00> : vector<392x64xf32>
    %2 = tpu.matmul %0, %1, %cst {dimension_numbers = #tpu.dot_dimension_numbers<[1], [0], [0], [1], [0, 0, 1, 1], [], []>} : vector<392x800xbf16>, vector<800x64xbf16>, vector<392x64xf32> -> vector<392x64xf32>
    %c0_3 = arith.constant 0 : index
    %c0_4 = arith.constant 0 : index
    %3 = vector.load %arg3[%c0_3, %c0_4] : memref<1x64xf32, #tpu.memory_space<vmem>>, vector<1x64xf32>
    %4 = vector.broadcast %3 : vector<1x64xf32> to vector<392x64xf32>
    %5 = arith.addf %2, %4 : vector<392x64xf32>
    %cst_5 = arith.constant 0.000000e+00 : f32
    %6 = vector.broadcast %cst_5 : f32 to vector<392x64xf32>
    %7 = arith.maximumf %5, %6 : vector<392x64xf32>
    %8 = arith.truncf %7 : vector<392x64xf32> to vector<392x64xbf16>
    %c0_6 = arith.constant 0 : index
    %c0_7 = arith.constant 0 : index
    %9 = vector.load %arg4[%c0_6, %c0_7] : memref<392x64xbf16, #tpu.memory_space<vmem>>, vector<392x64xbf16>
    tpu.vector_store %arg4[%c0_6, %c0_7], %8 {strides = array<i32>} : memref<392x64xbf16, #tpu.memory_space<vmem>>, vector<392x64xbf16>,
    return
  }
  func.func @transform_0(%arg0: i32) -> (i32, i32) {
    %c0_i32 = arith.constant 0 : i32
    %c0_i32_0 = arith.constant 0 : i32
    return %arg0, %c0_i32 : i32, i32
  }
  func.func @transform_1(%arg0: i32) -> (i32, i32) {
    %c0_i32 = arith.constant 0 : i32
    %c0_i32_0 = arith.constant 0 : i32
    %c0_i32_1 = arith.constant 0 : i32
    return %c0_i32, %c0_i32_0 : i32, i32
  }
  func.func @transform_2(%arg0: i32) -> (i32, i32) {
    %c0_i32 = arith.constant 0 : i32
    %c0_i32_0 = arith.constant 0 : i32
    %c0_i32_1 = arith.constant 0 : i32
    return %c0_i32, %c0_i32_0 : i32, i32
  }
  func.func @transform_3(%arg0: i32) -> (i32, i32) {
    %c0_i32 = arith.constant 0 : i32
    %c0_i32_0 = arith.constant 0 : i32
    return %arg0, %c0_i32 : i32, i32
  }
}

module attributes {stable_mosaic.version = 11 : i64} {
  func.func @_maxpool2x2_kernel(%arg0: i32, %arg1: memref<14x2x7x128xbf16, #tpu.memory_space<vmem>>, %arg2: memref<14x7x64xbf16, #tpu.memory_space<vmem>>) attributes {dimension_semantics = [#tpu.dimension_semantics<parallel>], iteration_bounds = array<i64: 1>, scalar_prefetch = 0 : i64, scratch_operands = 0 : i64, tpu.core_type = #tpu.core_type<tc>, window_params = [{transform_indices = @transform_0, window_bounds = array<i64: 14, 2, 7, 128>}, {transform_indices = @transform_1, window_bounds = array<i64: 14, 7, 64>}]} {
    %c0 = arith.constant 0 : index
    %c0_0 = arith.constant 0 : index
    %c0_1 = arith.constant 0 : index
    %c0_2 = arith.constant 0 : index
    %0 = vector.load %arg1[%c0, %c0_0, %c0_1, %c0_2] : memref<14x2x7x128xbf16, #tpu.memory_space<vmem>>, vector<14x1x7x128xbf16>
    %1 = vector.shape_cast %0 : vector<14x1x7x128xbf16> to vector<14x7x128xbf16>
    %c0_3 = arith.constant 0 : index
    %c1 = arith.constant 1 : index
    %c0_4 = arith.constant 0 : index
    %c0_5 = arith.constant 0 : index
    %2 = vector.load %arg1[%c0_3, %c1, %c0_4, %c0_5] : memref<14x2x7x128xbf16, #tpu.memory_space<vmem>>, vector<14x1x7x128xbf16>
    %3 = vector.shape_cast %2 : vector<14x1x7x128xbf16> to vector<14x7x128xbf16>
    %4 = arith.maximumf %1, %3 : vector<14x7x128xbf16>
    %5 = vector.extract_strided_slice %4 {offsets = [0, 0, 0], sizes = [14, 7, 64], strides = [1, 1, 1]} : vector<14x7x128xbf16> to vector<14x7x64xbf16>
    %6 = vector.extract_strided_slice %4 {offsets = [0, 0, 64], sizes = [14, 7, 64], strides = [1, 1, 1]} : vector<14x7x128xbf16> to vector<14x7x64xbf16>
    %7 = arith.maximumf %5, %6 : vector<14x7x64xbf16>
    %c0_6 = arith.constant 0 : index
    %c0_7 = arith.constant 0 : index
    %c0_8 = arith.constant 0 : index
    %8 = vector.load %arg2[%c0_6, %c0_7, %c0_8] : memref<14x7x64xbf16, #tpu.memory_space<vmem>>, vector<14x7x64xbf16>
    tpu.vector_store %arg2[%c0_6, %c0_7, %c0_8], %7 {strides = array<i32>} : memref<14x7x64xbf16, #tpu.memory_space<vmem>>, vector<14x7x64xbf16>,
    return
  }
  func.func @transform_0(%arg0: i32) -> (i32, i32, i32, i32) {
    %c0_i32 = arith.constant 0 : i32
    %c0_i32_0 = arith.constant 0 : i32
    %c0_i32_1 = arith.constant 0 : i32
    %c0_i32_2 = arith.constant 0 : i32
    return %arg0, %c0_i32, %c0_i32_0, %c0_i32_1 : i32, i32, i32, i32
  }
  func.func @transform_1(%arg0: i32) -> (i32, i32, i32) {
    %c0_i32 = arith.constant 0 : i32
    %c0_i32_0 = arith.constant 0 : i32
    %c0_i32_1 = arith.constant 0 : i32
    return %arg0, %c0_i32, %c0_i32_0 : i32, i32, i32
  }
}

module attributes {stable_mosaic.version = 11 : i64} {
  func.func @_matmul_bias_act_kernel(%arg0: i32, %arg1: memref<98x576xbf16, #tpu.memory_space<vmem>>, %arg2: memref<576x128xbf16, #tpu.memory_space<vmem>>, %arg3: memref<1x128xf32, #tpu.memory_space<vmem>>, %arg4: memref<98x128xbf16, #tpu.memory_space<vmem>>) attributes {dimension_semantics = [#tpu.dimension_semantics<parallel>], iteration_bounds = array<i64: 1>, scalar_prefetch = 0 : i64, scratch_operands = 0 : i64, tpu.core_type = #tpu.core_type<tc>, window_params = [{transform_indices = @transform_0, window_bounds = array<i64: 98, 576>}, {pipeline_mode = #tpu.pipeline_mode<synchronous>, transform_indices = @transform_1, window_bounds = array<i64: 576, 128>}, {pipeline_mode = #tpu.pipeline_mode<synchronous>, transform_indices = @transform_2, window_bounds = array<i64: 1, 128>}, {transform_indices = @transform_3, window_bounds = array<i64: 98, 128>}]} {
    %c0 = arith.constant 0 : index
    %c0_0 = arith.constant 0 : index
    %0 = vector.load %arg1[%c0, %c0_0] : memref<98x576xbf16, #tpu.memory_space<vmem>>, vector<98x576xbf16>
    %c0_1 = arith.constant 0 : index
    %c0_2 = arith.constant 0 : index
    %1 = vector.load %arg2[%c0_1, %c0_2] : memref<576x128xbf16, #tpu.memory_space<vmem>>, vector<576x128xbf16>
    %cst = arith.constant dense<0.000000e+00> : vector<98x128xf32>
    %2 = tpu.matmul %0, %1, %cst {dimension_numbers = #tpu.dot_dimension_numbers<[1], [0], [0], [1], [0, 0, 1, 1], [], []>} : vector<98x576xbf16>, vector<576x128xbf16>, vector<98x128xf32> -> vector<98x128xf32>
    %c0_3 = arith.constant 0 : index
    %c0_4 = arith.constant 0 : index
    %3 = vector.load %arg3[%c0_3, %c0_4] : memref<1x128xf32, #tpu.memory_space<vmem>>, vector<1x128xf32>
    %4 = vector.broadcast %3 : vector<1x128xf32> to vector<98x128xf32>
    %5 = arith.addf %2, %4 : vector<98x128xf32>
    %cst_5 = arith.constant 0.000000e+00 : f32
    %6 = vector.broadcast %cst_5 : f32 to vector<98x128xf32>
    %7 = arith.maximumf %5, %6 : vector<98x128xf32>
    %8 = arith.truncf %7 : vector<98x128xf32> to vector<98x128xbf16>
    %c0_6 = arith.constant 0 : index
    %c0_7 = arith.constant 0 : index
    %9 = vector.load %arg4[%c0_6, %c0_7] : memref<98x128xbf16, #tpu.memory_space<vmem>>, vector<98x128xbf16>
    tpu.vector_store %arg4[%c0_6, %c0_7], %8 {strides = array<i32>} : memref<98x128xbf16, #tpu.memory_space<vmem>>, vector<98x128xbf16>,
    return
  }
  func.func @transform_0(%arg0: i32) -> (i32, i32) {
    %c0_i32 = arith.constant 0 : i32
    %c0_i32_0 = arith.constant 0 : i32
    return %arg0, %c0_i32 : i32, i32
  }
  func.func @transform_1(%arg0: i32) -> (i32, i32) {
    %c0_i32 = arith.constant 0 : i32
    %c0_i32_0 = arith.constant 0 : i32
    %c0_i32_1 = arith.constant 0 : i32
    return %c0_i32, %c0_i32_0 : i32, i32
  }
  func.func @transform_2(%arg0: i32) -> (i32, i32) {
    %c0_i32 = arith.constant 0 : i32
    %c0_i32_0 = arith.constant 0 : i32
    %c0_i32_1 = arith.constant 0 : i32
    return %c0_i32, %c0_i32_0 : i32, i32
  }
  func.func @transform_3(%arg0: i32) -> (i32, i32) {
    %c0_i32 = arith.constant 0 : i32
    %c0_i32_0 = arith.constant 0 : i32
    return %arg0, %c0_i32 : i32, i32
  }
}

module attributes {stable_mosaic.version = 11 : i64} {
  func.func @_maxpool2x2_kernel(%arg0: i32, %arg1: memref<6x2x3x256xbf16, #tpu.memory_space<vmem>>, %arg2: memref<6x3x128xbf16, #tpu.memory_space<vmem>>) attributes {dimension_semantics = [#tpu.dimension_semantics<parallel>], iteration_bounds = array<i64: 1>, scalar_prefetch = 0 : i64, scratch_operands = 0 : i64, tpu.core_type = #tpu.core_type<tc>, window_params = [{transform_indices = @transform_0, window_bounds = array<i64: 6, 2, 3, 256>}, {transform_indices = @transform_1, window_bounds = array<i64: 6, 3, 128>}]} {
    %c0 = arith.constant 0 : index
    %c0_0 = arith.constant 0 : index
    %c0_1 = arith.constant 0 : index
    %c0_2 = arith.constant 0 : index
    %0 = vector.load %arg1[%c0, %c0_0, %c0_1, %c0_2] : memref<6x2x3x256xbf16, #tpu.memory_space<vmem>>, vector<6x1x3x256xbf16>
    %1 = vector.shape_cast %0 : vector<6x1x3x256xbf16> to vector<6x3x256xbf16>
    %c0_3 = arith.constant 0 : index
    %c1 = arith.constant 1 : index
    %c0_4 = arith.constant 0 : index
    %c0_5 = arith.constant 0 : index
    %2 = vector.load %arg1[%c0_3, %c1, %c0_4, %c0_5] : memref<6x2x3x256xbf16, #tpu.memory_space<vmem>>, vector<6x1x3x256xbf16>
    %3 = vector.shape_cast %2 : vector<6x1x3x256xbf16> to vector<6x3x256xbf16>
    %4 = arith.maximumf %1, %3 : vector<6x3x256xbf16>
    %5 = vector.extract_strided_slice %4 {offsets = [0, 0, 0], sizes = [6, 3, 128], strides = [1, 1, 1]} : vector<6x3x256xbf16> to vector<6x3x128xbf16>
    %6 = vector.extract_strided_slice %4 {offsets = [0, 0, 128], sizes = [6, 3, 128], strides = [1, 1, 1]} : vector<6x3x256xbf16> to vector<6x3x128xbf16>
    %7 = arith.maximumf %5, %6 : vector<6x3x128xbf16>
    %c0_6 = arith.constant 0 : index
    %c0_7 = arith.constant 0 : index
    %c0_8 = arith.constant 0 : index
    %8 = vector.load %arg2[%c0_6, %c0_7, %c0_8] : memref<6x3x128xbf16, #tpu.memory_space<vmem>>, vector<6x3x128xbf16>
    tpu.vector_store %arg2[%c0_6, %c0_7, %c0_8], %7 {strides = array<i32>} : memref<6x3x128xbf16, #tpu.memory_space<vmem>>, vector<6x3x128xbf16>,
    return
  }
  func.func @transform_0(%arg0: i32) -> (i32, i32, i32, i32) {
    %c0_i32 = arith.constant 0 : i32
    %c0_i32_0 = arith.constant 0 : i32
    %c0_i32_1 = arith.constant 0 : i32
    %c0_i32_2 = arith.constant 0 : i32
    return %arg0, %c0_i32, %c0_i32_0, %c0_i32_1 : i32, i32, i32, i32
  }
  func.func @transform_1(%arg0: i32) -> (i32, i32, i32) {
    %c0_i32 = arith.constant 0 : i32
    %c0_i32_0 = arith.constant 0 : i32
    %c0_i32_1 = arith.constant 0 : i32
    return %arg0, %c0_i32, %c0_i32_0 : i32, i32, i32
  }
}

module attributes {stable_mosaic.version = 11 : i64} {
  func.func @_fc_fused_kernel(%arg0: i32, %arg1: memref<2x1152xbf16, #tpu.memory_space<vmem>>, %arg2: memref<1152x256xbf16, #tpu.memory_space<vmem>>, %arg3: memref<1x256xf32, #tpu.memory_space<vmem>>, %arg4: memref<256x10xbf16, #tpu.memory_space<vmem>>, %arg5: memref<1x10xf32, #tpu.memory_space<vmem>>, %arg6: memref<2x10xf32, #tpu.memory_space<vmem>>) attributes {dimension_semantics = [#tpu.dimension_semantics<arbitrary>], iteration_bounds = array<i64: 1>, scalar_prefetch = 0 : i64, scratch_operands = 0 : i64, tpu.core_type = #tpu.core_type<tc>, window_params = [{pipeline_mode = #tpu.pipeline_mode<synchronous>, transform_indices = @transform_0, window_bounds = array<i64: 2, 1152>}, {pipeline_mode = #tpu.pipeline_mode<synchronous>, transform_indices = @transform_1, window_bounds = array<i64: 1152, 256>}, {pipeline_mode = #tpu.pipeline_mode<synchronous>, transform_indices = @transform_2, window_bounds = array<i64: 1, 256>}, {pipeline_mode = #tpu.pipeline_mode<synchronous>, transform_indices = @transform_3, window_bounds = array<i64: 256, 10>}, {pipeline_mode = #tpu.pipeline_mode<synchronous>, transform_indices = @transform_4, window_bounds = array<i64: 1, 10>}, {pipeline_mode = #tpu.pipeline_mode<synchronous>, transform_indices = @transform_5, window_bounds = array<i64: 2, 10>}]} {
    %c0 = arith.constant 0 : index
    %c0_0 = arith.constant 0 : index
    %0 = vector.load %arg1[%c0, %c0_0] : memref<2x1152xbf16, #tpu.memory_space<vmem>>, vector<2x1152xbf16>
    %c0_1 = arith.constant 0 : index
    %c0_2 = arith.constant 0 : index
    %1 = vector.load %arg2[%c0_1, %c0_2] : memref<1152x256xbf16, #tpu.memory_space<vmem>>, vector<1152x256xbf16>
    %cst = arith.constant dense<0.000000e+00> : vector<2x256xf32>
    %2 = tpu.matmul %0, %1, %cst {dimension_numbers = #tpu.dot_dimension_numbers<[1], [0], [0], [1], [0, 0, 1, 1], [], []>} : vector<2x1152xbf16>, vector<1152x256xbf16>, vector<2x256xf32> -> vector<2x256xf32>
    %c0_3 = arith.constant 0 : index
    %c0_4 = arith.constant 0 : index
    %3 = vector.load %arg3[%c0_3, %c0_4] : memref<1x256xf32, #tpu.memory_space<vmem>>, vector<1x256xf32>
    %4 = vector.broadcast %3 : vector<1x256xf32> to vector<2x256xf32>
    %5 = arith.addf %2, %4 : vector<2x256xf32>
    %cst_5 = arith.constant 0.000000e+00 : f32
    %6 = vector.broadcast %cst_5 : f32 to vector<2x256xf32>
    %7 = arith.maximumf %5, %6 : vector<2x256xf32>
    %8 = arith.truncf %7 : vector<2x256xf32> to vector<2x256xbf16>
    %c0_6 = arith.constant 0 : index
    %c0_7 = arith.constant 0 : index
    %9 = vector.load %arg4[%c0_6, %c0_7] : memref<256x10xbf16, #tpu.memory_space<vmem>>, vector<256x10xbf16>
    %cst_8 = arith.constant dense<0.000000e+00> : vector<2x10xf32>
    %10 = tpu.matmul %8, %9, %cst_8 {dimension_numbers = #tpu.dot_dimension_numbers<[1], [0], [0], [1], [0, 0, 1, 1], [], []>} : vector<2x256xbf16>, vector<256x10xbf16>, vector<2x10xf32> -> vector<2x10xf32>
    %c0_9 = arith.constant 0 : index
    %c0_10 = arith.constant 0 : index
    %11 = vector.load %arg5[%c0_9, %c0_10] : memref<1x10xf32, #tpu.memory_space<vmem>>, vector<1x10xf32>
    %12 = vector.broadcast %11 : vector<1x10xf32> to vector<2x10xf32>
    %13 = arith.addf %10, %12 : vector<2x10xf32>
    %c0_11 = arith.constant 0 : index
    %c0_12 = arith.constant 0 : index
    %14 = vector.load %arg6[%c0_11, %c0_12] : memref<2x10xf32, #tpu.memory_space<vmem>>, vector<2x10xf32>
    tpu.vector_store %arg6[%c0_11, %c0_12], %13 {strides = array<i32>} : memref<2x10xf32, #tpu.memory_space<vmem>>, vector<2x10xf32>,
    return
  }
  func.func @transform_0(%arg0: i32) -> (i32, i32) {
    %c0_i32 = arith.constant 0 : i32
    %c0_i32_0 = arith.constant 0 : i32
    %c0_i32_1 = arith.constant 0 : i32
    return %c0_i32, %c0_i32_0 : i32, i32
  }
  func.func @transform_1(%arg0: i32) -> (i32, i32) {
    %c0_i32 = arith.constant 0 : i32
    %c0_i32_0 = arith.constant 0 : i32
    %c0_i32_1 = arith.constant 0 : i32
    return %c0_i32, %c0_i32_0 : i32, i32
  }
  func.func @transform_2(%arg0: i32) -> (i32, i32) {
    %c0_i32 = arith.constant 0 : i32
    %c0_i32_0 = arith.constant 0 : i32
    %c0_i32_1 = arith.constant 0 : i32
    return %c0_i32, %c0_i32_0 : i32, i32
  }
  func.func @transform_3(%arg0: i32) -> (i32, i32) {
    %c0_i32 = arith.constant 0 : i32
    %c0_i32_0 = arith.constant 0 : i32
    %c0_i32_1 = arith.constant 0 : i32
    return %c0_i32, %c0_i32_0 : i32, i32
  }
  func.func @transform_4(%arg0: i32) -> (i32, i32) {
    %c0_i32 = arith.constant 0 : i32
    %c0_i32_0 = arith.constant 0 : i32
    %c0_i32_1 = arith.constant 0 : i32
    return %c0_i32, %c0_i32_0 : i32, i32
  }
  func.func @transform_5(%arg0: i32) -> (i32, i32) {
    %c0_i32 = arith.constant 0 : i32
    %c0_i32_0 = arith.constant 0 : i32
    %c0_i32_1 = arith.constant 0 : i32
    return %c0_i32, %c0_i32_0 : i32, i32
  }
}

</mosaic_0001>

<llo_original>
// kernel: improved_digit_recognizer_forward.7
$region0: #{improved_digit_recognizer_forward.7}
  #allocation0 [shape = 'u32[]', space=smem, size = 0x4, offset = 0x4, fixed_abs, tag = 'smem constant byte address 0x4 - core index']
  #allocation1 [shape = 'u32[144,128]{1,0:T(1,128)}', space=vmem, size = 0x12000, scoped, tag = 'internal scratch']
  %s0 = inlined_call_operand.vmem [shape: bf16[1568,25], index: 0, kind: input, shape index: {}]
  %s1 = inlined_call_operand.vmem [shape: bf16[25,32], index: 1, kind: input, shape index: {}]
  %s2 = inlined_call_operand.vmem [shape: f32[1,32], index: 2, kind: input, shape index: {}]
  %s3 = inlined_call_operand.vmem [shape: bf16[1568,32], index: 3, kind: output, shape index: {}]
  %s4 = sld [smem:[#allocation0]]
  $region89: #{improved_digit_recognizer_forward.7} parent=0
    _
  %s6 = ssub.s32 1, %s4
  %s7 = scalar_select 0, %s6, %s4
  $region1: #{improved_digit_recognizer_forward.7} parent=0
    #allocation2 [shape = 'u8[262144]{0}', space=vmem, size = 0x40000, scoped, tag = 'output window, operand 0']
    loop: start=0, step=1, limit=6
    $region2: #{improved_digit_recognizer_forward.7} parent=1 // loop_pre_header
      _
    $region3: #{improved_digit_recognizer_forward.7} parent=1 // loop_header
      %s9 = sphi 0, %s13
      %p10 = scmp.ge.s32.totalorder %s9, 6
      %s19 = sphi 0, %s21
      %s22 = sphi 0, %s19
      %s23 = sphi 0, %s22
      %s39 = sphi 0, %s23
      %s43 = sphi 0, %s43
      %s45 = sphi 0, %s43
      %s46 = sphi 0, %s45
      %s60 = sphi 0, %s46
      %s64 = sphi 0, %s64
      %s66 = sphi 0, %s64
      %s67 = sphi 0, %s66
      %s81 = sphi 0, %s67
      %s87 = sphi 0, %s89
      %s90 = sphi 0, %s87
      %s91 = sphi 0, %s90
      %s107 = sphi 0, %s91
    $region4: #{improved_digit_recognizer_forward.7} parent=1 // loop_header_branch
      %12 = sbr.rel (%p10) target = $region8
    $region5: #{improved_digit_recognizer_forward.7} parent=1 // loop_body
      %s14 = ssub.s32 %s9, 1
      %s15 = ssub.s32 %s9, 2
      %s16 = sadd.s32 %s9, 1
      %s17 = ssub.s32 %s9, %s16
      %p18 = scmp.eq.s32.totalorder %s17, 0
      %s20 = sadd.s32 %s19, 1
      %s21 = scalar_select %p18, %s19, %s20
      %p24 = pneg %p18
      %p25 = scmp.eq.s32.totalorder %s9, 3
      %p26 = por %p24, %p25
      %p27 = scmp.ne.s32.totalorder %s19, %s22
      %p28 = scmp.eq.s32.totalorder %s9, 0
      %p29 = por %p27, %p28
      %p30 = scmp.ne.s32.totalorder %s19, %s22
      %p31 = scmp.eq.s32.totalorder %s14, 3
      %p32 = por %p30, %p31
      %p33 = scmp.ne.s32.totalorder %s22, %s23
      %p34 = scmp.eq.s32.totalorder %s14, 0
      %p35 = por %p33, %p34
      %p36 = scmp.ne.s32.totalorder %s22, %s23
      %p37 = scmp.eq.s32.totalorder %s15, 3
      %p38 = por %p36, %p37
      %p40 = scmp.ne.s32.totalorder %s23, %s39
      %p41 = scmp.eq.s32.totalorder %s15, 0
      %p42 = por %p40, %p41
      %s44 = sadd.s32 %s43, 1
      %p47 = scmp.eq.s32.totalorder %s9, 3
      %p48 = scmp.ne.s32.totalorder %s43, %s45
      %p49 = scmp.eq.s32.totalorder %s9, 0
      %p50 = por %p48, %p49
      %p51 = scmp.ne.s32.totalorder %s43, %s45
      %p52 = scmp.eq.s32.totalorder %s14, 3
      %p53 = por %p51, %p52
      %p54 = scmp.ne.s32.totalorder %s45, %s46
      %p55 = scmp.eq.s32.totalorder %s14, 0
      %p56 = por %p54, %p55
      %p57 = scmp.ne.s32.totalorder %s45, %s46
      %p58 = scmp.eq.s32.totalorder %s15, 3
      %p59 = por %p57, %p58
      %p61 = scmp.ne.s32.totalorder %s46, %s60
      %p62 = scmp.eq.s32.totalorder %s15, 0
      %p63 = por %p61, %p62
      %s65 = sadd.s32 %s64, 1
      %p68 = scmp.eq.s32.totalorder %s9, 3
      %p69 = scmp.ne.s32.totalorder %s64, %s66
      %p70 = scmp.eq.s32.totalorder %s9, 0
      %p71 = por %p69, %p70
      %p72 = scmp.ne.s32.totalorder %s64, %s66
      %p73 = scmp.eq.s32.totalorder %s14, 3
      %p74 = por %p72, %p73
      %p75 = scmp.ne.s32.totalorder %s66, %s67
      %p76 = scmp.eq.s32.totalorder %s14, 0
      %p77 = por %p75, %p76
      %p78 = scmp.ne.s32.totalorder %s66, %s67
      %p79 = scmp.eq.s32.totalorder %s15, 3
      %p80 = por %p78, %p79
      %p82 = scmp.ne.s32.totalorder %s67, %s81
      %p83 = scmp.eq.s32.totalorder %s15, 0
      %p84 = por %p82, %p83
      %s85 = ssub.s32 %s9, %s16
      %p86 = scmp.eq.s32.totalorder %s85, 0
      %s88 = sadd.s32 %s87, 1
      %s89 = scalar_select %p86, %s87, %s88
      %p92 = pneg %p86
      %p93 = scmp.eq.s32.totalorder %s9, 3
      %p94 = por %p92, %p93
      %p95 = scmp.ne.s32.totalorder %s87, %s90
      %p96 = scmp.eq.s32.totalorder %s9, 0
      %p97 = por %p95, %p96
      %p98 = scmp.ne.s32.totalorder %s87, %s90
      %p99 = scmp.eq.s32.totalorder %s14, 3
      %p100 = por %p98, %p99
      %p101 = scmp.ne.s32.totalorder %s90, %s91
      %p102 = scmp.eq.s32.totalorder %s14, 0
      %p103 = por %p101, %p102
      %p104 = scmp.ne.s32.totalorder %s90, %s91
      %p105 = scmp.eq.s32.totalorder %s15, 3
      %p106 = por %p104, %p105
      %p108 = scmp.ne.s32.totalorder %s91, %s107
      %p109 = scmp.eq.s32.totalorder %s15, 0
      %p110 = por %p108, %p109
      %p111 = scmp.le.s32.totalorder 1, %s9
      %p112 = scmp.lt.s32.totalorder %s9, 5
      %p113 = pnand %p111, %p112
      %p114 = pneg %p113
      // Predicated region
      $region9: #{improved_digit_recognizer_forward.7} parent=5 // pred_check
        _
      $region10: #{improved_digit_recognizer_forward.7} parent=5 // pred_check_branch
        %116 = sbr.rel (%p113) target = $region12
      $region11: #{improved_digit_recognizer_forward.7} parent=5 // pred_region
        %s117 = ssub.s32 %s9, 1
        // Predicated region
        $region13: #{improved_digit_recognizer_forward.7} parent=11 // pred_check
          %p118 = pneg %p56
        $region14: #{improved_digit_recognizer_forward.7} parent=11 // pred_check_branch
          %120 = sbr.rel (%p118) target = $region16
        $region15: #{improved_digit_recognizer_forward.7} parent=11 // pred_region
          _
        $region16: #{improved_digit_recognizer_forward.7} parent=11 // pred_fallthru
          _
        // Predicated region
        $region17: #{improved_digit_recognizer_forward.7} parent=11 // pred_check
          %p121 = pneg %p77
        $region18: #{improved_digit_recognizer_forward.7} parent=11 // pred_check_branch
          %123 = sbr.rel (%p121) target = $region20
        $region19: #{improved_digit_recognizer_forward.7} parent=11 // pred_region
          _
        $region20: #{improved_digit_recognizer_forward.7} parent=11 // pred_fallthru
          _
      $region12: #{improved_digit_recognizer_forward.7} parent=5 // pred_fallthru
        _
      %p124 = scmp.lt.s32.totalorder %s9, 4
      // Predicated region
      $region21: #{improved_digit_recognizer_forward.7} parent=5 // pred_check
        %p125 = pneg %p124
      $region22: #{improved_digit_recognizer_forward.7} parent=5 // pred_check_branch
        %127 = sbr.rel (%p125) target = $region24
      $region23: #{improved_digit_recognizer_forward.7} parent=5 // pred_region
        // Predicated region
        $region25: #{improved_digit_recognizer_forward.7} parent=23 // pred_check
          %p128 = pneg %p29
        $region26: #{improved_digit_recognizer_forward.7} parent=23 // pred_check_branch
          %130 = sbr.rel (%p128) target = $region28
        $region27: #{improved_digit_recognizer_forward.7} parent=23 // pred_region
          %s131 = smul.u32 64, %s9
          %s132 = ssub.s32 196, %s131
          %p133 = scmp.lt.s32.totalorder %s132, 64
          %s134 = scalar_select %p133, %s132, 64
          %s135 = smul.u32 64, %s134
          %p136 = scmp.lt.s32.totalorder %s131, 195
          %s137 = scalar_select %p136, %s131, 195
          %s138 = smul.addr %s137, 4
          %s139 = scalar_lea.vmem %s0, %s138
          %s140 = smul.u32 64, %s9
          %s141 = ssub.s32 196, %s140
          %p142 = scmp.lt.s32.totalorder %s141, 64
          %s143 = scalar_select %p142, %s141, 64
          %s144 = smul.u32 64, %s143
        $region28: #{improved_digit_recognizer_forward.7} parent=23 // pred_fallthru
          _
      $region24: #{improved_digit_recognizer_forward.7} parent=5 // pred_fallthru
        _
      %p145 = scmp.le.s32.totalorder 1, %s9
      %p146 = scmp.lt.s32.totalorder %s9, 5
      %p147 = pnand %p145, %p146
      %p148 = pneg %p147
      // Predicated region
      $region29: #{improved_digit_recognizer_forward.7} parent=5 // pred_check
        _
      $region30: #{improved_digit_recognizer_forward.7} parent=5 // pred_check_branch
        %150 = sbr.rel (%p147) target = $region32
      $region31: #{improved_digit_recognizer_forward.7} parent=5 // pred_region
        %s151 = ssub.s32 %s9, 1
        %s152 = smul.u32 64, %s14
        %s153 = ssub.s32 196, %s152
        %p154 = scmp.lt.s32.totalorder %s153, 64
        %s155 = scalar_select %p154, %s153, 64
        %s156 = smul.u32 64, %s155
        %p157 = scmp.lt.s32.totalorder %s152, 195
        %s158 = scalar_select %p157, %s152, 195
        %s159 = smul.addr %s158, 4
        %s160 = scalar_lea.vmem %s0, %s159
        %p161 = pneg %p35
        %p162 = pneg %p32
        %p163 = pneg %p56
        %p164 = pneg %p53
        %p165 = pneg %p77
        %p166 = pneg %p74
        %p167 = pneg %p103
        %p168 = pneg %p100
        %s169 = sand.u32 %s90, 1
        %s170 = sand.u32 %s90, 1
        %s171 = smul.addr %s170, 256
        %s172 = scalar_lea.vmem [#allocation2], %s171
        %s173 = smul.u32 64, %s14
        %s174 = ssub.s32 196, %s173
        %p175 = scmp.lt.s32.totalorder %s174, 64
        %s176 = scalar_select %p175, %s174, 64
        %s177 = smul.u32 64, %s176
        %p178 = scmp.lt.s32.totalorder %s173, 195
        %s179 = scalar_select %p178, %s173, 195
        %s180 = smul.addr %s179, 4
        %s181 = scalar_lea.vmem %s0, %s180
        %s182 = smul.u32 64, %s14
        %s183 = ssub.s32 196, %s182
        %p184 = scmp.lt.s32.totalorder %s183, 64
        %s185 = scalar_select %p184, %s183, 64
        %s186 = smul.u32 64, %s185
        %s187 = smul.u32 64, %s14
        %s188 = ssub.s32 196, %s187
        %p189 = scmp.lt.s32.totalorder %s188, 64
        %s190 = scalar_select %p189, %s188, 64
        %s191 = smul.u32 64, %s190
        %v193 = vld [vmem:[%s181] sm:$0xf]
        %v194 = vld [vmem:[%s181 + $0x4] sm:$0xf]
        %v195 = vld [vmem:[%s181 + $0x8] sm:$0xf]
        %v196 = vld [vmem:[%s181 + $0xc] sm:$0xf]
        %v197 = vld [vmem:[%s181 + $0x10] sm:$0xf]
        %v198 = vld [vmem:[%s181 + $0x14] sm:$0xf]
        %v199 = vld [vmem:[%s181 + $0x18] sm:$0xf]
        %v200 = vld [vmem:[%s181 + $0x1c] sm:$0xf]
        %v201 = vld [vmem:[%s181 + $0x20] sm:$0xf]
        %v202 = vld [vmem:[%s181 + $0x24] sm:$0xf]
        %v203 = vld [vmem:[%s181 + $0x28] sm:$0xf]
        %v204 = vld [vmem:[%s181 + $0x2c] sm:$0xf]
        %v205 = vld [vmem:[%s181 + $0x30] sm:$0xf]
        %v206 = vld [vmem:[%s181 + $0x34] sm:$0xf]
        %v207 = vld [vmem:[%s181 + $0x38] sm:$0xf]
        %v208 = vld [vmem:[%s181 + $0x3c] sm:$0xf]
        %v209 = vld [vmem:[%s181 + $0x40] sm:$0xf]
        %v210 = vld [vmem:[%s181 + $0x44] sm:$0xf]
        %v211 = vld [vmem:[%s181 + $0x48] sm:$0xf]
        %v212 = vld [vmem:[%s181 + $0x4c] sm:$0xf]
        %v213 = vld [vmem:[%s181 + $0x50] sm:$0xf]
        %v214 = vld [vmem:[%s181 + $0x54] sm:$0xf]
        %v215 = vld [vmem:[%s181 + $0x58] sm:$0xf]
        %v216 = vld [vmem:[%s181 + $0x5c] sm:$0xf]
        %v217 = vld [vmem:[%s181 + $0x60] sm:$0xf]
        %v218 = vld [vmem:[%s181 + $0x64] sm:$0xf]
        %v219 = vld [vmem:[%s181 + $0x68] sm:$0xf]
        %v220 = vld [vmem:[%s181 + $0x6c] sm:$0xf]
        %v221 = vld [vmem:[%s181 + $0x70] sm:$0xf]
        %v222 = vld [vmem:[%s181 + $0x74] sm:$0xf]
        %v223 = vld [vmem:[%s181 + $0x78] sm:$0xf]
        %v224 = vld [vmem:[%s181 + $0x7c] sm:$0xf]
        %v225 = vld [vmem:[%s181 + $0x80] sm:$0xf]
        %v226 = vld [vmem:[%s181 + $0x84] sm:$0xf]
        %v227 = vld [vmem:[%s181 + $0x88] sm:$0xf]
        %v228 = vld [vmem:[%s181 + $0x8c] sm:$0xf]
        %v229 = vld [vmem:[%s181 + $0x90] sm:$0xf]
        %v230 = vld [vmem:[%s181 + $0x94] sm:$0xf]
        %v231 = vld [vmem:[%s181 + $0x98] sm:$0xf]
        %v232 = vld [vmem:[%s181 + $0x9c] sm:$0xf]
        %v233 = vld [vmem:[%s181 + $0xa0] sm:$0xf]
        %v234 = vld [vmem:[%s181 + $0xa4] sm:$0xf]
        %v235 = vld [vmem:[%s181 + $0xa8] sm:$0xf]
        %v236 = vld [vmem:[%s181 + $0xac] sm:$0xf]
        %v237 = vld [vmem:[%s181 + $0xb0] sm:$0xf]
        %v238 = vld [vmem:[%s181 + $0xb4] sm:$0xf]
        %v239 = vld [vmem:[%s181 + $0xb8] sm:$0xf]
        %v240 = vld [vmem:[%s181 + $0xbc] sm:$0xf]
        %v241 = vld [vmem:[%s181 + $0xc0] sm:$0xf]
        %v242 = vld [vmem:[%s181 + $0xc4] sm:$0xf]
        %v243 = vld [vmem:[%s181 + $0xc8] sm:$0xf]
        %v244 = vld [vmem:[%s181 + $0xcc] sm:$0xf]
        %v245 = vld [vmem:[%s181 + $0xd0] sm:$0xf]
        %v246 = vld [vmem:[%s181 + $0xd4] sm:$0xf]
        %v247 = vld [vmem:[%s181 + $0xd8] sm:$0xf]
        %v248 = vld [vmem:[%s181 + $0xdc] sm:$0xf]
        %v249 = vld [vmem:[%s181 + $0xe0] sm:$0xf]
        %v250 = vld [vmem:[%s181 + $0xe4] sm:$0xf]
        %v251 = vld [vmem:[%s181 + $0xe8] sm:$0xf]
        %v252 = vld [vmem:[%s181 + $0xec] sm:$0xf]
        %v253 = vld [vmem:[%s181 + $0xf0] sm:$0xf]
        %v254 = vld [vmem:[%s181 + $0xf4] sm:$0xf]
        %v255 = vld [vmem:[%s181 + $0xf8] sm:$0xf]
        %v256 = vld [vmem:[%s181 + $0xfc] sm:$0xf]
        %v257 = vld [vmem:[%s1] sm:$0xf]
        %v258 = vld [vmem:[%s1 + $0x4] sm:$0xf]
        %v259 = vld [vmem:[%s1 + $0x8] sm:$0xf]
        %v260 = vld [vmem:[%s1 + $0xc] sm:$0x1]
        %v261 = vld [vmem:[%s2] sm:$0x1]
        %v263 = vlaneseq
        %v264 = vshrl.u32 %v263, 7
        %v265 = vsub.s32 0, %v264
        %v266 = vrot.slane %v261, %v265
        %v332 = vunpack.c.l.b16 %v193
        %v333 = vunpack.c.l.b16 %v194
        %v334 = vunpack.c.l.b16 %v195
        %v335 = vunpack.c.l.b16 %v196
        %v336 = vunpack.c.l.b16 %v197
        %v337 = vunpack.c.l.b16 %v198
        %v338 = vunpack.c.l.b16 %v199
        %v339 = vunpack.c.l.b16 %v200
        %v340 = vunpack.c.l.b16 %v201
        %v341 = vunpack.c.l.b16 %v202
        %v342 = vunpack.c.l.b16 %v203
        %v343 = vunpack.c.l.b16 %v204
        %v344 = vunpack.c.l.b16 %v205
        %v345 = vunpack.c.l.b16 %v206
        %v346 = vunpack.c.l.b16 %v207
        %v347 = vunpack.c.l.b16 %v208
        %v348 = vunpack.c.l.b16 %v209
        %v349 = vunpack.c.l.b16 %v210
        %v350 = vunpack.c.l.b16 %v211
        %v351 = vunpack.c.l.b16 %v212
        %v352 = vunpack.c.l.b16 %v213
        %v353 = vunpack.c.l.b16 %v214
        %v354 = vunpack.c.l.b16 %v215
        %v355 = vunpack.c.l.b16 %v216
        %v356 = vunpack.c.l.b16 %v217
        %v357 = vunpack.c.l.b16 %v218
        %v358 = vunpack.c.l.b16 %v219
        %v359 = vunpack.c.l.b16 %v220
        %v360 = vunpack.c.l.b16 %v221
        %v361 = vunpack.c.l.b16 %v222
        %v362 = vunpack.c.l.b16 %v223
        %v363 = vunpack.c.l.b16 %v224
        %v364 = vunpack.c.l.b16 %v225
        %v365 = vunpack.c.l.b16 %v226
        %v366 = vunpack.c.l.b16 %v227
        %v367 = vunpack.c.l.b16 %v228
        %v368 = vunpack.c.l.b16 %v229
        %v369 = vunpack.c.l.b16 %v230
        %v370 = vunpack.c.l.b16 %v231
        %v371 = vunpack.c.l.b16 %v232
        %v372 = vunpack.c.l.b16 %v233
        %v373 = vunpack.c.l.b16 %v234
        %v374 = vunpack.c.l.b16 %v235
        %v375 = vunpack.c.l.b16 %v236
        %v376 = vunpack.c.l.b16 %v237
        %v377 = vunpack.c.l.b16 %v238
        %v378 = vunpack.c.l.b16 %v239
        %v379 = vunpack.c.l.b16 %v240
        %v380 = vunpack.c.l.b16 %v241
        %v381 = vunpack.c.l.b16 %v242
        %v382 = vunpack.c.l.b16 %v243
        %v383 = vunpack.c.l.b16 %v244
        %v384 = vunpack.c.l.b16 %v245
        %v385 = vunpack.c.l.b16 %v246
        %v386 = vunpack.c.l.b16 %v247
        %v387 = vunpack.c.l.b16 %v248
        %v388 = vunpack.c.l.b16 %v249
        %v389 = vunpack.c.l.b16 %v250
        %v390 = vunpack.c.l.b16 %v251
        %v391 = vunpack.c.l.b16 %v252
        %v392 = vunpack.c.l.b16 %v253
        %v393 = vunpack.c.l.b16 %v254
        %v394 = vunpack.c.l.b16 %v255
        %v395 = vunpack.c.l.b16 %v256
        %v396 = vpack.c.b16 %v333, %v332
        %v397 = vpack.c.b16 %v335, %v334
        %v398 = vpack.c.b16 %v337, %v336
        %v399 = vpack.c.b16 %v339, %v338
        %v400 = vpack.c.b16 %v341, %v340
        %v401 = vpack.c.b16 %v343, %v342
        %v402 = vpack.c.b16 %v345, %v344
        %v403 = vpack.c.b16 %v347, %v346
        %v404 = vpack.c.b16 %v349, %v348
        %v405 = vpack.c.b16 %v351, %v350
        %v406 = vpack.c.b16 %v353, %v352
        %v407 = vpack.c.b16 %v355, %v354
        %v408 = vpack.c.b16 %v357, %v356
        %v409 = vpack.c.b16 %v359, %v358
        %v410 = vpack.c.b16 %v361, %v360
        %v411 = vpack.c.b16 %v363, %v362
        %v412 = vpack.c.b16 %v365, %v364
        %v413 = vpack.c.b16 %v367, %v366
        %v414 = vpack.c.b16 %v369, %v368
        %v415 = vpack.c.b16 %v371, %v370
        %v416 = vpack.c.b16 %v373, %v372
        %v417 = vpack.c.b16 %v375, %v374
        %v418 = vpack.c.b16 %v377, %v376
        %v419 = vpack.c.b16 %v379, %v378
        %v420 = vpack.c.b16 %v381, %v380
        %v421 = vpack.c.b16 %v383, %v382
        %v422 = vpack.c.b16 %v385, %v384
        %v423 = vpack.c.b16 %v387, %v386
        %v424 = vpack.c.b16 %v389, %v388
        %v425 = vpack.c.b16 %v391, %v390
        %v426 = vpack.c.b16 %v393, %v392
        %v427 = vpack.c.b16 %v395, %v394
        %v432 = vunpack.c.l.b16 %v257
        %v433 = vunpack.c.l.b16 %v258
        %v434 = vunpack.c.l.b16 %v259
        %v435 = vunpack.c.l.b16 %v260
        %v436 = vpack.c.b16 %v433, %v432
        %v437 = vpack.c.b16 %v435, %v434
        %vm439 = vcmask 203776
        %v441 = vsel %vm439, %v396, 0
        %v444 = vsel %vm439, %v397, 0
        %v447 = vsel %vm439, %v398, 0
        %v450 = vsel %vm439, %v399, 0
        %v453 = vsel %vm439, %v400, 0
        %v456 = vsel %vm439, %v401, 0
        %v459 = vsel %vm439, %v402, 0
        %v462 = vsel %vm439, %v403, 0
        %v465 = vsel %vm439, %v404, 0
        %v468 = vsel %vm439, %v405, 0
        %v471 = vsel %vm439, %v406, 0
        %v474 = vsel %vm439, %v407, 0
        %v477 = vsel %vm439, %v408, 0
        %v480 = vsel %vm439, %v409, 0
        %v483 = vsel %vm439, %v410, 0
        %v486 = vsel %vm439, %v411, 0
        %v489 = vsel %vm439, %v412, 0
        %v492 = vsel %vm439, %v413, 0
        %v495 = vsel %vm439, %v414, 0
        %v498 = vsel %vm439, %v415, 0
        %v501 = vsel %vm439, %v416, 0
        %v504 = vsel %vm439, %v417, 0
        %v507 = vsel %vm439, %v418, 0
        %v510 = vsel %vm439, %v419, 0
        %v513 = vsel %vm439, %v420, 0
        %v516 = vsel %vm439, %v421, 0
        %v519 = vsel %vm439, %v422, 0
        %v522 = vsel %vm439, %v423, 0
        %v525 = vsel %vm439, %v424, 0
        %v528 = vsel %vm439, %v425, 0
        %v531 = vsel %vm439, %v426, 0
        %v534 = vsel %vm439, %v427, 0
        %vm536 = vcmask 1043456
        %vm537 = vcmask 1044480
        %v538 = vsel %vm536, 4294967295, 65535
        %v539 = vsel %vm537, %v538, 0
        %v541 = vand.u32 %v437, %v539
        %543 = vmatprep.subr.bf16.mxu0 0
        %544 = vmatpush1.bf16.msra.mxu0 0
        %545 = vmatprep.subr.bf16.mxu0 0
        %546 = vmatpush1.bf16.msra.mxu0 0
        %547 = vmatprep.subr.bf16.mxu0 0
        %548 = vmatpush1.bf16.msra.mxu0 0
        %549 = vmatprep.subr.bf16.mxu0 0
        %550 = vmatpush1.bf16.msra.mxu0 0
        %551 = vmatprep.subr.bf16.mxu0 0
        %552 = vmatpush1.bf16.msra.mxu0 0
        %553 = vmatprep.subr.bf16.mxu0 0
        %554 = vmatpush1.bf16.msra.mxu0 0
        %555 = vmatprep.subr.bf16.mxu0 0
        %556 = vmatpush1.bf16.msra.mxu0 %v541
        %557 = vmatprep.subr.bf16.mxu0 0
        %558 = vmatpush1.bf16.msra.mxu0 %v436
        %559 = vmatprep.subr.bf16.mxu0 0
        %560 = vmatpush2.bf16.msra.mxu0 0
        %561 = vmatprep.subr.bf16.mxu0 0
        %562 = vmatpush2.bf16.msra.mxu0 0
        %563 = vmatprep.subr.bf16.mxu0 0
        %564 = vmatpush2.bf16.msra.mxu0 0
        %565 = vmatprep.subr.bf16.mxu0 0
        %566 = vmatpush2.bf16.msra.mxu0 0
        %567 = vmatprep.subr.bf16.mxu0 0
        %568 = vmatpush2.bf16.msra.mxu0 0
        %569 = vmatprep.subr.bf16.mxu0 0
        %570 = vmatpush2.bf16.msra.mxu0 0
        %571 = vmatprep.subr.bf16.mxu0 0
        %572 = vmatpush2.bf16.msra.mxu0 0
        %573 = vmatprep.subr.bf16.mxu0 0
        %574 = vmatpush2.bf16.msra.mxu0 0
        %575 = vmatprep.mubr.bf16.mxu0 0
        %576 = vmatmul.mubr.bf16.gmra.mxu0 %v441
        %v577 = vpop.f32.mrf.mxu0
        %v578 = vadd.f32 %v266, %v577
        %v579 = vpop.f32.mrf.mxu0
        %v580 = vpop.f32.mrf.mxu0
        %v581 = vadd.f32 %v266, %v580
        %v582 = vpop.f32.mrf.mxu0
        %583 = vmatprep.mubr.bf16.mxu0 0
        %584 = vmatmul.mubr.bf16.gmra.mxu0 %v444
        %v585 = vpop.f32.mrf.mxu0
        %v586 = vadd.f32 %v266, %v585
        %v587 = vpop.f32.mrf.mxu0
        %v588 = vpop.f32.mrf.mxu0
        %v589 = vadd.f32 %v266, %v588
        %v590 = vpop.f32.mrf.mxu0
        %591 = vmatprep.mubr.bf16.mxu0 0
        %592 = vmatmul.mubr.bf16.gmra.mxu0 %v447
        %v593 = vpop.f32.mrf.mxu0
        %v594 = vadd.f32 %v266, %v593
        %v595 = vpop.f32.mrf.mxu0
        %v596 = vpop.f32.mrf.mxu0
        %v597 = vadd.f32 %v266, %v596
        %v598 = vpop.f32.mrf.mxu0
        %599 = vmatprep.mubr.bf16.mxu0 0
        %600 = vmatmul.mubr.bf16.gmra.mxu0 %v450
        %v601 = vpop.f32.mrf.mxu0
        %v602 = vadd.f32 %v266, %v601
        %v603 = vpop.f32.mrf.mxu0
        %v604 = vpop.f32.mrf.mxu0
        %v605 = vadd.f32 %v266, %v604
        %v606 = vpop.f32.mrf.mxu0
        %607 = vmatprep.mubr.bf16.mxu0 0
        %608 = vmatmul.mubr.bf16.gmra.mxu0 %v453
        %v609 = vpop.f32.mrf.mxu0
        %v610 = vadd.f32 %v266, %v609
        %v611 = vpop.f32.mrf.mxu0
        %v612 = vpop.f32.mrf.mxu0
        %v613 = vadd.f32 %v266, %v612
        %v614 = vpop.f32.mrf.mxu0
        %615 = vmatprep.mubr.bf16.mxu0 0
        %616 = vmatmul.mubr.bf16.gmra.mxu0 %v456
        %v617 = vpop.f32.mrf.mxu0
        %v618 = vadd.f32 %v266, %v617
        %v619 = vpop.f32.mrf.mxu0
        %v620 = vpop.f32.mrf.mxu0
        %v621 = vadd.f32 %v266, %v620
        %v622 = vpop.f32.mrf.mxu0
        %623 = vmatprep.mubr.bf16.mxu0 0
        %624 = vmatmul.mubr.bf16.gmra.mxu0 %v459
        %v625 = vpop.f32.mrf.mxu0
        %v626 = vadd.f32 %v266, %v625
        %v627 = vpop.f32.mrf.mxu0
        %v628 = vpop.f32.mrf.mxu0
        %v629 = vadd.f32 %v266, %v628
        %v630 = vpop.f32.mrf.mxu0
        %631 = vmatprep.mubr.bf16.mxu0 0
        %632 = vmatmul.mubr.bf16.gmra.mxu0 %v462
        %v633 = vpop.f32.mrf.mxu0
        %v634 = vadd.f32 %v266, %v633
        %v635 = vpop.f32.mrf.mxu0
        %v636 = vpop.f32.mrf.mxu0
        %v637 = vadd.f32 %v266, %v636
        %v638 = vpop.f32.mrf.mxu0
        %639 = vmatprep.mubr.bf16.mxu0 0
        %640 = vmatmul.mubr.bf16.gmra.mxu0 %v465
        %v641 = vpop.f32.mrf.mxu0
        %v642 = vadd.f32 %v266, %v641
        %v643 = vpop.f32.mrf.mxu0
        %v644 = vpop.f32.mrf.mxu0
        %v645 = vadd.f32 %v266, %v644
        %v646 = vpop.f32.mrf.mxu0
        %647 = vmatprep.mubr.bf16.mxu0 0
        %648 = vmatmul.mubr.bf16.gmra.mxu0 %v468
        %v649 = vpop.f32.mrf.mxu0
        %v650 = vadd.f32 %v266, %v649
        %v651 = vpop.f32.mrf.mxu0
        %v652 = vpop.f32.mrf.mxu0
        %v653 = vadd.f32 %v266, %v652
        %v654 = vpop.f32.mrf.mxu0
        %655 = vmatprep.mubr.bf16.mxu0 0
        %656 = vmatmul.mubr.bf16.gmra.mxu0 %v471
        %v657 = vpop.f32.mrf.mxu0
        %v658 = vadd.f32 %v266, %v657
        %v659 = vpop.f32.mrf.mxu0
        %v660 = vpop.f32.mrf.mxu0
        %v661 = vadd.f32 %v266, %v660
        %v662 = vpop.f32.mrf.mxu0
        %663 = vmatprep.mubr.bf16.mxu0 0
        %664 = vmatmul.mubr.bf16.gmra.mxu0 %v474
        %v665 = vpop.f32.mrf.mxu0
        %v666 = vadd.f32 %v266, %v665
        %v667 = vpop.f32.mrf.mxu0
        %v668 = vpop.f32.mrf.mxu0
        %v669 = vadd.f32 %v266, %v668
        %v670 = vpop.f32.mrf.mxu0
        %671 = vmatprep.mubr.bf16.mxu0 0
        %672 = vmatmul.mubr.bf16.gmra.mxu0 %v477
        %v673 = vpop.f32.mrf.mxu0
        %v674 = vadd.f32 %v266, %v673
        %v675 = vpop.f32.mrf.mxu0
        %v676 = vpop.f32.mrf.mxu0
        %v677 = vadd.f32 %v266, %v676
        %v678 = vpop.f32.mrf.mxu0
        %679 = vmatprep.mubr.bf16.mxu0 0
        %680 = vmatmul.mubr.bf16.gmra.mxu0 %v480
        %v681 = vpop.f32.mrf.mxu0
        %v682 = vadd.f32 %v266, %v681
        %v683 = vpop.f32.mrf.mxu0
        %v684 = vpop.f32.mrf.mxu0
        %v685 = vadd.f32 %v266, %v684
        %v686 = vpop.f32.mrf.mxu0
        %687 = vmatprep.mubr.bf16.mxu0 0
        %688 = vmatmul.mubr.bf16.gmra.mxu0 %v483
        %v689 = vpop.f32.mrf.mxu0
        %v690 = vadd.f32 %v266, %v689
        %v691 = vpop.f32.mrf.mxu0
        %v692 = vpop.f32.mrf.mxu0
        %v693 = vadd.f32 %v266, %v692
        %v694 = vpop.f32.mrf.mxu0
        %695 = vmatprep.mubr.bf16.mxu0 0
        %696 = vmatmul.mubr.bf16.gmra.mxu0 %v486
        %v697 = vpop.f32.mrf.mxu0
        %v698 = vadd.f32 %v266, %v697
        %v699 = vpop.f32.mrf.mxu0
        %v700 = vpop.f32.mrf.mxu0
        %v701 = vadd.f32 %v266, %v700
        %v702 = vpop.f32.mrf.mxu0
        %703 = vmatprep.mubr.bf16.mxu0 0
        %704 = vmatmul.mubr.bf16.gmra.mxu0 %v489
        %v705 = vpop.f32.mrf.mxu0
        %v706 = vadd.f32 %v266, %v705
        %v707 = vpop.f32.mrf.mxu0
        %v708 = vpop.f32.mrf.mxu0
        %v709 = vadd.f32 %v266, %v708
        %v710 = vpop.f32.mrf.mxu0
        %711 = vmatprep.mubr.bf16.mxu0 0
        %712 = vmatmul.mubr.bf16.gmra.mxu0 %v492
        %v713 = vpop.f32.mrf.mxu0
        %v714 = vadd.f32 %v266, %v713
        %v715 = vpop.f32.mrf.mxu0
        %v716 = vpop.f32.mrf.mxu0
        %v717 = vadd.f32 %v266, %v716
        %v718 = vpop.f32.mrf.mxu0
        %719 = vmatprep.mubr.bf16.mxu0 0
        %720 = vmatmul.mubr.bf16.gmra.mxu0 %v495
        %v721 = vpop.f32.mrf.mxu0
        %v722 = vadd.f32 %v266, %v721
        %v723 = vpop.f32.mrf.mxu0
        %v724 = vpop.f32.mrf.mxu0
        %v725 = vadd.f32 %v266, %v724
        %v726 = vpop.f32.mrf.mxu0
        %727 = vmatprep.mubr.bf16.mxu0 0
        %728 = vmatmul.mubr.bf16.gmra.mxu0 %v498
        %v729 = vpop.f32.mrf.mxu0
        %v730 = vadd.f32 %v266, %v729
        %v731 = vpop.f32.mrf.mxu0
        %v732 = vpop.f32.mrf.mxu0
        %v733 = vadd.f32 %v266, %v732
        %v734 = vpop.f32.mrf.mxu0
        %735 = vmatprep.mubr.bf16.mxu0 0
        %736 = vmatmul.mubr.bf16.gmra.mxu0 %v501
        %v737 = vpop.f32.mrf.mxu0
        %v738 = vadd.f32 %v266, %v737
        %v739 = vpop.f32.mrf.mxu0
        %v740 = vpop.f32.mrf.mxu0
        %v741 = vadd.f32 %v266, %v740
        %v742 = vpop.f32.mrf.mxu0
        %743 = vmatprep.mubr.bf16.mxu0 0
        %744 = vmatmul.mubr.bf16.gmra.mxu0 %v504
        %v745 = vpop.f32.mrf.mxu0
        %v746 = vadd.f32 %v266, %v745
        %v747 = vpop.f32.mrf.mxu0
        %v748 = vpop.f32.mrf.mxu0
        %v749 = vadd.f32 %v266, %v748
        %v750 = vpop.f32.mrf.mxu0
        %751 = vmatprep.mubr.bf16.mxu0 0
        %752 = vmatmul.mubr.bf16.gmra.mxu0 %v507
        %v753 = vpop.f32.mrf.mxu0
        %v754 = vadd.f32 %v266, %v753
        %v755 = vpop.f32.mrf.mxu0
        %v756 = vpop.f32.mrf.mxu0
        %v757 = vadd.f32 %v266, %v756
        %v758 = vpop.f32.mrf.mxu0
        %759 = vmatprep.mubr.bf16.mxu0 0
        %760 = vmatmul.mubr.bf16.gmra.mxu0 %v510
        %v761 = vpop.f32.mrf.mxu0
        %v762 = vadd.f32 %v266, %v761
        %v763 = vpop.f32.mrf.mxu0
        %v764 = vpop.f32.mrf.mxu0
        %v765 = vadd.f32 %v266, %v764
        %v766 = vpop.f32.mrf.mxu0
        %767 = vmatprep.mubr.bf16.mxu0 0
        %768 = vmatmul.mubr.bf16.gmra.mxu0 %v513
        %v769 = vpop.f32.mrf.mxu0
        %v770 = vadd.f32 %v266, %v769
        %v771 = vpop.f32.mrf.mxu0
        %v772 = vpop.f32.mrf.mxu0
        %v773 = vadd.f32 %v266, %v772
        %v774 = vpop.f32.mrf.mxu0
        %775 = vmatprep.mubr.bf16.mxu0 0
        %776 = vmatmul.mubr.bf16.gmra.mxu0 %v516
        %v777 = vpop.f32.mrf.mxu0
        %v778 = vadd.f32 %v266, %v777
        %v779 = vpop.f32.mrf.mxu0
        %v780 = vpop.f32.mrf.mxu0
        %v781 = vadd.f32 %v266, %v780
        %v782 = vpop.f32.mrf.mxu0
        %783 = vmatprep.mubr.bf16.mxu0 0
        %784 = vmatmul.mubr.bf16.gmra.mxu0 %v519
        %v785 = vpop.f32.mrf.mxu0
        %v786 = vadd.f32 %v266, %v785
        %v787 = vpop.f32.mrf.mxu0
        %v788 = vpop.f32.mrf.mxu0
        %v789 = vadd.f32 %v266, %v788
        %v790 = vpop.f32.mrf.mxu0
        %791 = vmatprep.mubr.bf16.mxu0 0
        %792 = vmatmul.mubr.bf16.gmra.mxu0 %v522
        %v793 = vpop.f32.mrf.mxu0
        %v794 = vadd.f32 %v266, %v793
        %v795 = vpop.f32.mrf.mxu0
        %v796 = vpop.f32.mrf.mxu0
        %v797 = vadd.f32 %v266, %v796
        %v798 = vpop.f32.mrf.mxu0
        %799 = vmatprep.mubr.bf16.mxu0 0
        %800 = vmatmul.mubr.bf16.gmra.mxu0 %v525
        %v801 = vpop.f32.mrf.mxu0
        %v802 = vadd.f32 %v266, %v801
        %v803 = vpop.f32.mrf.mxu0
        %v804 = vpop.f32.mrf.mxu0
        %v805 = vadd.f32 %v266, %v804
        %v806 = vpop.f32.mrf.mxu0
        %807 = vmatprep.mubr.bf16.mxu0 0
        %808 = vmatmul.mubr.bf16.gmra.mxu0 %v528
        %v809 = vpop.f32.mrf.mxu0
        %v810 = vadd.f32 %v266, %v809
        %v811 = vpop.f32.mrf.mxu0
        %v812 = vpop.f32.mrf.mxu0
        %v813 = vadd.f32 %v266, %v812
        %v814 = vpop.f32.mrf.mxu0
        %815 = vmatprep.mubr.bf16.mxu0 0
        %816 = vmatmul.mubr.bf16.gmra.mxu0 %v531
        %v817 = vpop.f32.mrf.mxu0
        %v818 = vadd.f32 %v266, %v817
        %v819 = vpop.f32.mrf.mxu0
        %v820 = vpop.f32.mrf.mxu0
        %v821 = vadd.f32 %v266, %v820
        %v822 = vpop.f32.mrf.mxu0
        %823 = vmatprep.mubr.bf16.mxu0 0
        %824 = vmatmul.mubr.bf16.gmra.mxu0 %v534
        %v825 = vpop.f32.mrf.mxu0
        %v826 = vadd.f32 %v266, %v825
        %v827 = vpop.f32.mrf.mxu0
        %v828 = vpop.f32.mrf.mxu0
        %v829 = vadd.f32 %v266, %v828
        %v830 = vpop.f32.mrf.mxu0
        %831 = vdwg.mxu0
        %v832 = vmax.f32 %v578, 0.0
        %v833 = vmax.f32 %v581, 0.0
        %v834 = vmax.f32 %v586, 0.0
        %v835 = vmax.f32 %v589, 0.0
        %v836 = vmax.f32 %v594, 0.0
        %v837 = vmax.f32 %v597, 0.0
        %v838 = vmax.f32 %v602, 0.0
        %v839 = vmax.f32 %v605, 0.0
        %v840 = vmax.f32 %v610, 0.0
        %v841 = vmax.f32 %v613, 0.0
        %v842 = vmax.f32 %v618, 0.0
        %v843 = vmax.f32 %v621, 0.0
        %v844 = vmax.f32 %v626, 0.0
        %v845 = vmax.f32 %v629, 0.0
        %v846 = vmax.f32 %v634, 0.0
        %v847 = vmax.f32 %v637, 0.0
        %v848 = vmax.f32 %v642, 0.0
        %v849 = vmax.f32 %v645, 0.0
        %v850 = vmax.f32 %v650, 0.0
        %v851 = vmax.f32 %v653, 0.0
        %v852 = vmax.f32 %v658, 0.0
        %v853 = vmax.f32 %v661, 0.0
        %v854 = vmax.f32 %v666, 0.0
        %v855 = vmax.f32 %v669, 0.0
        %v856 = vmax.f32 %v674, 0.0
        %v857 = vmax.f32 %v677, 0.0
        %v858 = vmax.f32 %v682, 0.0
        %v859 = vmax.f32 %v685, 0.0
        %v860 = vmax.f32 %v690, 0.0
        %v861 = vmax.f32 %v693, 0.0
        %v862 = vmax.f32 %v698, 0.0
        %v863 = vmax.f32 %v701, 0.0
        %v864 = vmax.f32 %v706, 0.0
        %v865 = vmax.f32 %v709, 0.0
        %v866 = vmax.f32 %v714, 0.0
        %v867 = vmax.f32 %v717, 0.0
        %v868 = vmax.f32 %v722, 0.0
        %v869 = vmax.f32 %v725, 0.0
        %v870 = vmax.f32 %v730, 0.0
        %v871 = vmax.f32 %v733, 0.0
        %v872 = vmax.f32 %v738, 0.0
        %v873 = vmax.f32 %v741, 0.0
        %v874 = vmax.f32 %v746, 0.0
        %v875 = vmax.f32 %v749, 0.0
        %v876 = vmax.f32 %v754, 0.0
        %v877 = vmax.f32 %v757, 0.0
        %v878 = vmax.f32 %v762, 0.0
        %v879 = vmax.f32 %v765, 0.0
        %v880 = vmax.f32 %v770, 0.0
        %v881 = vmax.f32 %v773, 0.0
        %v882 = vmax.f32 %v778, 0.0
        %v883 = vmax.f32 %v781, 0.0
        %v884 = vmax.f32 %v786, 0.0
        %v885 = vmax.f32 %v789, 0.0
        %v886 = vmax.f32 %v794, 0.0
        %v887 = vmax.f32 %v797, 0.0
        %v888 = vmax.f32 %v802, 0.0
        %v889 = vmax.f32 %v805, 0.0
        %v890 = vmax.f32 %v810, 0.0
        %v891 = vmax.f32 %v813, 0.0
        %v892 = vmax.f32 %v818, 0.0
        %v893 = vmax.f32 %v821, 0.0
        %v894 = vmax.f32 %v826, 0.0
        %v895 = vmax.f32 %v829, 0.0
        %v896 = vpack.c.bf16 %v833, %v832
        %v897 = vpack.c.bf16 %v835, %v834
        %v898 = vpack.c.bf16 %v837, %v836
        %v899 = vpack.c.bf16 %v839, %v838
        %v900 = vpack.c.bf16 %v841, %v840
        %v901 = vpack.c.bf16 %v843, %v842
        %v902 = vpack.c.bf16 %v845, %v844
        %v903 = vpack.c.bf16 %v847, %v846
        %v904 = vpack.c.bf16 %v849, %v848
        %v905 = vpack.c.bf16 %v851, %v850
        %v906 = vpack.c.bf16 %v853, %v852
        %v907 = vpack.c.bf16 %v855, %v854
        %v908 = vpack.c.bf16 %v857, %v856
        %v909 = vpack.c.bf16 %v859, %v858
        %v910 = vpack.c.bf16 %v861, %v860
        %v911 = vpack.c.bf16 %v863, %v862
        %v912 = vpack.c.bf16 %v865, %v864
        %v913 = vpack.c.bf16 %v867, %v866
        %v914 = vpack.c.bf16 %v869, %v868
        %v915 = vpack.c.bf16 %v871, %v870
        %v916 = vpack.c.bf16 %v873, %v872
        %v917 = vpack.c.bf16 %v875, %v874
        %v918 = vpack.c.bf16 %v877, %v876
        %v919 = vpack.c.bf16 %v879, %v878
        %v920 = vpack.c.bf16 %v881, %v880
        %v921 = vpack.c.bf16 %v883, %v882
        %v922 = vpack.c.bf16 %v885, %v884
        %v923 = vpack.c.bf16 %v887, %v886
        %v924 = vpack.c.bf16 %v889, %v888
        %v925 = vpack.c.bf16 %v891, %v890
        %v926 = vpack.c.bf16 %v893, %v892
        %v927 = vpack.c.bf16 %v895, %v894
        %v960 = vunpack.c.l.b16 %v896
        %v961 = vunpack.c.h.b16 %v896
        %v962 = vunpack.c.l.b16 %v897
        %v963 = vunpack.c.h.b16 %v897
        %v964 = vunpack.c.l.b16 %v898
        %v965 = vunpack.c.h.b16 %v898
        %v966 = vunpack.c.l.b16 %v899
        %v967 = vunpack.c.h.b16 %v899
        %v968 = vunpack.c.l.b16 %v900
        %v969 = vunpack.c.h.b16 %v900
        %v970 = vunpack.c.l.b16 %v901
        %v971 = vunpack.c.h.b16 %v901
        %v972 = vunpack.c.l.b16 %v902
        %v973 = vunpack.c.h.b16 %v902
        %v974 = vunpack.c.l.b16 %v903
        %v975 = vunpack.c.h.b16 %v903
        %v976 = vunpack.c.l.b16 %v904
        %v977 = vunpack.c.h.b16 %v904
        %v978 = vunpack.c.l.b16 %v905
        %v979 = vunpack.c.h.b16 %v905
        %v980 = vunpack.c.l.b16 %v906
        %v981 = vunpack.c.h.b16 %v906
        %v982 = vunpack.c.l.b16 %v907
        %v983 = vunpack.c.h.b16 %v907
        %v984 = vunpack.c.l.b16 %v908
        %v985 = vunpack.c.h.b16 %v908
        %v986 = vunpack.c.l.b16 %v909
        %v987 = vunpack.c.h.b16 %v909
        %v988 = vunpack.c.l.b16 %v910
        %v989 = vunpack.c.h.b16 %v910
        %v990 = vunpack.c.l.b16 %v911
        %v991 = vunpack.c.h.b16 %v911
        %v992 = vunpack.c.l.b16 %v912
        %v993 = vunpack.c.h.b16 %v912
        %v994 = vunpack.c.l.b16 %v913
        %v995 = vunpack.c.h.b16 %v913
        %v996 = vunpack.c.l.b16 %v914
        %v997 = vunpack.c.h.b16 %v914
        %v998 = vunpack.c.l.b16 %v915
        %v999 = vunpack.c.h.b16 %v915
        %v1000 = vunpack.c.l.b16 %v916
        %v1001 = vunpack.c.h.b16 %v916
        %v1002 = vunpack.c.l.b16 %v917
        %v1003 = vunpack.c.h.b16 %v917
        %v1004 = vunpack.c.l.b16 %v918
        %v1005 = vunpack.c.h.b16 %v918
        %v1006 = vunpack.c.l.b16 %v919
        %v1007 = vunpack.c.h.b16 %v919
        %v1008 = vunpack.c.l.b16 %v920
        %v1009 = vunpack.c.h.b16 %v920
        %v1010 = vunpack.c.l.b16 %v921
        %v1011 = vunpack.c.h.b16 %v921
        %v1012 = vunpack.c.l.b16 %v922
        %v1013 = vunpack.c.h.b16 %v922
        %v1014 = vunpack.c.l.b16 %v923
        %v1015 = vunpack.c.h.b16 %v923
        %v1016 = vunpack.c.l.b16 %v924
        %v1017 = vunpack.c.h.b16 %v924
        %v1018 = vunpack.c.l.b16 %v925
        %v1019 = vunpack.c.h.b16 %v925
        %v1020 = vunpack.c.l.b16 %v926
        %v1021 = vunpack.c.h.b16 %v926
        %v1022 = vunpack.c.l.b16 %v927
        %v1023 = vunpack.c.h.b16 %v927
        %v1024 = vpack.c.b16 %v960, %v960
        %v1025 = vpack.c.b16 %v961, %v961
        %v1026 = vpack.c.b16 %v962, %v962
        %v1027 = vpack.c.b16 %v963, %v963
        %v1028 = vpack.c.b16 %v964, %v964
        %v1029 = vpack.c.b16 %v965, %v965
        %v1030 = vpack.c.b16 %v966, %v966
        %v1031 = vpack.c.b16 %v967, %v967
        %v1032 = vpack.c.b16 %v968, %v968
        %v1033 = vpack.c.b16 %v969, %v969
        %v1034 = vpack.c.b16 %v970, %v970
        %v1035 = vpack.c.b16 %v971, %v971
        %v1036 = vpack.c.b16 %v972, %v972
        %v1037 = vpack.c.b16 %v973, %v973
        %v1038 = vpack.c.b16 %v974, %v974
        %v1039 = vpack.c.b16 %v975, %v975
        %v1040 = vpack.c.b16 %v976, %v976
        %v1041 = vpack.c.b16 %v977, %v977
        %v1042 = vpack.c.b16 %v978, %v978
        %v1043 = vpack.c.b16 %v979, %v979
        %v1044 = vpack.c.b16 %v980, %v980
        %v1045 = vpack.c.b16 %v981, %v981
        %v1046 = vpack.c.b16 %v982, %v982
        %v1047 = vpack.c.b16 %v983, %v983
        %v1048 = vpack.c.b16 %v984, %v984
        %v1049 = vpack.c.b16 %v985, %v985
        %v1050 = vpack.c.b16 %v986, %v986
        %v1051 = vpack.c.b16 %v987, %v987
        %v1052 = vpack.c.b16 %v988, %v988
        %v1053 = vpack.c.b16 %v989, %v989
        %v1054 = vpack.c.b16 %v990, %v990
        %v1055 = vpack.c.b16 %v991, %v991
        %v1056 = vpack.c.b16 %v992, %v992
        %v1057 = vpack.c.b16 %v993, %v993
        %v1058 = vpack.c.b16 %v994, %v994
        %v1059 = vpack.c.b16 %v995, %v995
        %v1060 = vpack.c.b16 %v996, %v996
        %v1061 = vpack.c.b16 %v997, %v997
        %v1062 = vpack.c.b16 %v998, %v998
        %v1063 = vpack.c.b16 %v999, %v999
        %v1064 = vpack.c.b16 %v1000, %v1000
        %v1065 = vpack.c.b16 %v1001, %v1001
        %v1066 = vpack.c.b16 %v1002, %v1002
        %v1067 = vpack.c.b16 %v1003, %v1003
        %v1068 = vpack.c.b16 %v1004, %v1004
        %v1069 = vpack.c.b16 %v1005, %v1005
        %v1070 = vpack.c.b16 %v1006, %v1006
        %v1071 = vpack.c.b16 %v1007, %v1007
        %v1072 = vpack.c.b16 %v1008, %v1008
        %v1073 = vpack.c.b16 %v1009, %v1009
        %v1074 = vpack.c.b16 %v1010, %v1010
        %v1075 = vpack.c.b16 %v1011, %v1011
        %v1076 = vpack.c.b16 %v1012, %v1012
        %v1077 = vpack.c.b16 %v1013, %v1013
        %v1078 = vpack.c.b16 %v1014, %v1014
        %v1079 = vpack.c.b16 %v1015, %v1015
        %v1080 = vpack.c.b16 %v1016, %v1016
        %v1081 = vpack.c.b16 %v1017, %v1017
        %v1082 = vpack.c.b16 %v1018, %v1018
        %v1083 = vpack.c.b16 %v1019, %v1019
        %v1084 = vpack.c.b16 %v1020, %v1020
        %v1085 = vpack.c.b16 %v1021, %v1021
        %v1086 = vpack.c.b16 %v1022, %v1022
        %v1087 = vpack.c.b16 %v1023, %v1023
        %vm1152 = vcmask 257024
        %1153 = vst.msk [vmem:[%s172] sm:$0xf] %vm1152, %v1024
        %1154 = vst.msk [vmem:[%s172 + $0x4] sm:$0xf] %vm1152, %v1025
        %1155 = vst.msk [vmem:[%s172 + $0x8] sm:$0xf] %vm1152, %v1026
        %1156 = vst.msk [vmem:[%s172 + $0xc] sm:$0xf] %vm1152, %v1027
        %1157 = vst.msk [vmem:[%s172 + $0x10] sm:$0xf] %vm1152, %v1028
        %1158 = vst.msk [vmem:[%s172 + $0x14] sm:$0xf] %vm1152, %v1029
        %1159 = vst.msk [vmem:[%s172 + $0x18] sm:$0xf] %vm1152, %v1030
        %1160 = vst.msk [vmem:[%s172 + $0x1c] sm:$0xf] %vm1152, %v1031
        %1161 = vst.msk [vmem:[%s172 + $0x20] sm:$0xf] %vm1152, %v1032
        %1162 = vst.msk [vmem:[%s172 + $0x24] sm:$0xf] %vm1152, %v1033
        %1163 = vst.msk [vmem:[%s172 + $0x28] sm:$0xf] %vm1152, %v1034
        %1164 = vst.msk [vmem:[%s172 + $0x2c] sm:$0xf] %vm1152, %v1035
        %1165 = vst.msk [vmem:[%s172 + $0x30] sm:$0xf] %vm1152, %v1036
        %1166 = vst.msk [vmem:[%s172 + $0x34] sm:$0xf] %vm1152, %v1037
        %1167 = vst.msk [vmem:[%s172 + $0x38] sm:$0xf] %vm1152, %v1038
        %1168 = vst.msk [vmem:[%s172 + $0x3c] sm:$0xf] %vm1152, %v1039
        %1169 = vst.msk [vmem:[%s172 + $0x40] sm:$0xf] %vm1152, %v1040
        %1170 = vst.msk [vmem:[%s172 + $0x44] sm:$0xf] %vm1152, %v1041
        %1171 = vst.msk [vmem:[%s172 + $0x48] sm:$0xf] %vm1152, %v1042
        %1172 = vst.msk [vmem:[%s172 + $0x4c] sm:$0xf] %vm1152, %v1043
        %1173 = vst.msk [vmem:[%s172 + $0x50] sm:$0xf] %vm1152, %v1044
        %1174 = vst.msk [vmem:[%s172 + $0x54] sm:$0xf] %vm1152, %v1045
        %1175 = vst.msk [vmem:[%s172 + $0x58] sm:$0xf] %vm1152, %v1046
        %1176 = vst.msk [vmem:[%s172 + $0x5c] sm:$0xf] %vm1152, %v1047
        %1177 = vst.msk [vmem:[%s172 + $0x60] sm:$0xf] %vm1152, %v1048
        %1178 = vst.msk [vmem:[%s172 + $0x64] sm:$0xf] %vm1152, %v1049
        %1179 = vst.msk [vmem:[%s172 + $0x68] sm:$0xf] %vm1152, %v1050
        %1180 = vst.msk [vmem:[%s172 + $0x6c] sm:$0xf] %vm1152, %v1051
        %1181 = vst.msk [vmem:[%s172 + $0x70] sm:$0xf] %vm1152, %v1052
        %1182 = vst.msk [vmem:[%s172 + $0x74] sm:$0xf] %vm1152, %v1053
        %1183 = vst.msk [vmem:[%s172 + $0x78] sm:$0xf] %vm1152, %v1054
        %1184 = vst.msk [vmem:[%s172 + $0x7c] sm:$0xf] %vm1152, %v1055
        %1185 = vst.msk [vmem:[%s172 + $0x80] sm:$0xf] %vm1152, %v1056
        %1186 = vst.msk [vmem:[%s172 + $0x84] sm:$0xf] %vm1152, %v1057
        %1187 = vst.msk [vmem:[%s172 + $0x88] sm:$0xf] %vm1152, %v1058
        %1188 = vst.msk [vmem:[%s172 + $0x8c] sm:$0xf] %vm1152, %v1059
        %1189 = vst.msk [vmem:[%s172 + $0x90] sm:$0xf] %vm1152, %v1060
        %1190 = vst.msk [vmem:[%s172 + $0x94] sm:$0xf] %vm1152, %v1061
        %1191 = vst.msk [vmem:[%s172 + $0x98] sm:$0xf] %vm1152, %v1062
        %1192 = vst.msk [vmem:[%s172 + $0x9c] sm:$0xf] %vm1152, %v1063
        %1193 = vst.msk [vmem:[%s172 + $0xa0] sm:$0xf] %vm1152, %v1064
        %1194 = vst.msk [vmem:[%s172 + $0xa4] sm:$0xf] %vm1152, %v1065
        %1195 = vst.msk [vmem:[%s172 + $0xa8] sm:$0xf] %vm1152, %v1066
        %1196 = vst.msk [vmem:[%s172 + $0xac] sm:$0xf] %vm1152, %v1067
        %1197 = vst.msk [vmem:[%s172 + $0xb0] sm:$0xf] %vm1152, %v1068
        %1198 = vst.msk [vmem:[%s172 + $0xb4] sm:$0xf] %vm1152, %v1069
        %1199 = vst.msk [vmem:[%s172 + $0xb8] sm:$0xf] %vm1152, %v1070
        %1200 = vst.msk [vmem:[%s172 + $0xbc] sm:$0xf] %vm1152, %v1071
        %1201 = vst.msk [vmem:[%s172 + $0xc0] sm:$0xf] %vm1152, %v1072
        %1202 = vst.msk [vmem:[%s172 + $0xc4] sm:$0xf] %vm1152, %v1073
        %1203 = vst.msk [vmem:[%s172 + $0xc8] sm:$0xf] %vm1152, %v1074
        %1204 = vst.msk [vmem:[%s172 + $0xcc] sm:$0xf] %vm1152, %v1075
        %1205 = vst.msk [vmem:[%s172 + $0xd0] sm:$0xf] %vm1152, %v1076
        %1206 = vst.msk [vmem:[%s172 + $0xd4] sm:$0xf] %vm1152, %v1077
        %1207 = vst.msk [vmem:[%s172 + $0xd8] sm:$0xf] %vm1152, %v1078
        %1208 = vst.msk [vmem:[%s172 + $0xdc] sm:$0xf] %vm1152, %v1079
        %1209 = vst.msk [vmem:[%s172 + $0xe0] sm:$0xf] %vm1152, %v1080
        %1210 = vst.msk [vmem:[%s172 + $0xe4] sm:$0xf] %vm1152, %v1081
        %1211 = vst.msk [vmem:[%s172 + $0xe8] sm:$0xf] %vm1152, %v1082
        %1212 = vst.msk [vmem:[%s172 + $0xec] sm:$0xf] %vm1152, %v1083
        %1213 = vst.msk [vmem:[%s172 + $0xf0] sm:$0xf] %vm1152, %v1084
        %1214 = vst.msk [vmem:[%s172 + $0xf4] sm:$0xf] %vm1152, %v1085
        %1215 = vst.msk [vmem:[%s172 + $0xf8] sm:$0xf] %vm1152, %v1086
        %1216 = vst.msk [vmem:[%s172 + $0xfc] sm:$0xf] %vm1152, %v1087
        %s1217 = sand.u32 %s90, 1
        %s1218 = sand.u32 %s90, 1
        %s1219 = smul.addr %s1218, 256
        %s1220 = scalar_lea.vmem [#allocation2], %s1219
        // Predicated region
        $region33: #{improved_digit_recognizer_forward.7} parent=31 // pred_check
          %p1221 = pneg %p100
        $region34: #{improved_digit_recognizer_forward.7} parent=31 // pred_check_branch
          %1223 = sbr.rel (%p1221) target = $region36
        $region35: #{improved_digit_recognizer_forward.7} parent=31 // pred_region
          %s1224 = smul.u32 64, %s14
          %s1225 = ssub.s32 196, %s1224
          %p1226 = scmp.lt.s32.totalorder %s1225, 64
          %s1227 = scalar_select %p1226, %s1225, 64
          %s1228 = smul.u32 64, %s1227
          %p1229 = scmp.ne.s32.totalorder 0, %s1228
          %s1230 = smul.addr %s1224, 4
          %s1231 = scalar_lea.vmem %s3, %s1230
          // Predicated region
          $region37: #{improved_digit_recognizer_forward.7} parent=35 // pred_check
            %p1232 = pneg %p1229
          $region38: #{improved_digit_recognizer_forward.7} parent=35 // pred_check_branch
            %1234 = sbr.rel (%p1232) target = $region40
          $region39: #{improved_digit_recognizer_forward.7} parent=35 // pred_region
            // Predicated region
            $region41: #{improved_digit_recognizer_forward.7} parent=39 // pred_check
              _
            $region42: #{improved_digit_recognizer_forward.7} parent=39 // pred_check_branch
              %1236 = sbr.rel target = $region44
            $region43: #{improved_digit_recognizer_forward.7} parent=39 // pred_region
              // Predicated region
              $region63: #{improved_digit_recognizer_forward.7} parent=43 // pred_check
                _
              $region64: #{improved_digit_recognizer_forward.7} parent=43 // pred_check_branch
                %1412 = sbr.rel (0) target = $region66
              $region65: #{improved_digit_recognizer_forward.7} parent=43 // pred_region
                %s1414 = ssub.s32 16, 1
                %s1415 = sshrl.u32 %s1227, 6
                // While loop
                $region67: #{improved_digit_recognizer_forward.7} parent=65 // loop_pre_header
                  _
                $region68: #{improved_digit_recognizer_forward.7} parent=65 // loop_header
                  %s1417 = sphi 0, %s1419
                  %p1418 = scmp.ge.s32.totalorder %s1417, %s1415
                  %s1422 = sphi 0, %s1555
                  %s1423 = sphi %s1220, %s1558
                  %s1424 = sphi %s1231, %s1559
                $region69: #{improved_digit_recognizer_forward.7} parent=65 // loop_header_branch
                  %1421 = sbr.rel (%p1418) target = $region73
                $region70: #{improved_digit_recognizer_forward.7} parent=65 // loop_body
                  %v1425 = vld [vmem:[%s1423] sm:%s1414]
                  %1426 = vst [vmem:[%s1424] sm:%s1414] %v1425
                  %v1427 = vld [vmem:[%s1423 + $0x4] sm:%s1414]
                  %1428 = vst [vmem:[%s1424 + $0x4] sm:%s1414] %v1427
                  %v1429 = vld [vmem:[%s1423 + $0x8] sm:%s1414]
                  %1430 = vst [vmem:[%s1424 + $0x8] sm:%s1414] %v1429
                  %v1431 = vld [vmem:[%s1423 + $0xc] sm:%s1414]
                  %1432 = vst [vmem:[%s1424 + $0xc] sm:%s1414] %v1431
                  %v1433 = vld [vmem:[%s1423 + $0x10] sm:%s1414]
                  %1434 = vst [vmem:[%s1424 + $0x10] sm:%s1414] %v1433
                  %v1435 = vld [vmem:[%s1423 + $0x14] sm:%s1414]
                  %1436 = vst [vmem:[%s1424 + $0x14] sm:%s1414] %v1435
                  %v1437 = vld [vmem:[%s1423 + $0x18] sm:%s1414]
                  %1438 = vst [vmem:[%s1424 + $0x18] sm:%s1414] %v1437
                  %v1439 = vld [vmem:[%s1423 + $0x1c] sm:%s1414]
                  %1440 = vst [vmem:[%s1424 + $0x1c] sm:%s1414] %v1439
                  %v1441 = vld [vmem:[%s1423 + $0x20] sm:%s1414]
                  %1442 = vst [vmem:[%s1424 + $0x20] sm:%s1414] %v1441
                  %v1443 = vld [vmem:[%s1423 + $0x24] sm:%s1414]
                  %1444 = vst [vmem:[%s1424 + $0x24] sm:%s1414] %v1443
                  %v1445 = vld [vmem:[%s1423 + $0x28] sm:%s1414]
                  %1446 = vst [vmem:[%s1424 + $0x28] sm:%s1414] %v1445
                  %v1447 = vld [vmem:[%s1423 + $0x2c] sm:%s1414]
                  %1448 = vst [vmem:[%s1424 + $0x2c] sm:%s1414] %v1447
                  %v1449 = vld [vmem:[%s1423 + $0x30] sm:%s1414]
                  %1450 = vst [vmem:[%s1424 + $0x30] sm:%s1414] %v1449
                  %v1451 = vld [vmem:[%s1423 + $0x34] sm:%s1414]
                  %1452 = vst [vmem:[%s1424 + $0x34] sm:%s1414] %v1451
                  %v1453 = vld [vmem:[%s1423 + $0x38] sm:%s1414]
                  %1454 = vst [vmem:[%s1424 + $0x38] sm:%s1414] %v1453
                  %v1455 = vld [vmem:[%s1423 + $0x3c] sm:%s1414]
                  %1456 = vst [vmem:[%s1424 + $0x3c] sm:%s1414] %v1455
                  %v1457 = vld [vmem:[%s1423 + $0x40] sm:%s1414]
                  %1458 = vst [vmem:[%s1424 + $0x40] sm:%s1414] %v1457
                  %v1459 = vld [vmem:[%s1423 + $0x44] sm:%s1414]
                  %1460 = vst [vmem:[%s1424 + $0x44] sm:%s1414] %v1459
                  %v1461 = vld [vmem:[%s1423 + $0x48] sm:%s1414]
                  %1462 = vst [vmem:[%s1424 + $0x48] sm:%s1414] %v1461
                  %v1463 = vld [vmem:[%s1423 + $0x4c] sm:%s1414]
                  %1464 = vst [vmem:[%s1424 + $0x4c] sm:%s1414] %v1463
                  %v1465 = vld [vmem:[%s1423 + $0x50] sm:%s1414]
                  %1466 = vst [vmem:[%s1424 + $0x50] sm:%s1414] %v1465
                  %v1467 = vld [vmem:[%s1423 + $0x54] sm:%s1414]
                  %1468 = vst [vmem:[%s1424 + $0x54] sm:%s1414] %v1467
                  %v1469 = vld [vmem:[%s1423 + $0x58] sm:%s1414]
                  %1470 = vst [vmem:[%s1424 + $0x58] sm:%s1414] %v1469
                  %v1471 = vld [vmem:[%s1423 + $0x5c] sm:%s1414]
                  %1472 = vst [vmem:[%s1424 + $0x5c] sm:%s1414] %v1471
                  %v1473 = vld [vmem:[%s1423 + $0x60] sm:%s1414]
                  %1474 = vst [vmem:[%s1424 + $0x60] sm:%s1414] %v1473
                  %v1475 = vld [vmem:[%s1423 + $0x64] sm:%s1414]
                  %1476 = vst [vmem:[%s1424 + $0x64] sm:%s1414] %v1475
                  %v1477 = vld [vmem:[%s1423 + $0x68] sm:%s1414]
                  %1478 = vst [vmem:[%s1424 + $0x68] sm:%s1414] %v1477
                  %v1479 = vld [vmem:[%s1423 + $0x6c] sm:%s1414]
                  %1480 = vst [vmem:[%s1424 + $0x6c] sm:%s1414] %v1479
                  %v1481 = vld [vmem:[%s1423 + $0x70] sm:%s1414]
                  %1482 = vst [vmem:[%s1424 + $0x70] sm:%s1414] %v1481
                  %v1483 = vld [vmem:[%s1423 + $0x74] sm:%s1414]
                  %1484 = vst [vmem:[%s1424 + $0x74] sm:%s1414] %v1483
                  %v1485 = vld [vmem:[%s1423 + $0x78] sm:%s1414]
                  %1486 = vst [vmem:[%s1424 + $0x78] sm:%s1414] %v1485
                  %v1487 = vld [vmem:[%s1423 + $0x7c] sm:%s1414]
                  %1488 = vst [vmem:[%s1424 + $0x7c] sm:%s1414] %v1487
                  %v1489 = vld [vmem:[%s1423 + $0x80] sm:%s1414]
                  %1490 = vst [vmem:[%s1424 + $0x80] sm:%s1414] %v1489
                  %v1491 = vld [vmem:[%s1423 + $0x84] sm:%s1414]
                  %1492 = vst [vmem:[%s1424 + $0x84] sm:%s1414] %v1491
                  %v1493 = vld [vmem:[%s1423 + $0x88] sm:%s1414]
                  %1494 = vst [vmem:[%s1424 + $0x88] sm:%s1414] %v1493
                  %v1495 = vld [vmem:[%s1423 + $0x8c] sm:%s1414]
                  %1496 = vst [vmem:[%s1424 + $0x8c] sm:%s1414] %v1495
                  %v1497 = vld [vmem:[%s1423 + $0x90] sm:%s1414]
                  %1498 = vst [vmem:[%s1424 + $0x90] sm:%s1414] %v1497
                  %v1499 = vld [vmem:[%s1423 + $0x94] sm:%s1414]
                  %1500 = vst [vmem:[%s1424 + $0x94] sm:%s1414] %v1499
                  %v1501 = vld [vmem:[%s1423 + $0x98] sm:%s1414]
                  %1502 = vst [vmem:[%s1424 + $0x98] sm:%s1414] %v1501
                  %v1503 = vld [vmem:[%s1423 + $0x9c] sm:%s1414]
                  %1504 = vst [vmem:[%s1424 + $0x9c] sm:%s1414] %v1503
                  %v1505 = vld [vmem:[%s1423 + $0xa0] sm:%s1414]
                  %1506 = vst [vmem:[%s1424 + $0xa0] sm:%s1414] %v1505
                  %v1507 = vld [vmem:[%s1423 + $0xa4] sm:%s1414]
                  %1508 = vst [vmem:[%s1424 + $0xa4] sm:%s1414] %v1507
                  %v1509 = vld [vmem:[%s1423 + $0xa8] sm:%s1414]
                  %1510 = vst [vmem:[%s1424 + $0xa8] sm:%s1414] %v1509
                  %v1511 = vld [vmem:[%s1423 + $0xac] sm:%s1414]
                  %1512 = vst [vmem:[%s1424 + $0xac] sm:%s1414] %v1511
                  %v1513 = vld [vmem:[%s1423 + $0xb0] sm:%s1414]
                  %1514 = vst [vmem:[%s1424 + $0xb0] sm:%s1414] %v1513
                  %v1515 = vld [vmem:[%s1423 + $0xb4] sm:%s1414]
                  %1516 = vst [vmem:[%s1424 + $0xb4] sm:%s1414] %v1515
                  %v1517 = vld [vmem:[%s1423 + $0xb8] sm:%s1414]
                  %1518 = vst [vmem:[%s1424 + $0xb8] sm:%s1414] %v1517
                  %v1519 = vld [vmem:[%s1423 + $0xbc] sm:%s1414]
                  %1520 = vst [vmem:[%s1424 + $0xbc] sm:%s1414] %v1519
                  %v1521 = vld [vmem:[%s1423 + $0xc0] sm:%s1414]
                  %1522 = vst [vmem:[%s1424 + $0xc0] sm:%s1414] %v1521
                  %v1523 = vld [vmem:[%s1423 + $0xc4] sm:%s1414]
                  %1524 = vst [vmem:[%s1424 + $0xc4] sm:%s1414] %v1523
                  %v1525 = vld [vmem:[%s1423 + $0xc8] sm:%s1414]
                  %1526 = vst [vmem:[%s1424 + $0xc8] sm:%s1414] %v1525
                  %v1527 = vld [vmem:[%s1423 + $0xcc] sm:%s1414]
                  %1528 = vst [vmem:[%s1424 + $0xcc] sm:%s1414] %v1527
                  %v1529 = vld [vmem:[%s1423 + $0xd0] sm:%s1414]
                  %1530 = vst [vmem:[%s1424 + $0xd0] sm:%s1414] %v1529
                  %v1531 = vld [vmem:[%s1423 + $0xd4] sm:%s1414]
                  %1532 = vst [vmem:[%s1424 + $0xd4] sm:%s1414] %v1531
                  %v1533 = vld [vmem:[%s1423 + $0xd8] sm:%s1414]
                  %1534 = vst [vmem:[%s1424 + $0xd8] sm:%s1414] %v1533
                  %v1535 = vld [vmem:[%s1423 + $0xdc] sm:%s1414]
                  %1536 = vst [vmem:[%s1424 + $0xdc] sm:%s1414] %v1535
                  %v1537 = vld [vmem:[%s1423 + $0xe0] sm:%s1414]
                  %1538 = vst [vmem:[%s1424 + $0xe0] sm:%s1414] %v1537
                  %v1539 = vld [vmem:[%s1423 + $0xe4] sm:%s1414]
                  %1540 = vst [vmem:[%s1424 + $0xe4] sm:%s1414] %v1539
                  %v1541 = vld [vmem:[%s1423 + $0xe8] sm:%s1414]
                  %1542 = vst [vmem:[%s1424 + $0xe8] sm:%s1414] %v1541
                  %v1543 = vld [vmem:[%s1423 + $0xec] sm:%s1414]
                  %1544 = vst [vmem:[%s1424 + $0xec] sm:%s1414] %v1543
                  %v1545 = vld [vmem:[%s1423 + $0xf0] sm:%s1414]
                  %1546 = vst [vmem:[%s1424 + $0xf0] sm:%s1414] %v1545
                  %v1547 = vld [vmem:[%s1423 + $0xf4] sm:%s1414]
                  %1548 = vst [vmem:[%s1424 + $0xf4] sm:%s1414] %v1547
                  %v1549 = vld [vmem:[%s1423 + $0xf8] sm:%s1414]
                  %1550 = vst [vmem:[%s1424 + $0xf8] sm:%s1414] %v1549
                  %v1551 = vld [vmem:[%s1423 + $0xfc] sm:%s1414]
                  %1552 = vst [vmem:[%s1424 + $0xfc] sm:%s1414] %v1551
                  %s1553 = sadd.s32 1, %s1422
                  %p1554 = scmp.ge.s32.totalorder %s1553, %s1415
                  %s1555 = scalar_select %p1554, 0, %s1553
                  %s1556 = smul.u32 %s1555, 256
                  %s1557 = smul.u32 %s1555, 256
                  %s1558 = scalar_lea.vmem %s1220, %s1556 [#allocation2]
                  %s1559 = scalar_lea.vmem %s1231, %s1557
                $region71: #{improved_digit_recognizer_forward.7} parent=65 // loop_footer
                  %s1419 = sadd.s32 %s1417, 1
                $region72: #{improved_digit_recognizer_forward.7} parent=65 // loop_footer_branch
                  %1416 = sbr.rel target = $region68
                $region73: #{improved_digit_recognizer_forward.7} parent=65 // loop_exit
                  _
                %s1560 = sshrl.u32 %s1227, 6
                %s1561 = sand.u32 %s1227, 63
                %s1562 = smul.u32 %s1560, 64
                %s1563 = smul.u32 4, %s1562
                %s1564 = scalar_lea.vmem %s1220, %s1563 [#allocation2]
                %s1565 = smul.u32 4, %s1562
                %s1566 = scalar_lea.vmem %s1231, %s1565
                // While loop
                $region74: #{improved_digit_recognizer_forward.7} parent=65 // loop_pre_header
                  _
                $region75: #{improved_digit_recognizer_forward.7} parent=65 // loop_header
                  %s1568 = sphi 0, %s1570
                  %p1569 = scmp.ge.s32.totalorder %s1568, %s1561
                  %s1573 = sphi 0, %s1580
                  %s1574 = sphi %s1564, %s1583
                  %s1575 = sphi %s1566, %s1584
                $region76: #{improved_digit_recognizer_forward.7} parent=65 // loop_header_branch
                  %1572 = sbr.rel (%p1569) target = $region80
                $region77: #{improved_digit_recognizer_forward.7} parent=65 // loop_body
                  %v1576 = vld [vmem:[%s1574] sm:%s1414]
                  %1577 = vst [vmem:[%s1575] sm:%s1414] %v1576
                  %s1578 = sadd.s32 1, %s1573
                  %p1579 = scmp.ge.s32.totalorder %s1578, %s1561
                  %s1580 = scalar_select %p1579, 0, %s1578
                  %s1581 = smul.u32 %s1580, 4
                  %s1582 = smul.u32 %s1580, 4
                  %s1583 = scalar_lea.vmem %s1564, %s1581 [#allocation2]
                  %s1584 = scalar_lea.vmem %s1566, %s1582
                $region78: #{improved_digit_recognizer_forward.7} parent=65 // loop_footer
                  %s1570 = sadd.s32 %s1568, 1
                $region79: #{improved_digit_recognizer_forward.7} parent=65 // loop_footer_branch
                  %1567 = sbr.rel target = $region75
                $region80: #{improved_digit_recognizer_forward.7} parent=65 // loop_exit
                  _
              $region66: #{improved_digit_recognizer_forward.7} parent=43 // pred_fallthru
                _
            $region44: #{improved_digit_recognizer_forward.7} parent=39 // pred_fallthru
              _
            // Predicated region
            $region45: #{improved_digit_recognizer_forward.7} parent=39 // pred_check
              _
            $region46: #{improved_digit_recognizer_forward.7} parent=39 // pred_check_branch
              %1238 = sbr.rel (0) target = $region48
            $region47: #{improved_digit_recognizer_forward.7} parent=39 // pred_region
              %s1240 = ssub.s32 16, 1
              %s1241 = sshrl.u32 %s1227, 6
              // While loop
              $region49: #{improved_digit_recognizer_forward.7} parent=47 // loop_pre_header
                _
              $region50: #{improved_digit_recognizer_forward.7} parent=47 // loop_header
                %s1243 = sphi 0, %s1245
                %p1244 = scmp.ge.s32.totalorder %s1243, %s1241
                %s1248 = sphi 0, %s1381
                %s1249 = sphi %s1220, %s1384
                %s1250 = sphi %s1231, %s1385
              $region51: #{improved_digit_recognizer_forward.7} parent=47 // loop_header_branch
                %1247 = sbr.rel (%p1244) target = $region55
              $region52: #{improved_digit_recognizer_forward.7} parent=47 // loop_body
                %v1251 = vld [vmem:[%s1249] sm:%s1240]
                %1252 = vst [vmem:[%s1250] sm:%s1240] %v1251
                %v1253 = vld [vmem:[%s1249 + $0x4] sm:%s1240]
                %1254 = vst [vmem:[%s1250 + $0x4] sm:%s1240] %v1253
                %v1255 = vld [vmem:[%s1249 + $0x8] sm:%s1240]
                %1256 = vst [vmem:[%s1250 + $0x8] sm:%s1240] %v1255
                %v1257 = vld [vmem:[%s1249 + $0xc] sm:%s1240]
                %1258 = vst [vmem:[%s1250 + $0xc] sm:%s1240] %v1257
                %v1259 = vld [vmem:[%s1249 + $0x10] sm:%s1240]
                %1260 = vst [vmem:[%s1250 + $0x10] sm:%s1240] %v1259
                %v1261 = vld [vmem:[%s1249 + $0x14] sm:%s1240]
                %1262 = vst [vmem:[%s1250 + $0x14] sm:%s1240] %v1261
                %v1263 = vld [vmem:[%s1249 + $0x18] sm:%s1240]
                %1264 = vst [vmem:[%s1250 + $0x18] sm:%s1240] %v1263
                %v1265 = vld [vmem:[%s1249 + $0x1c] sm:%s1240]
                %1266 = vst [vmem:[%s1250 + $0x1c] sm:%s1240] %v1265
                %v1267 = vld [vmem:[%s1249 + $0x20] sm:%s1240]
                %1268 = vst [vmem:[%s1250 + $0x20] sm:%s1240] %v1267
                %v1269 = vld [vmem:[%s1249 + $0x24] sm:%s1240]
                %1270 = vst [vmem:[%s1250 + $0x24] sm:%s1240] %v1269
                %v1271 = vld [vmem:[%s1249 + $0x28] sm:%s1240]
                %1272 = vst [vmem:[%s1250 + $0x28] sm:%s1240] %v1271
                %v1273 = vld [vmem:[%s1249 + $0x2c] sm:%s1240]
                %1274 = vst [vmem:[%s1250 + $0x2c] sm:%s1240] %v1273
                %v1275 = vld [vmem:[%s1249 + $0x30] sm:%s1240]
                %1276 = vst [vmem:[%s1250 + $0x30] sm:%s1240] %v1275
                %v1277 = vld [vmem:[%s1249 + $0x34] sm:%s1240]
                %1278 = vst [vmem:[%s1250 + $0x34] sm:%s1240] %v1277
                %v1279 = vld [vmem:[%s1249 + $0x38] sm:%s1240]
                %1280 = vst [vmem:[%s1250 + $0x38] sm:%s1240] %v1279
                %v1281 = vld [vmem:[%s1249 + $0x3c] sm:%s1240]
                %1282 = vst [vmem:[%s1250 + $0x3c] sm:%s1240] %v1281
                %v1283 = vld [vmem:[%s1249 + $0x40] sm:%s1240]
                %1284 = vst [vmem:[%s1250 + $0x40] sm:%s1240] %v1283
                %v1285 = vld [vmem:[%s1249 + $0x44] sm:%s1240]
                %1286 = vst [vmem:[%s1250 + $0x44] sm:%s1240] %v1285
                %v1287 = vld [vmem:[%s1249 + $0x48] sm:%s1240]
                %1288 = vst [vmem:[%s1250 + $0x48] sm:%s1240] %v1287
                %v1289 = vld [vmem:[%s1249 + $0x4c] sm:%s1240]
                %1290 = vst [vmem:[%s1250 + $0x4c] sm:%s1240] %v1289
                %v1291 = vld [vmem:[%s1249 + $0x50] sm:%s1240]
                %1292 = vst [vmem:[%s1250 + $0x50] sm:%s1240] %v1291
                %v1293 = vld [vmem:[%s1249 + $0x54] sm:%s1240]
                %1294 = vst [vmem:[%s1250 + $0x54] sm:%s1240] %v1293
                %v1295 = vld [vmem:[%s1249 + $0x58] sm:%s1240]
                %1296 = vst [vmem:[%s1250 + $0x58] sm:%s1240] %v1295
                %v1297 = vld [vmem:[%s1249 + $0x5c] sm:%s1240]
                %1298 = vst [vmem:[%s1250 + $0x5c] sm:%s1240] %v1297
                %v1299 = vld [vmem:[%s1249 + $0x60] sm:%s1240]
                %1300 = vst [vmem:[%s1250 + $0x60] sm:%s1240] %v1299
                %v1301 = vld [vmem:[%s1249 + $0x64] sm:%s1240]
                %1302 = vst [vmem:[%s1250 + $0x64] sm:%s1240] %v1301
                %v1303 = vld [vmem:[%s1249 + $0x68] sm:%s1240]
                %1304 = vst [vmem:[%s1250 + $0x68] sm:%s1240] %v1303
                %v1305 = vld [vmem:[%s1249 + $0x6c] sm:%s1240]
                %1306 = vst [vmem:[%s1250 + $0x6c] sm:%s1240] %v1305
                %v1307 = vld [vmem:[%s1249 + $0x70] sm:%s1240]
                %1308 = vst [vmem:[%s1250 + $0x70] sm:%s1240] %v1307
                %v1309 = vld [vmem:[%s1249 + $0x74] sm:%s1240]
                %1310 = vst [vmem:[%s1250 + $0x74] sm:%s1240] %v1309
                %v1311 = vld [vmem:[%s1249 + $0x78] sm:%s1240]
                %1312 = vst [vmem:[%s1250 + $0x78] sm:%s1240] %v1311
                %v1313 = vld [vmem:[%s1249 + $0x7c] sm:%s1240]
                %1314 = vst [vmem:[%s1250 + $0x7c] sm:%s1240] %v1313
                %v1315 = vld [vmem:[%s1249 + $0x80] sm:%s1240]
                %1316 = vst [vmem:[%s1250 + $0x80] sm:%s1240] %v1315
                %v1317 = vld [vmem:[%s1249 + $0x84] sm:%s1240]
                %1318 = vst [vmem:[%s1250 + $0x84] sm:%s1240] %v1317
                %v1319 = vld [vmem:[%s1249 + $0x88] sm:%s1240]
                %1320 = vst [vmem:[%s1250 + $0x88] sm:%s1240] %v1319
                %v1321 = vld [vmem:[%s1249 + $0x8c] sm:%s1240]
                %1322 = vst [vmem:[%s1250 + $0x8c] sm:%s1240] %v1321
                %v1323 = vld [vmem:[%s1249 + $0x90] sm:%s1240]
                %1324 = vst [vmem:[%s1250 + $0x90] sm:%s1240] %v1323
                %v1325 = vld [vmem:[%s1249 + $0x94] sm:%s1240]
                %1326 = vst [vmem:[%s1250 + $0x94] sm:%s1240] %v1325
                %v1327 = vld [vmem:[%s1249 + $0x98] sm:%s1240]
                %1328 = vst [vmem:[%s1250 + $0x98] sm:%s1240] %v1327
                %v1329 = vld [vmem:[%s1249 + $0x9c] sm:%s1240]
                %1330 = vst [vmem:[%s1250 + $0x9c] sm:%s1240] %v1329
                %v1331 = vld [vmem:[%s1249 + $0xa0] sm:%s1240]
                %1332 = vst [vmem:[%s1250 + $0xa0] sm:%s1240] %v1331
                %v1333 = vld [vmem:[%s1249 + $0xa4] sm:%s1240]
                %1334 = vst [vmem:[%s1250 + $0xa4] sm:%s1240] %v1333
                %v1335 = vld [vmem:[%s1249 + $0xa8] sm:%s1240]
                %1336 = vst [vmem:[%s1250 + $0xa8] sm:%s1240] %v1335
                %v1337 = vld [vmem:[%s1249 + $0xac] sm:%s1240]
                %1338 = vst [vmem:[%s1250 + $0xac] sm:%s1240] %v1337
                %v1339 = vld [vmem:[%s1249 + $0xb0] sm:%s1240]
                %1340 = vst [vmem:[%s1250 + $0xb0] sm:%s1240] %v1339
                %v1341 = vld [vmem:[%s1249 + $0xb4] sm:%s1240]
                %1342 = vst [vmem:[%s1250 + $0xb4] sm:%s1240] %v1341
                %v1343 = vld [vmem:[%s1249 + $0xb8] sm:%s1240]
                %1344 = vst [vmem:[%s1250 + $0xb8] sm:%s1240] %v1343
                %v1345 = vld [vmem:[%s1249 + $0xbc] sm:%s1240]
                %1346 = vst [vmem:[%s1250 + $0xbc] sm:%s1240] %v1345
                %v1347 = vld [vmem:[%s1249 + $0xc0] sm:%s1240]
                %1348 = vst [vmem:[%s1250 + $0xc0] sm:%s1240] %v1347
                %v1349 = vld [vmem:[%s1249 + $0xc4] sm:%s1240]
                %1350 = vst [vmem:[%s1250 + $0xc4] sm:%s1240] %v1349
                %v1351 = vld [vmem:[%s1249 + $0xc8] sm:%s1240]
                %1352 = vst [vmem:[%s1250 + $0xc8] sm:%s1240] %v1351
                %v1353 = vld [vmem:[%s1249 + $0xcc] sm:%s1240]
                %1354 = vst [vmem:[%s1250 + $0xcc] sm:%s1240] %v1353
                %v1355 = vld [vmem:[%s1249 + $0xd0] sm:%s1240]
                %1356 = vst [vmem:[%s1250 + $0xd0] sm:%s1240] %v1355
                %v1357 = vld [vmem:[%s1249 + $0xd4] sm:%s1240]
                %1358 = vst [vmem:[%s1250 + $0xd4] sm:%s1240] %v1357
                %v1359 = vld [vmem:[%s1249 + $0xd8] sm:%s1240]
                %1360 = vst [vmem:[%s1250 + $0xd8] sm:%s1240] %v1359
                %v1361 = vld [vmem:[%s1249 + $0xdc] sm:%s1240]
                %1362 = vst [vmem:[%s1250 + $0xdc] sm:%s1240] %v1361
                %v1363 = vld [vmem:[%s1249 + $0xe0] sm:%s1240]
                %1364 = vst [vmem:[%s1250 + $0xe0] sm:%s1240] %v1363
                %v1365 = vld [vmem:[%s1249 + $0xe4] sm:%s1240]
                %1366 = vst [vmem:[%s1250 + $0xe4] sm:%s1240] %v1365
                %v1367 = vld [vmem:[%s1249 + $0xe8] sm:%s1240]
                %1368 = vst [vmem:[%s1250 + $0xe8] sm:%s1240] %v1367
                %v1369 = vld [vmem:[%s1249 + $0xec] sm:%s1240]
                %1370 = vst [vmem:[%s1250 + $0xec] sm:%s1240] %v1369
                %v1371 = vld [vmem:[%s1249 + $0xf0] sm:%s1240]
                %1372 = vst [vmem:[%s1250 + $0xf0] sm:%s1240] %v1371
                %v1373 = vld [vmem:[%s1249 + $0xf4] sm:%s1240]
                %1374 = vst [vmem:[%s1250 + $0xf4] sm:%s1240] %v1373
                %v1375 = vld [vmem:[%s1249 + $0xf8] sm:%s1240]
                %1376 = vst [vmem:[%s1250 + $0xf8] sm:%s1240] %v1375
                %v1377 = vld [vmem:[%s1249 + $0xfc] sm:%s1240]
                %1378 = vst [vmem:[%s1250 + $0xfc] sm:%s1240] %v1377
                %s1379 = sadd.s32 1, %s1248
                %p1380 = scmp.ge.s32.totalorder %s1379, %s1241
                %s1381 = scalar_select %p1380, 0, %s1379
                %s1382 = smul.u32 %s1381, 256
                %s1383 = smul.u32 %s1381, 256
                %s1384 = scalar_lea.vmem %s1220, %s1382 [#allocation2]
                %s1385 = scalar_lea.vmem %s1231, %s1383
              $region53: #{improved_digit_recognizer_forward.7} parent=47 // loop_footer
                %s1245 = sadd.s32 %s1243, 1
              $region54: #{improved_digit_recognizer_forward.7} parent=47 // loop_footer_branch
                %1242 = sbr.rel target = $region50
              $region55: #{improved_digit_recognizer_forward.7} parent=47 // loop_exit
                _
              %s1386 = sshrl.u32 %s1227, 6
              %s1387 = sand.u32 %s1227, 63
              %s1388 = smul.u32 %s1386, 64
              %s1389 = smul.u32 4, %s1388
              %s1390 = scalar_lea.vmem %s1220, %s1389 [#allocation2]
              %s1391 = smul.u32 4, %s1388
              %s1392 = scalar_lea.vmem %s1231, %s1391
              // While loop
              $region56: #{improved_digit_recognizer_forward.7} parent=47 // loop_pre_header
                _
              $region57: #{improved_digit_recognizer_forward.7} parent=47 // loop_header
                %s1394 = sphi 0, %s1396
                %p1395 = scmp.ge.s32.totalorder %s1394, %s1387
                %s1399 = sphi 0, %s1406
                %s1400 = sphi %s1390, %s1409
                %s1401 = sphi %s1392, %s1410
              $region58: #{improved_digit_recognizer_forward.7} parent=47 // loop_header_branch
                %1398 = sbr.rel (%p1395) target = $region62
              $region59: #{improved_digit_recognizer_forward.7} parent=47 // loop_body
                %v1402 = vld [vmem:[%s1400] sm:%s1240]
                %1403 = vst [vmem:[%s1401] sm:%s1240] %v1402
                %s1404 = sadd.s32 1, %s1399
                %p1405 = scmp.ge.s32.totalorder %s1404, %s1387
                %s1406 = scalar_select %p1405, 0, %s1404
                %s1407 = smul.u32 %s1406, 4
                %s1408 = smul.u32 %s1406, 4
                %s1409 = scalar_lea.vmem %s1390, %s1407 [#allocation2]
                %s1410 = scalar_lea.vmem %s1392, %s1408
              $region60: #{improved_digit_recognizer_forward.7} parent=47 // loop_footer
                %s1396 = sadd.s32 %s1394, 1
              $region61: #{improved_digit_recognizer_forward.7} parent=47 // loop_footer_branch
                %1393 = sbr.rel target = $region57
              $region62: #{improved_digit_recognizer_forward.7} parent=47 // loop_exit
                _
            $region48: #{improved_digit_recognizer_forward.7} parent=39 // pred_fallthru
              _
          $region40: #{improved_digit_recognizer_forward.7} parent=35 // pred_fallthru
            _
          %1585 = vnop
        $region36: #{improved_digit_recognizer_forward.7} parent=31 // pred_fallthru
          _
      $region32: #{improved_digit_recognizer_forward.7} parent=5 // pred_fallthru
        _
      %p1586 = scmp.le.s32.totalorder 2, %s9
      // Predicated region
      $region81: #{improved_digit_recognizer_forward.7} parent=5 // pred_check
        %p1587 = pneg %p1586
      $region82: #{improved_digit_recognizer_forward.7} parent=5 // pred_check_branch
        %1589 = sbr.rel (%p1587) target = $region84
      $region83: #{improved_digit_recognizer_forward.7} parent=5 // pred_region
        %s1590 = ssub.s32 %s9, 2
        // Predicated region
        $region85: #{improved_digit_recognizer_forward.7} parent=83 // pred_check
          %p1591 = pneg %p106
        $region86: #{improved_digit_recognizer_forward.7} parent=83 // pred_check_branch
          %1593 = sbr.rel (%p1591) target = $region88
        $region87: #{improved_digit_recognizer_forward.7} parent=83 // pred_region
          %s1594 = sand.u32 %s91, 1
          %s1595 = sand.u32 %s91, 1
          %s1596 = smul.addr %s1595, 256
          %s1597 = scalar_lea.vmem [#allocation2], %s1596
        $region88: #{improved_digit_recognizer_forward.7} parent=83 // pred_fallthru
          _
      $region84: #{improved_digit_recognizer_forward.7} parent=5 // pred_fallthru
        _
    $region6: #{improved_digit_recognizer_forward.7} parent=1 // loop_footer
      %s13 = sadd.s32 1, %s9
    $region7: #{improved_digit_recognizer_forward.7} parent=1 // loop_footer_branch
      %8 = sbr.rel target = $region3
    $region8: #{improved_digit_recognizer_forward.7} parent=1 // loop_exit
      _

// kernel: improved_digit_recognizer_forward.8
$region0: #{improved_digit_recognizer_forward.8}
  #allocation0 [shape = 'u32[]', space=smem, size = 0x4, offset = 0x4, fixed_abs, tag = 'smem constant byte address 0x4 - core index']
  #allocation1 [shape = 'u32[144,128]{1,0:T(1,128)}', space=vmem, size = 0x12000, scoped, tag = 'internal scratch']
  %s0 = inlined_call_operand.vmem [shape: bf16[28,2,14,64], index: 0, kind: input, shape index: {}]
  %s1 = inlined_call_operand.vmem [shape: bf16[28,14,32], index: 1, kind: output, shape index: {}]
  %s2 = sld [smem:[#allocation0]]
  $region14: #{improved_digit_recognizer_forward.8} parent=0
    _
  %s4 = ssub.s32 1, %s2
  %s5 = scalar_select 0, %s4, %s2
  // Predicated region
  $region2: #{improved_digit_recognizer_forward.8} parent=0 // pred_check
    _
  $region3: #{improved_digit_recognizer_forward.8} parent=0 // pred_check_branch
    %7 = sbr.rel (0) target = $region5
  $region4: #{improved_digit_recognizer_forward.8} parent=0 // pred_region
    _
  $region5: #{improved_digit_recognizer_forward.8} parent=0 // pred_fallthru
    _
  %v8 = vld [vmem:[%s0] sm:$0xf]
  %v9 = vld [vmem:[%s0 + $0x4] sm:$0x7]
  %v10 = vld [vmem:[%s0 + $0x10] sm:$0xf]
  %v11 = vld [vmem:[%s0 + $0x14] sm:$0x7]
  %v12 = vld [vmem:[%s0 + $0x20] sm:$0xf]
  %v13 = vld [vmem:[%s0 + $0x24] sm:$0x7]
  %v14 = vld [vmem:[%s0 + $0x30] sm:$0xf]
  %v15 = vld [vmem:[%s0 + $0x34] sm:$0x7]
  %v16 = vld [vmem:[%s0 + $0x40] sm:$0xf]
  %v17 = vld [vmem:[%s0 + $0x44] sm:$0x7]
  %v18 = vld [vmem:[%s0 + $0x50] sm:$0xf]
  %v19 = vld [vmem:[%s0 + $0x54] sm:$0x7]
  %v20 = vld [vmem:[%s0 + $0x60] sm:$0xf]
  %v21 = vld [vmem:[%s0 + $0x64] sm:$0x7]
  %v22 = vld [vmem:[%s0 + $0x70] sm:$0xf]
  %v23 = vld [vmem:[%s0 + $0x74] sm:$0x7]
  %v24 = vld [vmem:[%s0 + $0x80] sm:$0xf]
  %v25 = vld [vmem:[%s0 + $0x84] sm:$0x7]
  %v26 = vld [vmem:[%s0 + $0x90] sm:$0xf]
  %v27 = vld [vmem:[%s0 + $0x94] sm:$0x7]
  %v28 = vld [vmem:[%s0 + $0xa0] sm:$0xf]
  %v29 = vld [vmem:[%s0 + $0xa4] sm:$0x7]
  %v30 = vld [vmem:[%s0 + $0xb0] sm:$0xf]
  %v31 = vld [vmem:[%s0 + $0xb4] sm:$0x7]
  %v32 = vld [vmem:[%s0 + $0xc0] sm:$0xf]
  %v33 = vld [vmem:[%s0 + $0xc4] sm:$0x7]
  %v34 = vld [vmem:[%s0 + $0xd0] sm:$0xf]
  %v35 = vld [vmem:[%s0 + $0xd4] sm:$0x7]
  %v36 = vld [vmem:[%s0 + $0xe0] sm:$0xf]
  %v37 = vld [vmem:[%s0 + $0xe4] sm:$0x7]
  %v38 = vld [vmem:[%s0 + $0xf0] sm:$0xf]
  %v39 = vld [vmem:[%s0 + $0xf4] sm:$0x7]
  %v40 = vld [vmem:[%s0 + $0x100] sm:$0xf]
  %v41 = vld [vmem:[%s0 + $0x104] sm:$0x7]
  %v42 = vld [vmem:[%s0 + $0x110] sm:$0xf]
  %v43 = vld [vmem:[%s0 + $0x114] sm:$0x7]
  %v44 = vld [vmem:[%s0 + $0x120] sm:$0xf]
  %v45 = vld [vmem:[%s0 + $0x124] sm:$0x7]
  %v46 = vld [vmem:[%s0 + $0x130] sm:$0xf]
  %v47 = vld [vmem:[%s0 + $0x134] sm:$0x7]
  %v48 = vld [vmem:[%s0 + $0x140] sm:$0xf]
  %v49 = vld [vmem:[%s0 + $0x144] sm:$0x7]
  %v50 = vld [vmem:[%s0 + $0x150] sm:$0xf]
  %v51 = vld [vmem:[%s0 + $0x154] sm:$0x7]
  %v52 = vld [vmem:[%s0 + $0x160] sm:$0xf]
  %v53 = vld [vmem:[%s0 + $0x164] sm:$0x7]
  %v54 = vld [vmem:[%s0 + $0x170] sm:$0xf]
  %v55 = vld [vmem:[%s0 + $0x174] sm:$0x7]
  %v56 = vld [vmem:[%s0 + $0x180] sm:$0xf]
  %v57 = vld [vmem:[%s0 + $0x184] sm:$0x7]
  %v58 = vld [vmem:[%s0 + $0x190] sm:$0xf]
  %v59 = vld [vmem:[%s0 + $0x194] sm:$0x7]
  %v60 = vld [vmem:[%s0 + $0x1a0] sm:$0xf]
  %v61 = vld [vmem:[%s0 + $0x1a4] sm:$0x7]
  %v62 = vld [vmem:[%s0 + $0x1b0] sm:$0xf]
  %v63 = vld [vmem:[%s0 + $0x1b4] sm:$0x7]
  %s64 = scalar_lea.vmem %s0, 8
  %v65 = vld [vmem:[%s64] sm:$0xf]
  %v66 = vld [vmem:[%s64 + $0x4] sm:$0x7]
  %v67 = vld [vmem:[%s64 + $0x10] sm:$0xf]
  %v68 = vld [vmem:[%s64 + $0x14] sm:$0x7]
  %v69 = vld [vmem:[%s64 + $0x20] sm:$0xf]
  %v70 = vld [vmem:[%s64 + $0x24] sm:$0x7]
  %v71 = vld [vmem:[%s64 + $0x30] sm:$0xf]
  %v72 = vld [vmem:[%s64 + $0x34] sm:$0x7]
  %v73 = vld [vmem:[%s64 + $0x40] sm:$0xf]
  %v74 = vld [vmem:[%s64 + $0x44] sm:$0x7]
  %v75 = vld [vmem:[%s64 + $0x50] sm:$0xf]
  %v76 = vld [vmem:[%s64 + $0x54] sm:$0x7]
  %v77 = vld [vmem:[%s64 + $0x60] sm:$0xf]
  %v78 = vld [vmem:[%s64 + $0x64] sm:$0x7]
  %v79 = vld [vmem:[%s64 + $0x70] sm:$0xf]
  %v80 = vld [vmem:[%s64 + $0x74] sm:$0x7]
  %v81 = vld [vmem:[%s64 + $0x80] sm:$0xf]
  %v82 = vld [vmem:[%s64 + $0x84] sm:$0x7]
  %v83 = vld [vmem:[%s64 + $0x90] sm:$0xf]
  %v84 = vld [vmem:[%s64 + $0x94] sm:$0x7]
  %v85 = vld [vmem:[%s64 + $0xa0] sm:$0xf]
  %v86 = vld [vmem:[%s64 + $0xa4] sm:$0x7]
  %v87 = vld [vmem:[%s64 + $0xb0] sm:$0xf]
  %v88 = vld [vmem:[%s64 + $0xb4] sm:$0x7]
  %v89 = vld [vmem:[%s64 + $0xc0] sm:$0xf]
  %v90 = vld [vmem:[%s64 + $0xc4] sm:$0x7]
  %v91 = vld [vmem:[%s64 + $0xd0] sm:$0xf]
  %v92 = vld [vmem:[%s64 + $0xd4] sm:$0x7]
  %v93 = vld [vmem:[%s64 + $0xe0] sm:$0xf]
  %v94 = vld [vmem:[%s64 + $0xe4] sm:$0x7]
  %v95 = vld [vmem:[%s64 + $0xf0] sm:$0xf]
  %v96 = vld [vmem:[%s64 + $0xf4] sm:$0x7]
  %v97 = vld [vmem:[%s64 + $0x100] sm:$0xf]
  %v98 = vld [vmem:[%s64 + $0x104] sm:$0x7]
  %v99 = vld [vmem:[%s64 + $0x110] sm:$0xf]
  %v100 = vld [vmem:[%s64 + $0x114] sm:$0x7]
  %v101 = vld [vmem:[%s64 + $0x120] sm:$0xf]
  %v102 = vld [vmem:[%s64 + $0x124] sm:$0x7]
  %v103 = vld [vmem:[%s64 + $0x130] sm:$0xf]
  %v104 = vld [vmem:[%s64 + $0x134] sm:$0x7]
  %v105 = vld [vmem:[%s64 + $0x140] sm:$0xf]
  %v106 = vld [vmem:[%s64 + $0x144] sm:$0x7]
  %v107 = vld [vmem:[%s64 + $0x150] sm:$0xf]
  %v108 = vld [vmem:[%s64 + $0x154] sm:$0x7]
  %v109 = vld [vmem:[%s64 + $0x160] sm:$0xf]
  %v110 = vld [vmem:[%s64 + $0x164] sm:$0x7]
  %v111 = vld [vmem:[%s64 + $0x170] sm:$0xf]
  %v112 = vld [vmem:[%s64 + $0x174] sm:$0x7]
  %v113 = vld [vmem:[%s64 + $0x180] sm:$0xf]
  %v114 = vld [vmem:[%s64 + $0x184] sm:$0x7]
  %v115 = vld [vmem:[%s64 + $0x190] sm:$0xf]
  %v116 = vld [vmem:[%s64 + $0x194] sm:$0x7]
  %v117 = vld [vmem:[%s64 + $0x1a0] sm:$0xf]
  %v118 = vld [vmem:[%s64 + $0x1a4] sm:$0x7]
  %v119 = vld [vmem:[%s64 + $0x1b0] sm:$0xf]
  %v120 = vld [vmem:[%s64 + $0x1b4] sm:$0x7]
  %v121 = vmax.bf16 %v8, %v65
  %v122 = vmax.bf16 %v9, %v66
  %v123 = vmax.bf16 %v10, %v67
  %v124 = vmax.bf16 %v11, %v68
  %v125 = vmax.bf16 %v12, %v69
  %v126 = vmax.bf16 %v13, %v70
  %v127 = vmax.bf16 %v14, %v71
  %v128 = vmax.bf16 %v15, %v72
  %v129 = vmax.bf16 %v16, %v73
  %v130 = vmax.bf16 %v17, %v74
  %v131 = vmax.bf16 %v18, %v75
  %v132 = vmax.bf16 %v19, %v76
  %v133 = vmax.bf16 %v20, %v77
  %v134 = vmax.bf16 %v21, %v78
  %v135 = vmax.bf16 %v22, %v79
  %v136 = vmax.bf16 %v23, %v80
  %v137 = vmax.bf16 %v24, %v81
  %v138 = vmax.bf16 %v25, %v82
  %v139 = vmax.bf16 %v26, %v83
  %v140 = vmax.bf16 %v27, %v84
  %v141 = vmax.bf16 %v28, %v85
  %v142 = vmax.bf16 %v29, %v86
  %v143 = vmax.bf16 %v30, %v87
  %v144 = vmax.bf16 %v31, %v88
  %v145 = vmax.bf16 %v32, %v89
  %v146 = vmax.bf16 %v33, %v90
  %v147 = vmax.bf16 %v34, %v91
  %v148 = vmax.bf16 %v35, %v92
  %v149 = vmax.bf16 %v36, %v93
  %v150 = vmax.bf16 %v37, %v94
  %v151 = vmax.bf16 %v38, %v95
  %v152 = vmax.bf16 %v39, %v96
  %v153 = vmax.bf16 %v40, %v97
  %v154 = vmax.bf16 %v41, %v98
  %v155 = vmax.bf16 %v42, %v99
  %v156 = vmax.bf16 %v43, %v100
  %v157 = vmax.bf16 %v44, %v101
  %v158 = vmax.bf16 %v45, %v102
  %v159 = vmax.bf16 %v46, %v103
  %v160 = vmax.bf16 %v47, %v104
  %v161 = vmax.bf16 %v48, %v105
  %v162 = vmax.bf16 %v49, %v106
  %v163 = vmax.bf16 %v50, %v107
  %v164 = vmax.bf16 %v51, %v108
  %v165 = vmax.bf16 %v52, %v109
  %v166 = vmax.bf16 %v53, %v110
  %v167 = vmax.bf16 %v54, %v111
  %v168 = vmax.bf16 %v55, %v112
  %v169 = vmax.bf16 %v56, %v113
  %v170 = vmax.bf16 %v57, %v114
  %v171 = vmax.bf16 %v58, %v115
  %v172 = vmax.bf16 %v59, %v116
  %v173 = vmax.bf16 %v60, %v117
  %v174 = vmax.bf16 %v61, %v118
  %v175 = vmax.bf16 %v62, %v119
  %v176 = vmax.bf16 %v63, %v120
  %233 = vrot.lane.b32.xlu0 %v121, 96
  %v234 = vpop.permute.xlu0 %233
  %235 = vrot.lane.b32.xlu0 %v122, 96
  %v236 = vpop.permute.xlu0 %235
  %237 = vrot.lane.b32.xlu0 %v123, 96
  %v238 = vpop.permute.xlu0 %237
  %239 = vrot.lane.b32.xlu0 %v124, 96
  %v240 = vpop.permute.xlu0 %239
  %241 = vrot.lane.b32.xlu0 %v125, 96
  %v242 = vpop.permute.xlu0 %241
  %243 = vrot.lane.b32.xlu0 %v126, 96
  %v244 = vpop.permute.xlu0 %243
  %245 = vrot.lane.b32.xlu0 %v127, 96
  %v246 = vpop.permute.xlu0 %245
  %247 = vrot.lane.b32.xlu0 %v128, 96
  %v248 = vpop.permute.xlu0 %247
  %249 = vrot.lane.b32.xlu0 %v129, 96
  %v250 = vpop.permute.xlu0 %249
  %251 = vrot.lane.b32.xlu0 %v130, 96
  %v252 = vpop.permute.xlu0 %251
  %253 = vrot.lane.b32.xlu0 %v131, 96
  %v254 = vpop.permute.xlu0 %253
  %255 = vrot.lane.b32.xlu0 %v132, 96
  %v256 = vpop.permute.xlu0 %255
  %257 = vrot.lane.b32.xlu0 %v133, 96
  %v258 = vpop.permute.xlu0 %257
  %259 = vrot.lane.b32.xlu0 %v134, 96
  %v260 = vpop.permute.xlu0 %259
  %261 = vrot.lane.b32.xlu0 %v135, 96
  %v262 = vpop.permute.xlu0 %261
  %263 = vrot.lane.b32.xlu0 %v136, 96
  %v264 = vpop.permute.xlu0 %263
  %265 = vrot.lane.b32.xlu0 %v137, 96
  %v266 = vpop.permute.xlu0 %265
  %267 = vrot.lane.b32.xlu0 %v138, 96
  %v268 = vpop.permute.xlu0 %267
  %269 = vrot.lane.b32.xlu0 %v139, 96
  %v270 = vpop.permute.xlu0 %269
  %271 = vrot.lane.b32.xlu0 %v140, 96
  %v272 = vpop.permute.xlu0 %271
  %273 = vrot.lane.b32.xlu0 %v141, 96
  %v274 = vpop.permute.xlu0 %273
  %275 = vrot.lane.b32.xlu0 %v142, 96
  %v276 = vpop.permute.xlu0 %275
  %277 = vrot.lane.b32.xlu0 %v143, 96
  %v278 = vpop.permute.xlu0 %277
  %279 = vrot.lane.b32.xlu0 %v144, 96
  %v280 = vpop.permute.xlu0 %279
  %281 = vrot.lane.b32.xlu0 %v145, 96
  %v282 = vpop.permute.xlu0 %281
  %283 = vrot.lane.b32.xlu0 %v146, 96
  %v284 = vpop.permute.xlu0 %283
  %285 = vrot.lane.b32.xlu0 %v147, 96
  %v286 = vpop.permute.xlu0 %285
  %287 = vrot.lane.b32.xlu0 %v148, 96
  %v288 = vpop.permute.xlu0 %287
  %289 = vrot.lane.b32.xlu0 %v149, 96
  %v290 = vpop.permute.xlu0 %289
  %291 = vrot.lane.b32.xlu0 %v150, 96
  %v292 = vpop.permute.xlu0 %291
  %293 = vrot.lane.b32.xlu0 %v151, 96
  %v294 = vpop.permute.xlu0 %293
  %295 = vrot.lane.b32.xlu0 %v152, 96
  %v296 = vpop.permute.xlu0 %295
  %297 = vrot.lane.b32.xlu0 %v153, 96
  %v298 = vpop.permute.xlu0 %297
  %299 = vrot.lane.b32.xlu0 %v154, 96
  %v300 = vpop.permute.xlu0 %299
  %301 = vrot.lane.b32.xlu0 %v155, 96
  %v302 = vpop.permute.xlu0 %301
  %303 = vrot.lane.b32.xlu0 %v156, 96
  %v304 = vpop.permute.xlu0 %303
  %305 = vrot.lane.b32.xlu0 %v157, 96
  %v306 = vpop.permute.xlu0 %305
  %307 = vrot.lane.b32.xlu0 %v158, 96
  %v308 = vpop.permute.xlu0 %307
  %309 = vrot.lane.b32.xlu0 %v159, 96
  %v310 = vpop.permute.xlu0 %309
  %311 = vrot.lane.b32.xlu0 %v160, 96
  %v312 = vpop.permute.xlu0 %311
  %313 = vrot.lane.b32.xlu0 %v161, 96
  %v314 = vpop.permute.xlu0 %313
  %315 = vrot.lane.b32.xlu0 %v162, 96
  %v316 = vpop.permute.xlu0 %315
  %317 = vrot.lane.b32.xlu0 %v163, 96
  %v318 = vpop.permute.xlu0 %317
  %319 = vrot.lane.b32.xlu0 %v164, 96
  %v320 = vpop.permute.xlu0 %319
  %321 = vrot.lane.b32.xlu0 %v165, 96
  %v322 = vpop.permute.xlu0 %321
  %323 = vrot.lane.b32.xlu0 %v166, 96
  %v324 = vpop.permute.xlu0 %323
  %325 = vrot.lane.b32.xlu0 %v167, 96
  %v326 = vpop.permute.xlu0 %325
  %327 = vrot.lane.b32.xlu0 %v168, 96
  %v328 = vpop.permute.xlu0 %327
  %329 = vrot.lane.b32.xlu0 %v169, 96
  %v330 = vpop.permute.xlu0 %329
  %331 = vrot.lane.b32.xlu0 %v170, 96
  %v332 = vpop.permute.xlu0 %331
  %333 = vrot.lane.b32.xlu0 %v171, 96
  %v334 = vpop.permute.xlu0 %333
  %335 = vrot.lane.b32.xlu0 %v172, 96
  %v336 = vpop.permute.xlu0 %335
  %337 = vrot.lane.b32.xlu0 %v173, 96
  %v338 = vpop.permute.xlu0 %337
  %339 = vrot.lane.b32.xlu0 %v174, 96
  %v340 = vpop.permute.xlu0 %339
  %341 = vrot.lane.b32.xlu0 %v175, 96
  %v342 = vpop.permute.xlu0 %341
  %343 = vrot.lane.b32.xlu0 %v176, 96
  %v344 = vpop.permute.xlu0 %343
  %v401 = vmax.bf16 %v121, %v234
  %v402 = vmax.bf16 %v122, %v236
  %v403 = vmax.bf16 %v123, %v238
  %v404 = vmax.bf16 %v124, %v240
  %v405 = vmax.bf16 %v125, %v242
  %v406 = vmax.bf16 %v126, %v244
  %v407 = vmax.bf16 %v127, %v246
  %v408 = vmax.bf16 %v128, %v248
  %v409 = vmax.bf16 %v129, %v250
  %v410 = vmax.bf16 %v130, %v252
  %v411 = vmax.bf16 %v131, %v254
  %v412 = vmax.bf16 %v132, %v256
  %v413 = vmax.bf16 %v133, %v258
  %v414 = vmax.bf16 %v134, %v260
  %v415 = vmax.bf16 %v135, %v262
  %v416 = vmax.bf16 %v136, %v264
  %v417 = vmax.bf16 %v137, %v266
  %v418 = vmax.bf16 %v138, %v268
  %v419 = vmax.bf16 %v139, %v270
  %v420 = vmax.bf16 %v140, %v272
  %v421 = vmax.bf16 %v141, %v274
  %v422 = vmax.bf16 %v142, %v276
  %v423 = vmax.bf16 %v143, %v278
  %v424 = vmax.bf16 %v144, %v280
  %v425 = vmax.bf16 %v145, %v282
  %v426 = vmax.bf16 %v146, %v284
  %v427 = vmax.bf16 %v147, %v286
  %v428 = vmax.bf16 %v148, %v288
  %v429 = vmax.bf16 %v149, %v290
  %v430 = vmax.bf16 %v150, %v292
  %v431 = vmax.bf16 %v151, %v294
  %v432 = vmax.bf16 %v152, %v296
  %v433 = vmax.bf16 %v153, %v298
  %v434 = vmax.bf16 %v154, %v300
  %v435 = vmax.bf16 %v155, %v302
  %v436 = vmax.bf16 %v156, %v304
  %v437 = vmax.bf16 %v157, %v306
  %v438 = vmax.bf16 %v158, %v308
  %v439 = vmax.bf16 %v159, %v310
  %v440 = vmax.bf16 %v160, %v312
  %v441 = vmax.bf16 %v161, %v314
  %v442 = vmax.bf16 %v162, %v316
  %v443 = vmax.bf16 %v163, %v318
  %v444 = vmax.bf16 %v164, %v320
  %v445 = vmax.bf16 %v165, %v322
  %v446 = vmax.bf16 %v166, %v324
  %v447 = vmax.bf16 %v167, %v326
  %v448 = vmax.bf16 %v168, %v328
  %v449 = vmax.bf16 %v169, %v330
  %v450 = vmax.bf16 %v170, %v332
  %v451 = vmax.bf16 %v171, %v334
  %v452 = vmax.bf16 %v172, %v336
  %v453 = vmax.bf16 %v173, %v338
  %v454 = vmax.bf16 %v174, %v340
  %v455 = vmax.bf16 %v175, %v342
  %v456 = vmax.bf16 %v176, %v344
  %vm457 = vcmask 257024
  %458 = vst.msk [vmem:[%s1] sm:$0xf] %vm457, %v401
  %vm459 = vcmask 256000
  %460 = vst.msk [vmem:[%s1 + $0x4] sm:$0x7] %vm459, %v402
  %461 = vst.msk [vmem:[%s1 + $0x8] sm:$0xf] %vm457, %v403
  %462 = vst.msk [vmem:[%s1 + $0xc] sm:$0x7] %vm459, %v404
  %463 = vst.msk [vmem:[%s1 + $0x10] sm:$0xf] %vm457, %v405
  %464 = vst.msk [vmem:[%s1 + $0x14] sm:$0x7] %vm459, %v406
  %465 = vst.msk [vmem:[%s1 + $0x18] sm:$0xf] %vm457, %v407
  %466 = vst.msk [vmem:[%s1 + $0x1c] sm:$0x7] %vm459, %v408
  %467 = vst.msk [vmem:[%s1 + $0x20] sm:$0xf] %vm457, %v409
  %468 = vst.msk [vmem:[%s1 + $0x24] sm:$0x7] %vm459, %v410
  %469 = vst.msk [vmem:[%s1 + $0x28] sm:$0xf] %vm457, %v411
  %470 = vst.msk [vmem:[%s1 + $0x2c] sm:$0x7] %vm459, %v412
  %471 = vst.msk [vmem:[%s1 + $0x30] sm:$0xf] %vm457, %v413
  %472 = vst.msk [vmem:[%s1 + $0x34] sm:$0x7] %vm459, %v414
  %473 = vst.msk [vmem:[%s1 + $0x38] sm:$0xf] %vm457, %v415
  %474 = vst.msk [vmem:[%s1 + $0x3c] sm:$0x7] %vm459, %v416
  %475 = vst.msk [vmem:[%s1 + $0x40] sm:$0xf] %vm457, %v417
  %476 = vst.msk [vmem:[%s1 + $0x44] sm:$0x7] %vm459, %v418
  %477 = vst.msk [vmem:[%s1 + $0x48] sm:$0xf] %vm457, %v419
  %478 = vst.msk [vmem:[%s1 + $0x4c] sm:$0x7] %vm459, %v420
  %479 = vst.msk [vmem:[%s1 + $0x50] sm:$0xf] %vm457, %v421
  %480 = vst.msk [vmem:[%s1 + $0x54] sm:$0x7] %vm459, %v422
  %481 = vst.msk [vmem:[%s1 + $0x58] sm:$0xf] %vm457, %v423
  %482 = vst.msk [vmem:[%s1 + $0x5c] sm:$0x7] %vm459, %v424
  %483 = vst.msk [vmem:[%s1 + $0x60] sm:$0xf] %vm457, %v425
  %484 = vst.msk [vmem:[%s1 + $0x64] sm:$0x7] %vm459, %v426
  %485 = vst.msk [vmem:[%s1 + $0x68] sm:$0xf] %vm457, %v427
  %486 = vst.msk [vmem:[%s1 + $0x6c] sm:$0x7] %vm459, %v428
  %487 = vst.msk [vmem:[%s1 + $0x70] sm:$0xf] %vm457, %v429
  %488 = vst.msk [vmem:[%s1 + $0x74] sm:$0x7] %vm459, %v430
  %489 = vst.msk [vmem:[%s1 + $0x78] sm:$0xf] %vm457, %v431
  %490 = vst.msk [vmem:[%s1 + $0x7c] sm:$0x7] %vm459, %v432
  %491 = vst.msk [vmem:[%s1 + $0x80] sm:$0xf] %vm457, %v433
  %492 = vst.msk [vmem:[%s1 + $0x84] sm:$0x7] %vm459, %v434
  %493 = vst.msk [vmem:[%s1 + $0x88] sm:$0xf] %vm457, %v435
  %494 = vst.msk [vmem:[%s1 + $0x8c] sm:$0x7] %vm459, %v436
  %495 = vst.msk [vmem:[%s1 + $0x90] sm:$0xf] %vm457, %v437
  %496 = vst.msk [vmem:[%s1 + $0x94] sm:$0x7] %vm459, %v438
  %497 = vst.msk [vmem:[%s1 + $0x98] sm:$0xf] %vm457, %v439
  %498 = vst.msk [vmem:[%s1 + $0x9c] sm:$0x7] %vm459, %v440
  %499 = vst.msk [vmem:[%s1 + $0xa0] sm:$0xf] %vm457, %v441
  %500 = vst.msk [vmem:[%s1 + $0xa4] sm:$0x7] %vm459, %v442
  %501 = vst.msk [vmem:[%s1 + $0xa8] sm:$0xf] %vm457, %v443
  %502 = vst.msk [vmem:[%s1 + $0xac] sm:$0x7] %vm459, %v444
  %503 = vst.msk [vmem:[%s1 + $0xb0] sm:$0xf] %vm457, %v445
  %504 = vst.msk [vmem:[%s1 + $0xb4] sm:$0x7] %vm459, %v446
  %505 = vst.msk [vmem:[%s1 + $0xb8] sm:$0xf] %vm457, %v447
  %506 = vst.msk [vmem:[%s1 + $0xbc] sm:$0x7] %vm459, %v448
  %507 = vst.msk [vmem:[%s1 + $0xc0] sm:$0xf] %vm457, %v449
  %508 = vst.msk [vmem:[%s1 + $0xc4] sm:$0x7] %vm459, %v450
  %509 = vst.msk [vmem:[%s1 + $0xc8] sm:$0xf] %vm457, %v451
  %510 = vst.msk [vmem:[%s1 + $0xcc] sm:$0x7] %vm459, %v452
  %511 = vst.msk [vmem:[%s1 + $0xd0] sm:$0xf] %vm457, %v453
  %512 = vst.msk [vmem:[%s1 + $0xd4] sm:$0x7] %vm459, %v454
  %513 = vst.msk [vmem:[%s1 + $0xd8] sm:$0xf] %vm457, %v455
  %514 = vst.msk [vmem:[%s1 + $0xdc] sm:$0x7] %vm459, %v456
  // Predicated region
  $region6: #{improved_digit_recognizer_forward.8} parent=0 // pred_check
    _
  $region7: #{improved_digit_recognizer_forward.8} parent=0 // pred_check_branch
    %516 = sbr.rel (0) target = $region9
  $region8: #{improved_digit_recognizer_forward.8} parent=0 // pred_region
    _
  $region9: #{improved_digit_recognizer_forward.8} parent=0 // pred_fallthru
    _
  // Predicated region
  $region10: #{improved_digit_recognizer_forward.8} parent=0 // pred_check
    _
  $region11: #{improved_digit_recognizer_forward.8} parent=0 // pred_check_branch
    %518 = sbr.rel (0) target = $region13
  $region12: #{improved_digit_recognizer_forward.8} parent=0 // pred_region
    _
  $region13: #{improved_digit_recognizer_forward.8} parent=0 // pred_fallthru
    _

// kernel: improved_digit_recognizer_forward.10
$region0: #{improved_digit_recognizer_forward.10}
  #allocation0 [shape = 'u32[]', space=smem, size = 0x4, offset = 0x4, fixed_abs, tag = 'smem constant byte address 0x4 - core index']
  #allocation1 [shape = 'u32[144,128]{1,0:T(1,128)}', space=vmem, size = 0x12000, scoped, tag = 'internal scratch']
  %s0 = inlined_call_operand.vmem [shape: bf16[14,2,7,128], index: 0, kind: input, shape index: {}]
  %s1 = inlined_call_operand.vmem [shape: bf16[14,7,64], index: 1, kind: output, shape index: {}]
  %s2 = sld [smem:[#allocation0]]
  $region14: #{improved_digit_recognizer_forward.10} parent=0
    _
  %s4 = ssub.s32 1, %s2
  %s5 = scalar_select 0, %s4, %s2
  // Predicated region
  $region2: #{improved_digit_recognizer_forward.10} parent=0 // pred_check
    _
  $region3: #{improved_digit_recognizer_forward.10} parent=0 // pred_check_branch
    %7 = sbr.rel (0) target = $region5
  $region4: #{improved_digit_recognizer_forward.10} parent=0 // pred_region
    _
  $region5: #{improved_digit_recognizer_forward.10} parent=0 // pred_fallthru
    _
  %v8 = vld [vmem:[%s0] sm:$0xf]
  %v9 = vld [vmem:[%s0 + $0x8] sm:$0xf]
  %v10 = vld [vmem:[%s0 + $0x10] sm:$0xf]
  %v11 = vld [vmem:[%s0 + $0x18] sm:$0xf]
  %v12 = vld [vmem:[%s0 + $0x20] sm:$0xf]
  %v13 = vld [vmem:[%s0 + $0x28] sm:$0xf]
  %v14 = vld [vmem:[%s0 + $0x30] sm:$0xf]
  %v15 = vld [vmem:[%s0 + $0x38] sm:$0xf]
  %v16 = vld [vmem:[%s0 + $0x40] sm:$0xf]
  %v17 = vld [vmem:[%s0 + $0x48] sm:$0xf]
  %v18 = vld [vmem:[%s0 + $0x50] sm:$0xf]
  %v19 = vld [vmem:[%s0 + $0x58] sm:$0xf]
  %v20 = vld [vmem:[%s0 + $0x60] sm:$0xf]
  %v21 = vld [vmem:[%s0 + $0x68] sm:$0xf]
  %s22 = scalar_lea.vmem %s0, 4
  %v23 = vld [vmem:[%s22] sm:$0xf]
  %v24 = vld [vmem:[%s22 + $0x8] sm:$0xf]
  %v25 = vld [vmem:[%s22 + $0x10] sm:$0xf]
  %v26 = vld [vmem:[%s22 + $0x18] sm:$0xf]
  %v27 = vld [vmem:[%s22 + $0x20] sm:$0xf]
  %v28 = vld [vmem:[%s22 + $0x28] sm:$0xf]
  %v29 = vld [vmem:[%s22 + $0x30] sm:$0xf]
  %v30 = vld [vmem:[%s22 + $0x38] sm:$0xf]
  %v31 = vld [vmem:[%s22 + $0x40] sm:$0xf]
  %v32 = vld [vmem:[%s22 + $0x48] sm:$0xf]
  %v33 = vld [vmem:[%s22 + $0x50] sm:$0xf]
  %v34 = vld [vmem:[%s22 + $0x58] sm:$0xf]
  %v35 = vld [vmem:[%s22 + $0x60] sm:$0xf]
  %v36 = vld [vmem:[%s22 + $0x68] sm:$0xf]
  %v37 = vmax.bf16 %v8, %v23
  %v38 = vmax.bf16 %v9, %v24
  %v39 = vmax.bf16 %v10, %v25
  %v40 = vmax.bf16 %v11, %v26
  %v41 = vmax.bf16 %v12, %v27
  %v42 = vmax.bf16 %v13, %v28
  %v43 = vmax.bf16 %v14, %v29
  %v44 = vmax.bf16 %v15, %v30
  %v45 = vmax.bf16 %v16, %v31
  %v46 = vmax.bf16 %v17, %v32
  %v47 = vmax.bf16 %v18, %v33
  %v48 = vmax.bf16 %v19, %v34
  %v49 = vmax.bf16 %v20, %v35
  %v50 = vmax.bf16 %v21, %v36
  %65 = vrot.lane.b32.xlu0 %v37, 64
  %v66 = vpop.permute.xlu0 %65
  %67 = vrot.lane.b32.xlu0 %v38, 64
  %v68 = vpop.permute.xlu0 %67
  %69 = vrot.lane.b32.xlu0 %v39, 64
  %v70 = vpop.permute.xlu0 %69
  %71 = vrot.lane.b32.xlu0 %v40, 64
  %v72 = vpop.permute.xlu0 %71
  %73 = vrot.lane.b32.xlu0 %v41, 64
  %v74 = vpop.permute.xlu0 %73
  %75 = vrot.lane.b32.xlu0 %v42, 64
  %v76 = vpop.permute.xlu0 %75
  %77 = vrot.lane.b32.xlu0 %v43, 64
  %v78 = vpop.permute.xlu0 %77
  %79 = vrot.lane.b32.xlu0 %v44, 64
  %v80 = vpop.permute.xlu0 %79
  %81 = vrot.lane.b32.xlu0 %v45, 64
  %v82 = vpop.permute.xlu0 %81
  %83 = vrot.lane.b32.xlu0 %v46, 64
  %v84 = vpop.permute.xlu0 %83
  %85 = vrot.lane.b32.xlu0 %v47, 64
  %v86 = vpop.permute.xlu0 %85
  %87 = vrot.lane.b32.xlu0 %v48, 64
  %v88 = vpop.permute.xlu0 %87
  %89 = vrot.lane.b32.xlu0 %v49, 64
  %v90 = vpop.permute.xlu0 %89
  %91 = vrot.lane.b32.xlu0 %v50, 64
  %v92 = vpop.permute.xlu0 %91
  %v107 = vmax.bf16 %v37, %v66
  %v108 = vmax.bf16 %v38, %v68
  %v109 = vmax.bf16 %v39, %v70
  %v110 = vmax.bf16 %v40, %v72
  %v111 = vmax.bf16 %v41, %v74
  %v112 = vmax.bf16 %v42, %v76
  %v113 = vmax.bf16 %v43, %v78
  %v114 = vmax.bf16 %v44, %v80
  %v115 = vmax.bf16 %v45, %v82
  %v116 = vmax.bf16 %v46, %v84
  %v117 = vmax.bf16 %v47, %v86
  %v118 = vmax.bf16 %v48, %v88
  %v119 = vmax.bf16 %v49, %v90
  %v120 = vmax.bf16 %v50, %v92
  %vm121 = vcmask 519168
  %vm122 = vsmask.f32 3328
  %vm123 = vmand %vm121, %vm122
  %v124 = vld [vmem:[%s1] sm:$0xf]
  %v125 = vsel %vm123, %v107, %v124
  %126 = vst [vmem:[%s1] sm:$0xf] %v125
  %v127 = vld [vmem:[%s1 + $0x4] sm:$0xf]
  %v128 = vsel %vm123, %v108, %v127
  %129 = vst [vmem:[%s1 + $0x4] sm:$0xf] %v128
  %v130 = vld [vmem:[%s1 + $0x8] sm:$0xf]
  %v131 = vsel %vm123, %v109, %v130
  %132 = vst [vmem:[%s1 + $0x8] sm:$0xf] %v131
  %v133 = vld [vmem:[%s1 + $0xc] sm:$0xf]
  %v134 = vsel %vm123, %v110, %v133
  %135 = vst [vmem:[%s1 + $0xc] sm:$0xf] %v134
  %v136 = vld [vmem:[%s1 + $0x10] sm:$0xf]
  %v137 = vsel %vm123, %v111, %v136
  %138 = vst [vmem:[%s1 + $0x10] sm:$0xf] %v137
  %v139 = vld [vmem:[%s1 + $0x14] sm:$0xf]
  %v140 = vsel %vm123, %v112, %v139
  %141 = vst [vmem:[%s1 + $0x14] sm:$0xf] %v140
  %v142 = vld [vmem:[%s1 + $0x18] sm:$0xf]
  %v143 = vsel %vm123, %v113, %v142
  %144 = vst [vmem:[%s1 + $0x18] sm:$0xf] %v143
  %v145 = vld [vmem:[%s1 + $0x1c] sm:$0xf]
  %v146 = vsel %vm123, %v114, %v145
  %147 = vst [vmem:[%s1 + $0x1c] sm:$0xf] %v146
  %v148 = vld [vmem:[%s1 + $0x20] sm:$0xf]
  %v149 = vsel %vm123, %v115, %v148
  %150 = vst [vmem:[%s1 + $0x20] sm:$0xf] %v149
  %v151 = vld [vmem:[%s1 + $0x24] sm:$0xf]
  %v152 = vsel %vm123, %v116, %v151
  %153 = vst [vmem:[%s1 + $0x24] sm:$0xf] %v152
  %v154 = vld [vmem:[%s1 + $0x28] sm:$0xf]
  %v155 = vsel %vm123, %v117, %v154
  %156 = vst [vmem:[%s1 + $0x28] sm:$0xf] %v155
  %v157 = vld [vmem:[%s1 + $0x2c] sm:$0xf]
  %v158 = vsel %vm123, %v118, %v157
  %159 = vst [vmem:[%s1 + $0x2c] sm:$0xf] %v158
  %v160 = vld [vmem:[%s1 + $0x30] sm:$0xf]
  %v161 = vsel %vm123, %v119, %v160
  %162 = vst [vmem:[%s1 + $0x30] sm:$0xf] %v161
  %v163 = vld [vmem:[%s1 + $0x34] sm:$0xf]
  %v164 = vsel %vm123, %v120, %v163
  %165 = vst [vmem:[%s1 + $0x34] sm:$0xf] %v164
  // Predicated region
  $region6: #{improved_digit_recognizer_forward.10} parent=0 // pred_check
    _
  $region7: #{improved_digit_recognizer_forward.10} parent=0 // pred_check_branch
    %167 = sbr.rel (0) target = $region9
  $region8: #{improved_digit_recognizer_forward.10} parent=0 // pred_region
    _
  $region9: #{improved_digit_recognizer_forward.10} parent=0 // pred_fallthru
    _
  // Predicated region
  $region10: #{improved_digit_recognizer_forward.10} parent=0 // pred_check
    _
  $region11: #{improved_digit_recognizer_forward.10} parent=0 // pred_check_branch
    %169 = sbr.rel (0) target = $region13
  $region12: #{improved_digit_recognizer_forward.10} parent=0 // pred_region
    _
  $region13: #{improved_digit_recognizer_forward.10} parent=0 // pred_fallthru
    _

// kernel: improved_digit_recognizer_forward.9
$region0: #{improved_digit_recognizer_forward.9}
  #allocation0 [shape = 'u32[]', space=smem, size = 0x4, offset = 0x4, fixed_abs, tag = 'smem constant byte address 0x4 - core index']
  #allocation1 [shape = 'u32[144,128]{1,0:T(1,128)}', space=vmem, size = 0x12000, scoped, tag = 'internal scratch']
  %s0 = inlined_call_operand.vmem [shape: bf16[392,800], index: 0, kind: input, shape index: {}]
  %s1 = inlined_call_operand.vmem [shape: bf16[800,64], index: 1, kind: input, shape index: {}]
  %s2 = inlined_call_operand.vmem [shape: f32[1,64], index: 2, kind: input, shape index: {}]
  %s3 = inlined_call_operand.vmem [shape: bf16[392,64], index: 3, kind: output, shape index: {}]
  %s4 = sld [smem:[#allocation0]]
  $region22: #{improved_digit_recognizer_forward.9} parent=0
    _
  %s6 = ssub.s32 1, %s4
  %s7 = scalar_select 0, %s6, %s4
  // Predicated region
  $region2: #{improved_digit_recognizer_forward.9} parent=0 // pred_check
    _
  $region3: #{improved_digit_recognizer_forward.9} parent=0 // pred_check_branch
    %9 = sbr.rel (0) target = $region5
  $region4: #{improved_digit_recognizer_forward.9} parent=0 // pred_region
    _
  $region5: #{improved_digit_recognizer_forward.9} parent=0 // pred_fallthru
    _
  // Predicated region
  $region6: #{improved_digit_recognizer_forward.9} parent=0 // pred_check
    _
  $region7: #{improved_digit_recognizer_forward.9} parent=0 // pred_check_branch
    %11 = sbr.rel (0) target = $region9
  $region8: #{improved_digit_recognizer_forward.9} parent=0 // pred_region
    _
  $region9: #{improved_digit_recognizer_forward.9} parent=0 // pred_fallthru
    _
  // Predicated region
  $region10: #{improved_digit_recognizer_forward.9} parent=0 // pred_check
    _
  $region11: #{improved_digit_recognizer_forward.9} parent=0 // pred_check_branch
    %13 = sbr.rel (0) target = $region13
  $region12: #{improved_digit_recognizer_forward.9} parent=0 // pred_region
    _
  $region13: #{improved_digit_recognizer_forward.9} parent=0 // pred_fallthru
    _
  %v15 = vld [vmem:[%s0] sm:$0xff]
  %v16 = vld [vmem:[%s0 + $0x8] sm:$0xff]
  %v17 = vld [vmem:[%s0 + $0x10] sm:$0xff]
  %v18 = vld [vmem:[%s0 + $0x18] sm:$0xf]
  %v19 = vld [vmem:[%s0 + $0x1c] sm:$0xff]
  %v20 = vld [vmem:[%s0 + $0x24] sm:$0xff]
  %v21 = vld [vmem:[%s0 + $0x2c] sm:$0xff]
  %v22 = vld [vmem:[%s0 + $0x34] sm:$0xf]
  %v23 = vld [vmem:[%s0 + $0x38] sm:$0xff]
  %v24 = vld [vmem:[%s0 + $0x40] sm:$0xff]
  %v25 = vld [vmem:[%s0 + $0x48] sm:$0xff]
  %v26 = vld [vmem:[%s0 + $0x50] sm:$0xf]
  %v27 = vld [vmem:[%s0 + $0x54] sm:$0xff]
  %v28 = vld [vmem:[%s0 + $0x5c] sm:$0xff]
  %v29 = vld [vmem:[%s0 + $0x64] sm:$0xff]
  %v30 = vld [vmem:[%s0 + $0x6c] sm:$0xf]
  %v31 = vld [vmem:[%s0 + $0x70] sm:$0xff]
  %v32 = vld [vmem:[%s0 + $0x78] sm:$0xff]
  %v33 = vld [vmem:[%s0 + $0x80] sm:$0xff]
  %v34 = vld [vmem:[%s0 + $0x88] sm:$0xf]
  %v35 = vld [vmem:[%s0 + $0x8c] sm:$0xff]
  %v36 = vld [vmem:[%s0 + $0x94] sm:$0xff]
  %v37 = vld [vmem:[%s0 + $0x9c] sm:$0xff]
  %v38 = vld [vmem:[%s0 + $0xa4] sm:$0xf]
  %v39 = vld [vmem:[%s0 + $0xa8] sm:$0xff]
  %v40 = vld [vmem:[%s0 + $0xb0] sm:$0xff]
  %v41 = vld [vmem:[%s0 + $0xb8] sm:$0xff]
  %v42 = vld [vmem:[%s0 + $0xc0] sm:$0xf]
  %v43 = vld [vmem:[%s0 + $0xc4] sm:$0xff]
  %v44 = vld [vmem:[%s0 + $0xcc] sm:$0xff]
  %v45 = vld [vmem:[%s0 + $0xd4] sm:$0xff]
  %v46 = vld [vmem:[%s0 + $0xdc] sm:$0xf]
  %v47 = vld [vmem:[%s0 + $0xe0] sm:$0xff]
  %v48 = vld [vmem:[%s0 + $0xe8] sm:$0xff]
  %v49 = vld [vmem:[%s0 + $0xf0] sm:$0xff]
  %v50 = vld [vmem:[%s0 + $0xf8] sm:$0xf]
  %v51 = vld [vmem:[%s0 + $0xfc] sm:$0xff]
  %v52 = vld [vmem:[%s0 + $0x104] sm:$0xff]
  %v53 = vld [vmem:[%s0 + $0x10c] sm:$0xff]
  %v54 = vld [vmem:[%s0 + $0x114] sm:$0xf]
  %v55 = vld [vmem:[%s0 + $0x118] sm:$0xff]
  %v56 = vld [vmem:[%s0 + $0x120] sm:$0xff]
  %v57 = vld [vmem:[%s0 + $0x128] sm:$0xff]
  %v58 = vld [vmem:[%s0 + $0x130] sm:$0xf]
  %v59 = vld [vmem:[%s0 + $0x134] sm:$0xff]
  %v60 = vld [vmem:[%s0 + $0x13c] sm:$0xff]
  %v61 = vld [vmem:[%s0 + $0x144] sm:$0xff]
  %v62 = vld [vmem:[%s0 + $0x14c] sm:$0xf]
  %v63 = vld [vmem:[%s0 + $0x150] sm:$0xff]
  %v64 = vld [vmem:[%s0 + $0x158] sm:$0xff]
  %v65 = vld [vmem:[%s0 + $0x160] sm:$0xff]
  %v66 = vld [vmem:[%s0 + $0x168] sm:$0xf]
  %v67 = vld [vmem:[%s0 + $0x16c] sm:$0xff]
  %v68 = vld [vmem:[%s0 + $0x174] sm:$0xff]
  %v69 = vld [vmem:[%s0 + $0x17c] sm:$0xff]
  %v70 = vld [vmem:[%s0 + $0x184] sm:$0xf]
  %v71 = vld [vmem:[%s0 + $0x188] sm:$0xff]
  %v72 = vld [vmem:[%s0 + $0x190] sm:$0xff]
  %v73 = vld [vmem:[%s0 + $0x198] sm:$0xff]
  %v74 = vld [vmem:[%s0 + $0x1a0] sm:$0xf]
  %v75 = vld [vmem:[%s0 + $0x1a4] sm:$0xff]
  %v76 = vld [vmem:[%s0 + $0x1ac] sm:$0xff]
  %v77 = vld [vmem:[%s0 + $0x1b4] sm:$0xff]
  %v78 = vld [vmem:[%s0 + $0x1bc] sm:$0xf]
  %v79 = vld [vmem:[%s0 + $0x1c0] sm:$0xff]
  %v80 = vld [vmem:[%s0 + $0x1c8] sm:$0xff]
  %v81 = vld [vmem:[%s0 + $0x1d0] sm:$0xff]
  %v82 = vld [vmem:[%s0 + $0x1d8] sm:$0xf]
  %v83 = vld [vmem:[%s0 + $0x1dc] sm:$0xff]
  %v84 = vld [vmem:[%s0 + $0x1e4] sm:$0xff]
  %v85 = vld [vmem:[%s0 + $0x1ec] sm:$0xff]
  %v86 = vld [vmem:[%s0 + $0x1f4] sm:$0xf]
  %v87 = vld [vmem:[%s0 + $0x1f8] sm:$0xff]
  %v88 = vld [vmem:[%s0 + $0x200] sm:$0xff]
  %v89 = vld [vmem:[%s0 + $0x208] sm:$0xff]
  %v90 = vld [vmem:[%s0 + $0x210] sm:$0xf]
  %v91 = vld [vmem:[%s0 + $0x214] sm:$0xff]
  %v92 = vld [vmem:[%s0 + $0x21c] sm:$0xff]
  %v93 = vld [vmem:[%s0 + $0x224] sm:$0xff]
  %v94 = vld [vmem:[%s0 + $0x22c] sm:$0xf]
  %v95 = vld [vmem:[%s0 + $0x230] sm:$0xff]
  %v96 = vld [vmem:[%s0 + $0x238] sm:$0xff]
  %v97 = vld [vmem:[%s0 + $0x240] sm:$0xff]
  %v98 = vld [vmem:[%s0 + $0x248] sm:$0xf]
  %v99 = vld [vmem:[%s0 + $0x24c] sm:$0xff]
  %v100 = vld [vmem:[%s0 + $0x254] sm:$0xff]
  %v101 = vld [vmem:[%s0 + $0x25c] sm:$0xff]
  %v102 = vld [vmem:[%s0 + $0x264] sm:$0xf]
  %v103 = vld [vmem:[%s0 + $0x268] sm:$0xff]
  %v104 = vld [vmem:[%s0 + $0x270] sm:$0xff]
  %v105 = vld [vmem:[%s0 + $0x278] sm:$0xff]
  %v106 = vld [vmem:[%s0 + $0x280] sm:$0xf]
  %v107 = vld [vmem:[%s0 + $0x284] sm:$0xff]
  %v108 = vld [vmem:[%s0 + $0x28c] sm:$0xff]
  %v109 = vld [vmem:[%s0 + $0x294] sm:$0xff]
  %v110 = vld [vmem:[%s0 + $0x29c] sm:$0xf]
  %v111 = vld [vmem:[%s0 + $0x2a0] sm:$0xff]
  %v112 = vld [vmem:[%s0 + $0x2a8] sm:$0xff]
  %v113 = vld [vmem:[%s0 + $0x2b0] sm:$0xff]
  %v114 = vld [vmem:[%s0 + $0x2b8] sm:$0xf]
  %v115 = vld [vmem:[%s0 + $0x2bc] sm:$0xff]
  %v116 = vld [vmem:[%s0 + $0x2c4] sm:$0xff]
  %v117 = vld [vmem:[%s0 + $0x2cc] sm:$0xff]
  %v118 = vld [vmem:[%s0 + $0x2d4] sm:$0xf]
  %v119 = vld [vmem:[%s0 + $0x2d8] sm:$0xff]
  %v120 = vld [vmem:[%s0 + $0x2e0] sm:$0xff]
  %v121 = vld [vmem:[%s0 + $0x2e8] sm:$0xff]
  %v122 = vld [vmem:[%s0 + $0x2f0] sm:$0xf]
  %v123 = vld [vmem:[%s0 + $0x2f4] sm:$0xff]
  %v124 = vld [vmem:[%s0 + $0x2fc] sm:$0xff]
  %v125 = vld [vmem:[%s0 + $0x304] sm:$0xff]
  %v126 = vld [vmem:[%s0 + $0x30c] sm:$0xf]
  %v127 = vld [vmem:[%s0 + $0x310] sm:$0xff]
  %v128 = vld [vmem:[%s0 + $0x318] sm:$0xff]
  %v129 = vld [vmem:[%s0 + $0x320] sm:$0xff]
  %v130 = vld [vmem:[%s0 + $0x328] sm:$0xf]
  %v131 = vld [vmem:[%s0 + $0x32c] sm:$0xff]
  %v132 = vld [vmem:[%s0 + $0x334] sm:$0xff]
  %v133 = vld [vmem:[%s0 + $0x33c] sm:$0xff]
  %v134 = vld [vmem:[%s0 + $0x344] sm:$0xf]
  %v135 = vld [vmem:[%s0 + $0x348] sm:$0xff]
  %v136 = vld [vmem:[%s0 + $0x350] sm:$0xff]
  %v137 = vld [vmem:[%s0 + $0x358] sm:$0xff]
  %v138 = vld [vmem:[%s0 + $0x360] sm:$0xf]
  %v139 = vld [vmem:[%s0 + $0x364] sm:$0xff]
  %v140 = vld [vmem:[%s0 + $0x36c] sm:$0xff]
  %v141 = vld [vmem:[%s0 + $0x374] sm:$0xff]
  %v142 = vld [vmem:[%s0 + $0x37c] sm:$0xf]
  %v143 = vld [vmem:[%s0 + $0x380] sm:$0xff]
  %v144 = vld [vmem:[%s0 + $0x388] sm:$0xff]
  %v145 = vld [vmem:[%s0 + $0x390] sm:$0xff]
  %v146 = vld [vmem:[%s0 + $0x398] sm:$0xf]
  %v147 = vld [vmem:[%s0 + $0x39c] sm:$0xff]
  %v148 = vld [vmem:[%s0 + $0x3a4] sm:$0xff]
  %v149 = vld [vmem:[%s0 + $0x3ac] sm:$0xff]
  %v150 = vld [vmem:[%s0 + $0x3b4] sm:$0xf]
  %v151 = vld [vmem:[%s0 + $0x3b8] sm:$0xff]
  %v152 = vld [vmem:[%s0 + $0x3c0] sm:$0xff]
  %v153 = vld [vmem:[%s0 + $0x3c8] sm:$0xff]
  %v154 = vld [vmem:[%s0 + $0x3d0] sm:$0xf]
  %v155 = vld [vmem:[%s0 + $0x3d4] sm:$0xff]
  %v156 = vld [vmem:[%s0 + $0x3dc] sm:$0xff]
  %v157 = vld [vmem:[%s0 + $0x3e4] sm:$0xff]
  %v158 = vld [vmem:[%s0 + $0x3ec] sm:$0xf]
  %v159 = vld [vmem:[%s0 + $0x3f0] sm:$0xff]
  %v160 = vld [vmem:[%s0 + $0x3f8] sm:$0xff]
  %v161 = vld [vmem:[%s0 + $0x400] sm:$0xff]
  %v162 = vld [vmem:[%s0 + $0x408] sm:$0xf]
  %v163 = vld [vmem:[%s0 + $0x40c] sm:$0xff]
  %v164 = vld [vmem:[%s0 + $0x414] sm:$0xff]
  %v165 = vld [vmem:[%s0 + $0x41c] sm:$0xff]
  %v166 = vld [vmem:[%s0 + $0x424] sm:$0xf]
  %v167 = vld [vmem:[%s0 + $0x428] sm:$0xff]
  %v168 = vld [vmem:[%s0 + $0x430] sm:$0xff]
  %v169 = vld [vmem:[%s0 + $0x438] sm:$0xff]
  %v170 = vld [vmem:[%s0 + $0x440] sm:$0xf]
  %v171 = vld [vmem:[%s0 + $0x444] sm:$0xff]
  %v172 = vld [vmem:[%s0 + $0x44c] sm:$0xff]
  %v173 = vld [vmem:[%s0 + $0x454] sm:$0xff]
  %v174 = vld [vmem:[%s0 + $0x45c] sm:$0xf]
  %v175 = vld [vmem:[%s0 + $0x460] sm:$0xff]
  %v176 = vld [vmem:[%s0 + $0x468] sm:$0xff]
  %v177 = vld [vmem:[%s0 + $0x470] sm:$0xff]
  %v178 = vld [vmem:[%s0 + $0x478] sm:$0xf]
  %v179 = vld [vmem:[%s0 + $0x47c] sm:$0xff]
  %v180 = vld [vmem:[%s0 + $0x484] sm:$0xff]
  %v181 = vld [vmem:[%s0 + $0x48c] sm:$0xff]
  %v182 = vld [vmem:[%s0 + $0x494] sm:$0xf]
  %v183 = vld [vmem:[%s0 + $0x498] sm:$0xff]
  %v184 = vld [vmem:[%s0 + $0x4a0] sm:$0xff]
  %v185 = vld [vmem:[%s0 + $0x4a8] sm:$0xff]
  %v186 = vld [vmem:[%s0 + $0x4b0] sm:$0xf]
  %v187 = vld [vmem:[%s0 + $0x4b4] sm:$0xff]
  %v188 = vld [vmem:[%s0 + $0x4bc] sm:$0xff]
  %v189 = vld [vmem:[%s0 + $0x4c4] sm:$0xff]
  %v190 = vld [vmem:[%s0 + $0x4cc] sm:$0xf]
  %v191 = vld [vmem:[%s0 + $0x4d0] sm:$0xff]
  %v192 = vld [vmem:[%s0 + $0x4d8] sm:$0xff]
  %v193 = vld [vmem:[%s0 + $0x4e0] sm:$0xff]
  %v194 = vld [vmem:[%s0 + $0x4e8] sm:$0xf]
  %v195 = vld [vmem:[%s0 + $0x4ec] sm:$0xff]
  %v196 = vld [vmem:[%s0 + $0x4f4] sm:$0xff]
  %v197 = vld [vmem:[%s0 + $0x4fc] sm:$0xff]
  %v198 = vld [vmem:[%s0 + $0x504] sm:$0xf]
  %v199 = vld [vmem:[%s0 + $0x508] sm:$0xff]
  %v200 = vld [vmem:[%s0 + $0x510] sm:$0xff]
  %v201 = vld [vmem:[%s0 + $0x518] sm:$0xff]
  %v202 = vld [vmem:[%s0 + $0x520] sm:$0xf]
  %v203 = vld [vmem:[%s0 + $0x524] sm:$0xff]
  %v204 = vld [vmem:[%s0 + $0x52c] sm:$0xff]
  %v205 = vld [vmem:[%s0 + $0x534] sm:$0xff]
  %v206 = vld [vmem:[%s0 + $0x53c] sm:$0xf]
  %v207 = vld [vmem:[%s0 + $0x540] sm:$0xff]
  %v208 = vld [vmem:[%s0 + $0x548] sm:$0xff]
  %v209 = vld [vmem:[%s0 + $0x550] sm:$0xff]
  %v210 = vld [vmem:[%s0 + $0x558] sm:$0xf]
  %v211 = vld [vmem:[%s1] sm:$0xf]
  %v212 = vld [vmem:[%s1 + $0x4] sm:$0xf]
  %v213 = vld [vmem:[%s1 + $0x8] sm:$0xf]
  %v214 = vld [vmem:[%s1 + $0xc] sm:$0xf]
  %v215 = vld [vmem:[%s1 + $0x10] sm:$0xf]
  %v216 = vld [vmem:[%s1 + $0x14] sm:$0xf]
  %v217 = vld [vmem:[%s1 + $0x18] sm:$0xf]
  %v218 = vld [vmem:[%s1 + $0x1c] sm:$0xf]
  %v219 = vld [vmem:[%s1 + $0x20] sm:$0xf]
  %v220 = vld [vmem:[%s1 + $0x24] sm:$0xf]
  %v221 = vld [vmem:[%s1 + $0x28] sm:$0xf]
  %v222 = vld [vmem:[%s1 + $0x2c] sm:$0xf]
  %v223 = vld [vmem:[%s1 + $0x30] sm:$0xf]
  %v224 = vld [vmem:[%s1 + $0x34] sm:$0xf]
  %v225 = vld [vmem:[%s1 + $0x38] sm:$0xf]
  %v226 = vld [vmem:[%s1 + $0x3c] sm:$0xf]
  %v227 = vld [vmem:[%s1 + $0x40] sm:$0xf]
  %v228 = vld [vmem:[%s1 + $0x44] sm:$0xf]
  %v229 = vld [vmem:[%s1 + $0x48] sm:$0xf]
  %v230 = vld [vmem:[%s1 + $0x4c] sm:$0xf]
  %v231 = vld [vmem:[%s1 + $0x50] sm:$0xf]
  %v232 = vld [vmem:[%s1 + $0x54] sm:$0xf]
  %v233 = vld [vmem:[%s1 + $0x58] sm:$0xf]
  %v234 = vld [vmem:[%s1 + $0x5c] sm:$0xf]
  %v235 = vld [vmem:[%s1 + $0x60] sm:$0xf]
  %v236 = vld [vmem:[%s1 + $0x64] sm:$0xf]
  %v237 = vld [vmem:[%s1 + $0x68] sm:$0xf]
  %v238 = vld [vmem:[%s1 + $0x6c] sm:$0xf]
  %v239 = vld [vmem:[%s1 + $0x70] sm:$0xf]
  %v240 = vld [vmem:[%s1 + $0x74] sm:$0xf]
  %v241 = vld [vmem:[%s1 + $0x78] sm:$0xf]
  %v242 = vld [vmem:[%s1 + $0x7c] sm:$0xf]
  %v243 = vld [vmem:[%s1 + $0x80] sm:$0xf]
  %v244 = vld [vmem:[%s1 + $0x84] sm:$0xf]
  %v245 = vld [vmem:[%s1 + $0x88] sm:$0xf]
  %v246 = vld [vmem:[%s1 + $0x8c] sm:$0xf]
  %v247 = vld [vmem:[%s1 + $0x90] sm:$0xf]
  %v248 = vld [vmem:[%s1 + $0x94] sm:$0xf]
  %v249 = vld [vmem:[%s1 + $0x98] sm:$0xf]
  %v250 = vld [vmem:[%s1 + $0x9c] sm:$0xf]
  %v251 = vld [vmem:[%s1 + $0xa0] sm:$0xf]
  %v252 = vld [vmem:[%s1 + $0xa4] sm:$0xf]
  %v253 = vld [vmem:[%s1 + $0xa8] sm:$0xf]
  %v254 = vld [vmem:[%s1 + $0xac] sm:$0xf]
  %v255 = vld [vmem:[%s1 + $0xb0] sm:$0xf]
  %v256 = vld [vmem:[%s1 + $0xb4] sm:$0xf]
  %v257 = vld [vmem:[%s1 + $0xb8] sm:$0xf]
  %v258 = vld [vmem:[%s1 + $0xbc] sm:$0xf]
  %v259 = vld [vmem:[%s1 + $0xc0] sm:$0xf]
  %v260 = vld [vmem:[%s1 + $0xc4] sm:$0xf]
  %v261 = vld [vmem:[%s1 + $0xc8] sm:$0xf]
  %v262 = vld [vmem:[%s1 + $0xcc] sm:$0xf]
  %v263 = vld [vmem:[%s1 + $0xd0] sm:$0xf]
  %v264 = vld [vmem:[%s1 + $0xd4] sm:$0xf]
  %v265 = vld [vmem:[%s1 + $0xd8] sm:$0xf]
  %v266 = vld [vmem:[%s1 + $0xdc] sm:$0xf]
  %v267 = vld [vmem:[%s1 + $0xe0] sm:$0xf]
  %v268 = vld [vmem:[%s1 + $0xe4] sm:$0xf]
  %v269 = vld [vmem:[%s1 + $0xe8] sm:$0xf]
  %v270 = vld [vmem:[%s1 + $0xec] sm:$0xf]
  %v271 = vld [vmem:[%s1 + $0xf0] sm:$0xf]
  %v272 = vld [vmem:[%s1 + $0xf4] sm:$0xf]
  %v273 = vld [vmem:[%s1 + $0xf8] sm:$0xf]
  %v274 = vld [vmem:[%s1 + $0xfc] sm:$0xf]
  %v275 = vld [vmem:[%s1 + $0x100] sm:$0xf]
  %v276 = vld [vmem:[%s1 + $0x104] sm:$0xf]
  %v277 = vld [vmem:[%s1 + $0x108] sm:$0xf]
  %v278 = vld [vmem:[%s1 + $0x10c] sm:$0xf]
  %v279 = vld [vmem:[%s1 + $0x110] sm:$0xf]
  %v280 = vld [vmem:[%s1 + $0x114] sm:$0xf]
  %v281 = vld [vmem:[%s1 + $0x118] sm:$0xf]
  %v282 = vld [vmem:[%s1 + $0x11c] sm:$0xf]
  %v283 = vld [vmem:[%s1 + $0x120] sm:$0xf]
  %v284 = vld [vmem:[%s1 + $0x124] sm:$0xf]
  %v285 = vld [vmem:[%s1 + $0x128] sm:$0xf]
  %v286 = vld [vmem:[%s1 + $0x12c] sm:$0xf]
  %v287 = vld [vmem:[%s1 + $0x130] sm:$0xf]
  %v288 = vld [vmem:[%s1 + $0x134] sm:$0xf]
  %v289 = vld [vmem:[%s1 + $0x138] sm:$0xf]
  %v290 = vld [vmem:[%s1 + $0x13c] sm:$0xf]
  %v291 = vld [vmem:[%s1 + $0x140] sm:$0xf]
  %v292 = vld [vmem:[%s1 + $0x144] sm:$0xf]
  %v293 = vld [vmem:[%s1 + $0x148] sm:$0xf]
  %v294 = vld [vmem:[%s1 + $0x14c] sm:$0xf]
  %v295 = vld [vmem:[%s1 + $0x150] sm:$0xf]
  %v296 = vld [vmem:[%s1 + $0x154] sm:$0xf]
  %v297 = vld [vmem:[%s1 + $0x158] sm:$0xf]
  %v298 = vld [vmem:[%s1 + $0x15c] sm:$0xf]
  %v299 = vld [vmem:[%s1 + $0x160] sm:$0xf]
  %v300 = vld [vmem:[%s1 + $0x164] sm:$0xf]
  %v301 = vld [vmem:[%s1 + $0x168] sm:$0xf]
  %v302 = vld [vmem:[%s1 + $0x16c] sm:$0xf]
  %v303 = vld [vmem:[%s1 + $0x170] sm:$0xf]
  %v304 = vld [vmem:[%s1 + $0x174] sm:$0xf]
  %v305 = vld [vmem:[%s1 + $0x178] sm:$0xf]
  %v306 = vld [vmem:[%s1 + $0x17c] sm:$0xf]
  %v307 = vld [vmem:[%s1 + $0x180] sm:$0xf]
  %v308 = vld [vmem:[%s1 + $0x184] sm:$0xf]
  %v309 = vld [vmem:[%s1 + $0x188] sm:$0xf]
  %v310 = vld [vmem:[%s1 + $0x18c] sm:$0xf]
  %v311 = vld [vmem:[%s2] sm:$0x1]
  %v313 = vlaneseq
  %v314 = vshrl.u32 %v313, 7
  %v315 = vsub.s32 0, %v314
  %v316 = vrot.slane %v311, %v315
  %v514 = vunpack.c.l.b16 %v15
  %v515 = vunpack.c.h.b16 %v15
  %v516 = vunpack.c.l.b16 %v16
  %v517 = vunpack.c.h.b16 %v16
  %v518 = vunpack.c.l.b16 %v17
  %v519 = vunpack.c.h.b16 %v17
  %v520 = vunpack.c.l.b16 %v18
  %v521 = vunpack.c.l.b16 %v19
  %v522 = vunpack.c.h.b16 %v19
  %v523 = vunpack.c.l.b16 %v20
  %v524 = vunpack.c.h.b16 %v20
  %v525 = vunpack.c.l.b16 %v21
  %v526 = vunpack.c.h.b16 %v21
  %v527 = vunpack.c.l.b16 %v22
  %v528 = vunpack.c.l.b16 %v23
  %v529 = vunpack.c.h.b16 %v23
  %v530 = vunpack.c.l.b16 %v24
  %v531 = vunpack.c.h.b16 %v24
  %v532 = vunpack.c.l.b16 %v25
  %v533 = vunpack.c.h.b16 %v25
  %v534 = vunpack.c.l.b16 %v26
  %v535 = vunpack.c.l.b16 %v27
  %v536 = vunpack.c.h.b16 %v27
  %v537 = vunpack.c.l.b16 %v28
  %v538 = vunpack.c.h.b16 %v28
  %v539 = vunpack.c.l.b16 %v29
  %v540 = vunpack.c.h.b16 %v29
  %v541 = vunpack.c.l.b16 %v30
  %v542 = vunpack.c.l.b16 %v31
  %v543 = vunpack.c.h.b16 %v31
  %v544 = vunpack.c.l.b16 %v32
  %v545 = vunpack.c.h.b16 %v32
  %v546 = vunpack.c.l.b16 %v33
  %v547 = vunpack.c.h.b16 %v33
  %v548 = vunpack.c.l.b16 %v34
  %v549 = vunpack.c.l.b16 %v35
  %v550 = vunpack.c.h.b16 %v35
  %v551 = vunpack.c.l.b16 %v36
  %v552 = vunpack.c.h.b16 %v36
  %v553 = vunpack.c.l.b16 %v37
  %v554 = vunpack.c.h.b16 %v37
  %v555 = vunpack.c.l.b16 %v38
  %v556 = vunpack.c.l.b16 %v39
  %v557 = vunpack.c.h.b16 %v39
  %v558 = vunpack.c.l.b16 %v40
  %v559 = vunpack.c.h.b16 %v40
  %v560 = vunpack.c.l.b16 %v41
  %v561 = vunpack.c.h.b16 %v41
  %v562 = vunpack.c.l.b16 %v42
  %v563 = vunpack.c.l.b16 %v43
  %v564 = vunpack.c.h.b16 %v43
  %v565 = vunpack.c.l.b16 %v44
  %v566 = vunpack.c.h.b16 %v44
  %v567 = vunpack.c.l.b16 %v45
  %v568 = vunpack.c.h.b16 %v45
  %v569 = vunpack.c.l.b16 %v46
  %v570 = vunpack.c.l.b16 %v47
  %v571 = vunpack.c.h.b16 %v47
  %v572 = vunpack.c.l.b16 %v48
  %v573 = vunpack.c.h.b16 %v48
  %v574 = vunpack.c.l.b16 %v49
  %v575 = vunpack.c.h.b16 %v49
  %v576 = vunpack.c.l.b16 %v50
  %v577 = vunpack.c.l.b16 %v51
  %v578 = vunpack.c.h.b16 %v51
  %v579 = vunpack.c.l.b16 %v52
  %v580 = vunpack.c.h.b16 %v52
  %v581 = vunpack.c.l.b16 %v53
  %v582 = vunpack.c.h.b16 %v53
  %v583 = vunpack.c.l.b16 %v54
  %v584 = vunpack.c.l.b16 %v55
  %v585 = vunpack.c.h.b16 %v55
  %v586 = vunpack.c.l.b16 %v56
  %v587 = vunpack.c.h.b16 %v56
  %v588 = vunpack.c.l.b16 %v57
  %v589 = vunpack.c.h.b16 %v57
  %v590 = vunpack.c.l.b16 %v58
  %v591 = vunpack.c.l.b16 %v59
  %v592 = vunpack.c.h.b16 %v59
  %v593 = vunpack.c.l.b16 %v60
  %v594 = vunpack.c.h.b16 %v60
  %v595 = vunpack.c.l.b16 %v61
  %v596 = vunpack.c.h.b16 %v61
  %v597 = vunpack.c.l.b16 %v62
  %v598 = vunpack.c.l.b16 %v63
  %v599 = vunpack.c.h.b16 %v63
  %v600 = vunpack.c.l.b16 %v64
  %v601 = vunpack.c.h.b16 %v64
  %v602 = vunpack.c.l.b16 %v65
  %v603 = vunpack.c.h.b16 %v65
  %v604 = vunpack.c.l.b16 %v66
  %v605 = vunpack.c.l.b16 %v67
  %v606 = vunpack.c.h.b16 %v67
  %v607 = vunpack.c.l.b16 %v68
  %v608 = vunpack.c.h.b16 %v68
  %v609 = vunpack.c.l.b16 %v69
  %v610 = vunpack.c.h.b16 %v69
  %v611 = vunpack.c.l.b16 %v70
  %v612 = vunpack.c.l.b16 %v71
  %v613 = vunpack.c.h.b16 %v71
  %v614 = vunpack.c.l.b16 %v72
  %v615 = vunpack.c.h.b16 %v72
  %v616 = vunpack.c.l.b16 %v73
  %v617 = vunpack.c.h.b16 %v73
  %v618 = vunpack.c.l.b16 %v74
  %v619 = vunpack.c.l.b16 %v75
  %v620 = vunpack.c.h.b16 %v75
  %v621 = vunpack.c.l.b16 %v76
  %v622 = vunpack.c.h.b16 %v76
  %v623 = vunpack.c.l.b16 %v77
  %v624 = vunpack.c.h.b16 %v77
  %v625 = vunpack.c.l.b16 %v78
  %v626 = vunpack.c.l.b16 %v79
  %v627 = vunpack.c.h.b16 %v79
  %v628 = vunpack.c.l.b16 %v80
  %v629 = vunpack.c.h.b16 %v80
  %v630 = vunpack.c.l.b16 %v81
  %v631 = vunpack.c.h.b16 %v81
  %v632 = vunpack.c.l.b16 %v82
  %v633 = vunpack.c.l.b16 %v83
  %v634 = vunpack.c.h.b16 %v83
  %v635 = vunpack.c.l.b16 %v84
  %v636 = vunpack.c.h.b16 %v84
  %v637 = vunpack.c.l.b16 %v85
  %v638 = vunpack.c.h.b16 %v85
  %v639 = vunpack.c.l.b16 %v86
  %v640 = vunpack.c.l.b16 %v87
  %v641 = vunpack.c.h.b16 %v87
  %v642 = vunpack.c.l.b16 %v88
  %v643 = vunpack.c.h.b16 %v88
  %v644 = vunpack.c.l.b16 %v89
  %v645 = vunpack.c.h.b16 %v89
  %v646 = vunpack.c.l.b16 %v90
  %v647 = vunpack.c.l.b16 %v91
  %v648 = vunpack.c.h.b16 %v91
  %v649 = vunpack.c.l.b16 %v92
  %v650 = vunpack.c.h.b16 %v92
  %v651 = vunpack.c.l.b16 %v93
  %v652 = vunpack.c.h.b16 %v93
  %v653 = vunpack.c.l.b16 %v94
  %v654 = vunpack.c.l.b16 %v95
  %v655 = vunpack.c.h.b16 %v95
  %v656 = vunpack.c.l.b16 %v96
  %v657 = vunpack.c.h.b16 %v96
  %v658 = vunpack.c.l.b16 %v97
  %v659 = vunpack.c.h.b16 %v97
  %v660 = vunpack.c.l.b16 %v98
  %v661 = vunpack.c.l.b16 %v99
  %v662 = vunpack.c.h.b16 %v99
  %v663 = vunpack.c.l.b16 %v100
  %v664 = vunpack.c.h.b16 %v100
  %v665 = vunpack.c.l.b16 %v101
  %v666 = vunpack.c.h.b16 %v101
  %v667 = vunpack.c.l.b16 %v102
  %v668 = vunpack.c.l.b16 %v103
  %v669 = vunpack.c.h.b16 %v103
  %v670 = vunpack.c.l.b16 %v104
  %v671 = vunpack.c.h.b16 %v104
  %v672 = vunpack.c.l.b16 %v105
  %v673 = vunpack.c.h.b16 %v105
  %v674 = vunpack.c.l.b16 %v106
  %v675 = vunpack.c.l.b16 %v107
  %v676 = vunpack.c.h.b16 %v107
  %v677 = vunpack.c.l.b16 %v108
  %v678 = vunpack.c.h.b16 %v108
  %v679 = vunpack.c.l.b16 %v109
  %v680 = vunpack.c.h.b16 %v109
  %v681 = vunpack.c.l.b16 %v110
  %v682 = vunpack.c.l.b16 %v111
  %v683 = vunpack.c.h.b16 %v111
  %v684 = vunpack.c.l.b16 %v112
  %v685 = vunpack.c.h.b16 %v112
  %v686 = vunpack.c.l.b16 %v113
  %v687 = vunpack.c.h.b16 %v113
  %v688 = vunpack.c.l.b16 %v114
  %v689 = vunpack.c.l.b16 %v115
  %v690 = vunpack.c.h.b16 %v115
  %v691 = vunpack.c.l.b16 %v116
  %v692 = vunpack.c.h.b16 %v116
  %v693 = vunpack.c.l.b16 %v117
  %v694 = vunpack.c.h.b16 %v117
  %v695 = vunpack.c.l.b16 %v118
  %v696 = vunpack.c.l.b16 %v119
  %v697 = vunpack.c.h.b16 %v119
  %v698 = vunpack.c.l.b16 %v120
  %v699 = vunpack.c.h.b16 %v120
  %v700 = vunpack.c.l.b16 %v121
  %v701 = vunpack.c.h.b16 %v121
  %v702 = vunpack.c.l.b16 %v122
  %v703 = vunpack.c.l.b16 %v123
  %v704 = vunpack.c.h.b16 %v123
  %v705 = vunpack.c.l.b16 %v124
  %v706 = vunpack.c.h.b16 %v124
  %v707 = vunpack.c.l.b16 %v125
  %v708 = vunpack.c.h.b16 %v125
  %v709 = vunpack.c.l.b16 %v126
  %v710 = vunpack.c.l.b16 %v127
  %v711 = vunpack.c.h.b16 %v127
  %v712 = vunpack.c.l.b16 %v128
  %v713 = vunpack.c.h.b16 %v128
  %v714 = vunpack.c.l.b16 %v129
  %v715 = vunpack.c.h.b16 %v129
  %v716 = vunpack.c.l.b16 %v130
  %v717 = vunpack.c.l.b16 %v131
  %v718 = vunpack.c.h.b16 %v131
  %v719 = vunpack.c.l.b16 %v132
  %v720 = vunpack.c.h.b16 %v132
  %v721 = vunpack.c.l.b16 %v133
  %v722 = vunpack.c.h.b16 %v133
  %v723 = vunpack.c.l.b16 %v134
  %v724 = vunpack.c.l.b16 %v135
  %v725 = vunpack.c.h.b16 %v135
  %v726 = vunpack.c.l.b16 %v136
  %v727 = vunpack.c.h.b16 %v136
  %v728 = vunpack.c.l.b16 %v137
  %v729 = vunpack.c.h.b16 %v137
  %v730 = vunpack.c.l.b16 %v138
  %v731 = vunpack.c.l.b16 %v139
  %v732 = vunpack.c.h.b16 %v139
  %v733 = vunpack.c.l.b16 %v140
  %v734 = vunpack.c.h.b16 %v140
  %v735 = vunpack.c.l.b16 %v141
  %v736 = vunpack.c.h.b16 %v141
  %v737 = vunpack.c.l.b16 %v142
  %v738 = vunpack.c.l.b16 %v143
  %v739 = vunpack.c.h.b16 %v143
  %v740 = vunpack.c.l.b16 %v144
  %v741 = vunpack.c.h.b16 %v144
  %v742 = vunpack.c.l.b16 %v145
  %v743 = vunpack.c.h.b16 %v145
  %v744 = vunpack.c.l.b16 %v146
  %v745 = vunpack.c.l.b16 %v147
  %v746 = vunpack.c.h.b16 %v147
  %v747 = vunpack.c.l.b16 %v148
  %v748 = vunpack.c.h.b16 %v148
  %v749 = vunpack.c.l.b16 %v149
  %v750 = vunpack.c.h.b16 %v149
  %v751 = vunpack.c.l.b16 %v150
  %v752 = vunpack.c.l.b16 %v151
  %v753 = vunpack.c.h.b16 %v151
  %v754 = vunpack.c.l.b16 %v152
  %v755 = vunpack.c.h.b16 %v152
  %v756 = vunpack.c.l.b16 %v153
  %v757 = vunpack.c.h.b16 %v153
  %v758 = vunpack.c.l.b16 %v154
  %v759 = vunpack.c.l.b16 %v155
  %v760 = vunpack.c.h.b16 %v155
  %v761 = vunpack.c.l.b16 %v156
  %v762 = vunpack.c.h.b16 %v156
  %v763 = vunpack.c.l.b16 %v157
  %v764 = vunpack.c.h.b16 %v157
  %v765 = vunpack.c.l.b16 %v158
  %v766 = vunpack.c.l.b16 %v159
  %v767 = vunpack.c.h.b16 %v159
  %v768 = vunpack.c.l.b16 %v160
  %v769 = vunpack.c.h.b16 %v160
  %v770 = vunpack.c.l.b16 %v161
  %v771 = vunpack.c.h.b16 %v161
  %v772 = vunpack.c.l.b16 %v162
  %v773 = vunpack.c.l.b16 %v163
  %v774 = vunpack.c.h.b16 %v163
  %v775 = vunpack.c.l.b16 %v164
  %v776 = vunpack.c.h.b16 %v164
  %v777 = vunpack.c.l.b16 %v165
  %v778 = vunpack.c.h.b16 %v165
  %v779 = vunpack.c.l.b16 %v166
  %v780 = vunpack.c.l.b16 %v167
  %v781 = vunpack.c.h.b16 %v167
  %v782 = vunpack.c.l.b16 %v168
  %v783 = vunpack.c.h.b16 %v168
  %v784 = vunpack.c.l.b16 %v169
  %v785 = vunpack.c.h.b16 %v169
  %v786 = vunpack.c.l.b16 %v170
  %v787 = vunpack.c.l.b16 %v171
  %v788 = vunpack.c.h.b16 %v171
  %v789 = vunpack.c.l.b16 %v172
  %v790 = vunpack.c.h.b16 %v172
  %v791 = vunpack.c.l.b16 %v173
  %v792 = vunpack.c.h.b16 %v173
  %v793 = vunpack.c.l.b16 %v174
  %v794 = vunpack.c.l.b16 %v175
  %v795 = vunpack.c.h.b16 %v175
  %v796 = vunpack.c.l.b16 %v176
  %v797 = vunpack.c.h.b16 %v176
  %v798 = vunpack.c.l.b16 %v177
  %v799 = vunpack.c.h.b16 %v177
  %v800 = vunpack.c.l.b16 %v178
  %v801 = vunpack.c.l.b16 %v179
  %v802 = vunpack.c.h.b16 %v179
  %v803 = vunpack.c.l.b16 %v180
  %v804 = vunpack.c.h.b16 %v180
  %v805 = vunpack.c.l.b16 %v181
  %v806 = vunpack.c.h.b16 %v181
  %v807 = vunpack.c.l.b16 %v182
  %v808 = vunpack.c.l.b16 %v183
  %v809 = vunpack.c.h.b16 %v183
  %v810 = vunpack.c.l.b16 %v184
  %v811 = vunpack.c.h.b16 %v184
  %v812 = vunpack.c.l.b16 %v185
  %v813 = vunpack.c.h.b16 %v185
  %v814 = vunpack.c.l.b16 %v186
  %v815 = vunpack.c.l.b16 %v187
  %v816 = vunpack.c.h.b16 %v187
  %v817 = vunpack.c.l.b16 %v188
  %v818 = vunpack.c.h.b16 %v188
  %v819 = vunpack.c.l.b16 %v189
  %v820 = vunpack.c.h.b16 %v189
  %v821 = vunpack.c.l.b16 %v190
  %v822 = vunpack.c.l.b16 %v191
  %v823 = vunpack.c.h.b16 %v191
  %v824 = vunpack.c.l.b16 %v192
  %v825 = vunpack.c.h.b16 %v192
  %v826 = vunpack.c.l.b16 %v193
  %v827 = vunpack.c.h.b16 %v193
  %v828 = vunpack.c.l.b16 %v194
  %v829 = vunpack.c.l.b16 %v195
  %v830 = vunpack.c.h.b16 %v195
  %v831 = vunpack.c.l.b16 %v196
  %v832 = vunpack.c.h.b16 %v196
  %v833 = vunpack.c.l.b16 %v197
  %v834 = vunpack.c.h.b16 %v197
  %v835 = vunpack.c.l.b16 %v198
  %v836 = vunpack.c.l.b16 %v199
  %v837 = vunpack.c.h.b16 %v199
  %v838 = vunpack.c.l.b16 %v200
  %v839 = vunpack.c.h.b16 %v200
  %v840 = vunpack.c.l.b16 %v201
  %v841 = vunpack.c.h.b16 %v201
  %v842 = vunpack.c.l.b16 %v202
  %v843 = vunpack.c.l.b16 %v203
  %v844 = vunpack.c.h.b16 %v203
  %v845 = vunpack.c.l.b16 %v204
  %v846 = vunpack.c.h.b16 %v204
  %v847 = vunpack.c.l.b16 %v205
  %v848 = vunpack.c.h.b16 %v205
  %v849 = vunpack.c.l.b16 %v206
  %v850 = vunpack.c.l.b16 %v207
  %v851 = vunpack.c.h.b16 %v207
  %v852 = vunpack.c.l.b16 %v208
  %v853 = vunpack.c.h.b16 %v208
  %v854 = vunpack.c.l.b16 %v209
  %v855 = vunpack.c.h.b16 %v209
  %v856 = vunpack.c.l.b16 %v210
  %v857 = vpack.c.b16 %v521, %v514
  %v858 = vpack.c.b16 %v522, %v515
  %v859 = vpack.c.b16 %v523, %v516
  %v860 = vpack.c.b16 %v524, %v517
  %v861 = vpack.c.b16 %v525, %v518
  %v862 = vpack.c.b16 %v526, %v519
  %v863 = vpack.c.b16 %v527, %v520
  %v864 = vpack.c.b16 %v535, %v528
  %v865 = vpack.c.b16 %v536, %v529
  %v866 = vpack.c.b16 %v537, %v530
  %v867 = vpack.c.b16 %v538, %v531
  %v868 = vpack.c.b16 %v539, %v532
  %v869 = vpack.c.b16 %v540, %v533
  %v870 = vpack.c.b16 %v541, %v534
  %v871 = vpack.c.b16 %v549, %v542
  %v872 = vpack.c.b16 %v550, %v543
  %v873 = vpack.c.b16 %v551, %v544
  %v874 = vpack.c.b16 %v552, %v545
  %v875 = vpack.c.b16 %v553, %v546
  %v876 = vpack.c.b16 %v554, %v547
  %v877 = vpack.c.b16 %v555, %v548
  %v878 = vpack.c.b16 %v563, %v556
  %v879 = vpack.c.b16 %v564, %v557
  %v880 = vpack.c.b16 %v565, %v558
  %v881 = vpack.c.b16 %v566, %v559
  %v882 = vpack.c.b16 %v567, %v560
  %v883 = vpack.c.b16 %v568, %v561
  %v884 = vpack.c.b16 %v569, %v562
  %v885 = vpack.c.b16 %v577, %v570
  %v886 = vpack.c.b16 %v578, %v571
  %v887 = vpack.c.b16 %v579, %v572
  %v888 = vpack.c.b16 %v580, %v573
  %v889 = vpack.c.b16 %v581, %v574
  %v890 = vpack.c.b16 %v582, %v575
  %v891 = vpack.c.b16 %v583, %v576
  %v892 = vpack.c.b16 %v591, %v584
  %v893 = vpack.c.b16 %v592, %v585
  %v894 = vpack.c.b16 %v593, %v586
  %v895 = vpack.c.b16 %v594, %v587
  %v896 = vpack.c.b16 %v595, %v588
  %v897 = vpack.c.b16 %v596, %v589
  %v898 = vpack.c.b16 %v597, %v590
  %v899 = vpack.c.b16 %v605, %v598
  %v900 = vpack.c.b16 %v606, %v599
  %v901 = vpack.c.b16 %v607, %v600
  %v902 = vpack.c.b16 %v608, %v601
  %v903 = vpack.c.b16 %v609, %v602
  %v904 = vpack.c.b16 %v610, %v603
  %v905 = vpack.c.b16 %v611, %v604
  %v906 = vpack.c.b16 %v619, %v612
  %v907 = vpack.c.b16 %v620, %v613
  %v908 = vpack.c.b16 %v621, %v614
  %v909 = vpack.c.b16 %v622, %v615
  %v910 = vpack.c.b16 %v623, %v616
  %v911 = vpack.c.b16 %v624, %v617
  %v912 = vpack.c.b16 %v625, %v618
  %v913 = vpack.c.b16 %v633, %v626
  %v914 = vpack.c.b16 %v634, %v627
  %v915 = vpack.c.b16 %v635, %v628
  %v916 = vpack.c.b16 %v636, %v629
  %v917 = vpack.c.b16 %v637, %v630
  %v918 = vpack.c.b16 %v638, %v631
  %v919 = vpack.c.b16 %v639, %v632
  %v920 = vpack.c.b16 %v647, %v640
  %v921 = vpack.c.b16 %v648, %v641
  %v922 = vpack.c.b16 %v649, %v642
  %v923 = vpack.c.b16 %v650, %v643
  %v924 = vpack.c.b16 %v651, %v644
  %v925 = vpack.c.b16 %v652, %v645
  %v926 = vpack.c.b16 %v653, %v646
  %v927 = vpack.c.b16 %v661, %v654
  %v928 = vpack.c.b16 %v662, %v655
  %v929 = vpack.c.b16 %v663, %v656
  %v930 = vpack.c.b16 %v664, %v657
  %v931 = vpack.c.b16 %v665, %v658
  %v932 = vpack.c.b16 %v666, %v659
  %v933 = vpack.c.b16 %v667, %v660
  %v934 = vpack.c.b16 %v675, %v668
  %v935 = vpack.c.b16 %v676, %v669
  %v936 = vpack.c.b16 %v677, %v670
  %v937 = vpack.c.b16 %v678, %v671
  %v938 = vpack.c.b16 %v679, %v672
  %v939 = vpack.c.b16 %v680, %v673
  %v940 = vpack.c.b16 %v681, %v674
  %v941 = vpack.c.b16 %v689, %v682
  %v942 = vpack.c.b16 %v690, %v683
  %v943 = vpack.c.b16 %v691, %v684
  %v944 = vpack.c.b16 %v692, %v685
  %v945 = vpack.c.b16 %v693, %v686
  %v946 = vpack.c.b16 %v694, %v687
  %v947 = vpack.c.b16 %v695, %v688
  %v948 = vpack.c.b16 %v703, %v696
  %v949 = vpack.c.b16 %v704, %v697
  %v950 = vpack.c.b16 %v705, %v698
  %v951 = vpack.c.b16 %v706, %v699
  %v952 = vpack.c.b16 %v707, %v700
  %v953 = vpack.c.b16 %v708, %v701
  %v954 = vpack.c.b16 %v709, %v702
  %v955 = vpack.c.b16 %v717, %v710
  %v956 = vpack.c.b16 %v718, %v711
  %v957 = vpack.c.b16 %v719, %v712
  %v958 = vpack.c.b16 %v720, %v713
  %v959 = vpack.c.b16 %v721, %v714
  %v960 = vpack.c.b16 %v722, %v715
  %v961 = vpack.c.b16 %v723, %v716
  %v962 = vpack.c.b16 %v731, %v724
  %v963 = vpack.c.b16 %v732, %v725
  %v964 = vpack.c.b16 %v733, %v726
  %v965 = vpack.c.b16 %v734, %v727
  %v966 = vpack.c.b16 %v735, %v728
  %v967 = vpack.c.b16 %v736, %v729
  %v968 = vpack.c.b16 %v737, %v730
  %v969 = vpack.c.b16 %v745, %v738
  %v970 = vpack.c.b16 %v746, %v739
  %v971 = vpack.c.b16 %v747, %v740
  %v972 = vpack.c.b16 %v748, %v741
  %v973 = vpack.c.b16 %v749, %v742
  %v974 = vpack.c.b16 %v750, %v743
  %v975 = vpack.c.b16 %v751, %v744
  %v976 = vpack.c.b16 %v759, %v752
  %v977 = vpack.c.b16 %v760, %v753
  %v978 = vpack.c.b16 %v761, %v754
  %v979 = vpack.c.b16 %v762, %v755
  %v980 = vpack.c.b16 %v763, %v756
  %v981 = vpack.c.b16 %v764, %v757
  %v982 = vpack.c.b16 %v765, %v758
  %v983 = vpack.c.b16 %v773, %v766
  %v984 = vpack.c.b16 %v774, %v767
  %v985 = vpack.c.b16 %v775, %v768
  %v986 = vpack.c.b16 %v776, %v769
  %v987 = vpack.c.b16 %v777, %v770
  %v988 = vpack.c.b16 %v778, %v771
  %v989 = vpack.c.b16 %v779, %v772
  %v990 = vpack.c.b16 %v787, %v780
  %v991 = vpack.c.b16 %v788, %v781
  %v992 = vpack.c.b16 %v789, %v782
  %v993 = vpack.c.b16 %v790, %v783
  %v994 = vpack.c.b16 %v791, %v784
  %v995 = vpack.c.b16 %v792, %v785
  %v996 = vpack.c.b16 %v793, %v786
  %v997 = vpack.c.b16 %v801, %v794
  %v998 = vpack.c.b16 %v802, %v795
  %v999 = vpack.c.b16 %v803, %v796
  %v1000 = vpack.c.b16 %v804, %v797
  %v1001 = vpack.c.b16 %v805, %v798
  %v1002 = vpack.c.b16 %v806, %v799
  %v1003 = vpack.c.b16 %v807, %v800
  %v1004 = vpack.c.b16 %v815, %v808
  %v1005 = vpack.c.b16 %v816, %v809
  %v1006 = vpack.c.b16 %v817, %v810
  %v1007 = vpack.c.b16 %v818, %v811
  %v1008 = vpack.c.b16 %v819, %v812
  %v1009 = vpack.c.b16 %v820, %v813
  %v1010 = vpack.c.b16 %v821, %v814
  %v1011 = vpack.c.b16 %v829, %v822
  %v1012 = vpack.c.b16 %v830, %v823
  %v1013 = vpack.c.b16 %v831, %v824
  %v1014 = vpack.c.b16 %v832, %v825
  %v1015 = vpack.c.b16 %v833, %v826
  %v1016 = vpack.c.b16 %v834, %v827
  %v1017 = vpack.c.b16 %v835, %v828
  %v1018 = vpack.c.b16 %v843, %v836
  %v1019 = vpack.c.b16 %v844, %v837
  %v1020 = vpack.c.b16 %v845, %v838
  %v1021 = vpack.c.b16 %v846, %v839
  %v1022 = vpack.c.b16 %v847, %v840
  %v1023 = vpack.c.b16 %v848, %v841
  %v1024 = vpack.c.b16 %v849, %v842
  %v1025 = vpack.c.b16 %v850, %v850
  %v1026 = vpack.c.b16 %v851, %v851
  %v1027 = vpack.c.b16 %v852, %v852
  %v1028 = vpack.c.b16 %v853, %v853
  %v1029 = vpack.c.b16 %v854, %v854
  %v1030 = vpack.c.b16 %v855, %v855
  %v1031 = vpack.c.b16 %v856, %v856
  %v1282 = vunpack.c.l.b16 %v211
  %v1283 = vunpack.c.l.b16 %v212
  %v1284 = vunpack.c.l.b16 %v213
  %v1285 = vunpack.c.l.b16 %v214
  %v1286 = vunpack.c.l.b16 %v215
  %v1287 = vunpack.c.l.b16 %v216
  %v1288 = vunpack.c.l.b16 %v217
  %v1289 = vunpack.c.l.b16 %v218
  %v1290 = vunpack.c.l.b16 %v219
  %v1291 = vunpack.c.l.b16 %v220
  %v1292 = vunpack.c.l.b16 %v221
  %v1293 = vunpack.c.l.b16 %v222
  %v1294 = vunpack.c.l.b16 %v223
  %v1295 = vunpack.c.l.b16 %v224
  %v1296 = vunpack.c.l.b16 %v225
  %v1297 = vunpack.c.l.b16 %v226
  %v1298 = vunpack.c.l.b16 %v227
  %v1299 = vunpack.c.l.b16 %v228
  %v1300 = vunpack.c.l.b16 %v229
  %v1301 = vunpack.c.l.b16 %v230
  %v1302 = vunpack.c.l.b16 %v231
  %v1303 = vunpack.c.l.b16 %v232
  %v1304 = vunpack.c.l.b16 %v233
  %v1305 = vunpack.c.l.b16 %v234
  %v1306 = vunpack.c.l.b16 %v235
  %v1307 = vunpack.c.l.b16 %v236
  %v1308 = vunpack.c.l.b16 %v237
  %v1309 = vunpack.c.l.b16 %v238
  %v1310 = vunpack.c.l.b16 %v239
  %v1311 = vunpack.c.l.b16 %v240
  %v1312 = vunpack.c.l.b16 %v241
  %v1313 = vunpack.c.l.b16 %v242
  %v1314 = vunpack.c.l.b16 %v243
  %v1315 = vunpack.c.l.b16 %v244
  %v1316 = vunpack.c.l.b16 %v245
  %v1317 = vunpack.c.l.b16 %v246
  %v1318 = vunpack.c.l.b16 %v247
  %v1319 = vunpack.c.l.b16 %v248
  %v1320 = vunpack.c.l.b16 %v249
  %v1321 = vunpack.c.l.b16 %v250
  %v1322 = vunpack.c.l.b16 %v251
  %v1323 = vunpack.c.l.b16 %v252
  %v1324 = vunpack.c.l.b16 %v253
  %v1325 = vunpack.c.l.b16 %v254
  %v1326 = vunpack.c.l.b16 %v255
  %v1327 = vunpack.c.l.b16 %v256
  %v1328 = vunpack.c.l.b16 %v257
  %v1329 = vunpack.c.l.b16 %v258
  %v1330 = vunpack.c.l.b16 %v259
  %v1331 = vunpack.c.l.b16 %v260
  %v1332 = vunpack.c.l.b16 %v261
  %v1333 = vunpack.c.l.b16 %v262
  %v1334 = vunpack.c.l.b16 %v263
  %v1335 = vunpack.c.l.b16 %v264
  %v1336 = vunpack.c.l.b16 %v265
  %v1337 = vunpack.c.l.b16 %v266
  %v1338 = vunpack.c.l.b16 %v267
  %v1339 = vunpack.c.l.b16 %v268
  %v1340 = vunpack.c.l.b16 %v269
  %v1341 = vunpack.c.l.b16 %v270
  %v1342 = vunpack.c.l.b16 %v271
  %v1343 = vunpack.c.l.b16 %v272
  %v1344 = vunpack.c.l.b16 %v273
  %v1345 = vunpack.c.l.b16 %v274
  %v1346 = vunpack.c.l.b16 %v275
  %v1347 = vunpack.c.l.b16 %v276
  %v1348 = vunpack.c.l.b16 %v277
  %v1349 = vunpack.c.l.b16 %v278
  %v1350 = vunpack.c.l.b16 %v279
  %v1351 = vunpack.c.l.b16 %v280
  %v1352 = vunpack.c.l.b16 %v281
  %v1353 = vunpack.c.l.b16 %v282
  %v1354 = vunpack.c.l.b16 %v283
  %v1355 = vunpack.c.l.b16 %v284
  %v1356 = vunpack.c.l.b16 %v285
  %v1357 = vunpack.c.l.b16 %v286
  %v1358 = vunpack.c.l.b16 %v287
  %v1359 = vunpack.c.l.b16 %v288
  %v1360 = vunpack.c.l.b16 %v289
  %v1361 = vunpack.c.l.b16 %v290
  %v1362 = vunpack.c.l.b16 %v291
  %v1363 = vunpack.c.l.b16 %v292
  %v1364 = vunpack.c.l.b16 %v293
  %v1365 = vunpack.c.l.b16 %v294
  %v1366 = vunpack.c.l.b16 %v295
  %v1367 = vunpack.c.l.b16 %v296
  %v1368 = vunpack.c.l.b16 %v297
  %v1369 = vunpack.c.l.b16 %v298
  %v1370 = vunpack.c.l.b16 %v299
  %v1371 = vunpack.c.l.b16 %v300
  %v1372 = vunpack.c.l.b16 %v301
  %v1373 = vunpack.c.l.b16 %v302
  %v1374 = vunpack.c.l.b16 %v303
  %v1375 = vunpack.c.l.b16 %v304
  %v1376 = vunpack.c.l.b16 %v305
  %v1377 = vunpack.c.l.b16 %v306
  %v1378 = vunpack.c.l.b16 %v307
  %v1379 = vunpack.c.l.b16 %v308
  %v1380 = vunpack.c.l.b16 %v309
  %v1381 = vunpack.c.l.b16 %v310
  %v1382 = vpack.c.b16 %v1283, %v1282
  %v1383 = vpack.c.b16 %v1285, %v1284
  %v1384 = vpack.c.b16 %v1287, %v1286
  %v1385 = vpack.c.b16 %v1289, %v1288
  %v1386 = vpack.c.b16 %v1291, %v1290
  %v1387 = vpack.c.b16 %v1293, %v1292
  %v1388 = vpack.c.b16 %v1295, %v1294
  %v1389 = vpack.c.b16 %v1297, %v1296
  %v1390 = vpack.c.b16 %v1299, %v1298
  %v1391 = vpack.c.b16 %v1301, %v1300
  %v1392 = vpack.c.b16 %v1303, %v1302
  %v1393 = vpack.c.b16 %v1305, %v1304
  %v1394 = vpack.c.b16 %v1307, %v1306
  %v1395 = vpack.c.b16 %v1309, %v1308
  %v1396 = vpack.c.b16 %v1311, %v1310
  %v1397 = vpack.c.b16 %v1313, %v1312
  %v1398 = vpack.c.b16 %v1315, %v1314
  %v1399 = vpack.c.b16 %v1317, %v1316
  %v1400 = vpack.c.b16 %v1319, %v1318
  %v1401 = vpack.c.b16 %v1321, %v1320
  %v1402 = vpack.c.b16 %v1323, %v1322
  %v1403 = vpack.c.b16 %v1325, %v1324
  %v1404 = vpack.c.b16 %v1327, %v1326
  %v1405 = vpack.c.b16 %v1329, %v1328
  %v1406 = vpack.c.b16 %v1331, %v1330
  %v1407 = vpack.c.b16 %v1333, %v1332
  %v1408 = vpack.c.b16 %v1335, %v1334
  %v1409 = vpack.c.b16 %v1337, %v1336
  %v1410 = vpack.c.b16 %v1339, %v1338
  %v1411 = vpack.c.b16 %v1341, %v1340
  %v1412 = vpack.c.b16 %v1343, %v1342
  %v1413 = vpack.c.b16 %v1345, %v1344
  %v1414 = vpack.c.b16 %v1347, %v1346
  %v1415 = vpack.c.b16 %v1349, %v1348
  %v1416 = vpack.c.b16 %v1351, %v1350
  %v1417 = vpack.c.b16 %v1353, %v1352
  %v1418 = vpack.c.b16 %v1355, %v1354
  %v1419 = vpack.c.b16 %v1357, %v1356
  %v1420 = vpack.c.b16 %v1359, %v1358
  %v1421 = vpack.c.b16 %v1361, %v1360
  %v1422 = vpack.c.b16 %v1363, %v1362
  %v1423 = vpack.c.b16 %v1365, %v1364
  %v1424 = vpack.c.b16 %v1367, %v1366
  %v1425 = vpack.c.b16 %v1369, %v1368
  %v1426 = vpack.c.b16 %v1371, %v1370
  %v1427 = vpack.c.b16 %v1373, %v1372
  %v1428 = vpack.c.b16 %v1375, %v1374
  %v1429 = vpack.c.b16 %v1377, %v1376
  %v1430 = vpack.c.b16 %v1379, %v1378
  %v1431 = vpack.c.b16 %v1381, %v1380
  %vm1482 = vcmask 261120
  %v1484 = vsel %vm1482, %v863, 0
  %v1487 = vsel %vm1482, %v870, 0
  %v1490 = vsel %vm1482, %v877, 0
  %v1493 = vsel %vm1482, %v884, 0
  %v1496 = vsel %vm1482, %v891, 0
  %v1499 = vsel %vm1482, %v898, 0
  %v1502 = vsel %vm1482, %v905, 0
  %v1505 = vsel %vm1482, %v912, 0
  %v1508 = vsel %vm1482, %v919, 0
  %v1511 = vsel %vm1482, %v926, 0
  %v1514 = vsel %vm1482, %v933, 0
  %v1517 = vsel %vm1482, %v940, 0
  %v1520 = vsel %vm1482, %v947, 0
  %v1523 = vsel %vm1482, %v954, 0
  %v1526 = vsel %vm1482, %v961, 0
  %v1529 = vsel %vm1482, %v968, 0
  %v1532 = vsel %vm1482, %v975, 0
  %v1535 = vsel %vm1482, %v982, 0
  %v1538 = vsel %vm1482, %v989, 0
  %v1541 = vsel %vm1482, %v996, 0
  %v1544 = vsel %vm1482, %v1003, 0
  %v1547 = vsel %vm1482, %v1010, 0
  %v1550 = vsel %vm1482, %v1017, 0
  %v1553 = vsel %vm1482, %v1024, 0
  %v1556 = vsel %vm1482, %v1031, 0
  %1558 = vmatprep.subr.bf16.mxu0 0
  %1559 = vmatpush1.bf16.msra.mxu0 %v1389
  %1560 = vmatprep.subr.bf16.mxu0 0
  %1561 = vmatpush1.bf16.msra.mxu0 %v1388
  %1562 = vmatprep.subr.bf16.mxu0 0
  %1563 = vmatpush1.bf16.msra.mxu0 %v1387
  %1564 = vmatprep.subr.bf16.mxu0 0
  %1565 = vmatpush1.bf16.msra.mxu0 %v1386
  %1566 = vmatprep.subr.bf16.mxu0 0
  %1567 = vmatpush1.bf16.msra.mxu0 %v1385
  %1568 = vmatprep.subr.bf16.mxu0 0
  %1569 = vmatpush1.bf16.msra.mxu0 %v1384
  %1570 = vmatprep.subr.bf16.mxu0 0
  %1571 = vmatpush1.bf16.msra.mxu0 %v1383
  %1572 = vmatprep.subr.bf16.mxu0 0
  %1573 = vmatpush1.bf16.msra.mxu0 %v1382
  %1574 = vmatprep.subr.bf16.mxu0 0
  %1575 = vmatpush2.bf16.msra.mxu0 %v1397
  %1576 = vmatprep.subr.bf16.mxu0 0
  %1577 = vmatpush2.bf16.msra.mxu0 %v1396
  %1578 = vmatprep.subr.bf16.mxu0 0
  %1579 = vmatpush2.bf16.msra.mxu0 %v1395
  %1580 = vmatprep.subr.bf16.mxu0 0
  %1581 = vmatpush2.bf16.msra.mxu0 %v1394
  %1582 = vmatprep.subr.bf16.mxu0 0
  %1583 = vmatpush2.bf16.msra.mxu0 %v1393
  %1584 = vmatprep.subr.bf16.mxu0 0
  %1585 = vmatpush2.bf16.msra.mxu0 %v1392
  %1586 = vmatprep.subr.bf16.mxu0 0
  %1587 = vmatpush2.bf16.msra.mxu0 %v1391
  %1588 = vmatprep.subr.bf16.mxu0 0
  %1589 = vmatpush2.bf16.msra.mxu0 %v1390
  %1590 = vmatprep.mubr.bf16.mxu0 %v858
  %1591 = vmatmul.mubr.bf16.gmra.mxu0 %v857
  %v1592 = vpop.f32.mrf.mxu0
  %v1593 = vadd.f32 %v316, %v1592
  %v1594 = vpop.f32.mrf.mxu0
  %v1595 = vpop.f32.mrf.mxu0
  %v1596 = vadd.f32 %v316, %v1595
  %v1597 = vpop.f32.mrf.mxu0
  %1598 = vmatprep.mubr.bf16.mxu0 %v865
  %1599 = vmatmul.mubr.bf16.gmra.mxu0 %v864
  %v1600 = vpop.f32.mrf.mxu0
  %v1601 = vadd.f32 %v316, %v1600
  %v1602 = vpop.f32.mrf.mxu0
  %v1603 = vpop.f32.mrf.mxu0
  %v1604 = vadd.f32 %v316, %v1603
  %v1605 = vpop.f32.mrf.mxu0
  %1606 = vmatprep.mubr.bf16.mxu0 %v872
  %1607 = vmatmul.mubr.bf16.gmra.mxu0 %v871
  %v1608 = vpop.f32.mrf.mxu0
  %v1609 = vadd.f32 %v316, %v1608
  %v1610 = vpop.f32.mrf.mxu0
  %v1611 = vpop.f32.mrf.mxu0
  %v1612 = vadd.f32 %v316, %v1611
  %v1613 = vpop.f32.mrf.mxu0
  %1614 = vmatprep.mubr.bf16.mxu0 %v879
  %1615 = vmatmul.mubr.bf16.gmra.mxu0 %v878
  %v1616 = vpop.f32.mrf.mxu0
  %v1617 = vadd.f32 %v316, %v1616
  %v1618 = vpop.f32.mrf.mxu0
  %v1619 = vpop.f32.mrf.mxu0
  %v1620 = vadd.f32 %v316, %v1619
  %v1621 = vpop.f32.mrf.mxu0
  %1622 = vmatprep.mubr.bf16.mxu0 %v886
  %1623 = vmatmul.mubr.bf16.gmra.mxu0 %v885
  %v1624 = vpop.f32.mrf.mxu0
  %v1625 = vadd.f32 %v316, %v1624
  %v1626 = vpop.f32.mrf.mxu0
  %v1627 = vpop.f32.mrf.mxu0
  %v1628 = vadd.f32 %v316, %v1627
  %v1629 = vpop.f32.mrf.mxu0
  %1630 = vmatprep.mubr.bf16.mxu0 %v893
  %1631 = vmatmul.mubr.bf16.gmra.mxu0 %v892
  %v1632 = vpop.f32.mrf.mxu0
  %v1633 = vadd.f32 %v316, %v1632
  %v1634 = vpop.f32.mrf.mxu0
  %v1635 = vpop.f32.mrf.mxu0
  %v1636 = vadd.f32 %v316, %v1635
  %v1637 = vpop.f32.mrf.mxu0
  %1638 = vmatprep.mubr.bf16.mxu0 %v900
  %1639 = vmatmul.mubr.bf16.gmra.mxu0 %v899
  %v1640 = vpop.f32.mrf.mxu0
  %v1641 = vadd.f32 %v316, %v1640
  %v1642 = vpop.f32.mrf.mxu0
  %v1643 = vpop.f32.mrf.mxu0
  %v1644 = vadd.f32 %v316, %v1643
  %v1645 = vpop.f32.mrf.mxu0
  %1646 = vmatprep.mubr.bf16.mxu0 %v907
  %1647 = vmatmul.mubr.bf16.gmra.mxu0 %v906
  %v1648 = vpop.f32.mrf.mxu0
  %v1649 = vadd.f32 %v316, %v1648
  %v1650 = vpop.f32.mrf.mxu0
  %v1651 = vpop.f32.mrf.mxu0
  %v1652 = vadd.f32 %v316, %v1651
  %v1653 = vpop.f32.mrf.mxu0
  %1654 = vmatprep.mubr.bf16.mxu0 %v914
  %1655 = vmatmul.mubr.bf16.gmra.mxu0 %v913
  %v1656 = vpop.f32.mrf.mxu0
  %v1657 = vadd.f32 %v316, %v1656
  %v1658 = vpop.f32.mrf.mxu0
  %v1659 = vpop.f32.mrf.mxu0
  %v1660 = vadd.f32 %v316, %v1659
  %v1661 = vpop.f32.mrf.mxu0
  %1662 = vmatprep.mubr.bf16.mxu0 %v921
  %1663 = vmatmul.mubr.bf16.gmra.mxu0 %v920
  %v1664 = vpop.f32.mrf.mxu0
  %v1665 = vadd.f32 %v316, %v1664
  %v1666 = vpop.f32.mrf.mxu0
  %v1667 = vpop.f32.mrf.mxu0
  %v1668 = vadd.f32 %v316, %v1667
  %v1669 = vpop.f32.mrf.mxu0
  %1670 = vmatprep.mubr.bf16.mxu0 %v928
  %1671 = vmatmul.mubr.bf16.gmra.mxu0 %v927
  %v1672 = vpop.f32.mrf.mxu0
  %v1673 = vadd.f32 %v316, %v1672
  %v1674 = vpop.f32.mrf.mxu0
  %v1675 = vpop.f32.mrf.mxu0
  %v1676 = vadd.f32 %v316, %v1675
  %v1677 = vpop.f32.mrf.mxu0
  %1678 = vmatprep.mubr.bf16.mxu0 %v935
  %1679 = vmatmul.mubr.bf16.gmra.mxu0 %v934
  %v1680 = vpop.f32.mrf.mxu0
  %v1681 = vadd.f32 %v316, %v1680
  %v1682 = vpop.f32.mrf.mxu0
  %v1683 = vpop.f32.mrf.mxu0
  %v1684 = vadd.f32 %v316, %v1683
  %v1685 = vpop.f32.mrf.mxu0
  %1686 = vmatprep.mubr.bf16.mxu0 %v942
  %1687 = vmatmul.mubr.bf16.gmra.mxu0 %v941
  %v1688 = vpop.f32.mrf.mxu0
  %v1689 = vadd.f32 %v316, %v1688
  %v1690 = vpop.f32.mrf.mxu0
  %v1691 = vpop.f32.mrf.mxu0
  %v1692 = vadd.f32 %v316, %v1691
  %v1693 = vpop.f32.mrf.mxu0
  %1694 = vmatprep.mubr.bf16.mxu0 %v949
  %1695 = vmatmul.mubr.bf16.gmra.mxu0 %v948
  %v1696 = vpop.f32.mrf.mxu0
  %v1697 = vadd.f32 %v316, %v1696
  %v1698 = vpop.f32.mrf.mxu0
  %v1699 = vpop.f32.mrf.mxu0
  %v1700 = vadd.f32 %v316, %v1699
  %v1701 = vpop.f32.mrf.mxu0
  %1702 = vmatprep.mubr.bf16.mxu0 %v956
  %1703 = vmatmul.mubr.bf16.gmra.mxu0 %v955
  %v1704 = vpop.f32.mrf.mxu0
  %v1705 = vadd.f32 %v316, %v1704
  %v1706 = vpop.f32.mrf.mxu0
  %v1707 = vpop.f32.mrf.mxu0
  %v1708 = vadd.f32 %v316, %v1707
  %v1709 = vpop.f32.mrf.mxu0
  %1710 = vmatprep.mubr.bf16.mxu0 %v963
  %1711 = vmatmul.mubr.bf16.gmra.mxu0 %v962
  %v1712 = vpop.f32.mrf.mxu0
  %v1713 = vadd.f32 %v316, %v1712
  %v1714 = vpop.f32.mrf.mxu0
  %v1715 = vpop.f32.mrf.mxu0
  %v1716 = vadd.f32 %v316, %v1715
  %v1717 = vpop.f32.mrf.mxu0
  %1718 = vmatprep.mubr.bf16.mxu0 %v970
  %1719 = vmatmul.mubr.bf16.gmra.mxu0 %v969
  %v1720 = vpop.f32.mrf.mxu0
  %v1721 = vadd.f32 %v316, %v1720
  %v1722 = vpop.f32.mrf.mxu0
  %v1723 = vpop.f32.mrf.mxu0
  %v1724 = vadd.f32 %v316, %v1723
  %v1725 = vpop.f32.mrf.mxu0
  %1726 = vmatprep.mubr.bf16.mxu0 %v977
  %1727 = vmatmul.mubr.bf16.gmra.mxu0 %v976
  %v1728 = vpop.f32.mrf.mxu0
  %v1729 = vadd.f32 %v316, %v1728
  %v1730 = vpop.f32.mrf.mxu0
  %v1731 = vpop.f32.mrf.mxu0
  %v1732 = vadd.f32 %v316, %v1731
  %v1733 = vpop.f32.mrf.mxu0
  %1734 = vmatprep.mubr.bf16.mxu0 %v984
  %1735 = vmatmul.mubr.bf16.gmra.mxu0 %v983
  %v1736 = vpop.f32.mrf.mxu0
  %v1737 = vadd.f32 %v316, %v1736
  %v1738 = vpop.f32.mrf.mxu0
  %v1739 = vpop.f32.mrf.mxu0
  %v1740 = vadd.f32 %v316, %v1739
  %v1741 = vpop.f32.mrf.mxu0
  %1742 = vmatprep.mubr.bf16.mxu0 %v991
  %1743 = vmatmul.mubr.bf16.gmra.mxu0 %v990
  %v1744 = vpop.f32.mrf.mxu0
  %v1745 = vadd.f32 %v316, %v1744
  %v1746 = vpop.f32.mrf.mxu0
  %v1747 = vpop.f32.mrf.mxu0
  %v1748 = vadd.f32 %v316, %v1747
  %v1749 = vpop.f32.mrf.mxu0
  %1750 = vmatprep.mubr.bf16.mxu0 %v998
  %1751 = vmatmul.mubr.bf16.gmra.mxu0 %v997
  %v1752 = vpop.f32.mrf.mxu0
  %v1753 = vadd.f32 %v316, %v1752
  %v1754 = vpop.f32.mrf.mxu0
  %v1755 = vpop.f32.mrf.mxu0
  %v1756 = vadd.f32 %v316, %v1755
  %v1757 = vpop.f32.mrf.mxu0
  %1758 = vmatprep.mubr.bf16.mxu0 %v1005
  %1759 = vmatmul.mubr.bf16.gmra.mxu0 %v1004
  %v1760 = vpop.f32.mrf.mxu0
  %v1761 = vadd.f32 %v316, %v1760
  %v1762 = vpop.f32.mrf.mxu0
  %v1763 = vpop.f32.mrf.mxu0
  %v1764 = vadd.f32 %v316, %v1763
  %v1765 = vpop.f32.mrf.mxu0
  %1766 = vmatprep.mubr.bf16.mxu0 %v1012
  %1767 = vmatmul.mubr.bf16.gmra.mxu0 %v1011
  %v1768 = vpop.f32.mrf.mxu0
  %v1769 = vadd.f32 %v316, %v1768
  %v1770 = vpop.f32.mrf.mxu0
  %v1771 = vpop.f32.mrf.mxu0
  %v1772 = vadd.f32 %v316, %v1771
  %v1773 = vpop.f32.mrf.mxu0
  %1774 = vmatprep.mubr.bf16.mxu0 %v1019
  %1775 = vmatmul.mubr.bf16.gmra.mxu0 %v1018
  %v1776 = vpop.f32.mrf.mxu0
  %v1777 = vadd.f32 %v316, %v1776
  %v1778 = vpop.f32.mrf.mxu0
  %v1779 = vpop.f32.mrf.mxu0
  %v1780 = vadd.f32 %v316, %v1779
  %v1781 = vpop.f32.mrf.mxu0
  %1782 = vmatprep.mubr.bf16.mxu0 %v1026
  %1783 = vmatmul.mubr.bf16.gmra.mxu0 %v1025
  %v1784 = vpop.f32.mrf.mxu0
  %v1785 = vadd.f32 %v316, %v1784
  %v1786 = vpop.f32.mrf.mxu0
  %v1787 = vpop.f32.mrf.mxu0
  %v1788 = vpop.f32.mrf.mxu0
  %1789 = vdwg.mxu0
  %1790 = vmatprep.subr.bf16.mxu0 0
  %1791 = vmatpush1.bf16.msra.mxu0 %v1405
  %1792 = vmatprep.subr.bf16.mxu0 0
  %1793 = vmatpush1.bf16.msra.mxu0 %v1404
  %1794 = vmatprep.subr.bf16.mxu0 0
  %1795 = vmatpush1.bf16.msra.mxu0 %v1403
  %1796 = vmatprep.subr.bf16.mxu0 0
  %1797 = vmatpush1.bf16.msra.mxu0 %v1402
  %1798 = vmatprep.subr.bf16.mxu0 0
  %1799 = vmatpush1.bf16.msra.mxu0 %v1401
  %1800 = vmatprep.subr.bf16.mxu0 0
  %1801 = vmatpush1.bf16.msra.mxu0 %v1400
  %1802 = vmatprep.subr.bf16.mxu0 0
  %1803 = vmatpush1.bf16.msra.mxu0 %v1399
  %1804 = vmatprep.subr.bf16.mxu0 0
  %1805 = vmatpush1.bf16.msra.mxu0 %v1398
  %1806 = vmatprep.subr.bf16.mxu0 0
  %1807 = vmatpush2.bf16.msra.mxu0 %v1413
  %1808 = vmatprep.subr.bf16.mxu0 0
  %1809 = vmatpush2.bf16.msra.mxu0 %v1412
  %1810 = vmatprep.subr.bf16.mxu0 0
  %1811 = vmatpush2.bf16.msra.mxu0 %v1411
  %1812 = vmatprep.subr.bf16.mxu0 0
  %1813 = vmatpush2.bf16.msra.mxu0 %v1410
  %1814 = vmatprep.subr.bf16.mxu0 0
  %1815 = vmatpush2.bf16.msra.mxu0 %v1409
  %1816 = vmatprep.subr.bf16.mxu0 0
  %1817 = vmatpush2.bf16.msra.mxu0 %v1408
  %1818 = vmatprep.subr.bf16.mxu0 0
  %1819 = vmatpush2.bf16.msra.mxu0 %v1407
  %1820 = vmatprep.subr.bf16.mxu0 0
  %1821 = vmatpush2.bf16.msra.mxu0 %v1406
  %1822 = vmatprep.mubr.bf16.mxu0 %v860
  %1823 = vmatmul.mubr.bf16.gmra.mxu0 %v859
  %v1824 = vpop.f32.mrf.mxu0
  %v1825 = vadd.f32 %v1593, %v1824
  %v1826 = vpop.f32.mrf.mxu0
  %v1827 = vpop.f32.mrf.mxu0
  %v1828 = vadd.f32 %v1596, %v1827
  %v1829 = vpop.f32.mrf.mxu0
  %1830 = vmatprep.mubr.bf16.mxu0 %v867
  %1831 = vmatmul.mubr.bf16.gmra.mxu0 %v866
  %v1832 = vpop.f32.mrf.mxu0
  %v1833 = vadd.f32 %v1601, %v1832
  %v1834 = vpop.f32.mrf.mxu0
  %v1835 = vpop.f32.mrf.mxu0
  %v1836 = vadd.f32 %v1604, %v1835
  %v1837 = vpop.f32.mrf.mxu0
  %1838 = vmatprep.mubr.bf16.mxu0 %v874
  %1839 = vmatmul.mubr.bf16.gmra.mxu0 %v873
  %v1840 = vpop.f32.mrf.mxu0
  %v1841 = vadd.f32 %v1609, %v1840
  %v1842 = vpop.f32.mrf.mxu0
  %v1843 = vpop.f32.mrf.mxu0
  %v1844 = vadd.f32 %v1612, %v1843
  %v1845 = vpop.f32.mrf.mxu0
  %1846 = vmatprep.mubr.bf16.mxu0 %v881
  %1847 = vmatmul.mubr.bf16.gmra.mxu0 %v880
  %v1848 = vpop.f32.mrf.mxu0
  %v1849 = vadd.f32 %v1617, %v1848
  %v1850 = vpop.f32.mrf.mxu0
  %v1851 = vpop.f32.mrf.mxu0
  %v1852 = vadd.f32 %v1620, %v1851
  %v1853 = vpop.f32.mrf.mxu0
  %1854 = vmatprep.mubr.bf16.mxu0 %v888
  %1855 = vmatmul.mubr.bf16.gmra.mxu0 %v887
  %v1856 = vpop.f32.mrf.mxu0
  %v1857 = vadd.f32 %v1625, %v1856
  %v1858 = vpop.f32.mrf.mxu0
  %v1859 = vpop.f32.mrf.mxu0
  %v1860 = vadd.f32 %v1628, %v1859
  %v1861 = vpop.f32.mrf.mxu0
  %1862 = vmatprep.mubr.bf16.mxu0 %v895
  %1863 = vmatmul.mubr.bf16.gmra.mxu0 %v894
  %v1864 = vpop.f32.mrf.mxu0
  %v1865 = vadd.f32 %v1633, %v1864
  %v1866 = vpop.f32.mrf.mxu0
  %v1867 = vpop.f32.mrf.mxu0
  %v1868 = vadd.f32 %v1636, %v1867
  %v1869 = vpop.f32.mrf.mxu0
  %1870 = vmatprep.mubr.bf16.mxu0 %v902
  %1871 = vmatmul.mubr.bf16.gmra.mxu0 %v901
  %v1872 = vpop.f32.mrf.mxu0
  %v1873 = vadd.f32 %v1641, %v1872
  %v1874 = vpop.f32.mrf.mxu0
  %v1875 = vpop.f32.mrf.mxu0
  %v1876 = vadd.f32 %v1644, %v1875
  %v1877 = vpop.f32.mrf.mxu0
  %1878 = vmatprep.mubr.bf16.mxu0 %v909
  %1879 = vmatmul.mubr.bf16.gmra.mxu0 %v908
  %v1880 = vpop.f32.mrf.mxu0
  %v1881 = vadd.f32 %v1649, %v1880
  %v1882 = vpop.f32.mrf.mxu0
  %v1883 = vpop.f32.mrf.mxu0
  %v1884 = vadd.f32 %v1652, %v1883
  %v1885 = vpop.f32.mrf.mxu0
  %1886 = vmatprep.mubr.bf16.mxu0 %v916
  %1887 = vmatmul.mubr.bf16.gmra.mxu0 %v915
  %v1888 = vpop.f32.mrf.mxu0
  %v1889 = vadd.f32 %v1657, %v1888
  %v1890 = vpop.f32.mrf.mxu0
  %v1891 = vpop.f32.mrf.mxu0
  %v1892 = vadd.f32 %v1660, %v1891
  %v1893 = vpop.f32.mrf.mxu0
  %1894 = vmatprep.mubr.bf16.mxu0 %v923
  %1895 = vmatmul.mubr.bf16.gmra.mxu0 %v922
  %v1896 = vpop.f32.mrf.mxu0
  %v1897 = vadd.f32 %v1665, %v1896
  %v1898 = vpop.f32.mrf.mxu0
  %v1899 = vpop.f32.mrf.mxu0
  %v1900 = vadd.f32 %v1668, %v1899
  %v1901 = vpop.f32.mrf.mxu0
  %1902 = vmatprep.mubr.bf16.mxu0 %v930
  %1903 = vmatmul.mubr.bf16.gmra.mxu0 %v929
  %v1904 = vpop.f32.mrf.mxu0
  %v1905 = vadd.f32 %v1673, %v1904
  %v1906 = vpop.f32.mrf.mxu0
  %v1907 = vpop.f32.mrf.mxu0
  %v1908 = vadd.f32 %v1676, %v1907
  %v1909 = vpop.f32.mrf.mxu0
  %1910 = vmatprep.mubr.bf16.mxu0 %v937
  %1911 = vmatmul.mubr.bf16.gmra.mxu0 %v936
  %v1912 = vpop.f32.mrf.mxu0
  %v1913 = vadd.f32 %v1681, %v1912
  %v1914 = vpop.f32.mrf.mxu0
  %v1915 = vpop.f32.mrf.mxu0
  %v1916 = vadd.f32 %v1684, %v1915
  %v1917 = vpop.f32.mrf.mxu0
  %1918 = vmatprep.mubr.bf16.mxu0 %v944
  %1919 = vmatmul.mubr.bf16.gmra.mxu0 %v943
  %v1920 = vpop.f32.mrf.mxu0
  %v1921 = vadd.f32 %v1689, %v1920
  %v1922 = vpop.f32.mrf.mxu0
  %v1923 = vpop.f32.mrf.mxu0
  %v1924 = vadd.f32 %v1692, %v1923
  %v1925 = vpop.f32.mrf.mxu0
  %1926 = vmatprep.mubr.bf16.mxu0 %v951
  %1927 = vmatmul.mubr.bf16.gmra.mxu0 %v950
  %v1928 = vpop.f32.mrf.mxu0
  %v1929 = vadd.f32 %v1697, %v1928
  %v1930 = vpop.f32.mrf.mxu0
  %v1931 = vpop.f32.mrf.mxu0
  %v1932 = vadd.f32 %v1700, %v1931
  %v1933 = vpop.f32.mrf.mxu0
  %1934 = vmatprep.mubr.bf16.mxu0 %v958
  %1935 = vmatmul.mubr.bf16.gmra.mxu0 %v957
  %v1936 = vpop.f32.mrf.mxu0
  %v1937 = vadd.f32 %v1705, %v1936
  %v1938 = vpop.f32.mrf.mxu0
  %v1939 = vpop.f32.mrf.mxu0
  %v1940 = vadd.f32 %v1708, %v1939
  %v1941 = vpop.f32.mrf.mxu0
  %1942 = vmatprep.mubr.bf16.mxu0 %v965
  %1943 = vmatmul.mubr.bf16.gmra.mxu0 %v964
  %v1944 = vpop.f32.mrf.mxu0
  %v1945 = vadd.f32 %v1713, %v1944
  %v1946 = vpop.f32.mrf.mxu0
  %v1947 = vpop.f32.mrf.mxu0
  %v1948 = vadd.f32 %v1716, %v1947
  %v1949 = vpop.f32.mrf.mxu0
  %1950 = vmatprep.mubr.bf16.mxu0 %v972
  %1951 = vmatmul.mubr.bf16.gmra.mxu0 %v971
  %v1952 = vpop.f32.mrf.mxu0
  %v1953 = vadd.f32 %v1721, %v1952
  %v1954 = vpop.f32.mrf.mxu0
  %v1955 = vpop.f32.mrf.mxu0
  %v1956 = vadd.f32 %v1724, %v1955
  %v1957 = vpop.f32.mrf.mxu0
  %1958 = vmatprep.mubr.bf16.mxu0 %v979
  %1959 = vmatmul.mubr.bf16.gmra.mxu0 %v978
  %v1960 = vpop.f32.mrf.mxu0
  %v1961 = vadd.f32 %v1729, %v1960
  %v1962 = vpop.f32.mrf.mxu0
  %v1963 = vpop.f32.mrf.mxu0
  %v1964 = vadd.f32 %v1732, %v1963
  %v1965 = vpop.f32.mrf.mxu0
  %1966 = vmatprep.mubr.bf16.mxu0 %v986
  %1967 = vmatmul.mubr.bf16.gmra.mxu0 %v985
  %v1968 = vpop.f32.mrf.mxu0
  %v1969 = vadd.f32 %v1737, %v1968
  %v1970 = vpop.f32.mrf.mxu0
  %v1971 = vpop.f32.mrf.mxu0
  %v1972 = vadd.f32 %v1740, %v1971
  %v1973 = vpop.f32.mrf.mxu0
  %1974 = vmatprep.mubr.bf16.mxu0 %v993
  %1975 = vmatmul.mubr.bf16.gmra.mxu0 %v992
  %v1976 = vpop.f32.mrf.mxu0
  %v1977 = vadd.f32 %v1745, %v1976
  %v1978 = vpop.f32.mrf.mxu0
  %v1979 = vpop.f32.mrf.mxu0
  %v1980 = vadd.f32 %v1748, %v1979
  %v1981 = vpop.f32.mrf.mxu0
  %1982 = vmatprep.mubr.bf16.mxu0 %v1000
  %1983 = vmatmul.mubr.bf16.gmra.mxu0 %v999
  %v1984 = vpop.f32.mrf.mxu0
  %v1985 = vadd.f32 %v1753, %v1984
  %v1986 = vpop.f32.mrf.mxu0
  %v1987 = vpop.f32.mrf.mxu0
  %v1988 = vadd.f32 %v1756, %v1987
  %v1989 = vpop.f32.mrf.mxu0
  %1990 = vmatprep.mubr.bf16.mxu0 %v1007
  %1991 = vmatmul.mubr.bf16.gmra.mxu0 %v1006
  %v1992 = vpop.f32.mrf.mxu0
  %v1993 = vadd.f32 %v1761, %v1992
  %v1994 = vpop.f32.mrf.mxu0
  %v1995 = vpop.f32.mrf.mxu0
  %v1996 = vadd.f32 %v1764, %v1995
  %v1997 = vpop.f32.mrf.mxu0
  %1998 = vmatprep.mubr.bf16.mxu0 %v1014
  %1999 = vmatmul.mubr.bf16.gmra.mxu0 %v1013
  %v2000 = vpop.f32.mrf.mxu0
  %v2001 = vadd.f32 %v1769, %v2000
  %v2002 = vpop.f32.mrf.mxu0
  %v2003 = vpop.f32.mrf.mxu0
  %v2004 = vadd.f32 %v1772, %v2003
  %v2005 = vpop.f32.mrf.mxu0
  %2006 = vmatprep.mubr.bf16.mxu0 %v1021
  %2007 = vmatmul.mubr.bf16.gmra.mxu0 %v1020
  %v2008 = vpop.f32.mrf.mxu0
  %v2009 = vadd.f32 %v1777, %v2008
  %v2010 = vpop.f32.mrf.mxu0
  %v2011 = vpop.f32.mrf.mxu0
  %v2012 = vadd.f32 %v1780, %v2011
  %v2013 = vpop.f32.mrf.mxu0
  %2014 = vmatprep.mubr.bf16.mxu0 %v1028
  %2015 = vmatmul.mubr.bf16.gmra.mxu0 %v1027
  %v2016 = vpop.f32.mrf.mxu0
  %v2017 = vadd.f32 %v1785, %v2016
  %v2018 = vpop.f32.mrf.mxu0
  %v2019 = vpop.f32.mrf.mxu0
  %v2020 = vpop.f32.mrf.mxu0
  %2021 = vdwg.mxu0
  %2022 = vmatprep.subr.bf16.mxu0 0
  %2023 = vmatpush1.bf16.msra.mxu0 %v1421
  %2024 = vmatprep.subr.bf16.mxu0 0
  %2025 = vmatpush1.bf16.msra.mxu0 %v1420
  %2026 = vmatprep.subr.bf16.mxu0 0
  %2027 = vmatpush1.bf16.msra.mxu0 %v1419
  %2028 = vmatprep.subr.bf16.mxu0 0
  %2029 = vmatpush1.bf16.msra.mxu0 %v1418
  %2030 = vmatprep.subr.bf16.mxu0 0
  %2031 = vmatpush1.bf16.msra.mxu0 %v1417
  %2032 = vmatprep.subr.bf16.mxu0 0
  %2033 = vmatpush1.bf16.msra.mxu0 %v1416
  %2034 = vmatprep.subr.bf16.mxu0 0
  %2035 = vmatpush1.bf16.msra.mxu0 %v1415
  %2036 = vmatprep.subr.bf16.mxu0 0
  %2037 = vmatpush1.bf16.msra.mxu0 %v1414
  %2038 = vmatprep.subr.bf16.mxu0 0
  %2039 = vmatpush2.bf16.msra.mxu0 %v1429
  %2040 = vmatprep.subr.bf16.mxu0 0
  %2041 = vmatpush2.bf16.msra.mxu0 %v1428
  %2042 = vmatprep.subr.bf16.mxu0 0
  %2043 = vmatpush2.bf16.msra.mxu0 %v1427
  %2044 = vmatprep.subr.bf16.mxu0 0
  %2045 = vmatpush2.bf16.msra.mxu0 %v1426
  %2046 = vmatprep.subr.bf16.mxu0 0
  %2047 = vmatpush2.bf16.msra.mxu0 %v1425
  %2048 = vmatprep.subr.bf16.mxu0 0
  %2049 = vmatpush2.bf16.msra.mxu0 %v1424
  %2050 = vmatprep.subr.bf16.mxu0 0
  %2051 = vmatpush2.bf16.msra.mxu0 %v1423
  %2052 = vmatprep.subr.bf16.mxu0 0
  %2053 = vmatpush2.bf16.msra.mxu0 %v1422
  %2054 = vmatprep.mubr.bf16.mxu0 %v862
  %2055 = vmatmul.mubr.bf16.gmra.mxu0 %v861
  %v2056 = vpop.f32.mrf.mxu0
  %v2057 = vadd.f32 %v1825, %v2056
  %v2058 = vpop.f32.mrf.mxu0
  %v2059 = vpop.f32.mrf.mxu0
  %v2060 = vadd.f32 %v1828, %v2059
  %v2061 = vpop.f32.mrf.mxu0
  %2062 = vmatprep.mubr.bf16.mxu0 %v869
  %2063 = vmatmul.mubr.bf16.gmra.mxu0 %v868
  %v2064 = vpop.f32.mrf.mxu0
  %v2065 = vadd.f32 %v1833, %v2064
  %v2066 = vpop.f32.mrf.mxu0
  %v2067 = vpop.f32.mrf.mxu0
  %v2068 = vadd.f32 %v1836, %v2067
  %v2069 = vpop.f32.mrf.mxu0
  %2070 = vmatprep.mubr.bf16.mxu0 %v876
  %2071 = vmatmul.mubr.bf16.gmra.mxu0 %v875
  %v2072 = vpop.f32.mrf.mxu0
  %v2073 = vadd.f32 %v1841, %v2072
  %v2074 = vpop.f32.mrf.mxu0
  %v2075 = vpop.f32.mrf.mxu0
  %v2076 = vadd.f32 %v1844, %v2075
  %v2077 = vpop.f32.mrf.mxu0
  %2078 = vmatprep.mubr.bf16.mxu0 %v883
  %2079 = vmatmul.mubr.bf16.gmra.mxu0 %v882
  %v2080 = vpop.f32.mrf.mxu0
  %v2081 = vadd.f32 %v1849, %v2080
  %v2082 = vpop.f32.mrf.mxu0
  %v2083 = vpop.f32.mrf.mxu0
  %v2084 = vadd.f32 %v1852, %v2083
  %v2085 = vpop.f32.mrf.mxu0
  %2086 = vmatprep.mubr.bf16.mxu0 %v890
  %2087 = vmatmul.mubr.bf16.gmra.mxu0 %v889
  %v2088 = vpop.f32.mrf.mxu0
  %v2089 = vadd.f32 %v1857, %v2088
  %v2090 = vpop.f32.mrf.mxu0
  %v2091 = vpop.f32.mrf.mxu0
  %v2092 = vadd.f32 %v1860, %v2091
  %v2093 = vpop.f32.mrf.mxu0
  %2094 = vmatprep.mubr.bf16.mxu0 %v897
  %2095 = vmatmul.mubr.bf16.gmra.mxu0 %v896
  %v2096 = vpop.f32.mrf.mxu0
  %v2097 = vadd.f32 %v1865, %v2096
  %v2098 = vpop.f32.mrf.mxu0
  %v2099 = vpop.f32.mrf.mxu0
  %v2100 = vadd.f32 %v1868, %v2099
  %v2101 = vpop.f32.mrf.mxu0
  %2102 = vmatprep.mubr.bf16.mxu0 %v904
  %2103 = vmatmul.mubr.bf16.gmra.mxu0 %v903
  %v2104 = vpop.f32.mrf.mxu0
  %v2105 = vadd.f32 %v1873, %v2104
  %v2106 = vpop.f32.mrf.mxu0
  %v2107 = vpop.f32.mrf.mxu0
  %v2108 = vadd.f32 %v1876, %v2107
  %v2109 = vpop.f32.mrf.mxu0
  %2110 = vmatprep.mubr.bf16.mxu0 %v911
  %2111 = vmatmul.mubr.bf16.gmra.mxu0 %v910
  %v2112 = vpop.f32.mrf.mxu0
  %v2113 = vadd.f32 %v1881, %v2112
  %v2114 = vpop.f32.mrf.mxu0
  %v2115 = vpop.f32.mrf.mxu0
  %v2116 = vadd.f32 %v1884, %v2115
  %v2117 = vpop.f32.mrf.mxu0
  %2118 = vmatprep.mubr.bf16.mxu0 %v918
  %2119 = vmatmul.mubr.bf16.gmra.mxu0 %v917
  %v2120 = vpop.f32.mrf.mxu0
  %v2121 = vadd.f32 %v1889, %v2120
  %v2122 = vpop.f32.mrf.mxu0
  %v2123 = vpop.f32.mrf.mxu0
  %v2124 = vadd.f32 %v1892, %v2123
  %v2125 = vpop.f32.mrf.mxu0
  %2126 = vmatprep.mubr.bf16.mxu0 %v925
  %2127 = vmatmul.mubr.bf16.gmra.mxu0 %v924
  %v2128 = vpop.f32.mrf.mxu0
  %v2129 = vadd.f32 %v1897, %v2128
  %v2130 = vpop.f32.mrf.mxu0
  %v2131 = vpop.f32.mrf.mxu0
  %v2132 = vadd.f32 %v1900, %v2131
  %v2133 = vpop.f32.mrf.mxu0
  %2134 = vmatprep.mubr.bf16.mxu0 %v932
  %2135 = vmatmul.mubr.bf16.gmra.mxu0 %v931
  %v2136 = vpop.f32.mrf.mxu0
  %v2137 = vadd.f32 %v1905, %v2136
  %v2138 = vpop.f32.mrf.mxu0
  %v2139 = vpop.f32.mrf.mxu0
  %v2140 = vadd.f32 %v1908, %v2139
  %v2141 = vpop.f32.mrf.mxu0
  %2142 = vmatprep.mubr.bf16.mxu0 %v939
  %2143 = vmatmul.mubr.bf16.gmra.mxu0 %v938
  %v2144 = vpop.f32.mrf.mxu0
  %v2145 = vadd.f32 %v1913, %v2144
  %v2146 = vpop.f32.mrf.mxu0
  %v2147 = vpop.f32.mrf.mxu0
  %v2148 = vadd.f32 %v1916, %v2147
  %v2149 = vpop.f32.mrf.mxu0
  %2150 = vmatprep.mubr.bf16.mxu0 %v946
  %2151 = vmatmul.mubr.bf16.gmra.mxu0 %v945
  %v2152 = vpop.f32.mrf.mxu0
  %v2153 = vadd.f32 %v1921, %v2152
  %v2154 = vpop.f32.mrf.mxu0
  %v2155 = vpop.f32.mrf.mxu0
  %v2156 = vadd.f32 %v1924, %v2155
  %v2157 = vpop.f32.mrf.mxu0
  %2158 = vmatprep.mubr.bf16.mxu0 %v953
  %2159 = vmatmul.mubr.bf16.gmra.mxu0 %v952
  %v2160 = vpop.f32.mrf.mxu0
  %v2161 = vadd.f32 %v1929, %v2160
  %v2162 = vpop.f32.mrf.mxu0
  %v2163 = vpop.f32.mrf.mxu0
  %v2164 = vadd.f32 %v1932, %v2163
  %v2165 = vpop.f32.mrf.mxu0
  %2166 = vmatprep.mubr.bf16.mxu0 %v960
  %2167 = vmatmul.mubr.bf16.gmra.mxu0 %v959
  %v2168 = vpop.f32.mrf.mxu0
  %v2169 = vadd.f32 %v1937, %v2168
  %v2170 = vpop.f32.mrf.mxu0
  %v2171 = vpop.f32.mrf.mxu0
  %v2172 = vadd.f32 %v1940, %v2171
  %v2173 = vpop.f32.mrf.mxu0
  %2174 = vmatprep.mubr.bf16.mxu0 %v967
  %2175 = vmatmul.mubr.bf16.gmra.mxu0 %v966
  %v2176 = vpop.f32.mrf.mxu0
  %v2177 = vadd.f32 %v1945, %v2176
  %v2178 = vpop.f32.mrf.mxu0
  %v2179 = vpop.f32.mrf.mxu0
  %v2180 = vadd.f32 %v1948, %v2179
  %v2181 = vpop.f32.mrf.mxu0
  %2182 = vmatprep.mubr.bf16.mxu0 %v974
  %2183 = vmatmul.mubr.bf16.gmra.mxu0 %v973
  %v2184 = vpop.f32.mrf.mxu0
  %v2185 = vadd.f32 %v1953, %v2184
  %v2186 = vpop.f32.mrf.mxu0
  %v2187 = vpop.f32.mrf.mxu0
  %v2188 = vadd.f32 %v1956, %v2187
  %v2189 = vpop.f32.mrf.mxu0
  %2190 = vmatprep.mubr.bf16.mxu0 %v981
  %2191 = vmatmul.mubr.bf16.gmra.mxu0 %v980
  %v2192 = vpop.f32.mrf.mxu0
  %v2193 = vadd.f32 %v1961, %v2192
  %v2194 = vpop.f32.mrf.mxu0
  %v2195 = vpop.f32.mrf.mxu0
  %v2196 = vadd.f32 %v1964, %v2195
  %v2197 = vpop.f32.mrf.mxu0
  %2198 = vmatprep.mubr.bf16.mxu0 %v988
  %2199 = vmatmul.mubr.bf16.gmra.mxu0 %v987
  %v2200 = vpop.f32.mrf.mxu0
  %v2201 = vadd.f32 %v1969, %v2200
  %v2202 = vpop.f32.mrf.mxu0
  %v2203 = vpop.f32.mrf.mxu0
  %v2204 = vadd.f32 %v1972, %v2203
  %v2205 = vpop.f32.mrf.mxu0
  %2206 = vmatprep.mubr.bf16.mxu0 %v995
  %2207 = vmatmul.mubr.bf16.gmra.mxu0 %v994
  %v2208 = vpop.f32.mrf.mxu0
  %v2209 = vadd.f32 %v1977, %v2208
  %v2210 = vpop.f32.mrf.mxu0
  %v2211 = vpop.f32.mrf.mxu0
  %v2212 = vadd.f32 %v1980, %v2211
  %v2213 = vpop.f32.mrf.mxu0
  %2214 = vmatprep.mubr.bf16.mxu0 %v1002
  %2215 = vmatmul.mubr.bf16.gmra.mxu0 %v1001
  %v2216 = vpop.f32.mrf.mxu0
  %v2217 = vadd.f32 %v1985, %v2216
  %v2218 = vpop.f32.mrf.mxu0
  %v2219 = vpop.f32.mrf.mxu0
  %v2220 = vadd.f32 %v1988, %v2219
  %v2221 = vpop.f32.mrf.mxu0
  %2222 = vmatprep.mubr.bf16.mxu0 %v1009
  %2223 = vmatmul.mubr.bf16.gmra.mxu0 %v1008
  %v2224 = vpop.f32.mrf.mxu0
  %v2225 = vadd.f32 %v1993, %v2224
  %v2226 = vpop.f32.mrf.mxu0
  %v2227 = vpop.f32.mrf.mxu0
  %v2228 = vadd.f32 %v1996, %v2227
  %v2229 = vpop.f32.mrf.mxu0
  %2230 = vmatprep.mubr.bf16.mxu0 %v1016
  %2231 = vmatmul.mubr.bf16.gmra.mxu0 %v1015
  %v2232 = vpop.f32.mrf.mxu0
  %v2233 = vadd.f32 %v2001, %v2232
  %v2234 = vpop.f32.mrf.mxu0
  %v2235 = vpop.f32.mrf.mxu0
  %v2236 = vadd.f32 %v2004, %v2235
  %v2237 = vpop.f32.mrf.mxu0
  %2238 = vmatprep.mubr.bf16.mxu0 %v1023
  %2239 = vmatmul.mubr.bf16.gmra.mxu0 %v1022
  %v2240 = vpop.f32.mrf.mxu0
  %v2241 = vadd.f32 %v2009, %v2240
  %v2242 = vpop.f32.mrf.mxu0
  %v2243 = vpop.f32.mrf.mxu0
  %v2244 = vadd.f32 %v2012, %v2243
  %v2245 = vpop.f32.mrf.mxu0
  %2246 = vmatprep.mubr.bf16.mxu0 %v1030
  %2247 = vmatmul.mubr.bf16.gmra.mxu0 %v1029
  %v2248 = vpop.f32.mrf.mxu0
  %v2249 = vadd.f32 %v2017, %v2248
  %v2250 = vpop.f32.mrf.mxu0
  %v2251 = vpop.f32.mrf.mxu0
  %v2252 = vpop.f32.mrf.mxu0
  %2253 = vdwg.mxu0
  %2254 = vmatprep.subr.bf16.mxu0 0
  %2255 = vmatpush1.bf16.msra.mxu0 0
  %2256 = vmatprep.subr.bf16.mxu0 0
  %2257 = vmatpush1.bf16.msra.mxu0 0
  %2258 = vmatprep.subr.bf16.mxu0 0
  %2259 = vmatpush1.bf16.msra.mxu0 0
  %2260 = vmatprep.subr.bf16.mxu0 0
  %2261 = vmatpush1.bf16.msra.mxu0 0
  %2262 = vmatprep.subr.bf16.mxu0 0
  %2263 = vmatpush1.bf16.msra.mxu0 0
  %2264 = vmatprep.subr.bf16.mxu0 0
  %2265 = vmatpush1.bf16.msra.mxu0 0
  %2266 = vmatprep.subr.bf16.mxu0 0
  %2267 = vmatpush1.bf16.msra.mxu0 %v1431
  %2268 = vmatprep.subr.bf16.mxu0 0
  %2269 = vmatpush1.bf16.msra.mxu0 %v1430
  %2270 = vmatprep.subr.bf16.mxu0 0
  %2271 = vmatpush2.bf16.msra.mxu0 0
  %2272 = vmatprep.subr.bf16.mxu0 0
  %2273 = vmatpush2.bf16.msra.mxu0 0
  %2274 = vmatprep.subr.bf16.mxu0 0
  %2275 = vmatpush2.bf16.msra.mxu0 0
  %2276 = vmatprep.subr.bf16.mxu0 0
  %2277 = vmatpush2.bf16.msra.mxu0 0
  %2278 = vmatprep.subr.bf16.mxu0 0
  %2279 = vmatpush2.bf16.msra.mxu0 0
  %2280 = vmatprep.subr.bf16.mxu0 0
  %2281 = vmatpush2.bf16.msra.mxu0 0
  %2282 = vmatprep.subr.bf16.mxu0 0
  %2283 = vmatpush2.bf16.msra.mxu0 0
  %2284 = vmatprep.subr.bf16.mxu0 0
  %2285 = vmatpush2.bf16.msra.mxu0 0
  %2286 = vmatprep.mubr.bf16.mxu0 0
  %2287 = vmatmul.mubr.bf16.gmra.mxu0 %v1484
  %v2288 = vpop.f32.mrf.mxu0
  %v2289 = vadd.f32 %v2057, %v2288
  %v2290 = vpop.f32.mrf.mxu0
  %v2291 = vpop.f32.mrf.mxu0
  %v2292 = vadd.f32 %v2060, %v2291
  %v2293 = vpop.f32.mrf.mxu0
  %2294 = vmatprep.mubr.bf16.mxu0 0
  %2295 = vmatmul.mubr.bf16.gmra.mxu0 %v1487
  %v2296 = vpop.f32.mrf.mxu0
  %v2297 = vadd.f32 %v2065, %v2296
  %v2298 = vpop.f32.mrf.mxu0
  %v2299 = vpop.f32.mrf.mxu0
  %v2300 = vadd.f32 %v2068, %v2299
  %v2301 = vpop.f32.mrf.mxu0
  %2302 = vmatprep.mubr.bf16.mxu0 0
  %2303 = vmatmul.mubr.bf16.gmra.mxu0 %v1490
  %v2304 = vpop.f32.mrf.mxu0
  %v2305 = vadd.f32 %v2073, %v2304
  %v2306 = vpop.f32.mrf.mxu0
  %v2307 = vpop.f32.mrf.mxu0
  %v2308 = vadd.f32 %v2076, %v2307
  %v2309 = vpop.f32.mrf.mxu0
  %2310 = vmatprep.mubr.bf16.mxu0 0
  %2311 = vmatmul.mubr.bf16.gmra.mxu0 %v1493
  %v2312 = vpop.f32.mrf.mxu0
  %v2313 = vadd.f32 %v2081, %v2312
  %v2314 = vpop.f32.mrf.mxu0
  %v2315 = vpop.f32.mrf.mxu0
  %v2316 = vadd.f32 %v2084, %v2315
  %v2317 = vpop.f32.mrf.mxu0
  %2318 = vmatprep.mubr.bf16.mxu0 0
  %2319 = vmatmul.mubr.bf16.gmra.mxu0 %v1496
  %v2320 = vpop.f32.mrf.mxu0
  %v2321 = vadd.f32 %v2089, %v2320
  %v2322 = vpop.f32.mrf.mxu0
  %v2323 = vpop.f32.mrf.mxu0
  %v2324 = vadd.f32 %v2092, %v2323
  %v2325 = vpop.f32.mrf.mxu0
  %2326 = vmatprep.mubr.bf16.mxu0 0
  %2327 = vmatmul.mubr.bf16.gmra.mxu0 %v1499
  %v2328 = vpop.f32.mrf.mxu0
  %v2329 = vadd.f32 %v2097, %v2328
  %v2330 = vpop.f32.mrf.mxu0
  %v2331 = vpop.f32.mrf.mxu0
  %v2332 = vadd.f32 %v2100, %v2331
  %v2333 = vpop.f32.mrf.mxu0
  %2334 = vmatprep.mubr.bf16.mxu0 0
  %2335 = vmatmul.mubr.bf16.gmra.mxu0 %v1502
  %v2336 = vpop.f32.mrf.mxu0
  %v2337 = vadd.f32 %v2105, %v2336
  %v2338 = vpop.f32.mrf.mxu0
  %v2339 = vpop.f32.mrf.mxu0
  %v2340 = vadd.f32 %v2108, %v2339
  %v2341 = vpop.f32.mrf.mxu0
  %2342 = vmatprep.mubr.bf16.mxu0 0
  %2343 = vmatmul.mubr.bf16.gmra.mxu0 %v1505
  %v2344 = vpop.f32.mrf.mxu0
  %v2345 = vadd.f32 %v2113, %v2344
  %v2346 = vpop.f32.mrf.mxu0
  %v2347 = vpop.f32.mrf.mxu0
  %v2348 = vadd.f32 %v2116, %v2347
  %v2349 = vpop.f32.mrf.mxu0
  %2350 = vmatprep.mubr.bf16.mxu0 0
  %2351 = vmatmul.mubr.bf16.gmra.mxu0 %v1508
  %v2352 = vpop.f32.mrf.mxu0
  %v2353 = vadd.f32 %v2121, %v2352
  %v2354 = vpop.f32.mrf.mxu0
  %v2355 = vpop.f32.mrf.mxu0
  %v2356 = vadd.f32 %v2124, %v2355
  %v2357 = vpop.f32.mrf.mxu0
  %2358 = vmatprep.mubr.bf16.mxu0 0
  %2359 = vmatmul.mubr.bf16.gmra.mxu0 %v1511
  %v2360 = vpop.f32.mrf.mxu0
  %v2361 = vadd.f32 %v2129, %v2360
  %v2362 = vpop.f32.mrf.mxu0
  %v2363 = vpop.f32.mrf.mxu0
  %v2364 = vadd.f32 %v2132, %v2363
  %v2365 = vpop.f32.mrf.mxu0
  %2366 = vmatprep.mubr.bf16.mxu0 0
  %2367 = vmatmul.mubr.bf16.gmra.mxu0 %v1514
  %v2368 = vpop.f32.mrf.mxu0
  %v2369 = vadd.f32 %v2137, %v2368
  %v2370 = vpop.f32.mrf.mxu0
  %v2371 = vpop.f32.mrf.mxu0
  %v2372 = vadd.f32 %v2140, %v2371
  %v2373 = vpop.f32.mrf.mxu0
  %2374 = vmatprep.mubr.bf16.mxu0 0
  %2375 = vmatmul.mubr.bf16.gmra.mxu0 %v1517
  %v2376 = vpop.f32.mrf.mxu0
  %v2377 = vadd.f32 %v2145, %v2376
  %v2378 = vpop.f32.mrf.mxu0
  %v2379 = vpop.f32.mrf.mxu0
  %v2380 = vadd.f32 %v2148, %v2379
  %v2381 = vpop.f32.mrf.mxu0
  %2382 = vmatprep.mubr.bf16.mxu0 0
  %2383 = vmatmul.mubr.bf16.gmra.mxu0 %v1520
  %v2384 = vpop.f32.mrf.mxu0
  %v2385 = vadd.f32 %v2153, %v2384
  %v2386 = vpop.f32.mrf.mxu0
  %v2387 = vpop.f32.mrf.mxu0
  %v2388 = vadd.f32 %v2156, %v2387
  %v2389 = vpop.f32.mrf.mxu0
  %2390 = vmatprep.mubr.bf16.mxu0 0
  %2391 = vmatmul.mubr.bf16.gmra.mxu0 %v1523
  %v2392 = vpop.f32.mrf.mxu0
  %v2393 = vadd.f32 %v2161, %v2392
  %v2394 = vpop.f32.mrf.mxu0
  %v2395 = vpop.f32.mrf.mxu0
  %v2396 = vadd.f32 %v2164, %v2395
  %v2397 = vpop.f32.mrf.mxu0
  %2398 = vmatprep.mubr.bf16.mxu0 0
  %2399 = vmatmul.mubr.bf16.gmra.mxu0 %v1526
  %v2400 = vpop.f32.mrf.mxu0
  %v2401 = vadd.f32 %v2169, %v2400
  %v2402 = vpop.f32.mrf.mxu0
  %v2403 = vpop.f32.mrf.mxu0
  %v2404 = vadd.f32 %v2172, %v2403
  %v2405 = vpop.f32.mrf.mxu0
  %2406 = vmatprep.mubr.bf16.mxu0 0
  %2407 = vmatmul.mubr.bf16.gmra.mxu0 %v1529
  %v2408 = vpop.f32.mrf.mxu0
  %v2409 = vadd.f32 %v2177, %v2408
  %v2410 = vpop.f32.mrf.mxu0
  %v2411 = vpop.f32.mrf.mxu0
  %v2412 = vadd.f32 %v2180, %v2411
  %v2413 = vpop.f32.mrf.mxu0
  %2414 = vmatprep.mubr.bf16.mxu0 0
  %2415 = vmatmul.mubr.bf16.gmra.mxu0 %v1532
  %v2416 = vpop.f32.mrf.mxu0
  %v2417 = vadd.f32 %v2185, %v2416
  %v2418 = vpop.f32.mrf.mxu0
  %v2419 = vpop.f32.mrf.mxu0
  %v2420 = vadd.f32 %v2188, %v2419
  %v2421 = vpop.f32.mrf.mxu0
  %2422 = vmatprep.mubr.bf16.mxu0 0
  %2423 = vmatmul.mubr.bf16.gmra.mxu0 %v1535
  %v2424 = vpop.f32.mrf.mxu0
  %v2425 = vadd.f32 %v2193, %v2424
  %v2426 = vpop.f32.mrf.mxu0
  %v2427 = vpop.f32.mrf.mxu0
  %v2428 = vadd.f32 %v2196, %v2427
  %v2429 = vpop.f32.mrf.mxu0
  %2430 = vmatprep.mubr.bf16.mxu0 0
  %2431 = vmatmul.mubr.bf16.gmra.mxu0 %v1538
  %v2432 = vpop.f32.mrf.mxu0
  %v2433 = vadd.f32 %v2201, %v2432
  %v2434 = vpop.f32.mrf.mxu0
  %v2435 = vpop.f32.mrf.mxu0
  %v2436 = vadd.f32 %v2204, %v2435
  %v2437 = vpop.f32.mrf.mxu0
  %2438 = vmatprep.mubr.bf16.mxu0 0
  %2439 = vmatmul.mubr.bf16.gmra.mxu0 %v1541
  %v2440 = vpop.f32.mrf.mxu0
  %v2441 = vadd.f32 %v2209, %v2440
  %v2442 = vpop.f32.mrf.mxu0
  %v2443 = vpop.f32.mrf.mxu0
  %v2444 = vadd.f32 %v2212, %v2443
  %v2445 = vpop.f32.mrf.mxu0
  %2446 = vmatprep.mubr.bf16.mxu0 0
  %2447 = vmatmul.mubr.bf16.gmra.mxu0 %v1544
  %v2448 = vpop.f32.mrf.mxu0
  %v2449 = vadd.f32 %v2217, %v2448
  %v2450 = vpop.f32.mrf.mxu0
  %v2451 = vpop.f32.mrf.mxu0
  %v2452 = vadd.f32 %v2220, %v2451
  %v2453 = vpop.f32.mrf.mxu0
  %2454 = vmatprep.mubr.bf16.mxu0 0
  %2455 = vmatmul.mubr.bf16.gmra.mxu0 %v1547
  %v2456 = vpop.f32.mrf.mxu0
  %v2457 = vadd.f32 %v2225, %v2456
  %v2458 = vpop.f32.mrf.mxu0
  %v2459 = vpop.f32.mrf.mxu0
  %v2460 = vadd.f32 %v2228, %v2459
  %v2461 = vpop.f32.mrf.mxu0
  %2462 = vmatprep.mubr.bf16.mxu0 0
  %2463 = vmatmul.mubr.bf16.gmra.mxu0 %v1550
  %v2464 = vpop.f32.mrf.mxu0
  %v2465 = vadd.f32 %v2233, %v2464
  %v2466 = vpop.f32.mrf.mxu0
  %v2467 = vpop.f32.mrf.mxu0
  %v2468 = vadd.f32 %v2236, %v2467
  %v2469 = vpop.f32.mrf.mxu0
  %2470 = vmatprep.mubr.bf16.mxu0 0
  %2471 = vmatmul.mubr.bf16.gmra.mxu0 %v1553
  %v2472 = vpop.f32.mrf.mxu0
  %v2473 = vadd.f32 %v2241, %v2472
  %v2474 = vpop.f32.mrf.mxu0
  %v2475 = vpop.f32.mrf.mxu0
  %v2476 = vadd.f32 %v2244, %v2475
  %v2477 = vpop.f32.mrf.mxu0
  %2478 = vmatprep.mubr.bf16.mxu0 0
  %2479 = vmatmul.mubr.bf16.gmra.mxu0 %v1556
  %v2480 = vpop.f32.mrf.mxu0
  %v2481 = vadd.f32 %v2249, %v2480
  %v2482 = vpop.f32.mrf.mxu0
  %v2483 = vpop.f32.mrf.mxu0
  %v2484 = vpop.f32.mrf.mxu0
  %2485 = vdwg.mxu0
  %v2486 = vmax.f32 %v2289, 0.0
  %v2487 = vmax.f32 %v2292, 0.0
  %v2488 = vmax.f32 %v2297, 0.0
  %v2489 = vmax.f32 %v2300, 0.0
  %v2490 = vmax.f32 %v2305, 0.0
  %v2491 = vmax.f32 %v2308, 0.0
  %v2492 = vmax.f32 %v2313, 0.0
  %v2493 = vmax.f32 %v2316, 0.0
  %v2494 = vmax.f32 %v2321, 0.0
  %v2495 = vmax.f32 %v2324, 0.0
  %v2496 = vmax.f32 %v2329, 0.0
  %v2497 = vmax.f32 %v2332, 0.0
  %v2498 = vmax.f32 %v2337, 0.0
  %v2499 = vmax.f32 %v2340, 0.0
  %v2500 = vmax.f32 %v2345, 0.0
  %v2501 = vmax.f32 %v2348, 0.0
  %v2502 = vmax.f32 %v2353, 0.0
  %v2503 = vmax.f32 %v2356, 0.0
  %v2504 = vmax.f32 %v2361, 0.0
  %v2505 = vmax.f32 %v2364, 0.0
  %v2506 = vmax.f32 %v2369, 0.0
  %v2507 = vmax.f32 %v2372, 0.0
  %v2508 = vmax.f32 %v2377, 0.0
  %v2509 = vmax.f32 %v2380, 0.0
  %v2510 = vmax.f32 %v2385, 0.0
  %v2511 = vmax.f32 %v2388, 0.0
  %v2512 = vmax.f32 %v2393, 0.0
  %v2513 = vmax.f32 %v2396, 0.0
  %v2514 = vmax.f32 %v2401, 0.0
  %v2515 = vmax.f32 %v2404, 0.0
  %v2516 = vmax.f32 %v2409, 0.0
  %v2517 = vmax.f32 %v2412, 0.0
  %v2518 = vmax.f32 %v2417, 0.0
  %v2519 = vmax.f32 %v2420, 0.0
  %v2520 = vmax.f32 %v2425, 0.0
  %v2521 = vmax.f32 %v2428, 0.0
  %v2522 = vmax.f32 %v2433, 0.0
  %v2523 = vmax.f32 %v2436, 0.0
  %v2524 = vmax.f32 %v2441, 0.0
  %v2525 = vmax.f32 %v2444, 0.0
  %v2526 = vmax.f32 %v2449, 0.0
  %v2527 = vmax.f32 %v2452, 0.0
  %v2528 = vmax.f32 %v2457, 0.0
  %v2529 = vmax.f32 %v2460, 0.0
  %v2530 = vmax.f32 %v2465, 0.0
  %v2531 = vmax.f32 %v2468, 0.0
  %v2532 = vmax.f32 %v2473, 0.0
  %v2533 = vmax.f32 %v2476, 0.0
  %v2534 = vmax.f32 %v2481, 0.0
  %v2535 = vpack.c.bf16 %v2487, %v2486
  %v2536 = vpack.c.bf16 %v2489, %v2488
  %v2537 = vpack.c.bf16 %v2491, %v2490
  %v2538 = vpack.c.bf16 %v2493, %v2492
  %v2539 = vpack.c.bf16 %v2495, %v2494
  %v2540 = vpack.c.bf16 %v2497, %v2496
  %v2541 = vpack.c.bf16 %v2499, %v2498
  %v2542 = vpack.c.bf16 %v2501, %v2500
  %v2543 = vpack.c.bf16 %v2503, %v2502
  %v2544 = vpack.c.bf16 %v2505, %v2504
  %v2545 = vpack.c.bf16 %v2507, %v2506
  %v2546 = vpack.c.bf16 %v2509, %v2508
  %v2547 = vpack.c.bf16 %v2511, %v2510
  %v2548 = vpack.c.bf16 %v2513, %v2512
  %v2549 = vpack.c.bf16 %v2515, %v2514
  %v2550 = vpack.c.bf16 %v2517, %v2516
  %v2551 = vpack.c.bf16 %v2519, %v2518
  %v2552 = vpack.c.bf16 %v2521, %v2520
  %v2553 = vpack.c.bf16 %v2523, %v2522
  %v2554 = vpack.c.bf16 %v2525, %v2524
  %v2555 = vpack.c.bf16 %v2527, %v2526
  %v2556 = vpack.c.bf16 %v2529, %v2528
  %v2557 = vpack.c.bf16 %v2531, %v2530
  %v2558 = vpack.c.bf16 %v2533, %v2532
  %v2559 = vpack.c.bf16 %v2534, %v2534
  %v2585 = vunpack.c.l.b16 %v2535
  %v2586 = vunpack.c.h.b16 %v2535
  %v2587 = vunpack.c.l.b16 %v2536
  %v2588 = vunpack.c.h.b16 %v2536
  %v2589 = vunpack.c.l.b16 %v2537
  %v2590 = vunpack.c.h.b16 %v2537
  %v2591 = vunpack.c.l.b16 %v2538
  %v2592 = vunpack.c.h.b16 %v2538
  %v2593 = vunpack.c.l.b16 %v2539
  %v2594 = vunpack.c.h.b16 %v2539
  %v2595 = vunpack.c.l.b16 %v2540
  %v2596 = vunpack.c.h.b16 %v2540
  %v2597 = vunpack.c.l.b16 %v2541
  %v2598 = vunpack.c.h.b16 %v2541
  %v2599 = vunpack.c.l.b16 %v2542
  %v2600 = vunpack.c.h.b16 %v2542
  %v2601 = vunpack.c.l.b16 %v2543
  %v2602 = vunpack.c.h.b16 %v2543
  %v2603 = vunpack.c.l.b16 %v2544
  %v2604 = vunpack.c.h.b16 %v2544
  %v2605 = vunpack.c.l.b16 %v2545
  %v2606 = vunpack.c.h.b16 %v2545
  %v2607 = vunpack.c.l.b16 %v2546
  %v2608 = vunpack.c.h.b16 %v2546
  %v2609 = vunpack.c.l.b16 %v2547
  %v2610 = vunpack.c.h.b16 %v2547
  %v2611 = vunpack.c.l.b16 %v2548
  %v2612 = vunpack.c.h.b16 %v2548
  %v2613 = vunpack.c.l.b16 %v2549
  %v2614 = vunpack.c.h.b16 %v2549
  %v2615 = vunpack.c.l.b16 %v2550
  %v2616 = vunpack.c.h.b16 %v2550
  %v2617 = vunpack.c.l.b16 %v2551
  %v2618 = vunpack.c.h.b16 %v2551
  %v2619 = vunpack.c.l.b16 %v2552
  %v2620 = vunpack.c.h.b16 %v2552
  %v2621 = vunpack.c.l.b16 %v2553
  %v2622 = vunpack.c.h.b16 %v2553
  %v2623 = vunpack.c.l.b16 %v2554
  %v2624 = vunpack.c.h.b16 %v2554
  %v2625 = vunpack.c.l.b16 %v2555
  %v2626 = vunpack.c.h.b16 %v2555
  %v2627 = vunpack.c.l.b16 %v2556
  %v2628 = vunpack.c.h.b16 %v2556
  %v2629 = vunpack.c.l.b16 %v2557
  %v2630 = vunpack.c.h.b16 %v2557
  %v2631 = vunpack.c.l.b16 %v2558
  %v2632 = vunpack.c.h.b16 %v2558
  %v2633 = vunpack.c.l.b16 %v2559
  %v2634 = vpack.c.b16 %v2585, %v2585
  %v2635 = vpack.c.b16 %v2586, %v2586
  %v2636 = vpack.c.b16 %v2587, %v2587
  %v2637 = vpack.c.b16 %v2588, %v2588
  %v2638 = vpack.c.b16 %v2589, %v2589
  %v2639 = vpack.c.b16 %v2590, %v2590
  %v2640 = vpack.c.b16 %v2591, %v2591
  %v2641 = vpack.c.b16 %v2592, %v2592
  %v2642 = vpack.c.b16 %v2593, %v2593
  %v2643 = vpack.c.b16 %v2594, %v2594
  %v2644 = vpack.c.b16 %v2595, %v2595
  %v2645 = vpack.c.b16 %v2596, %v2596
  %v2646 = vpack.c.b16 %v2597, %v2597
  %v2647 = vpack.c.b16 %v2598, %v2598
  %v2648 = vpack.c.b16 %v2599, %v2599
  %v2649 = vpack.c.b16 %v2600, %v2600
  %v2650 = vpack.c.b16 %v2601, %v2601
  %v2651 = vpack.c.b16 %v2602, %v2602
  %v2652 = vpack.c.b16 %v2603, %v2603
  %v2653 = vpack.c.b16 %v2604, %v2604
  %v2654 = vpack.c.b16 %v2605, %v2605
  %v2655 = vpack.c.b16 %v2606, %v2606
  %v2656 = vpack.c.b16 %v2607, %v2607
  %v2657 = vpack.c.b16 %v2608, %v2608
  %v2658 = vpack.c.b16 %v2609, %v2609
  %v2659 = vpack.c.b16 %v2610, %v2610
  %v2660 = vpack.c.b16 %v2611, %v2611
  %v2661 = vpack.c.b16 %v2612, %v2612
  %v2662 = vpack.c.b16 %v2613, %v2613
  %v2663 = vpack.c.b16 %v2614, %v2614
  %v2664 = vpack.c.b16 %v2615, %v2615
  %v2665 = vpack.c.b16 %v2616, %v2616
  %v2666 = vpack.c.b16 %v2617, %v2617
  %v2667 = vpack.c.b16 %v2618, %v2618
  %v2668 = vpack.c.b16 %v2619, %v2619
  %v2669 = vpack.c.b16 %v2620, %v2620
  %v2670 = vpack.c.b16 %v2621, %v2621
  %v2671 = vpack.c.b16 %v2622, %v2622
  %v2672 = vpack.c.b16 %v2623, %v2623
  %v2673 = vpack.c.b16 %v2624, %v2624
  %v2674 = vpack.c.b16 %v2625, %v2625
  %v2675 = vpack.c.b16 %v2626, %v2626
  %v2676 = vpack.c.b16 %v2627, %v2627
  %v2677 = vpack.c.b16 %v2628, %v2628
  %v2678 = vpack.c.b16 %v2629, %v2629
  %v2679 = vpack.c.b16 %v2630, %v2630
  %v2680 = vpack.c.b16 %v2631, %v2631
  %v2681 = vpack.c.b16 %v2632, %v2632
  %v2682 = vpack.c.b16 %v2633, %v2633
  %vm2732 = vcmask 519168
  %2733 = vst.msk [vmem:[%s3] sm:$0xf] %vm2732, %v2634
  %2734 = vst.msk [vmem:[%s3 + $0x4] sm:$0xf] %vm2732, %v2635
  %2735 = vst.msk [vmem:[%s3 + $0x8] sm:$0xf] %vm2732, %v2636
  %2736 = vst.msk [vmem:[%s3 + $0xc] sm:$0xf] %vm2732, %v2637
  %2737 = vst.msk [vmem:[%s3 + $0x10] sm:$0xf] %vm2732, %v2638
  %2738 = vst.msk [vmem:[%s3 + $0x14] sm:$0xf] %vm2732, %v2639
  %2739 = vst.msk [vmem:[%s3 + $0x18] sm:$0xf] %vm2732, %v2640
  %2740 = vst.msk [vmem:[%s3 + $0x1c] sm:$0xf] %vm2732, %v2641
  %2741 = vst.msk [vmem:[%s3 + $0x20] sm:$0xf] %vm2732, %v2642
  %2742 = vst.msk [vmem:[%s3 + $0x24] sm:$0xf] %vm2732, %v2643
  %2743 = vst.msk [vmem:[%s3 + $0x28] sm:$0xf] %vm2732, %v2644
  %2744 = vst.msk [vmem:[%s3 + $0x2c] sm:$0xf] %vm2732, %v2645
  %2745 = vst.msk [vmem:[%s3 + $0x30] sm:$0xf] %vm2732, %v2646
  %2746 = vst.msk [vmem:[%s3 + $0x34] sm:$0xf] %vm2732, %v2647
  %2747 = vst.msk [vmem:[%s3 + $0x38] sm:$0xf] %vm2732, %v2648
  %2748 = vst.msk [vmem:[%s3 + $0x3c] sm:$0xf] %vm2732, %v2649
  %2749 = vst.msk [vmem:[%s3 + $0x40] sm:$0xf] %vm2732, %v2650
  %2750 = vst.msk [vmem:[%s3 + $0x44] sm:$0xf] %vm2732, %v2651
  %2751 = vst.msk [vmem:[%s3 + $0x48] sm:$0xf] %vm2732, %v2652
  %2752 = vst.msk [vmem:[%s3 + $0x4c] sm:$0xf] %vm2732, %v2653
  %2753 = vst.msk [vmem:[%s3 + $0x50] sm:$0xf] %vm2732, %v2654
  %2754 = vst.msk [vmem:[%s3 + $0x54] sm:$0xf] %vm2732, %v2655
  %2755 = vst.msk [vmem:[%s3 + $0x58] sm:$0xf] %vm2732, %v2656
  %2756 = vst.msk [vmem:[%s3 + $0x5c] sm:$0xf] %vm2732, %v2657
  %2757 = vst.msk [vmem:[%s3 + $0x60] sm:$0xf] %vm2732, %v2658
  %2758 = vst.msk [vmem:[%s3 + $0x64] sm:$0xf] %vm2732, %v2659
  %2759 = vst.msk [vmem:[%s3 + $0x68] sm:$0xf] %vm2732, %v2660
  %2760 = vst.msk [vmem:[%s3 + $0x6c] sm:$0xf] %vm2732, %v2661
  %2761 = vst.msk [vmem:[%s3 + $0x70] sm:$0xf] %vm2732, %v2662
  %2762 = vst.msk [vmem:[%s3 + $0x74] sm:$0xf] %vm2732, %v2663
  %2763 = vst.msk [vmem:[%s3 + $0x78] sm:$0xf] %vm2732, %v2664
  %2764 = vst.msk [vmem:[%s3 + $0x7c] sm:$0xf] %vm2732, %v2665
  %2765 = vst.msk [vmem:[%s3 + $0x80] sm:$0xf] %vm2732, %v2666
  %2766 = vst.msk [vmem:[%s3 + $0x84] sm:$0xf] %vm2732, %v2667
  %2767 = vst.msk [vmem:[%s3 + $0x88] sm:$0xf] %vm2732, %v2668
  %2768 = vst.msk [vmem:[%s3 + $0x8c] sm:$0xf] %vm2732, %v2669
  %2769 = vst.msk [vmem:[%s3 + $0x90] sm:$0xf] %vm2732, %v2670
  %2770 = vst.msk [vmem:[%s3 + $0x94] sm:$0xf] %vm2732, %v2671
  %2771 = vst.msk [vmem:[%s3 + $0x98] sm:$0xf] %vm2732, %v2672
  %2772 = vst.msk [vmem:[%s3 + $0x9c] sm:$0xf] %vm2732, %v2673
  %2773 = vst.msk [vmem:[%s3 + $0xa0] sm:$0xf] %vm2732, %v2674
  %2774 = vst.msk [vmem:[%s3 + $0xa4] sm:$0xf] %vm2732, %v2675
  %2775 = vst.msk [vmem:[%s3 + $0xa8] sm:$0xf] %vm2732, %v2676
  %2776 = vst.msk [vmem:[%s3 + $0xac] sm:$0xf] %vm2732, %v2677
  %2777 = vst.msk [vmem:[%s3 + $0xb0] sm:$0xf] %vm2732, %v2678
  %2778 = vst.msk [vmem:[%s3 + $0xb4] sm:$0xf] %vm2732, %v2679
  %2779 = vst.msk [vmem:[%s3 + $0xb8] sm:$0xf] %vm2732, %v2680
  %2780 = vst.msk [vmem:[%s3 + $0xbc] sm:$0xf] %vm2732, %v2681
  %2781 = vst.msk [vmem:[%s3 + $0xc0] sm:$0xf] %vm2732, %v2682
  // Predicated region
  $region14: #{improved_digit_recognizer_forward.9} parent=0 // pred_check
    _
  $region15: #{improved_digit_recognizer_forward.9} parent=0 // pred_check_branch
    %2783 = sbr.rel (0) target = $region17
  $region16: #{improved_digit_recognizer_forward.9} parent=0 // pred_region
    _
  $region17: #{improved_digit_recognizer_forward.9} parent=0 // pred_fallthru
    _
  // Predicated region
  $region18: #{improved_digit_recognizer_forward.9} parent=0 // pred_check
    _
  $region19: #{improved_digit_recognizer_forward.9} parent=0 // pred_check_branch
    %2785 = sbr.rel (0) target = $region21
  $region20: #{improved_digit_recognizer_forward.9} parent=0 // pred_region
    _
  $region21: #{improved_digit_recognizer_forward.9} parent=0 // pred_fallthru
    _

// kernel: improved_digit_recognizer_forward.11
$region0: #{improved_digit_recognizer_forward.11}
  #allocation0 [shape = 'u32[]', space=smem, size = 0x4, offset = 0x4, fixed_abs, tag = 'smem constant byte address 0x4 - core index']
  #allocation1 [shape = 'u32[144,128]{1,0:T(1,128)}', space=vmem, size = 0x12000, scoped, tag = 'internal scratch']
  %s0 = inlined_call_operand.vmem [shape: bf16[98,576], index: 0, kind: input, shape index: {}]
  %s1 = inlined_call_operand.vmem [shape: bf16[576,128], index: 1, kind: input, shape index: {}]
  %s2 = inlined_call_operand.vmem [shape: f32[1,128], index: 2, kind: input, shape index: {}]
  %s3 = inlined_call_operand.vmem [shape: bf16[98,128], index: 3, kind: output, shape index: {}]
  %s4 = sld [smem:[#allocation0]]
  $region22: #{improved_digit_recognizer_forward.11} parent=0
    _
  %s6 = ssub.s32 1, %s4
  %s7 = scalar_select 0, %s6, %s4
  // Predicated region
  $region2: #{improved_digit_recognizer_forward.11} parent=0 // pred_check
    _
  $region3: #{improved_digit_recognizer_forward.11} parent=0 // pred_check_branch
    %9 = sbr.rel (0) target = $region5
  $region4: #{improved_digit_recognizer_forward.11} parent=0 // pred_region
    _
  $region5: #{improved_digit_recognizer_forward.11} parent=0 // pred_fallthru
    _
  // Predicated region
  $region6: #{improved_digit_recognizer_forward.11} parent=0 // pred_check
    _
  $region7: #{improved_digit_recognizer_forward.11} parent=0 // pred_check_branch
    %11 = sbr.rel (0) target = $region9
  $region8: #{improved_digit_recognizer_forward.11} parent=0 // pred_region
    _
  $region9: #{improved_digit_recognizer_forward.11} parent=0 // pred_fallthru
    _
  // Predicated region
  $region10: #{improved_digit_recognizer_forward.11} parent=0 // pred_check
    _
  $region11: #{improved_digit_recognizer_forward.11} parent=0 // pred_check_branch
    %13 = sbr.rel (0) target = $region13
  $region12: #{improved_digit_recognizer_forward.11} parent=0 // pred_region
    _
  $region13: #{improved_digit_recognizer_forward.11} parent=0 // pred_fallthru
    _
  %v15 = vld [vmem:[%s0] sm:$0xff]
  %v16 = vld [vmem:[%s0 + $0x8] sm:$0xff]
  %v17 = vld [vmem:[%s0 + $0x10] sm:$0xf]
  %v18 = vld [vmem:[%s0 + $0x14] sm:$0xff]
  %v19 = vld [vmem:[%s0 + $0x1c] sm:$0xff]
  %v20 = vld [vmem:[%s0 + $0x24] sm:$0xf]
  %v21 = vld [vmem:[%s0 + $0x28] sm:$0xff]
  %v22 = vld [vmem:[%s0 + $0x30] sm:$0xff]
  %v23 = vld [vmem:[%s0 + $0x38] sm:$0xf]
  %v24 = vld [vmem:[%s0 + $0x3c] sm:$0xff]
  %v25 = vld [vmem:[%s0 + $0x44] sm:$0xff]
  %v26 = vld [vmem:[%s0 + $0x4c] sm:$0xf]
  %v27 = vld [vmem:[%s0 + $0x50] sm:$0xff]
  %v28 = vld [vmem:[%s0 + $0x58] sm:$0xff]
  %v29 = vld [vmem:[%s0 + $0x60] sm:$0xf]
  %v30 = vld [vmem:[%s0 + $0x64] sm:$0xff]
  %v31 = vld [vmem:[%s0 + $0x6c] sm:$0xff]
  %v32 = vld [vmem:[%s0 + $0x74] sm:$0xf]
  %v33 = vld [vmem:[%s0 + $0x78] sm:$0xff]
  %v34 = vld [vmem:[%s0 + $0x80] sm:$0xff]
  %v35 = vld [vmem:[%s0 + $0x88] sm:$0xf]
  %v36 = vld [vmem:[%s0 + $0x8c] sm:$0xff]
  %v37 = vld [vmem:[%s0 + $0x94] sm:$0xff]
  %v38 = vld [vmem:[%s0 + $0x9c] sm:$0xf]
  %v39 = vld [vmem:[%s0 + $0xa0] sm:$0xff]
  %v40 = vld [vmem:[%s0 + $0xa8] sm:$0xff]
  %v41 = vld [vmem:[%s0 + $0xb0] sm:$0xf]
  %v42 = vld [vmem:[%s0 + $0xb4] sm:$0xff]
  %v43 = vld [vmem:[%s0 + $0xbc] sm:$0xff]
  %v44 = vld [vmem:[%s0 + $0xc4] sm:$0xf]
  %v45 = vld [vmem:[%s0 + $0xc8] sm:$0xff]
  %v46 = vld [vmem:[%s0 + $0xd0] sm:$0xff]
  %v47 = vld [vmem:[%s0 + $0xd8] sm:$0xf]
  %v48 = vld [vmem:[%s0 + $0xdc] sm:$0xff]
  %v49 = vld [vmem:[%s0 + $0xe4] sm:$0xff]
  %v50 = vld [vmem:[%s0 + $0xec] sm:$0xf]
  %v51 = vld [vmem:[%s0 + $0xf0] sm:$0x11]
  %v52 = vld [vmem:[%s0 + $0xf8] sm:$0x11]
  %v53 = vld [vmem:[%s0 + $0x100] sm:$0x1]
  %v54 = vld [vmem:[%s1] sm:$0xf]
  %v55 = vld [vmem:[%s1 + $0x4] sm:$0xf]
  %v56 = vld [vmem:[%s1 + $0x8] sm:$0xf]
  %v57 = vld [vmem:[%s1 + $0xc] sm:$0xf]
  %v58 = vld [vmem:[%s1 + $0x10] sm:$0xf]
  %v59 = vld [vmem:[%s1 + $0x14] sm:$0xf]
  %v60 = vld [vmem:[%s1 + $0x18] sm:$0xf]
  %v61 = vld [vmem:[%s1 + $0x1c] sm:$0xf]
  %v62 = vld [vmem:[%s1 + $0x20] sm:$0xf]
  %v63 = vld [vmem:[%s1 + $0x24] sm:$0xf]
  %v64 = vld [vmem:[%s1 + $0x28] sm:$0xf]
  %v65 = vld [vmem:[%s1 + $0x2c] sm:$0xf]
  %v66 = vld [vmem:[%s1 + $0x30] sm:$0xf]
  %v67 = vld [vmem:[%s1 + $0x34] sm:$0xf]
  %v68 = vld [vmem:[%s1 + $0x38] sm:$0xf]
  %v69 = vld [vmem:[%s1 + $0x3c] sm:$0xf]
  %v70 = vld [vmem:[%s1 + $0x40] sm:$0xf]
  %v71 = vld [vmem:[%s1 + $0x44] sm:$0xf]
  %v72 = vld [vmem:[%s1 + $0x48] sm:$0xf]
  %v73 = vld [vmem:[%s1 + $0x4c] sm:$0xf]
  %v74 = vld [vmem:[%s1 + $0x50] sm:$0xf]
  %v75 = vld [vmem:[%s1 + $0x54] sm:$0xf]
  %v76 = vld [vmem:[%s1 + $0x58] sm:$0xf]
  %v77 = vld [vmem:[%s1 + $0x5c] sm:$0xf]
  %v78 = vld [vmem:[%s1 + $0x60] sm:$0xf]
  %v79 = vld [vmem:[%s1 + $0x64] sm:$0xf]
  %v80 = vld [vmem:[%s1 + $0x68] sm:$0xf]
  %v81 = vld [vmem:[%s1 + $0x6c] sm:$0xf]
  %v82 = vld [vmem:[%s1 + $0x70] sm:$0xf]
  %v83 = vld [vmem:[%s1 + $0x74] sm:$0xf]
  %v84 = vld [vmem:[%s1 + $0x78] sm:$0xf]
  %v85 = vld [vmem:[%s1 + $0x7c] sm:$0xf]
  %v86 = vld [vmem:[%s1 + $0x80] sm:$0xf]
  %v87 = vld [vmem:[%s1 + $0x84] sm:$0xf]
  %v88 = vld [vmem:[%s1 + $0x88] sm:$0xf]
  %v89 = vld [vmem:[%s1 + $0x8c] sm:$0xf]
  %v90 = vld [vmem:[%s1 + $0x90] sm:$0xf]
  %v91 = vld [vmem:[%s1 + $0x94] sm:$0xf]
  %v92 = vld [vmem:[%s1 + $0x98] sm:$0xf]
  %v93 = vld [vmem:[%s1 + $0x9c] sm:$0xf]
  %v94 = vld [vmem:[%s1 + $0xa0] sm:$0xf]
  %v95 = vld [vmem:[%s1 + $0xa4] sm:$0xf]
  %v96 = vld [vmem:[%s1 + $0xa8] sm:$0xf]
  %v97 = vld [vmem:[%s1 + $0xac] sm:$0xf]
  %v98 = vld [vmem:[%s1 + $0xb0] sm:$0xf]
  %v99 = vld [vmem:[%s1 + $0xb4] sm:$0xf]
  %v100 = vld [vmem:[%s1 + $0xb8] sm:$0xf]
  %v101 = vld [vmem:[%s1 + $0xbc] sm:$0xf]
  %v102 = vld [vmem:[%s1 + $0xc0] sm:$0xf]
  %v103 = vld [vmem:[%s1 + $0xc4] sm:$0xf]
  %v104 = vld [vmem:[%s1 + $0xc8] sm:$0xf]
  %v105 = vld [vmem:[%s1 + $0xcc] sm:$0xf]
  %v106 = vld [vmem:[%s1 + $0xd0] sm:$0xf]
  %v107 = vld [vmem:[%s1 + $0xd4] sm:$0xf]
  %v108 = vld [vmem:[%s1 + $0xd8] sm:$0xf]
  %v109 = vld [vmem:[%s1 + $0xdc] sm:$0xf]
  %v110 = vld [vmem:[%s1 + $0xe0] sm:$0xf]
  %v111 = vld [vmem:[%s1 + $0xe4] sm:$0xf]
  %v112 = vld [vmem:[%s1 + $0xe8] sm:$0xf]
  %v113 = vld [vmem:[%s1 + $0xec] sm:$0xf]
  %v114 = vld [vmem:[%s1 + $0xf0] sm:$0xf]
  %v115 = vld [vmem:[%s1 + $0xf4] sm:$0xf]
  %v116 = vld [vmem:[%s1 + $0xf8] sm:$0xf]
  %v117 = vld [vmem:[%s1 + $0xfc] sm:$0xf]
  %v118 = vld [vmem:[%s1 + $0x100] sm:$0xf]
  %v119 = vld [vmem:[%s1 + $0x104] sm:$0xf]
  %v120 = vld [vmem:[%s1 + $0x108] sm:$0xf]
  %v121 = vld [vmem:[%s1 + $0x10c] sm:$0xf]
  %v122 = vld [vmem:[%s1 + $0x110] sm:$0xf]
  %v123 = vld [vmem:[%s1 + $0x114] sm:$0xf]
  %v124 = vld [vmem:[%s1 + $0x118] sm:$0xf]
  %v125 = vld [vmem:[%s1 + $0x11c] sm:$0xf]
  %v126 = vld [vmem:[%s2] sm:$0x1]
  %v128 = vlaneseq
  %v129 = vshrl.u32 %v128, 7
  %v130 = vsub.s32 0, %v129
  %v131 = vrot.slane %v126, %v130
  %v172 = vunpack.c.l.b16 %v15
  %v173 = vunpack.c.h.b16 %v15
  %v174 = vunpack.c.l.b16 %v16
  %v175 = vunpack.c.h.b16 %v16
  %v176 = vunpack.c.l.b16 %v17
  %v177 = vunpack.c.l.b16 %v18
  %v178 = vunpack.c.h.b16 %v18
  %v179 = vunpack.c.l.b16 %v19
  %v180 = vunpack.c.h.b16 %v19
  %v181 = vunpack.c.l.b16 %v20
  %v182 = vunpack.c.l.b16 %v21
  %v183 = vunpack.c.h.b16 %v21
  %v184 = vunpack.c.l.b16 %v22
  %v185 = vunpack.c.h.b16 %v22
  %v186 = vunpack.c.l.b16 %v23
  %v187 = vunpack.c.l.b16 %v24
  %v188 = vunpack.c.h.b16 %v24
  %v189 = vunpack.c.l.b16 %v25
  %v190 = vunpack.c.h.b16 %v25
  %v191 = vunpack.c.l.b16 %v26
  %v192 = vunpack.c.l.b16 %v27
  %v193 = vunpack.c.h.b16 %v27
  %v194 = vunpack.c.l.b16 %v28
  %v195 = vunpack.c.h.b16 %v28
  %v196 = vunpack.c.l.b16 %v29
  %v197 = vunpack.c.l.b16 %v30
  %v198 = vunpack.c.h.b16 %v30
  %v199 = vunpack.c.l.b16 %v31
  %v200 = vunpack.c.h.b16 %v31
  %v201 = vunpack.c.l.b16 %v32
  %v202 = vunpack.c.l.b16 %v33
  %v203 = vunpack.c.h.b16 %v33
  %v204 = vunpack.c.l.b16 %v34
  %v205 = vunpack.c.h.b16 %v34
  %v206 = vunpack.c.l.b16 %v35
  %v207 = vunpack.c.l.b16 %v36
  %v208 = vunpack.c.h.b16 %v36
  %v209 = vunpack.c.l.b16 %v37
  %v210 = vunpack.c.h.b16 %v37
  %v211 = vunpack.c.l.b16 %v38
  %v212 = vunpack.c.l.b16 %v39
  %v213 = vunpack.c.h.b16 %v39
  %v214 = vunpack.c.l.b16 %v40
  %v215 = vunpack.c.h.b16 %v40
  %v216 = vunpack.c.l.b16 %v41
  %v217 = vunpack.c.l.b16 %v42
  %v218 = vunpack.c.h.b16 %v42
  %v219 = vunpack.c.l.b16 %v43
  %v220 = vunpack.c.h.b16 %v43
  %v221 = vunpack.c.l.b16 %v44
  %v222 = vunpack.c.l.b16 %v45
  %v223 = vunpack.c.h.b16 %v45
  %v224 = vunpack.c.l.b16 %v46
  %v225 = vunpack.c.h.b16 %v46
  %v226 = vunpack.c.l.b16 %v47
  %v227 = vunpack.c.l.b16 %v48
  %v228 = vunpack.c.h.b16 %v48
  %v229 = vunpack.c.l.b16 %v49
  %v230 = vunpack.c.h.b16 %v49
  %v231 = vunpack.c.l.b16 %v50
  %v232 = vunpack.c.l.b16 %v51
  %v233 = vunpack.c.h.b16 %v51
  %v234 = vunpack.c.l.b16 %v52
  %v235 = vunpack.c.h.b16 %v52
  %v236 = vunpack.c.l.b16 %v53
  %v237 = vpack.c.b16 %v177, %v172
  %v238 = vpack.c.b16 %v178, %v173
  %v239 = vpack.c.b16 %v179, %v174
  %v240 = vpack.c.b16 %v180, %v175
  %v241 = vpack.c.b16 %v181, %v176
  %v242 = vpack.c.b16 %v187, %v182
  %v243 = vpack.c.b16 %v188, %v183
  %v244 = vpack.c.b16 %v189, %v184
  %v245 = vpack.c.b16 %v190, %v185
  %v246 = vpack.c.b16 %v191, %v186
  %v247 = vpack.c.b16 %v197, %v192
  %v248 = vpack.c.b16 %v198, %v193
  %v249 = vpack.c.b16 %v199, %v194
  %v250 = vpack.c.b16 %v200, %v195
  %v251 = vpack.c.b16 %v201, %v196
  %v252 = vpack.c.b16 %v207, %v202
  %v253 = vpack.c.b16 %v208, %v203
  %v254 = vpack.c.b16 %v209, %v204
  %v255 = vpack.c.b16 %v210, %v205
  %v256 = vpack.c.b16 %v211, %v206
  %v257 = vpack.c.b16 %v217, %v212
  %v258 = vpack.c.b16 %v218, %v213
  %v259 = vpack.c.b16 %v219, %v214
  %v260 = vpack.c.b16 %v220, %v215
  %v261 = vpack.c.b16 %v221, %v216
  %v262 = vpack.c.b16 %v227, %v222
  %v263 = vpack.c.b16 %v228, %v223
  %v264 = vpack.c.b16 %v229, %v224
  %v265 = vpack.c.b16 %v230, %v225
  %v266 = vpack.c.b16 %v231, %v226
  %v267 = vpack.c.b16 %v232, %v232
  %v268 = vpack.c.b16 %v233, %v233
  %v269 = vpack.c.b16 %v234, %v234
  %v270 = vpack.c.b16 %v235, %v235
  %v271 = vpack.c.b16 %v236, %v236
  %v372 = vunpack.c.l.b16 %v54
  %v373 = vunpack.c.l.b16 %v55
  %v374 = vunpack.c.l.b16 %v56
  %v375 = vunpack.c.l.b16 %v57
  %v376 = vunpack.c.l.b16 %v58
  %v377 = vunpack.c.l.b16 %v59
  %v378 = vunpack.c.l.b16 %v60
  %v379 = vunpack.c.l.b16 %v61
  %v380 = vunpack.c.l.b16 %v62
  %v381 = vunpack.c.l.b16 %v63
  %v382 = vunpack.c.l.b16 %v64
  %v383 = vunpack.c.l.b16 %v65
  %v384 = vunpack.c.l.b16 %v66
  %v385 = vunpack.c.l.b16 %v67
  %v386 = vunpack.c.l.b16 %v68
  %v387 = vunpack.c.l.b16 %v69
  %v388 = vunpack.c.l.b16 %v70
  %v389 = vunpack.c.l.b16 %v71
  %v390 = vunpack.c.l.b16 %v72
  %v391 = vunpack.c.l.b16 %v73
  %v392 = vunpack.c.l.b16 %v74
  %v393 = vunpack.c.l.b16 %v75
  %v394 = vunpack.c.l.b16 %v76
  %v395 = vunpack.c.l.b16 %v77
  %v396 = vunpack.c.l.b16 %v78
  %v397 = vunpack.c.l.b16 %v79
  %v398 = vunpack.c.l.b16 %v80
  %v399 = vunpack.c.l.b16 %v81
  %v400 = vunpack.c.l.b16 %v82
  %v401 = vunpack.c.l.b16 %v83
  %v402 = vunpack.c.l.b16 %v84
  %v403 = vunpack.c.l.b16 %v85
  %v404 = vunpack.c.l.b16 %v86
  %v405 = vunpack.c.l.b16 %v87
  %v406 = vunpack.c.l.b16 %v88
  %v407 = vunpack.c.l.b16 %v89
  %v408 = vunpack.c.l.b16 %v90
  %v409 = vunpack.c.l.b16 %v91
  %v410 = vunpack.c.l.b16 %v92
  %v411 = vunpack.c.l.b16 %v93
  %v412 = vunpack.c.l.b16 %v94
  %v413 = vunpack.c.l.b16 %v95
  %v414 = vunpack.c.l.b16 %v96
  %v415 = vunpack.c.l.b16 %v97
  %v416 = vunpack.c.l.b16 %v98
  %v417 = vunpack.c.l.b16 %v99
  %v418 = vunpack.c.l.b16 %v100
  %v419 = vunpack.c.l.b16 %v101
  %v420 = vunpack.c.l.b16 %v102
  %v421 = vunpack.c.l.b16 %v103
  %v422 = vunpack.c.l.b16 %v104
  %v423 = vunpack.c.l.b16 %v105
  %v424 = vunpack.c.l.b16 %v106
  %v425 = vunpack.c.l.b16 %v107
  %v426 = vunpack.c.l.b16 %v108
  %v427 = vunpack.c.l.b16 %v109
  %v428 = vunpack.c.l.b16 %v110
  %v429 = vunpack.c.l.b16 %v111
  %v430 = vunpack.c.l.b16 %v112
  %v431 = vunpack.c.l.b16 %v113
  %v432 = vunpack.c.l.b16 %v114
  %v433 = vunpack.c.l.b16 %v115
  %v434 = vunpack.c.l.b16 %v116
  %v435 = vunpack.c.l.b16 %v117
  %v436 = vunpack.c.l.b16 %v118
  %v437 = vunpack.c.l.b16 %v119
  %v438 = vunpack.c.l.b16 %v120
  %v439 = vunpack.c.l.b16 %v121
  %v440 = vunpack.c.l.b16 %v122
  %v441 = vunpack.c.l.b16 %v123
  %v442 = vunpack.c.l.b16 %v124
  %v443 = vunpack.c.l.b16 %v125
  %v444 = vpack.c.b16 %v373, %v372
  %v445 = vpack.c.b16 %v375, %v374
  %v446 = vpack.c.b16 %v377, %v376
  %v447 = vpack.c.b16 %v379, %v378
  %v448 = vpack.c.b16 %v381, %v380
  %v449 = vpack.c.b16 %v383, %v382
  %v450 = vpack.c.b16 %v385, %v384
  %v451 = vpack.c.b16 %v387, %v386
  %v452 = vpack.c.b16 %v389, %v388
  %v453 = vpack.c.b16 %v391, %v390
  %v454 = vpack.c.b16 %v393, %v392
  %v455 = vpack.c.b16 %v395, %v394
  %v456 = vpack.c.b16 %v397, %v396
  %v457 = vpack.c.b16 %v399, %v398
  %v458 = vpack.c.b16 %v401, %v400
  %v459 = vpack.c.b16 %v403, %v402
  %v460 = vpack.c.b16 %v405, %v404
  %v461 = vpack.c.b16 %v407, %v406
  %v462 = vpack.c.b16 %v409, %v408
  %v463 = vpack.c.b16 %v411, %v410
  %v464 = vpack.c.b16 %v413, %v412
  %v465 = vpack.c.b16 %v415, %v414
  %v466 = vpack.c.b16 %v417, %v416
  %v467 = vpack.c.b16 %v419, %v418
  %v468 = vpack.c.b16 %v421, %v420
  %v469 = vpack.c.b16 %v423, %v422
  %v470 = vpack.c.b16 %v425, %v424
  %v471 = vpack.c.b16 %v427, %v426
  %v472 = vpack.c.b16 %v429, %v428
  %v473 = vpack.c.b16 %v431, %v430
  %v474 = vpack.c.b16 %v433, %v432
  %v475 = vpack.c.b16 %v435, %v434
  %v476 = vpack.c.b16 %v437, %v436
  %v477 = vpack.c.b16 %v439, %v438
  %v478 = vpack.c.b16 %v441, %v440
  %v479 = vpack.c.b16 %v443, %v442
  %vm516 = vcmask 523264
  %v518 = vsel %vm516, %v241, 0
  %v521 = vsel %vm516, %v246, 0
  %v524 = vsel %vm516, %v251, 0
  %v527 = vsel %vm516, %v256, 0
  %v530 = vsel %vm516, %v261, 0
  %v533 = vsel %vm516, %v266, 0
  %v536 = vsel %vm516, %v271, 0
  %538 = vmatprep.subr.bf16.mxu0 0
  %539 = vmatpush1.bf16.msra.mxu0 %v451
  %540 = vmatprep.subr.bf16.mxu0 0
  %541 = vmatpush1.bf16.msra.mxu0 %v450
  %542 = vmatprep.subr.bf16.mxu0 0
  %543 = vmatpush1.bf16.msra.mxu0 %v449
  %544 = vmatprep.subr.bf16.mxu0 0
  %545 = vmatpush1.bf16.msra.mxu0 %v448
  %546 = vmatprep.subr.bf16.mxu0 0
  %547 = vmatpush1.bf16.msra.mxu0 %v447
  %548 = vmatprep.subr.bf16.mxu0 0
  %549 = vmatpush1.bf16.msra.mxu0 %v446
  %550 = vmatprep.subr.bf16.mxu0 0
  %551 = vmatpush1.bf16.msra.mxu0 %v445
  %552 = vmatprep.subr.bf16.mxu0 0
  %553 = vmatpush1.bf16.msra.mxu0 %v444
  %554 = vmatprep.subr.bf16.mxu0 0
  %555 = vmatpush2.bf16.msra.mxu0 %v459
  %556 = vmatprep.subr.bf16.mxu0 0
  %557 = vmatpush2.bf16.msra.mxu0 %v458
  %558 = vmatprep.subr.bf16.mxu0 0
  %559 = vmatpush2.bf16.msra.mxu0 %v457
  %560 = vmatprep.subr.bf16.mxu0 0
  %561 = vmatpush2.bf16.msra.mxu0 %v456
  %562 = vmatprep.subr.bf16.mxu0 0
  %563 = vmatpush2.bf16.msra.mxu0 %v455
  %564 = vmatprep.subr.bf16.mxu0 0
  %565 = vmatpush2.bf16.msra.mxu0 %v454
  %566 = vmatprep.subr.bf16.mxu0 0
  %567 = vmatpush2.bf16.msra.mxu0 %v453
  %568 = vmatprep.subr.bf16.mxu0 0
  %569 = vmatpush2.bf16.msra.mxu0 %v452
  %570 = vmatprep.mubr.bf16.mxu0 %v238
  %571 = vmatmul.mubr.bf16.gmra.mxu0 %v237
  %v572 = vpop.f32.mrf.mxu0
  %v573 = vadd.f32 %v131, %v572
  %v574 = vpop.f32.mrf.mxu0
  %v575 = vpop.f32.mrf.mxu0
  %v576 = vadd.f32 %v131, %v575
  %v577 = vpop.f32.mrf.mxu0
  %578 = vmatprep.mubr.bf16.mxu0 %v243
  %579 = vmatmul.mubr.bf16.gmra.mxu0 %v242
  %v580 = vpop.f32.mrf.mxu0
  %v581 = vadd.f32 %v131, %v580
  %v582 = vpop.f32.mrf.mxu0
  %v583 = vpop.f32.mrf.mxu0
  %v584 = vadd.f32 %v131, %v583
  %v585 = vpop.f32.mrf.mxu0
  %586 = vmatprep.mubr.bf16.mxu0 %v248
  %587 = vmatmul.mubr.bf16.gmra.mxu0 %v247
  %v588 = vpop.f32.mrf.mxu0
  %v589 = vadd.f32 %v131, %v588
  %v590 = vpop.f32.mrf.mxu0
  %v591 = vpop.f32.mrf.mxu0
  %v592 = vadd.f32 %v131, %v591
  %v593 = vpop.f32.mrf.mxu0
  %594 = vmatprep.mubr.bf16.mxu0 %v253
  %595 = vmatmul.mubr.bf16.gmra.mxu0 %v252
  %v596 = vpop.f32.mrf.mxu0
  %v597 = vadd.f32 %v131, %v596
  %v598 = vpop.f32.mrf.mxu0
  %v599 = vpop.f32.mrf.mxu0
  %v600 = vadd.f32 %v131, %v599
  %v601 = vpop.f32.mrf.mxu0
  %602 = vmatprep.mubr.bf16.mxu0 %v258
  %603 = vmatmul.mubr.bf16.gmra.mxu0 %v257
  %v604 = vpop.f32.mrf.mxu0
  %v605 = vadd.f32 %v131, %v604
  %v606 = vpop.f32.mrf.mxu0
  %v607 = vpop.f32.mrf.mxu0
  %v608 = vadd.f32 %v131, %v607
  %v609 = vpop.f32.mrf.mxu0
  %610 = vmatprep.mubr.bf16.mxu0 %v263
  %611 = vmatmul.mubr.bf16.gmra.mxu0 %v262
  %v612 = vpop.f32.mrf.mxu0
  %v613 = vadd.f32 %v131, %v612
  %v614 = vpop.f32.mrf.mxu0
  %v615 = vpop.f32.mrf.mxu0
  %v616 = vadd.f32 %v131, %v615
  %v617 = vpop.f32.mrf.mxu0
  %618 = vmatprep.mubr.bf16.mxu0 %v268
  %619 = vmatmul.mubr.bf16.gmra.mxu0 %v267
  %v620 = vpop.f32.mrf.mxu0
  %v621 = vadd.f32 %v131, %v620
  %v622 = vpop.f32.mrf.mxu0
  %v623 = vpop.f32.mrf.mxu0
  %v624 = vpop.f32.mrf.mxu0
  %625 = vdwg.mxu0
  %626 = vmatprep.subr.bf16.mxu0 0
  %627 = vmatpush1.bf16.msra.mxu0 %v467
  %628 = vmatprep.subr.bf16.mxu0 0
  %629 = vmatpush1.bf16.msra.mxu0 %v466
  %630 = vmatprep.subr.bf16.mxu0 0
  %631 = vmatpush1.bf16.msra.mxu0 %v465
  %632 = vmatprep.subr.bf16.mxu0 0
  %633 = vmatpush1.bf16.msra.mxu0 %v464
  %634 = vmatprep.subr.bf16.mxu0 0
  %635 = vmatpush1.bf16.msra.mxu0 %v463
  %636 = vmatprep.subr.bf16.mxu0 0
  %637 = vmatpush1.bf16.msra.mxu0 %v462
  %638 = vmatprep.subr.bf16.mxu0 0
  %639 = vmatpush1.bf16.msra.mxu0 %v461
  %640 = vmatprep.subr.bf16.mxu0 0
  %641 = vmatpush1.bf16.msra.mxu0 %v460
  %642 = vmatprep.subr.bf16.mxu0 0
  %643 = vmatpush2.bf16.msra.mxu0 %v475
  %644 = vmatprep.subr.bf16.mxu0 0
  %645 = vmatpush2.bf16.msra.mxu0 %v474
  %646 = vmatprep.subr.bf16.mxu0 0
  %647 = vmatpush2.bf16.msra.mxu0 %v473
  %648 = vmatprep.subr.bf16.mxu0 0
  %649 = vmatpush2.bf16.msra.mxu0 %v472
  %650 = vmatprep.subr.bf16.mxu0 0
  %651 = vmatpush2.bf16.msra.mxu0 %v471
  %652 = vmatprep.subr.bf16.mxu0 0
  %653 = vmatpush2.bf16.msra.mxu0 %v470
  %654 = vmatprep.subr.bf16.mxu0 0
  %655 = vmatpush2.bf16.msra.mxu0 %v469
  %656 = vmatprep.subr.bf16.mxu0 0
  %657 = vmatpush2.bf16.msra.mxu0 %v468
  %658 = vmatprep.mubr.bf16.mxu0 %v240
  %659 = vmatmul.mubr.bf16.gmra.mxu0 %v239
  %v660 = vpop.f32.mrf.mxu0
  %v661 = vadd.f32 %v573, %v660
  %v662 = vpop.f32.mrf.mxu0
  %v663 = vpop.f32.mrf.mxu0
  %v664 = vadd.f32 %v576, %v663
  %v665 = vpop.f32.mrf.mxu0
  %666 = vmatprep.mubr.bf16.mxu0 %v245
  %667 = vmatmul.mubr.bf16.gmra.mxu0 %v244
  %v668 = vpop.f32.mrf.mxu0
  %v669 = vadd.f32 %v581, %v668
  %v670 = vpop.f32.mrf.mxu0
  %v671 = vpop.f32.mrf.mxu0
  %v672 = vadd.f32 %v584, %v671
  %v673 = vpop.f32.mrf.mxu0
  %674 = vmatprep.mubr.bf16.mxu0 %v250
  %675 = vmatmul.mubr.bf16.gmra.mxu0 %v249
  %v676 = vpop.f32.mrf.mxu0
  %v677 = vadd.f32 %v589, %v676
  %v678 = vpop.f32.mrf.mxu0
  %v679 = vpop.f32.mrf.mxu0
  %v680 = vadd.f32 %v592, %v679
  %v681 = vpop.f32.mrf.mxu0
  %682 = vmatprep.mubr.bf16.mxu0 %v255
  %683 = vmatmul.mubr.bf16.gmra.mxu0 %v254
  %v684 = vpop.f32.mrf.mxu0
  %v685 = vadd.f32 %v597, %v684
  %v686 = vpop.f32.mrf.mxu0
  %v687 = vpop.f32.mrf.mxu0
  %v688 = vadd.f32 %v600, %v687
  %v689 = vpop.f32.mrf.mxu0
  %690 = vmatprep.mubr.bf16.mxu0 %v260
  %691 = vmatmul.mubr.bf16.gmra.mxu0 %v259
  %v692 = vpop.f32.mrf.mxu0
  %v693 = vadd.f32 %v605, %v692
  %v694 = vpop.f32.mrf.mxu0
  %v695 = vpop.f32.mrf.mxu0
  %v696 = vadd.f32 %v608, %v695
  %v697 = vpop.f32.mrf.mxu0
  %698 = vmatprep.mubr.bf16.mxu0 %v265
  %699 = vmatmul.mubr.bf16.gmra.mxu0 %v264
  %v700 = vpop.f32.mrf.mxu0
  %v701 = vadd.f32 %v613, %v700
  %v702 = vpop.f32.mrf.mxu0
  %v703 = vpop.f32.mrf.mxu0
  %v704 = vadd.f32 %v616, %v703
  %v705 = vpop.f32.mrf.mxu0
  %706 = vmatprep.mubr.bf16.mxu0 %v270
  %707 = vmatmul.mubr.bf16.gmra.mxu0 %v269
  %v708 = vpop.f32.mrf.mxu0
  %v709 = vadd.f32 %v621, %v708
  %v710 = vpop.f32.mrf.mxu0
  %v711 = vpop.f32.mrf.mxu0
  %v712 = vpop.f32.mrf.mxu0
  %713 = vdwg.mxu0
  %714 = vmatprep.subr.bf16.mxu0 0
  %715 = vmatpush1.bf16.msra.mxu0 0
  %716 = vmatprep.subr.bf16.mxu0 0
  %717 = vmatpush1.bf16.msra.mxu0 0
  %718 = vmatprep.subr.bf16.mxu0 0
  %719 = vmatpush1.bf16.msra.mxu0 0
  %720 = vmatprep.subr.bf16.mxu0 0
  %721 = vmatpush1.bf16.msra.mxu0 0
  %722 = vmatprep.subr.bf16.mxu0 0
  %723 = vmatpush1.bf16.msra.mxu0 %v479
  %724 = vmatprep.subr.bf16.mxu0 0
  %725 = vmatpush1.bf16.msra.mxu0 %v478
  %726 = vmatprep.subr.bf16.mxu0 0
  %727 = vmatpush1.bf16.msra.mxu0 %v477
  %728 = vmatprep.subr.bf16.mxu0 0
  %729 = vmatpush1.bf16.msra.mxu0 %v476
  %730 = vmatprep.subr.bf16.mxu0 0
  %731 = vmatpush2.bf16.msra.mxu0 0
  %732 = vmatprep.subr.bf16.mxu0 0
  %733 = vmatpush2.bf16.msra.mxu0 0
  %734 = vmatprep.subr.bf16.mxu0 0
  %735 = vmatpush2.bf16.msra.mxu0 0
  %736 = vmatprep.subr.bf16.mxu0 0
  %737 = vmatpush2.bf16.msra.mxu0 0
  %738 = vmatprep.subr.bf16.mxu0 0
  %739 = vmatpush2.bf16.msra.mxu0 0
  %740 = vmatprep.subr.bf16.mxu0 0
  %741 = vmatpush2.bf16.msra.mxu0 0
  %742 = vmatprep.subr.bf16.mxu0 0
  %743 = vmatpush2.bf16.msra.mxu0 0
  %744 = vmatprep.subr.bf16.mxu0 0
  %745 = vmatpush2.bf16.msra.mxu0 0
  %746 = vmatprep.mubr.bf16.mxu0 0
  %747 = vmatmul.mubr.bf16.gmra.mxu0 %v518
  %v748 = vpop.f32.mrf.mxu0
  %v749 = vadd.f32 %v661, %v748
  %v750 = vpop.f32.mrf.mxu0
  %v751 = vpop.f32.mrf.mxu0
  %v752 = vadd.f32 %v664, %v751
  %v753 = vpop.f32.mrf.mxu0
  %754 = vmatprep.mubr.bf16.mxu0 0
  %755 = vmatmul.mubr.bf16.gmra.mxu0 %v521
  %v756 = vpop.f32.mrf.mxu0
  %v757 = vadd.f32 %v669, %v756
  %v758 = vpop.f32.mrf.mxu0
  %v759 = vpop.f32.mrf.mxu0
  %v760 = vadd.f32 %v672, %v759
  %v761 = vpop.f32.mrf.mxu0
  %762 = vmatprep.mubr.bf16.mxu0 0
  %763 = vmatmul.mubr.bf16.gmra.mxu0 %v524
  %v764 = vpop.f32.mrf.mxu0
  %v765 = vadd.f32 %v677, %v764
  %v766 = vpop.f32.mrf.mxu0
  %v767 = vpop.f32.mrf.mxu0
  %v768 = vadd.f32 %v680, %v767
  %v769 = vpop.f32.mrf.mxu0
  %770 = vmatprep.mubr.bf16.mxu0 0
  %771 = vmatmul.mubr.bf16.gmra.mxu0 %v527
  %v772 = vpop.f32.mrf.mxu0
  %v773 = vadd.f32 %v685, %v772
  %v774 = vpop.f32.mrf.mxu0
  %v775 = vpop.f32.mrf.mxu0
  %v776 = vadd.f32 %v688, %v775
  %v777 = vpop.f32.mrf.mxu0
  %778 = vmatprep.mubr.bf16.mxu0 0
  %779 = vmatmul.mubr.bf16.gmra.mxu0 %v530
  %v780 = vpop.f32.mrf.mxu0
  %v781 = vadd.f32 %v693, %v780
  %v782 = vpop.f32.mrf.mxu0
  %v783 = vpop.f32.mrf.mxu0
  %v784 = vadd.f32 %v696, %v783
  %v785 = vpop.f32.mrf.mxu0
  %786 = vmatprep.mubr.bf16.mxu0 0
  %787 = vmatmul.mubr.bf16.gmra.mxu0 %v533
  %v788 = vpop.f32.mrf.mxu0
  %v789 = vadd.f32 %v701, %v788
  %v790 = vpop.f32.mrf.mxu0
  %v791 = vpop.f32.mrf.mxu0
  %v792 = vadd.f32 %v704, %v791
  %v793 = vpop.f32.mrf.mxu0
  %794 = vmatprep.mubr.bf16.mxu0 0
  %795 = vmatmul.mubr.bf16.gmra.mxu0 %v536
  %v796 = vpop.f32.mrf.mxu0
  %v797 = vadd.f32 %v709, %v796
  %v798 = vpop.f32.mrf.mxu0
  %v799 = vpop.f32.mrf.mxu0
  %v800 = vpop.f32.mrf.mxu0
  %801 = vdwg.mxu0
  %v802 = vmax.f32 %v749, 0.0
  %v803 = vmax.f32 %v752, 0.0
  %v804 = vmax.f32 %v757, 0.0
  %v805 = vmax.f32 %v760, 0.0
  %v806 = vmax.f32 %v765, 0.0
  %v807 = vmax.f32 %v768, 0.0
  %v808 = vmax.f32 %v773, 0.0
  %v809 = vmax.f32 %v776, 0.0
  %v810 = vmax.f32 %v781, 0.0
  %v811 = vmax.f32 %v784, 0.0
  %v812 = vmax.f32 %v789, 0.0
  %v813 = vmax.f32 %v792, 0.0
  %v814 = vmax.f32 %v797, 0.0
  %v815 = vpack.c.bf16 %v803, %v802
  %v816 = vpack.c.bf16 %v805, %v804
  %v817 = vpack.c.bf16 %v807, %v806
  %v818 = vpack.c.bf16 %v809, %v808
  %v819 = vpack.c.bf16 %v811, %v810
  %v820 = vpack.c.bf16 %v813, %v812
  %v821 = vpack.c.bf16 %v814, %v814
  %v829 = vunpack.c.l.b16 %v815
  %v830 = vunpack.c.h.b16 %v815
  %v831 = vunpack.c.l.b16 %v816
  %v832 = vunpack.c.h.b16 %v816
  %v833 = vunpack.c.l.b16 %v817
  %v834 = vunpack.c.h.b16 %v817
  %v835 = vunpack.c.l.b16 %v818
  %v836 = vunpack.c.h.b16 %v818
  %v837 = vunpack.c.l.b16 %v819
  %v838 = vunpack.c.h.b16 %v819
  %v839 = vunpack.c.l.b16 %v820
  %v840 = vunpack.c.h.b16 %v820
  %v841 = vunpack.c.l.b16 %v821
  %v842 = vpack.c.b16 %v829, %v829
  %v843 = vpack.c.b16 %v830, %v830
  %v844 = vpack.c.b16 %v831, %v831
  %v845 = vpack.c.b16 %v832, %v832
  %v846 = vpack.c.b16 %v833, %v833
  %v847 = vpack.c.b16 %v834, %v834
  %v848 = vpack.c.b16 %v835, %v835
  %v849 = vpack.c.b16 %v836, %v836
  %v850 = vpack.c.b16 %v837, %v837
  %v851 = vpack.c.b16 %v838, %v838
  %v852 = vpack.c.b16 %v839, %v839
  %v853 = vpack.c.b16 %v840, %v840
  %v854 = vpack.c.b16 %v841, %v841
  %868 = vst [vmem:[%s3] sm:$0xf] %v842
  %869 = vst [vmem:[%s3 + $0x4] sm:$0xf] %v843
  %870 = vst [vmem:[%s3 + $0x8] sm:$0xf] %v844
  %871 = vst [vmem:[%s3 + $0xc] sm:$0xf] %v845
  %872 = vst [vmem:[%s3 + $0x10] sm:$0xf] %v846
  %873 = vst [vmem:[%s3 + $0x14] sm:$0xf] %v847
  %874 = vst [vmem:[%s3 + $0x18] sm:$0xf] %v848
  %875 = vst [vmem:[%s3 + $0x1c] sm:$0xf] %v849
  %876 = vst [vmem:[%s3 + $0x20] sm:$0xf] %v850
  %877 = vst [vmem:[%s3 + $0x24] sm:$0xf] %v851
  %878 = vst [vmem:[%s3 + $0x28] sm:$0xf] %v852
  %879 = vst [vmem:[%s3 + $0x2c] sm:$0xf] %v853
  %880 = vst [vmem:[%s3 + $0x30] sm:$0x1] %v854
  // Predicated region
  $region14: #{improved_digit_recognizer_forward.11} parent=0 // pred_check
    _
  $region15: #{improved_digit_recognizer_forward.11} parent=0 // pred_check_branch
    %882 = sbr.rel (0) target = $region17
  $region16: #{improved_digit_recognizer_forward.11} parent=0 // pred_region
    _
  $region17: #{improved_digit_recognizer_forward.11} parent=0 // pred_fallthru
    _
  // Predicated region
  $region18: #{improved_digit_recognizer_forward.11} parent=0 // pred_check
    _
  $region19: #{improved_digit_recognizer_forward.11} parent=0 // pred_check_branch
    %884 = sbr.rel (0) target = $region21
  $region20: #{improved_digit_recognizer_forward.11} parent=0 // pred_region
    _
  $region21: #{improved_digit_recognizer_forward.11} parent=0 // pred_fallthru
    _

// kernel: improved_digit_recognizer_forward.12
$region0: #{improved_digit_recognizer_forward.12}
  #allocation0 [shape = 'u32[]', space=smem, size = 0x4, offset = 0x4, fixed_abs, tag = 'smem constant byte address 0x4 - core index']
  #allocation1 [shape = 'u32[144,128]{1,0:T(1,128)}', space=vmem, size = 0x12000, scoped, tag = 'internal scratch']
  %s0 = inlined_call_operand.vmem [shape: bf16[6,2,3,256], index: 0, kind: input, shape index: {}]
  %s1 = inlined_call_operand.vmem [shape: bf16[6,3,128], index: 1, kind: output, shape index: {}]
  %s2 = sld [smem:[#allocation0]]
  $region14: #{improved_digit_recognizer_forward.12} parent=0
    _
  %s4 = ssub.s32 1, %s2
  %s5 = scalar_select 0, %s4, %s2
  // Predicated region
  $region2: #{improved_digit_recognizer_forward.12} parent=0 // pred_check
    _
  $region3: #{improved_digit_recognizer_forward.12} parent=0 // pred_check_branch
    %7 = sbr.rel (0) target = $region5
  $region4: #{improved_digit_recognizer_forward.12} parent=0 // pred_region
    _
  $region5: #{improved_digit_recognizer_forward.12} parent=0 // pred_fallthru
    _
  %v8 = vld [vmem:[%s0] sm:$0xf]
  %v9 = vld [vmem:[%s0 + $0x8] sm:$0xf]
  %v10 = vld [vmem:[%s0 + $0x10] sm:$0xf]
  %v11 = vld [vmem:[%s0 + $0x18] sm:$0xf]
  %v12 = vld [vmem:[%s0 + $0x20] sm:$0xf]
  %v13 = vld [vmem:[%s0 + $0x28] sm:$0xf]
  %s14 = scalar_lea.vmem %s0, 4
  %v15 = vld [vmem:[%s14] sm:$0xf]
  %v16 = vld [vmem:[%s14 + $0x8] sm:$0xf]
  %v17 = vld [vmem:[%s14 + $0x10] sm:$0xf]
  %v18 = vld [vmem:[%s14 + $0x18] sm:$0xf]
  %v19 = vld [vmem:[%s14 + $0x20] sm:$0xf]
  %v20 = vld [vmem:[%s14 + $0x28] sm:$0xf]
  %v21 = vmax.bf16 %v8, %v15
  %v22 = vmax.bf16 %v9, %v16
  %v23 = vmax.bf16 %v10, %v17
  %v24 = vmax.bf16 %v11, %v18
  %v25 = vmax.bf16 %v12, %v19
  %v26 = vmax.bf16 %v13, %v20
  %v33 = vrot.slane %v21, 2
  %v34 = vrot.slane %v22, 2
  %v35 = vrot.slane %v23, 2
  %v36 = vrot.slane %v24, 2
  %v37 = vrot.slane %v25, 2
  %v38 = vrot.slane %v26, 2
  %v45 = vmax.bf16 %v21, %v33
  %v46 = vmax.bf16 %v22, %v34
  %v47 = vmax.bf16 %v23, %v35
  %v48 = vmax.bf16 %v24, %v36
  %v49 = vmax.bf16 %v25, %v37
  %v50 = vmax.bf16 %v26, %v38
  %vm51 = vcmask 1041408
  %vm52 = vsmask.f32 1280
  %vm53 = vmand %vm51, %vm52
  %v54 = vld [vmem:[%s1] sm:$0x3]
  %v55 = vsel %vm53, %v45, %v54
  %56 = vst [vmem:[%s1] sm:$0x3] %v55
  %v57 = vld [vmem:[%s1 + $0x2] sm:$0x3]
  %v58 = vsel %vm53, %v46, %v57
  %59 = vst [vmem:[%s1 + $0x2] sm:$0x3] %v58
  %v60 = vld [vmem:[%s1 + $0x4] sm:$0x3]
  %v61 = vsel %vm53, %v47, %v60
  %62 = vst [vmem:[%s1 + $0x4] sm:$0x3] %v61
  %v63 = vld [vmem:[%s1 + $0x6] sm:$0x3]
  %v64 = vsel %vm53, %v48, %v63
  %65 = vst [vmem:[%s1 + $0x6] sm:$0x3] %v64
  %v66 = vld [vmem:[%s1 + $0x8] sm:$0x3]
  %v67 = vsel %vm53, %v49, %v66
  %68 = vst [vmem:[%s1 + $0x8] sm:$0x3] %v67
  %v69 = vld [vmem:[%s1 + $0xa] sm:$0x3]
  %v70 = vsel %vm53, %v50, %v69
  %71 = vst [vmem:[%s1 + $0xa] sm:$0x3] %v70
  // Predicated region
  $region6: #{improved_digit_recognizer_forward.12} parent=0 // pred_check
    _
  $region7: #{improved_digit_recognizer_forward.12} parent=0 // pred_check_branch
    %73 = sbr.rel (0) target = $region9
  $region8: #{improved_digit_recognizer_forward.12} parent=0 // pred_region
    _
  $region9: #{improved_digit_recognizer_forward.12} parent=0 // pred_fallthru
    _
  // Predicated region
  $region10: #{improved_digit_recognizer_forward.12} parent=0 // pred_check
    _
  $region11: #{improved_digit_recognizer_forward.12} parent=0 // pred_check_branch
    %75 = sbr.rel (0) target = $region13
  $region12: #{improved_digit_recognizer_forward.12} parent=0 // pred_region
    _
  $region13: #{improved_digit_recognizer_forward.12} parent=0 // pred_fallthru
    _

// kernel: improved_digit_recognizer_forward.13
$region0: #{improved_digit_recognizer_forward.13}
  #allocation0 [shape = 'u32[]', space=smem, size = 0x4, offset = 0x4, fixed_abs, tag = 'smem constant byte address 0x4 - core index']
  #allocation1 [shape = 'u32[144,128]{1,0:T(1,128)}', space=vmem, size = 0x12000, scoped, tag = 'internal scratch']
  %s0 = inlined_call_operand.vmem [shape: bf16[2,1152], index: 0, kind: input, shape index: {}]
  %s1 = inlined_call_operand.vmem [shape: bf16[1152,256], index: 1, kind: input, shape index: {}]
  %s2 = inlined_call_operand.vmem [shape: f32[1,256], index: 2, kind: input, shape index: {}]
  %s3 = inlined_call_operand.vmem [shape: bf16[256,10], index: 3, kind: input, shape index: {}]
  %s4 = inlined_call_operand.vmem [shape: f32[1,10], index: 4, kind: input, shape index: {}]
  %s5 = inlined_call_operand.hbm [shape: f32[2,10], index: 5, kind: output, shape index: {}]
  %s6 = sld [smem:[#allocation0]]
  $region30: #{improved_digit_recognizer_forward.13} parent=0
    _
  %s8 = ssub.s32 1, %s6
  %s9 = scalar_select 0, %s8, %s6
  $region1: #{improved_digit_recognizer_forward.13} parent=0
    #allocation2 [shape = 'u8[1024]{0}', space=vmem, size = 0x400, scoped, tag = 'output window, operand 0, single buffered']
    #allocation3 [shape = 's32[1]{0}', space=sflag, size = 0x4, scoped, tag = 'scoped memory for improved_digit_recognizer_forward.13']
    %10 = vsyncpa [#allocation3], 0
    // Predicated region
    $region2: #{improved_digit_recognizer_forward.13} parent=1 // pred_check
      _
    $region3: #{improved_digit_recognizer_forward.13} parent=1 // pred_check_branch
      %12 = sbr.rel (0) target = $region5
    $region4: #{improved_digit_recognizer_forward.13} parent=1 // pred_region
      _
    $region5: #{improved_digit_recognizer_forward.13} parent=1 // pred_fallthru
      _
    // Predicated region
    $region6: #{improved_digit_recognizer_forward.13} parent=1 // pred_check
      _
    $region7: #{improved_digit_recognizer_forward.13} parent=1 // pred_check_branch
      %14 = sbr.rel (0) target = $region9
    $region8: #{improved_digit_recognizer_forward.13} parent=1 // pred_region
      _
    $region9: #{improved_digit_recognizer_forward.13} parent=1 // pred_fallthru
      _
    // Predicated region
    $region10: #{improved_digit_recognizer_forward.13} parent=1 // pred_check
      _
    $region11: #{improved_digit_recognizer_forward.13} parent=1 // pred_check_branch
      %16 = sbr.rel (0) target = $region13
    $region12: #{improved_digit_recognizer_forward.13} parent=1 // pred_region
      _
    $region13: #{improved_digit_recognizer_forward.13} parent=1 // pred_fallthru
      _
    // Predicated region
    $region14: #{improved_digit_recognizer_forward.13} parent=1 // pred_check
      _
    $region15: #{improved_digit_recognizer_forward.13} parent=1 // pred_check_branch
      %18 = sbr.rel (0) target = $region17
    $region16: #{improved_digit_recognizer_forward.13} parent=1 // pred_region
      _
    $region17: #{improved_digit_recognizer_forward.13} parent=1 // pred_fallthru
      _
    // Predicated region
    $region18: #{improved_digit_recognizer_forward.13} parent=1 // pred_check
      _
    $region19: #{improved_digit_recognizer_forward.13} parent=1 // pred_check_branch
      %20 = sbr.rel (0) target = $region21
    $region20: #{improved_digit_recognizer_forward.13} parent=1 // pred_region
      _
    $region21: #{improved_digit_recognizer_forward.13} parent=1 // pred_fallthru
      _
    %v22 = vld [vmem:[%s0] sm:$0xff]
    %v23 = vld [vmem:[%s0 + $0x8] sm:$0x1]
    %v24 = vld [vmem:[%s1] sm:$0xff]
    %v25 = vld [vmem:[%s1 + $0x8] sm:$0xff]
    %v26 = vld [vmem:[%s1 + $0x10] sm:$0xff]
    %v27 = vld [vmem:[%s1 + $0x18] sm:$0xff]
    %v28 = vld [vmem:[%s1 + $0x20] sm:$0xff]
    %v29 = vld [vmem:[%s1 + $0x28] sm:$0xff]
    %v30 = vld [vmem:[%s1 + $0x30] sm:$0xff]
    %v31 = vld [vmem:[%s1 + $0x38] sm:$0xff]
    %v32 = vld [vmem:[%s1 + $0x40] sm:$0xff]
    %v33 = vld [vmem:[%s1 + $0x48] sm:$0xff]
    %v34 = vld [vmem:[%s1 + $0x50] sm:$0xff]
    %v35 = vld [vmem:[%s1 + $0x58] sm:$0xff]
    %v36 = vld [vmem:[%s1 + $0x60] sm:$0xff]
    %v37 = vld [vmem:[%s1 + $0x68] sm:$0xff]
    %v38 = vld [vmem:[%s1 + $0x70] sm:$0xff]
    %v39 = vld [vmem:[%s1 + $0x78] sm:$0xff]
    %v40 = vld [vmem:[%s1 + $0x80] sm:$0xff]
    %v41 = vld [vmem:[%s1 + $0x88] sm:$0xff]
    %v42 = vld [vmem:[%s1 + $0x90] sm:$0xff]
    %v43 = vld [vmem:[%s1 + $0x98] sm:$0xff]
    %v44 = vld [vmem:[%s1 + $0xa0] sm:$0xff]
    %v45 = vld [vmem:[%s1 + $0xa8] sm:$0xff]
    %v46 = vld [vmem:[%s1 + $0xb0] sm:$0xff]
    %v47 = vld [vmem:[%s1 + $0xb8] sm:$0xff]
    %v48 = vld [vmem:[%s1 + $0xc0] sm:$0xff]
    %v49 = vld [vmem:[%s1 + $0xc8] sm:$0xff]
    %v50 = vld [vmem:[%s1 + $0xd0] sm:$0xff]
    %v51 = vld [vmem:[%s1 + $0xd8] sm:$0xff]
    %v52 = vld [vmem:[%s1 + $0xe0] sm:$0xff]
    %v53 = vld [vmem:[%s1 + $0xe8] sm:$0xff]
    %v54 = vld [vmem:[%s1 + $0xf0] sm:$0xff]
    %v55 = vld [vmem:[%s1 + $0xf8] sm:$0xff]
    %v56 = vld [vmem:[%s1 + $0x100] sm:$0xff]
    %v57 = vld [vmem:[%s1 + $0x108] sm:$0xff]
    %v58 = vld [vmem:[%s1 + $0x110] sm:$0xff]
    %v59 = vld [vmem:[%s1 + $0x118] sm:$0xff]
    %v60 = vld [vmem:[%s1 + $0x120] sm:$0xff]
    %v61 = vld [vmem:[%s1 + $0x128] sm:$0xff]
    %v62 = vld [vmem:[%s1 + $0x130] sm:$0xff]
    %v63 = vld [vmem:[%s1 + $0x138] sm:$0xff]
    %v64 = vld [vmem:[%s1 + $0x140] sm:$0xff]
    %v65 = vld [vmem:[%s1 + $0x148] sm:$0xff]
    %v66 = vld [vmem:[%s1 + $0x150] sm:$0xff]
    %v67 = vld [vmem:[%s1 + $0x158] sm:$0xff]
    %v68 = vld [vmem:[%s1 + $0x160] sm:$0xff]
    %v69 = vld [vmem:[%s1 + $0x168] sm:$0xff]
    %v70 = vld [vmem:[%s1 + $0x170] sm:$0xff]
    %v71 = vld [vmem:[%s1 + $0x178] sm:$0xff]
    %v72 = vld [vmem:[%s1 + $0x180] sm:$0xff]
    %v73 = vld [vmem:[%s1 + $0x188] sm:$0xff]
    %v74 = vld [vmem:[%s1 + $0x190] sm:$0xff]
    %v75 = vld [vmem:[%s1 + $0x198] sm:$0xff]
    %v76 = vld [vmem:[%s1 + $0x1a0] sm:$0xff]
    %v77 = vld [vmem:[%s1 + $0x1a8] sm:$0xff]
    %v78 = vld [vmem:[%s1 + $0x1b0] sm:$0xff]
    %v79 = vld [vmem:[%s1 + $0x1b8] sm:$0xff]
    %v80 = vld [vmem:[%s1 + $0x1c0] sm:$0xff]
    %v81 = vld [vmem:[%s1 + $0x1c8] sm:$0xff]
    %v82 = vld [vmem:[%s1 + $0x1d0] sm:$0xff]
    %v83 = vld [vmem:[%s1 + $0x1d8] sm:$0xff]
    %v84 = vld [vmem:[%s1 + $0x1e0] sm:$0xff]
    %v85 = vld [vmem:[%s1 + $0x1e8] sm:$0xff]
    %v86 = vld [vmem:[%s1 + $0x1f0] sm:$0xff]
    %v87 = vld [vmem:[%s1 + $0x1f8] sm:$0xff]
    %v88 = vld [vmem:[%s1 + $0x200] sm:$0xff]
    %v89 = vld [vmem:[%s1 + $0x208] sm:$0xff]
    %v90 = vld [vmem:[%s1 + $0x210] sm:$0xff]
    %v91 = vld [vmem:[%s1 + $0x218] sm:$0xff]
    %v92 = vld [vmem:[%s1 + $0x220] sm:$0xff]
    %v93 = vld [vmem:[%s1 + $0x228] sm:$0xff]
    %v94 = vld [vmem:[%s1 + $0x230] sm:$0xff]
    %v95 = vld [vmem:[%s1 + $0x238] sm:$0xff]
    %v96 = vld [vmem:[%s1 + $0x240] sm:$0xff]
    %v97 = vld [vmem:[%s1 + $0x248] sm:$0xff]
    %v98 = vld [vmem:[%s1 + $0x250] sm:$0xff]
    %v99 = vld [vmem:[%s1 + $0x258] sm:$0xff]
    %v100 = vld [vmem:[%s1 + $0x260] sm:$0xff]
    %v101 = vld [vmem:[%s1 + $0x268] sm:$0xff]
    %v102 = vld [vmem:[%s1 + $0x270] sm:$0xff]
    %v103 = vld [vmem:[%s1 + $0x278] sm:$0xff]
    %v104 = vld [vmem:[%s1 + $0x280] sm:$0xff]
    %v105 = vld [vmem:[%s1 + $0x288] sm:$0xff]
    %v106 = vld [vmem:[%s1 + $0x290] sm:$0xff]
    %v107 = vld [vmem:[%s1 + $0x298] sm:$0xff]
    %v108 = vld [vmem:[%s1 + $0x2a0] sm:$0xff]
    %v109 = vld [vmem:[%s1 + $0x2a8] sm:$0xff]
    %v110 = vld [vmem:[%s1 + $0x2b0] sm:$0xff]
    %v111 = vld [vmem:[%s1 + $0x2b8] sm:$0xff]
    %v112 = vld [vmem:[%s1 + $0x2c0] sm:$0xff]
    %v113 = vld [vmem:[%s1 + $0x2c8] sm:$0xff]
    %v114 = vld [vmem:[%s1 + $0x2d0] sm:$0xff]
    %v115 = vld [vmem:[%s1 + $0x2d8] sm:$0xff]
    %v116 = vld [vmem:[%s1 + $0x2e0] sm:$0xff]
    %v117 = vld [vmem:[%s1 + $0x2e8] sm:$0xff]
    %v118 = vld [vmem:[%s1 + $0x2f0] sm:$0xff]
    %v119 = vld [vmem:[%s1 + $0x2f8] sm:$0xff]
    %v120 = vld [vmem:[%s1 + $0x300] sm:$0xff]
    %v121 = vld [vmem:[%s1 + $0x308] sm:$0xff]
    %v122 = vld [vmem:[%s1 + $0x310] sm:$0xff]
    %v123 = vld [vmem:[%s1 + $0x318] sm:$0xff]
    %v124 = vld [vmem:[%s1 + $0x320] sm:$0xff]
    %v125 = vld [vmem:[%s1 + $0x328] sm:$0xff]
    %v126 = vld [vmem:[%s1 + $0x330] sm:$0xff]
    %v127 = vld [vmem:[%s1 + $0x338] sm:$0xff]
    %v128 = vld [vmem:[%s1 + $0x340] sm:$0xff]
    %v129 = vld [vmem:[%s1 + $0x348] sm:$0xff]
    %v130 = vld [vmem:[%s1 + $0x350] sm:$0xff]
    %v131 = vld [vmem:[%s1 + $0x358] sm:$0xff]
    %v132 = vld [vmem:[%s1 + $0x360] sm:$0xff]
    %v133 = vld [vmem:[%s1 + $0x368] sm:$0xff]
    %v134 = vld [vmem:[%s1 + $0x370] sm:$0xff]
    %v135 = vld [vmem:[%s1 + $0x378] sm:$0xff]
    %v136 = vld [vmem:[%s1 + $0x380] sm:$0xff]
    %v137 = vld [vmem:[%s1 + $0x388] sm:$0xff]
    %v138 = vld [vmem:[%s1 + $0x390] sm:$0xff]
    %v139 = vld [vmem:[%s1 + $0x398] sm:$0xff]
    %v140 = vld [vmem:[%s1 + $0x3a0] sm:$0xff]
    %v141 = vld [vmem:[%s1 + $0x3a8] sm:$0xff]
    %v142 = vld [vmem:[%s1 + $0x3b0] sm:$0xff]
    %v143 = vld [vmem:[%s1 + $0x3b8] sm:$0xff]
    %v144 = vld [vmem:[%s1 + $0x3c0] sm:$0xff]
    %v145 = vld [vmem:[%s1 + $0x3c8] sm:$0xff]
    %v146 = vld [vmem:[%s1 + $0x3d0] sm:$0xff]
    %v147 = vld [vmem:[%s1 + $0x3d8] sm:$0xff]
    %v148 = vld [vmem:[%s1 + $0x3e0] sm:$0xff]
    %v149 = vld [vmem:[%s1 + $0x3e8] sm:$0xff]
    %v150 = vld [vmem:[%s1 + $0x3f0] sm:$0xff]
    %v151 = vld [vmem:[%s1 + $0x3f8] sm:$0xff]
    %v152 = vld [vmem:[%s1 + $0x400] sm:$0xff]
    %v153 = vld [vmem:[%s1 + $0x408] sm:$0xff]
    %v154 = vld [vmem:[%s1 + $0x410] sm:$0xff]
    %v155 = vld [vmem:[%s1 + $0x418] sm:$0xff]
    %v156 = vld [vmem:[%s1 + $0x420] sm:$0xff]
    %v157 = vld [vmem:[%s1 + $0x428] sm:$0xff]
    %v158 = vld [vmem:[%s1 + $0x430] sm:$0xff]
    %v159 = vld [vmem:[%s1 + $0x438] sm:$0xff]
    %v160 = vld [vmem:[%s1 + $0x440] sm:$0xff]
    %v161 = vld [vmem:[%s1 + $0x448] sm:$0xff]
    %v162 = vld [vmem:[%s1 + $0x450] sm:$0xff]
    %v163 = vld [vmem:[%s1 + $0x458] sm:$0xff]
    %v164 = vld [vmem:[%s1 + $0x460] sm:$0xff]
    %v165 = vld [vmem:[%s1 + $0x468] sm:$0xff]
    %v166 = vld [vmem:[%s1 + $0x470] sm:$0xff]
    %v167 = vld [vmem:[%s1 + $0x478] sm:$0xff]
    %v168 = vld [vmem:[%s2] sm:$0x3]
    %v170 = vlaneseq
    %v171 = vshrl.u32 %v170, 7
    %v172 = vsub.s32 0, %v171
    %v173 = vrot.slane %v168, %v172
    %v174 = vlaneseq
    %v175 = vshrl.u32 %v174, 7
    %v176 = vsub.s32 1, %v175
    %v177 = vrot.slane %v168, %v176
    %v182 = vcombine.high %v22, %v22
    %v184 = vunpack.c.l.s4 1966171168
    %v185 = vunpack.c.0.s8 %v184
    %v186 = vlaneseq
    %v187 = vshrl.u32 %v186, 7
    %v188 = vsub.s32 %v185, %v187
    %v189 = vrot.slane %v22, %v188
    %v191 = vunpack.c.l.s4 1966171168
    %v192 = vunpack.c.0.s8 %v191
    %v193 = vlaneseq
    %v194 = vshrl.u32 %v193, 7
    %v195 = vsub.s32 %v192, %v194
    %v196 = vrot.slane %v182, %v195
    %v197 = vcombine.high %v189, %v189
    %v198 = vcombine.high %v196, %v196
    %v200 = vunpack.c.l.s4 1966171168
    %v201 = vunpack.c.0.s8 %v200
    %v202 = vlaneseq
    %v203 = vshrl.u32 %v202, 7
    %v204 = vsub.s32 %v201, %v203
    %v205 = vrot.slane %v189, %v204
    %v207 = vunpack.c.l.s4 1966171168
    %v208 = vunpack.c.0.s8 %v207
    %v209 = vlaneseq
    %v210 = vshrl.u32 %v209, 7
    %v211 = vsub.s32 %v208, %v210
    %v212 = vrot.slane %v196, %v211
    %v214 = vunpack.c.l.s4 1966171168
    %v215 = vunpack.c.0.s8 %v214
    %v216 = vlaneseq
    %v217 = vshrl.u32 %v216, 7
    %v218 = vsub.s32 %v215, %v217
    %v219 = vrot.slane %v197, %v218
    %v221 = vunpack.c.l.s4 1966171168
    %v222 = vunpack.c.0.s8 %v221
    %v223 = vlaneseq
    %v224 = vshrl.u32 %v223, 7
    %v225 = vsub.s32 %v222, %v224
    %v226 = vrot.slane %v198, %v225
    %v227 = vcombine.high %v205, %v205
    %v228 = vcombine.high %v212, %v212
    %v229 = vcombine.high %v219, %v219
    %v230 = vcombine.high %v226, %v226
    %v232 = vunpack.c.l.s4 1966171168
    %v233 = vunpack.c.0.s8 %v232
    %v234 = vlaneseq
    %v235 = vshrl.u32 %v234, 7
    %v236 = vsub.s32 %v233, %v235
    %v237 = vrot.slane %v23, %v236
    %v239 = vunpack.c.l.s4 1966171168
    %v240 = vunpack.c.0.s8 %v239
    %v241 = vlaneseq
    %v242 = vshrl.u32 %v241, 7
    %v243 = vsub.s32 %v240, %v242
    %v244 = vrot.slane %v237, %v243
    %v398 = vunpack.c.l.b16 %v24
    %v399 = vunpack.c.h.b16 %v24
    %v400 = vunpack.c.l.b16 %v25
    %v401 = vunpack.c.h.b16 %v25
    %v402 = vunpack.c.l.b16 %v26
    %v403 = vunpack.c.h.b16 %v26
    %v404 = vunpack.c.l.b16 %v27
    %v405 = vunpack.c.h.b16 %v27
    %v406 = vunpack.c.l.b16 %v28
    %v407 = vunpack.c.h.b16 %v28
    %v408 = vunpack.c.l.b16 %v29
    %v409 = vunpack.c.h.b16 %v29
    %v410 = vunpack.c.l.b16 %v30
    %v411 = vunpack.c.h.b16 %v30
    %v412 = vunpack.c.l.b16 %v31
    %v413 = vunpack.c.h.b16 %v31
    %v414 = vunpack.c.l.b16 %v32
    %v415 = vunpack.c.h.b16 %v32
    %v416 = vunpack.c.l.b16 %v33
    %v417 = vunpack.c.h.b16 %v33
    %v418 = vunpack.c.l.b16 %v34
    %v419 = vunpack.c.h.b16 %v34
    %v420 = vunpack.c.l.b16 %v35
    %v421 = vunpack.c.h.b16 %v35
    %v422 = vunpack.c.l.b16 %v36
    %v423 = vunpack.c.h.b16 %v36
    %v424 = vunpack.c.l.b16 %v37
    %v425 = vunpack.c.h.b16 %v37
    %v426 = vunpack.c.l.b16 %v38
    %v427 = vunpack.c.h.b16 %v38
    %v428 = vunpack.c.l.b16 %v39
    %v429 = vunpack.c.h.b16 %v39
    %v430 = vunpack.c.l.b16 %v40
    %v431 = vunpack.c.h.b16 %v40
    %v432 = vunpack.c.l.b16 %v41
    %v433 = vunpack.c.h.b16 %v41
    %v434 = vunpack.c.l.b16 %v42
    %v435 = vunpack.c.h.b16 %v42
    %v436 = vunpack.c.l.b16 %v43
    %v437 = vunpack.c.h.b16 %v43
    %v438 = vunpack.c.l.b16 %v44
    %v439 = vunpack.c.h.b16 %v44
    %v440 = vunpack.c.l.b16 %v45
    %v441 = vunpack.c.h.b16 %v45
    %v442 = vunpack.c.l.b16 %v46
    %v443 = vunpack.c.h.b16 %v46
    %v444 = vunpack.c.l.b16 %v47
    %v445 = vunpack.c.h.b16 %v47
    %v446 = vunpack.c.l.b16 %v48
    %v447 = vunpack.c.h.b16 %v48
    %v448 = vunpack.c.l.b16 %v49
    %v449 = vunpack.c.h.b16 %v49
    %v450 = vunpack.c.l.b16 %v50
    %v451 = vunpack.c.h.b16 %v50
    %v452 = vunpack.c.l.b16 %v51
    %v453 = vunpack.c.h.b16 %v51
    %v454 = vunpack.c.l.b16 %v52
    %v455 = vunpack.c.h.b16 %v52
    %v456 = vunpack.c.l.b16 %v53
    %v457 = vunpack.c.h.b16 %v53
    %v458 = vunpack.c.l.b16 %v54
    %v459 = vunpack.c.h.b16 %v54
    %v460 = vunpack.c.l.b16 %v55
    %v461 = vunpack.c.h.b16 %v55
    %v462 = vunpack.c.l.b16 %v56
    %v463 = vunpack.c.h.b16 %v56
    %v464 = vunpack.c.l.b16 %v57
    %v465 = vunpack.c.h.b16 %v57
    %v466 = vunpack.c.l.b16 %v58
    %v467 = vunpack.c.h.b16 %v58
    %v468 = vunpack.c.l.b16 %v59
    %v469 = vunpack.c.h.b16 %v59
    %v470 = vunpack.c.l.b16 %v60
    %v471 = vunpack.c.h.b16 %v60
    %v472 = vunpack.c.l.b16 %v61
    %v473 = vunpack.c.h.b16 %v61
    %v474 = vunpack.c.l.b16 %v62
    %v475 = vunpack.c.h.b16 %v62
    %v476 = vunpack.c.l.b16 %v63
    %v477 = vunpack.c.h.b16 %v63
    %v478 = vunpack.c.l.b16 %v64
    %v479 = vunpack.c.h.b16 %v64
    %v480 = vunpack.c.l.b16 %v65
    %v481 = vunpack.c.h.b16 %v65
    %v482 = vunpack.c.l.b16 %v66
    %v483 = vunpack.c.h.b16 %v66
    %v484 = vunpack.c.l.b16 %v67
    %v485 = vunpack.c.h.b16 %v67
    %v486 = vunpack.c.l.b16 %v68
    %v487 = vunpack.c.h.b16 %v68
    %v488 = vunpack.c.l.b16 %v69
    %v489 = vunpack.c.h.b16 %v69
    %v490 = vunpack.c.l.b16 %v70
    %v491 = vunpack.c.h.b16 %v70
    %v492 = vunpack.c.l.b16 %v71
    %v493 = vunpack.c.h.b16 %v71
    %v494 = vunpack.c.l.b16 %v72
    %v495 = vunpack.c.h.b16 %v72
    %v496 = vunpack.c.l.b16 %v73
    %v497 = vunpack.c.h.b16 %v73
    %v498 = vunpack.c.l.b16 %v74
    %v499 = vunpack.c.h.b16 %v74
    %v500 = vunpack.c.l.b16 %v75
    %v501 = vunpack.c.h.b16 %v75
    %v502 = vunpack.c.l.b16 %v76
    %v503 = vunpack.c.h.b16 %v76
    %v504 = vunpack.c.l.b16 %v77
    %v505 = vunpack.c.h.b16 %v77
    %v506 = vunpack.c.l.b16 %v78
    %v507 = vunpack.c.h.b16 %v78
    %v508 = vunpack.c.l.b16 %v79
    %v509 = vunpack.c.h.b16 %v79
    %v510 = vunpack.c.l.b16 %v80
    %v511 = vunpack.c.h.b16 %v80
    %v512 = vunpack.c.l.b16 %v81
    %v513 = vunpack.c.h.b16 %v81
    %v514 = vunpack.c.l.b16 %v82
    %v515 = vunpack.c.h.b16 %v82
    %v516 = vunpack.c.l.b16 %v83
    %v517 = vunpack.c.h.b16 %v83
    %v518 = vunpack.c.l.b16 %v84
    %v519 = vunpack.c.h.b16 %v84
    %v520 = vunpack.c.l.b16 %v85
    %v521 = vunpack.c.h.b16 %v85
    %v522 = vunpack.c.l.b16 %v86
    %v523 = vunpack.c.h.b16 %v86
    %v524 = vunpack.c.l.b16 %v87
    %v525 = vunpack.c.h.b16 %v87
    %v526 = vunpack.c.l.b16 %v88
    %v527 = vunpack.c.h.b16 %v88
    %v528 = vunpack.c.l.b16 %v89
    %v529 = vunpack.c.h.b16 %v89
    %v530 = vunpack.c.l.b16 %v90
    %v531 = vunpack.c.h.b16 %v90
    %v532 = vunpack.c.l.b16 %v91
    %v533 = vunpack.c.h.b16 %v91
    %v534 = vunpack.c.l.b16 %v92
    %v535 = vunpack.c.h.b16 %v92
    %v536 = vunpack.c.l.b16 %v93
    %v537 = vunpack.c.h.b16 %v93
    %v538 = vunpack.c.l.b16 %v94
    %v539 = vunpack.c.h.b16 %v94
    %v540 = vunpack.c.l.b16 %v95
    %v541 = vunpack.c.h.b16 %v95
    %v542 = vunpack.c.l.b16 %v96
    %v543 = vunpack.c.h.b16 %v96
    %v544 = vunpack.c.l.b16 %v97
    %v545 = vunpack.c.h.b16 %v97
    %v546 = vunpack.c.l.b16 %v98
    %v547 = vunpack.c.h.b16 %v98
    %v548 = vunpack.c.l.b16 %v99
    %v549 = vunpack.c.h.b16 %v99
    %v550 = vunpack.c.l.b16 %v100
    %v551 = vunpack.c.h.b16 %v100
    %v552 = vunpack.c.l.b16 %v101
    %v553 = vunpack.c.h.b16 %v101
    %v554 = vunpack.c.l.b16 %v102
    %v555 = vunpack.c.h.b16 %v102
    %v556 = vunpack.c.l.b16 %v103
    %v557 = vunpack.c.h.b16 %v103
    %v558 = vunpack.c.l.b16 %v104
    %v559 = vunpack.c.h.b16 %v104
    %v560 = vunpack.c.l.b16 %v105
    %v561 = vunpack.c.h.b16 %v105
    %v562 = vunpack.c.l.b16 %v106
    %v563 = vunpack.c.h.b16 %v106
    %v564 = vunpack.c.l.b16 %v107
    %v565 = vunpack.c.h.b16 %v107
    %v566 = vunpack.c.l.b16 %v108
    %v567 = vunpack.c.h.b16 %v108
    %v568 = vunpack.c.l.b16 %v109
    %v569 = vunpack.c.h.b16 %v109
    %v570 = vunpack.c.l.b16 %v110
    %v571 = vunpack.c.h.b16 %v110
    %v572 = vunpack.c.l.b16 %v111
    %v573 = vunpack.c.h.b16 %v111
    %v574 = vunpack.c.l.b16 %v112
    %v575 = vunpack.c.h.b16 %v112
    %v576 = vunpack.c.l.b16 %v113
    %v577 = vunpack.c.h.b16 %v113
    %v578 = vunpack.c.l.b16 %v114
    %v579 = vunpack.c.h.b16 %v114
    %v580 = vunpack.c.l.b16 %v115
    %v581 = vunpack.c.h.b16 %v115
    %v582 = vunpack.c.l.b16 %v116
    %v583 = vunpack.c.h.b16 %v116
    %v584 = vunpack.c.l.b16 %v117
    %v585 = vunpack.c.h.b16 %v117
    %v586 = vunpack.c.l.b16 %v118
    %v587 = vunpack.c.h.b16 %v118
    %v588 = vunpack.c.l.b16 %v119
    %v589 = vunpack.c.h.b16 %v119
    %v590 = vunpack.c.l.b16 %v120
    %v591 = vunpack.c.h.b16 %v120
    %v592 = vunpack.c.l.b16 %v121
    %v593 = vunpack.c.h.b16 %v121
    %v594 = vunpack.c.l.b16 %v122
    %v595 = vunpack.c.h.b16 %v122
    %v596 = vunpack.c.l.b16 %v123
    %v597 = vunpack.c.h.b16 %v123
    %v598 = vunpack.c.l.b16 %v124
    %v599 = vunpack.c.h.b16 %v124
    %v600 = vunpack.c.l.b16 %v125
    %v601 = vunpack.c.h.b16 %v125
    %v602 = vunpack.c.l.b16 %v126
    %v603 = vunpack.c.h.b16 %v126
    %v604 = vunpack.c.l.b16 %v127
    %v605 = vunpack.c.h.b16 %v127
    %v606 = vunpack.c.l.b16 %v128
    %v607 = vunpack.c.h.b16 %v128
    %v608 = vunpack.c.l.b16 %v129
    %v609 = vunpack.c.h.b16 %v129
    %v610 = vunpack.c.l.b16 %v130
    %v611 = vunpack.c.h.b16 %v130
    %v612 = vunpack.c.l.b16 %v131
    %v613 = vunpack.c.h.b16 %v131
    %v614 = vunpack.c.l.b16 %v132
    %v615 = vunpack.c.h.b16 %v132
    %v616 = vunpack.c.l.b16 %v133
    %v617 = vunpack.c.h.b16 %v133
    %v618 = vunpack.c.l.b16 %v134
    %v619 = vunpack.c.h.b16 %v134
    %v620 = vunpack.c.l.b16 %v135
    %v621 = vunpack.c.h.b16 %v135
    %v622 = vunpack.c.l.b16 %v136
    %v623 = vunpack.c.h.b16 %v136
    %v624 = vunpack.c.l.b16 %v137
    %v625 = vunpack.c.h.b16 %v137
    %v626 = vunpack.c.l.b16 %v138
    %v627 = vunpack.c.h.b16 %v138
    %v628 = vunpack.c.l.b16 %v139
    %v629 = vunpack.c.h.b16 %v139
    %v630 = vunpack.c.l.b16 %v140
    %v631 = vunpack.c.h.b16 %v140
    %v632 = vunpack.c.l.b16 %v141
    %v633 = vunpack.c.h.b16 %v141
    %v634 = vunpack.c.l.b16 %v142
    %v635 = vunpack.c.h.b16 %v142
    %v636 = vunpack.c.l.b16 %v143
    %v637 = vunpack.c.h.b16 %v143
    %v638 = vunpack.c.l.b16 %v144
    %v639 = vunpack.c.h.b16 %v144
    %v640 = vunpack.c.l.b16 %v145
    %v641 = vunpack.c.h.b16 %v145
    %v642 = vunpack.c.l.b16 %v146
    %v643 = vunpack.c.h.b16 %v146
    %v644 = vunpack.c.l.b16 %v147
    %v645 = vunpack.c.h.b16 %v147
    %v646 = vunpack.c.l.b16 %v148
    %v647 = vunpack.c.h.b16 %v148
    %v648 = vunpack.c.l.b16 %v149
    %v649 = vunpack.c.h.b16 %v149
    %v650 = vunpack.c.l.b16 %v150
    %v651 = vunpack.c.h.b16 %v150
    %v652 = vunpack.c.l.b16 %v151
    %v653 = vunpack.c.h.b16 %v151
    %v654 = vunpack.c.l.b16 %v152
    %v655 = vunpack.c.h.b16 %v152
    %v656 = vunpack.c.l.b16 %v153
    %v657 = vunpack.c.h.b16 %v153
    %v658 = vunpack.c.l.b16 %v154
    %v659 = vunpack.c.h.b16 %v154
    %v660 = vunpack.c.l.b16 %v155
    %v661 = vunpack.c.h.b16 %v155
    %v662 = vunpack.c.l.b16 %v156
    %v663 = vunpack.c.h.b16 %v156
    %v664 = vunpack.c.l.b16 %v157
    %v665 = vunpack.c.h.b16 %v157
    %v666 = vunpack.c.l.b16 %v158
    %v667 = vunpack.c.h.b16 %v158
    %v668 = vunpack.c.l.b16 %v159
    %v669 = vunpack.c.h.b16 %v159
    %v670 = vunpack.c.l.b16 %v160
    %v671 = vunpack.c.h.b16 %v160
    %v672 = vunpack.c.l.b16 %v161
    %v673 = vunpack.c.h.b16 %v161
    %v674 = vunpack.c.l.b16 %v162
    %v675 = vunpack.c.h.b16 %v162
    %v676 = vunpack.c.l.b16 %v163
    %v677 = vunpack.c.h.b16 %v163
    %v678 = vunpack.c.l.b16 %v164
    %v679 = vunpack.c.h.b16 %v164
    %v680 = vunpack.c.l.b16 %v165
    %v681 = vunpack.c.h.b16 %v165
    %v682 = vunpack.c.l.b16 %v166
    %v683 = vunpack.c.h.b16 %v166
    %v684 = vunpack.c.l.b16 %v167
    %v685 = vunpack.c.h.b16 %v167
    %v686 = vpack.c.b16 %v400, %v398
    %v687 = vpack.c.b16 %v401, %v399
    %v688 = vpack.c.b16 %v404, %v402
    %v689 = vpack.c.b16 %v405, %v403
    %v690 = vpack.c.b16 %v408, %v406
    %v691 = vpack.c.b16 %v409, %v407
    %v692 = vpack.c.b16 %v412, %v410
    %v693 = vpack.c.b16 %v413, %v411
    %v694 = vpack.c.b16 %v416, %v414
    %v695 = vpack.c.b16 %v417, %v415
    %v696 = vpack.c.b16 %v420, %v418
    %v697 = vpack.c.b16 %v421, %v419
    %v698 = vpack.c.b16 %v424, %v422
    %v699 = vpack.c.b16 %v425, %v423
    %v700 = vpack.c.b16 %v428, %v426
    %v701 = vpack.c.b16 %v429, %v427
    %v702 = vpack.c.b16 %v432, %v430
    %v703 = vpack.c.b16 %v433, %v431
    %v704 = vpack.c.b16 %v436, %v434
    %v705 = vpack.c.b16 %v437, %v435
    %v706 = vpack.c.b16 %v440, %v438
    %v707 = vpack.c.b16 %v441, %v439
    %v708 = vpack.c.b16 %v444, %v442
    %v709 = vpack.c.b16 %v445, %v443
    %v710 = vpack.c.b16 %v448, %v446
    %v711 = vpack.c.b16 %v449, %v447
    %v712 = vpack.c.b16 %v452, %v450
    %v713 = vpack.c.b16 %v453, %v451
    %v714 = vpack.c.b16 %v456, %v454
    %v715 = vpack.c.b16 %v457, %v455
    %v716 = vpack.c.b16 %v460, %v458
    %v717 = vpack.c.b16 %v461, %v459
    %v718 = vpack.c.b16 %v464, %v462
    %v719 = vpack.c.b16 %v465, %v463
    %v720 = vpack.c.b16 %v468, %v466
    %v721 = vpack.c.b16 %v469, %v467
    %v722 = vpack.c.b16 %v472, %v470
    %v723 = vpack.c.b16 %v473, %v471
    %v724 = vpack.c.b16 %v476, %v474
    %v725 = vpack.c.b16 %v477, %v475
    %v726 = vpack.c.b16 %v480, %v478
    %v727 = vpack.c.b16 %v481, %v479
    %v728 = vpack.c.b16 %v484, %v482
    %v729 = vpack.c.b16 %v485, %v483
    %v730 = vpack.c.b16 %v488, %v486
    %v731 = vpack.c.b16 %v489, %v487
    %v732 = vpack.c.b16 %v492, %v490
    %v733 = vpack.c.b16 %v493, %v491
    %v734 = vpack.c.b16 %v496, %v494
    %v735 = vpack.c.b16 %v497, %v495
    %v736 = vpack.c.b16 %v500, %v498
    %v737 = vpack.c.b16 %v501, %v499
    %v738 = vpack.c.b16 %v504, %v502
    %v739 = vpack.c.b16 %v505, %v503
    %v740 = vpack.c.b16 %v508, %v506
    %v741 = vpack.c.b16 %v509, %v507
    %v742 = vpack.c.b16 %v512, %v510
    %v743 = vpack.c.b16 %v513, %v511
    %v744 = vpack.c.b16 %v516, %v514
    %v745 = vpack.c.b16 %v517, %v515
    %v746 = vpack.c.b16 %v520, %v518
    %v747 = vpack.c.b16 %v521, %v519
    %v748 = vpack.c.b16 %v524, %v522
    %v749 = vpack.c.b16 %v525, %v523
    %v750 = vpack.c.b16 %v528, %v526
    %v751 = vpack.c.b16 %v529, %v527
    %v752 = vpack.c.b16 %v532, %v530
    %v753 = vpack.c.b16 %v533, %v531
    %v754 = vpack.c.b16 %v536, %v534
    %v755 = vpack.c.b16 %v537, %v535
    %v756 = vpack.c.b16 %v540, %v538
    %v757 = vpack.c.b16 %v541, %v539
    %v758 = vpack.c.b16 %v544, %v542
    %v759 = vpack.c.b16 %v545, %v543
    %v760 = vpack.c.b16 %v548, %v546
    %v761 = vpack.c.b16 %v549, %v547
    %v762 = vpack.c.b16 %v552, %v550
    %v763 = vpack.c.b16 %v553, %v551
    %v764 = vpack.c.b16 %v556, %v554
    %v765 = vpack.c.b16 %v557, %v555
    %v766 = vpack.c.b16 %v560, %v558
    %v767 = vpack.c.b16 %v561, %v559
    %v768 = vpack.c.b16 %v564, %v562
    %v769 = vpack.c.b16 %v565, %v563
    %v770 = vpack.c.b16 %v568, %v566
    %v771 = vpack.c.b16 %v569, %v567
    %v772 = vpack.c.b16 %v572, %v570
    %v773 = vpack.c.b16 %v573, %v571
    %v774 = vpack.c.b16 %v576, %v574
    %v775 = vpack.c.b16 %v577, %v575
    %v776 = vpack.c.b16 %v580, %v578
    %v777 = vpack.c.b16 %v581, %v579
    %v778 = vpack.c.b16 %v584, %v582
    %v779 = vpack.c.b16 %v585, %v583
    %v780 = vpack.c.b16 %v588, %v586
    %v781 = vpack.c.b16 %v589, %v587
    %v782 = vpack.c.b16 %v592, %v590
    %v783 = vpack.c.b16 %v593, %v591
    %v784 = vpack.c.b16 %v596, %v594
    %v785 = vpack.c.b16 %v597, %v595
    %v786 = vpack.c.b16 %v600, %v598
    %v787 = vpack.c.b16 %v601, %v599
    %v788 = vpack.c.b16 %v604, %v602
    %v789 = vpack.c.b16 %v605, %v603
    %v790 = vpack.c.b16 %v608, %v606
    %v791 = vpack.c.b16 %v609, %v607
    %v792 = vpack.c.b16 %v612, %v610
    %v793 = vpack.c.b16 %v613, %v611
    %v794 = vpack.c.b16 %v616, %v614
    %v795 = vpack.c.b16 %v617, %v615
    %v796 = vpack.c.b16 %v620, %v618
    %v797 = vpack.c.b16 %v621, %v619
    %v798 = vpack.c.b16 %v624, %v622
    %v799 = vpack.c.b16 %v625, %v623
    %v800 = vpack.c.b16 %v628, %v626
    %v801 = vpack.c.b16 %v629, %v627
    %v802 = vpack.c.b16 %v632, %v630
    %v803 = vpack.c.b16 %v633, %v631
    %v804 = vpack.c.b16 %v636, %v634
    %v805 = vpack.c.b16 %v637, %v635
    %v806 = vpack.c.b16 %v640, %v638
    %v807 = vpack.c.b16 %v641, %v639
    %v808 = vpack.c.b16 %v644, %v642
    %v809 = vpack.c.b16 %v645, %v643
    %v810 = vpack.c.b16 %v648, %v646
    %v811 = vpack.c.b16 %v649, %v647
    %v812 = vpack.c.b16 %v652, %v650
    %v813 = vpack.c.b16 %v653, %v651
    %v814 = vpack.c.b16 %v656, %v654
    %v815 = vpack.c.b16 %v657, %v655
    %v816 = vpack.c.b16 %v660, %v658
    %v817 = vpack.c.b16 %v661, %v659
    %v818 = vpack.c.b16 %v664, %v662
    %v819 = vpack.c.b16 %v665, %v663
    %v820 = vpack.c.b16 %v668, %v666
    %v821 = vpack.c.b16 %v669, %v667
    %v822 = vpack.c.b16 %v672, %v670
    %v823 = vpack.c.b16 %v673, %v671
    %v824 = vpack.c.b16 %v676, %v674
    %v825 = vpack.c.b16 %v677, %v675
    %v826 = vpack.c.b16 %v680, %v678
    %v827 = vpack.c.b16 %v681, %v679
    %v828 = vpack.c.b16 %v684, %v682
    %v829 = vpack.c.b16 %v685, %v683
    %974 = vmatprep.subr.bf16.mxu0 %v701
    %975 = vmatpush1.bf16.msra.mxu0 %v700
    %976 = vmatprep.subr.bf16.mxu0 %v699
    %977 = vmatpush1.bf16.msra.mxu0 %v698
    %978 = vmatprep.subr.bf16.mxu0 %v697
    %979 = vmatpush1.bf16.msra.mxu0 %v696
    %980 = vmatprep.subr.bf16.mxu0 %v695
    %981 = vmatpush1.bf16.msra.mxu0 %v694
    %982 = vmatprep.subr.bf16.mxu0 %v693
    %983 = vmatpush1.bf16.msra.mxu0 %v692
    %984 = vmatprep.subr.bf16.mxu0 %v691
    %985 = vmatpush1.bf16.msra.mxu0 %v690
    %986 = vmatprep.subr.bf16.mxu0 %v689
    %987 = vmatpush1.bf16.msra.mxu0 %v688
    %988 = vmatprep.subr.bf16.mxu0 %v687
    %989 = vmatpush1.bf16.msra.mxu0 %v686
    %990 = vmatprep.subr.bf16.mxu0 %v717
    %991 = vmatpush2.bf16.msra.mxu0 %v716
    %992 = vmatprep.subr.bf16.mxu0 %v715
    %993 = vmatpush2.bf16.msra.mxu0 %v714
    %994 = vmatprep.subr.bf16.mxu0 %v713
    %995 = vmatpush2.bf16.msra.mxu0 %v712
    %996 = vmatprep.subr.bf16.mxu0 %v711
    %997 = vmatpush2.bf16.msra.mxu0 %v710
    %998 = vmatprep.subr.bf16.mxu0 %v709
    %999 = vmatpush2.bf16.msra.mxu0 %v708
    %1000 = vmatprep.subr.bf16.mxu0 %v707
    %1001 = vmatpush2.bf16.msra.mxu0 %v706
    %1002 = vmatprep.subr.bf16.mxu0 %v705
    %1003 = vmatpush2.bf16.msra.mxu0 %v704
    %1004 = vmatprep.subr.bf16.mxu0 %v703
    %1005 = vmatpush2.bf16.msra.mxu0 %v702
    %1006 = vmatprep.mubr.bf16.mxu0 %v219
    %1007 = vmatmul.mubr.bf16.gmra.mxu0 %v205
    %v1008 = vpop.f32.mrf.mxu0
    %v1009 = vadd.f32 %v173, %v1008
    %v1010 = vpop.f32.mrf.mxu0
    %v1011 = vadd.f32 %v177, %v1010
    %v1012 = vpop.f32.mrf.mxu0
    %v1013 = vpop.f32.mrf.mxu0
    %1014 = vdwg.mxu0
    %1015 = vmatprep.subr.bf16.mxu0 %v733
    %1016 = vmatpush1.bf16.msra.mxu0 %v732
    %1017 = vmatprep.subr.bf16.mxu0 %v731
    %1018 = vmatpush1.bf16.msra.mxu0 %v730
    %1019 = vmatprep.subr.bf16.mxu0 %v729
    %1020 = vmatpush1.bf16.msra.mxu0 %v728
    %1021 = vmatprep.subr.bf16.mxu0 %v727
    %1022 = vmatpush1.bf16.msra.mxu0 %v726
    %1023 = vmatprep.subr.bf16.mxu0 %v725
    %1024 = vmatpush1.bf16.msra.mxu0 %v724
    %1025 = vmatprep.subr.bf16.mxu0 %v723
    %1026 = vmatpush1.bf16.msra.mxu0 %v722
    %1027 = vmatprep.subr.bf16.mxu0 %v721
    %1028 = vmatpush1.bf16.msra.mxu0 %v720
    %1029 = vmatprep.subr.bf16.mxu0 %v719
    %1030 = vmatpush1.bf16.msra.mxu0 %v718
    %1031 = vmatprep.subr.bf16.mxu0 %v749
    %1032 = vmatpush2.bf16.msra.mxu0 %v748
    %1033 = vmatprep.subr.bf16.mxu0 %v747
    %1034 = vmatpush2.bf16.msra.mxu0 %v746
    %1035 = vmatprep.subr.bf16.mxu0 %v745
    %1036 = vmatpush2.bf16.msra.mxu0 %v744
    %1037 = vmatprep.subr.bf16.mxu0 %v743
    %1038 = vmatpush2.bf16.msra.mxu0 %v742
    %1039 = vmatprep.subr.bf16.mxu0 %v741
    %1040 = vmatpush2.bf16.msra.mxu0 %v740
    %1041 = vmatprep.subr.bf16.mxu0 %v739
    %1042 = vmatpush2.bf16.msra.mxu0 %v738
    %1043 = vmatprep.subr.bf16.mxu0 %v737
    %1044 = vmatpush2.bf16.msra.mxu0 %v736
    %1045 = vmatprep.subr.bf16.mxu0 %v735
    %1046 = vmatpush2.bf16.msra.mxu0 %v734
    %1047 = vmatprep.mubr.bf16.mxu0 %v229
    %1048 = vmatmul.mubr.bf16.gmra.mxu0 %v227
    %v1049 = vpop.f32.mrf.mxu0
    %v1050 = vadd.f32 %v1009, %v1049
    %v1051 = vpop.f32.mrf.mxu0
    %v1052 = vadd.f32 %v1011, %v1051
    %v1053 = vpop.f32.mrf.mxu0
    %v1054 = vpop.f32.mrf.mxu0
    %1055 = vdwg.mxu0
    %1056 = vmatprep.subr.bf16.mxu0 %v765
    %1057 = vmatpush1.bf16.msra.mxu0 %v764
    %1058 = vmatprep.subr.bf16.mxu0 %v763
    %1059 = vmatpush1.bf16.msra.mxu0 %v762
    %1060 = vmatprep.subr.bf16.mxu0 %v761
    %1061 = vmatpush1.bf16.msra.mxu0 %v760
    %1062 = vmatprep.subr.bf16.mxu0 %v759
    %1063 = vmatpush1.bf16.msra.mxu0 %v758
    %1064 = vmatprep.subr.bf16.mxu0 %v757
    %1065 = vmatpush1.bf16.msra.mxu0 %v756
    %1066 = vmatprep.subr.bf16.mxu0 %v755
    %1067 = vmatpush1.bf16.msra.mxu0 %v754
    %1068 = vmatprep.subr.bf16.mxu0 %v753
    %1069 = vmatpush1.bf16.msra.mxu0 %v752
    %1070 = vmatprep.subr.bf16.mxu0 %v751
    %1071 = vmatpush1.bf16.msra.mxu0 %v750
    %1072 = vmatprep.subr.bf16.mxu0 %v781
    %1073 = vmatpush2.bf16.msra.mxu0 %v780
    %1074 = vmatprep.subr.bf16.mxu0 %v779
    %1075 = vmatpush2.bf16.msra.mxu0 %v778
    %1076 = vmatprep.subr.bf16.mxu0 %v777
    %1077 = vmatpush2.bf16.msra.mxu0 %v776
    %1078 = vmatprep.subr.bf16.mxu0 %v775
    %1079 = vmatpush2.bf16.msra.mxu0 %v774
    %1080 = vmatprep.subr.bf16.mxu0 %v773
    %1081 = vmatpush2.bf16.msra.mxu0 %v772
    %1082 = vmatprep.subr.bf16.mxu0 %v771
    %1083 = vmatpush2.bf16.msra.mxu0 %v770
    %1084 = vmatprep.subr.bf16.mxu0 %v769
    %1085 = vmatpush2.bf16.msra.mxu0 %v768
    %1086 = vmatprep.subr.bf16.mxu0 %v767
    %1087 = vmatpush2.bf16.msra.mxu0 %v766
    %1088 = vmatprep.mubr.bf16.mxu0 %v226
    %1089 = vmatmul.mubr.bf16.gmra.mxu0 %v212
    %v1090 = vpop.f32.mrf.mxu0
    %v1091 = vadd.f32 %v1050, %v1090
    %v1092 = vpop.f32.mrf.mxu0
    %v1093 = vadd.f32 %v1052, %v1092
    %v1094 = vpop.f32.mrf.mxu0
    %v1095 = vpop.f32.mrf.mxu0
    %1096 = vdwg.mxu0
    %1097 = vmatprep.subr.bf16.mxu0 %v797
    %1098 = vmatpush1.bf16.msra.mxu0 %v796
    %1099 = vmatprep.subr.bf16.mxu0 %v795
    %1100 = vmatpush1.bf16.msra.mxu0 %v794
    %1101 = vmatprep.subr.bf16.mxu0 %v793
    %1102 = vmatpush1.bf16.msra.mxu0 %v792
    %1103 = vmatprep.subr.bf16.mxu0 %v791
    %1104 = vmatpush1.bf16.msra.mxu0 %v790
    %1105 = vmatprep.subr.bf16.mxu0 %v789
    %1106 = vmatpush1.bf16.msra.mxu0 %v788
    %1107 = vmatprep.subr.bf16.mxu0 %v787
    %1108 = vmatpush1.bf16.msra.mxu0 %v786
    %1109 = vmatprep.subr.bf16.mxu0 %v785
    %1110 = vmatpush1.bf16.msra.mxu0 %v784
    %1111 = vmatprep.subr.bf16.mxu0 %v783
    %1112 = vmatpush1.bf16.msra.mxu0 %v782
    %1113 = vmatprep.subr.bf16.mxu0 %v813
    %1114 = vmatpush2.bf16.msra.mxu0 %v812
    %1115 = vmatprep.subr.bf16.mxu0 %v811
    %1116 = vmatpush2.bf16.msra.mxu0 %v810
    %1117 = vmatprep.subr.bf16.mxu0 %v809
    %1118 = vmatpush2.bf16.msra.mxu0 %v808
    %1119 = vmatprep.subr.bf16.mxu0 %v807
    %1120 = vmatpush2.bf16.msra.mxu0 %v806
    %1121 = vmatprep.subr.bf16.mxu0 %v805
    %1122 = vmatpush2.bf16.msra.mxu0 %v804
    %1123 = vmatprep.subr.bf16.mxu0 %v803
    %1124 = vmatpush2.bf16.msra.mxu0 %v802
    %1125 = vmatprep.subr.bf16.mxu0 %v801
    %1126 = vmatpush2.bf16.msra.mxu0 %v800
    %1127 = vmatprep.subr.bf16.mxu0 %v799
    %1128 = vmatpush2.bf16.msra.mxu0 %v798
    %1129 = vmatprep.mubr.bf16.mxu0 %v230
    %1130 = vmatmul.mubr.bf16.gmra.mxu0 %v228
    %v1131 = vpop.f32.mrf.mxu0
    %v1132 = vadd.f32 %v1091, %v1131
    %v1133 = vpop.f32.mrf.mxu0
    %v1134 = vadd.f32 %v1093, %v1133
    %v1135 = vpop.f32.mrf.mxu0
    %v1136 = vpop.f32.mrf.mxu0
    %1137 = vdwg.mxu0
    %1138 = vmatprep.subr.bf16.mxu0 %v829
    %1139 = vmatpush1.bf16.msra.mxu0 %v828
    %1140 = vmatprep.subr.bf16.mxu0 %v827
    %1141 = vmatpush1.bf16.msra.mxu0 %v826
    %1142 = vmatprep.subr.bf16.mxu0 %v825
    %1143 = vmatpush1.bf16.msra.mxu0 %v824
    %1144 = vmatprep.subr.bf16.mxu0 %v823
    %1145 = vmatpush1.bf16.msra.mxu0 %v822
    %1146 = vmatprep.subr.bf16.mxu0 %v821
    %1147 = vmatpush1.bf16.msra.mxu0 %v820
    %1148 = vmatprep.subr.bf16.mxu0 %v819
    %1149 = vmatpush1.bf16.msra.mxu0 %v818
    %1150 = vmatprep.subr.bf16.mxu0 %v817
    %1151 = vmatpush1.bf16.msra.mxu0 %v816
    %1152 = vmatprep.subr.bf16.mxu0 %v815
    %1153 = vmatpush1.bf16.msra.mxu0 %v814
    %1154 = vmatprep.subr.bf16.mxu0 0
    %1155 = vmatpush2.bf16.msra.mxu0 0
    %1156 = vmatprep.subr.bf16.mxu0 0
    %1157 = vmatpush2.bf16.msra.mxu0 0
    %1158 = vmatprep.subr.bf16.mxu0 0
    %1159 = vmatpush2.bf16.msra.mxu0 0
    %1160 = vmatprep.subr.bf16.mxu0 0
    %1161 = vmatpush2.bf16.msra.mxu0 0
    %1162 = vmatprep.subr.bf16.mxu0 0
    %1163 = vmatpush2.bf16.msra.mxu0 0
    %1164 = vmatprep.subr.bf16.mxu0 0
    %1165 = vmatpush2.bf16.msra.mxu0 0
    %1166 = vmatprep.subr.bf16.mxu0 0
    %1167 = vmatpush2.bf16.msra.mxu0 0
    %1168 = vmatprep.subr.bf16.mxu0 0
    %1169 = vmatpush2.bf16.msra.mxu0 0
    %1170 = vmatprep.mubr.bf16.mxu0 0
    %1171 = vmatmul.mubr.bf16.gmra.mxu0 %v244
    %v1172 = vpop.f32.mrf.mxu0
    %v1173 = vadd.f32 %v1132, %v1172
    %v1174 = vpop.f32.mrf.mxu0
    %v1175 = vadd.f32 %v1134, %v1174
    %v1176 = vpop.f32.mrf.mxu0
    %v1177 = vpop.f32.mrf.mxu0
    %1178 = vdwg.mxu0
    %v1179 = vmax.f32 %v1173, 0.0
    %v1180 = vmax.f32 %v1175, 0.0
    %v1181 = vpack.c.bf16 %v1179, %v1179
    %v1182 = vpack.c.bf16 %v1180, %v1180
    %v1183 = vld [vmem:[%s3] sm:$0xf]
    %v1184 = vld [vmem:[%s3 + $0x4] sm:$0xf]
    %v1185 = vld [vmem:[%s3 + $0x8] sm:$0xf]
    %v1186 = vld [vmem:[%s3 + $0xc] sm:$0xf]
    %v1187 = vld [vmem:[%s3 + $0x10] sm:$0xf]
    %v1188 = vld [vmem:[%s3 + $0x14] sm:$0xf]
    %v1189 = vld [vmem:[%s3 + $0x18] sm:$0xf]
    %v1190 = vld [vmem:[%s3 + $0x1c] sm:$0xf]
    %v1191 = vld [vmem:[%s3 + $0x20] sm:$0xf]
    %v1192 = vld [vmem:[%s3 + $0x24] sm:$0xf]
    %v1193 = vld [vmem:[%s3 + $0x28] sm:$0xf]
    %v1194 = vld [vmem:[%s3 + $0x2c] sm:$0xf]
    %v1195 = vld [vmem:[%s3 + $0x30] sm:$0xf]
    %v1196 = vld [vmem:[%s3 + $0x34] sm:$0xf]
    %v1197 = vld [vmem:[%s3 + $0x38] sm:$0xf]
    %v1198 = vld [vmem:[%s3 + $0x3c] sm:$0xf]
    %v1199 = vld [vmem:[%s3 + $0x40] sm:$0xf]
    %v1200 = vld [vmem:[%s3 + $0x44] sm:$0xf]
    %v1201 = vld [vmem:[%s3 + $0x48] sm:$0xf]
    %v1202 = vld [vmem:[%s3 + $0x4c] sm:$0xf]
    %v1203 = vld [vmem:[%s3 + $0x50] sm:$0xf]
    %v1204 = vld [vmem:[%s3 + $0x54] sm:$0xf]
    %v1205 = vld [vmem:[%s3 + $0x58] sm:$0xf]
    %v1206 = vld [vmem:[%s3 + $0x5c] sm:$0xf]
    %v1207 = vld [vmem:[%s3 + $0x60] sm:$0xf]
    %v1208 = vld [vmem:[%s3 + $0x64] sm:$0xf]
    %v1209 = vld [vmem:[%s3 + $0x68] sm:$0xf]
    %v1210 = vld [vmem:[%s3 + $0x6c] sm:$0xf]
    %v1211 = vld [vmem:[%s3 + $0x70] sm:$0xf]
    %v1212 = vld [vmem:[%s3 + $0x74] sm:$0xf]
    %v1213 = vld [vmem:[%s3 + $0x78] sm:$0xf]
    %v1214 = vld [vmem:[%s3 + $0x7c] sm:$0xf]
    %v1215 = vld [vmem:[%s4] sm:$0x1]
    %v1217 = vlaneseq
    %v1218 = vshrl.u32 %v1217, 7
    %v1219 = vsub.s32 0, %v1218
    %v1220 = vrot.slane %v1215, %v1219
    %v1254 = vunpack.c.l.b16 %v1183
    %v1255 = vunpack.c.l.b16 %v1184
    %v1256 = vunpack.c.l.b16 %v1185
    %v1257 = vunpack.c.l.b16 %v1186
    %v1258 = vunpack.c.l.b16 %v1187
    %v1259 = vunpack.c.l.b16 %v1188
    %v1260 = vunpack.c.l.b16 %v1189
    %v1261 = vunpack.c.l.b16 %v1190
    %v1262 = vunpack.c.l.b16 %v1191
    %v1263 = vunpack.c.l.b16 %v1192
    %v1264 = vunpack.c.l.b16 %v1193
    %v1265 = vunpack.c.l.b16 %v1194
    %v1266 = vunpack.c.l.b16 %v1195
    %v1267 = vunpack.c.l.b16 %v1196
    %v1268 = vunpack.c.l.b16 %v1197
    %v1269 = vunpack.c.l.b16 %v1198
    %v1270 = vunpack.c.l.b16 %v1199
    %v1271 = vunpack.c.l.b16 %v1200
    %v1272 = vunpack.c.l.b16 %v1201
    %v1273 = vunpack.c.l.b16 %v1202
    %v1274 = vunpack.c.l.b16 %v1203
    %v1275 = vunpack.c.l.b16 %v1204
    %v1276 = vunpack.c.l.b16 %v1205
    %v1277 = vunpack.c.l.b16 %v1206
    %v1278 = vunpack.c.l.b16 %v1207
    %v1279 = vunpack.c.l.b16 %v1208
    %v1280 = vunpack.c.l.b16 %v1209
    %v1281 = vunpack.c.l.b16 %v1210
    %v1282 = vunpack.c.l.b16 %v1211
    %v1283 = vunpack.c.l.b16 %v1212
    %v1284 = vunpack.c.l.b16 %v1213
    %v1285 = vunpack.c.l.b16 %v1214
    %v1286 = vpack.c.b16 %v1255, %v1254
    %v1287 = vpack.c.b16 %v1257, %v1256
    %v1288 = vpack.c.b16 %v1259, %v1258
    %v1289 = vpack.c.b16 %v1261, %v1260
    %v1290 = vpack.c.b16 %v1263, %v1262
    %v1291 = vpack.c.b16 %v1265, %v1264
    %v1292 = vpack.c.b16 %v1267, %v1266
    %v1293 = vpack.c.b16 %v1269, %v1268
    %v1294 = vpack.c.b16 %v1271, %v1270
    %v1295 = vpack.c.b16 %v1273, %v1272
    %v1296 = vpack.c.b16 %v1275, %v1274
    %v1297 = vpack.c.b16 %v1277, %v1276
    %v1298 = vpack.c.b16 %v1279, %v1278
    %v1299 = vpack.c.b16 %v1281, %v1280
    %v1300 = vpack.c.b16 %v1283, %v1282
    %v1301 = vpack.c.b16 %v1285, %v1284
    %1318 = vmatprep.subr.bf16.mxu0 0
    %1319 = vmatpush1.bf16.msra.mxu0 %v1293
    %1320 = vmatprep.subr.bf16.mxu0 0
    %1321 = vmatpush1.bf16.msra.mxu0 %v1292
    %1322 = vmatprep.subr.bf16.mxu0 0
    %1323 = vmatpush1.bf16.msra.mxu0 %v1291
    %1324 = vmatprep.subr.bf16.mxu0 0
    %1325 = vmatpush1.bf16.msra.mxu0 %v1290
    %1326 = vmatprep.subr.bf16.mxu0 0
    %1327 = vmatpush1.bf16.msra.mxu0 %v1289
    %1328 = vmatprep.subr.bf16.mxu0 0
    %1329 = vmatpush1.bf16.msra.mxu0 %v1288
    %1330 = vmatprep.subr.bf16.mxu0 0
    %1331 = vmatpush1.bf16.msra.mxu0 %v1287
    %1332 = vmatprep.subr.bf16.mxu0 0
    %1333 = vmatpush1.bf16.msra.mxu0 %v1286
    %1334 = vmatprep.subr.bf16.mxu0 0
    %1335 = vmatpush2.bf16.msra.mxu0 %v1301
    %1336 = vmatprep.subr.bf16.mxu0 0
    %1337 = vmatpush2.bf16.msra.mxu0 %v1300
    %1338 = vmatprep.subr.bf16.mxu0 0
    %1339 = vmatpush2.bf16.msra.mxu0 %v1299
    %1340 = vmatprep.subr.bf16.mxu0 0
    %1341 = vmatpush2.bf16.msra.mxu0 %v1298
    %1342 = vmatprep.subr.bf16.mxu0 0
    %1343 = vmatpush2.bf16.msra.mxu0 %v1297
    %1344 = vmatprep.subr.bf16.mxu0 0
    %1345 = vmatpush2.bf16.msra.mxu0 %v1296
    %1346 = vmatprep.subr.bf16.mxu0 0
    %1347 = vmatpush2.bf16.msra.mxu0 %v1295
    %1348 = vmatprep.subr.bf16.mxu0 0
    %1349 = vmatpush2.bf16.msra.mxu0 %v1294
    %1350 = vmatprep.mubr.bf16.mxu0 %v1182
    %1351 = vmatmul.mubr.bf16.gmra.mxu0 %v1181
    %v1352 = vpop.f32.mrf.mxu0
    %v1353 = vadd.f32 %v1220, %v1352
    %v1354 = vpop.f32.mrf.mxu0
    %v1355 = vpop.f32.mrf.mxu0
    %v1356 = vpop.f32.mrf.mxu0
    %1357 = vdwg.mxu0
    %vm1358 = vcmask 74752
    %1359 = vst.msk [vmem:[#allocation2] sm:$0x3] %vm1358, %v1353
    // Predicated region
    $region22: #{improved_digit_recognizer_forward.13} parent=1 // pred_check
      _
    $region23: #{improved_digit_recognizer_forward.13} parent=1 // pred_check_branch
      %1361 = sbr.rel (0) target = $region25
    $region24: #{improved_digit_recognizer_forward.13} parent=1 // pred_region
      %s1363 = ssub.s32 32, 32
      %1364 = vsyncadd [#allocation3], %s1363
      %s1366 = sshll.u32 [#allocation2], 4
      %s1367 = int_to_ptr.vmem [resolvable:$true] %s1366
      %1369 = dma.vmem_to_hbm [thread:$0]  %s1367, 32, %s5, [#allocation3]
    $region25: #{improved_digit_recognizer_forward.13} parent=1 // pred_fallthru
      _
    // Predicated region
    $region26: #{improved_digit_recognizer_forward.13} parent=1 // pred_check
      _
    $region27: #{improved_digit_recognizer_forward.13} parent=1 // pred_check_branch
      %1371 = sbr.rel (0) target = $region29
    $region28: #{improved_digit_recognizer_forward.13} parent=1 // pred_region
      %1372 = dma.done [#allocation3], 32
    $region29: #{improved_digit_recognizer_forward.13} parent=1 // pred_fallthru
      _
    %1373 = vsyncpa [#allocation3], 1

</llo_original>
